<compile_context>
chip_gen: v6e
topology: v6e:2x2x1
jax: 0.10.0
libtpu: 0.0.40
codegen_flags: <defaults>
</compile_context>

<pallas_src>
import jax
import jax.numpy as jnp
import numpy as np
from jax.experimental import pallas as pl
from jax.experimental.pallas import tpu as pltpu

POINT_DIM = 3
ZDIM = 1024
C4 = 512             # final per-point feature width
EPS = 1e-5           # nn.BatchNorm1d default eps


# ----------------------------------------------------------------------------
# Fused kernel: per-point MLP + max-pool + fc_m / fc_v head
# ----------------------------------------------------------------------------
def _make_fused_kernel(n_tiles, tile_n, compute_dt, sub):
    cdt = compute_dt

    def kernel(x_ref,
               w1, b1, w2, b2, w3, b3, w4, b4,
               hw1, hb1, hw2, hb2, hw3, hb3,
               m_ref, v_ref, acc_ref):
        t = pl.program_id(1)

        @pl.when(t == 0)
        def _init():
            acc_ref[...] = jnp.full_like(acc_ref, -jnp.inf)

        # ---- per-point MLP (conv1..conv4, BN folded) ------------------------
        x = x_ref[0]                                           # (tile_n, 3) f32
        # conv1 (K=3) as three VPU broadcast FMAs; skips a badly-shaped MXU op.
        h = (x[:, 0:1] * w1[0:1, :]
             + x[:, 1:2] * w1[1:2, :]
             + x[:, 2:3] * w1[2:3, :]
             + b1[...])
        h = jnp.maximum(h, 0.0).astype(jnp.bfloat16)
        # bf16 MXU operands, f32 accumulation; bias/ReLU/max epilogue in `cdt`
        # (bf16 on v6e/v7x, f32 on v5e).
        h = jnp.dot(h, w2[...], preferred_element_type=jnp.float32).astype(cdt) + b2[...]
        h = jnp.maximum(h, 0.0).astype(jnp.bfloat16)
        h = jnp.dot(h, w3[...], preferred_element_type=jnp.float32).astype(cdt) + b3[...]
        h = jnp.maximum(h, 0.0).astype(jnp.bfloat16)
        h = jnp.dot(h, w4[...], preferred_element_type=jnp.float32).astype(cdt) + b4[...]
        # (tile_n, 512); padded rows are duplicates of point 0 -> no masking.

        # ---- running max-pool: per-sublane partial maxima (pure VPU) --------
        part = jnp.max(h.reshape(tile_n // sub, sub, C4), axis=0)   # (sub, 512)
        acc_ref[...] = jnp.maximum(acc_ref[...], part)

        # ---- epilogue on the last point tile: finish max + fused fc head ----
        @pl.when(t == n_tiles - 1)
        def _head():
            g = jnp.max(acc_ref[...], axis=0, keepdims=True)         # (1, 512)
            g = jnp.where(jnp.isneginf(g), 0.0, g)                   # nan_to_num(neginf=0)
            hmv = jnp.dot(g.astype(jnp.bfloat16), hw1[...],
                          preferred_element_type=jnp.float32) + hb1[...]
            hmv = jnp.maximum(hmv, 0.0)
            hmv = jnp.dot(hmv.astype(jnp.bfloat16), hw2[...],
                          preferred_element_type=jnp.float32) + hb2[...]
            hmv = jnp.maximum(hmv, 0.0)
            hmv = jnp.dot(hmv.astype(jnp.bfloat16), hw3[...],
                          preferred_element_type=jnp.float32) + hb3[...]   # (1, 2*ZDIM)
            m_ref[0] = hmv[:, :ZDIM]
            v_ref[0] = hmv[:, ZDIM:]

    return kernel


def _full_spec(a):
    nd = a.ndim
    return pl.BlockSpec(a.shape, lambda *_: (0,) * nd)


# ----------------------------------------------------------------------------
# Parameter construction (deterministic, synthetic) and BN folding
# ----------------------------------------------------------------------------
def _bn_params(key, c):
    k1, k2, k3, k4 = jax.random.split(key, 4)
    gamma = jax.random.uniform(k1, (c,), minval=0.5, maxval=1.5, dtype=jnp.float32)
    beta = 0.1 * jax.random.normal(k2, (c,), dtype=jnp.float32)
    mean = 0.1 * jax.random.normal(k3, (c,), dtype=jnp.float32)
    var = jax.random.uniform(k4, (c,), minval=0.5, maxval=1.5, dtype=jnp.float32)
    return gamma, beta, mean, var


def _lin_params(key, cin, cout):
    k1, k2 = jax.random.split(key)
    w = 0.1 * jax.random.normal(k1, (cin, cout), dtype=jnp.float32)
    b = 0.05 * jax.random.normal(k2, (cout,), dtype=jnp.float32)
    return w, b


def init_params(key):
    keys = jax.random.split(key, 32)
    p = {}
    p["w1"], p["cb1"] = _lin_params(keys[0], POINT_DIM, 128)
    p["w2"], p["cb2"] = _lin_params(keys[1], 128, 128)
    p["w3"], p["cb3"] = _lin_params(keys[2], 128, 256)
    p["w4"], p["cb4"] = _lin_params(keys[3], 256, 512)
    p["bn1"] = _bn_params(keys[4], 128)
    p["bn2"] = _bn_params(keys[5], 128)
    p["bn3"] = _bn_params(keys[6], 256)
    p["bn4"] = _bn_params(keys[7], 512)
    p["w1m"], p["b1m"] = _lin_params(keys[8], 512, 256)
    p["w2m"], p["b2m"] = _lin_params(keys[9], 256, 128)
    p["w3m"], p["b3m"] = _lin_params(keys[10], 128, ZDIM)
    p["fbn1m"] = _bn_params(keys[11], 256)
    p["fbn2m"] = _bn_params(keys[12], 128)
    p["w1v"], p["b1v"] = _lin_params(keys[13], 512, 256)
    p["w2v"], p["b2v"] = _lin_params(keys[14], 256, 128)
    p["w3v"], p["b3v"] = _lin_params(keys[15], 128, ZDIM)
    p["fbn1v"] = _bn_params(keys[16], 256)
    p["fbn2v"] = _bn_params(keys[17], 128)
    return p


def _fold_bn(w, b, bn):
    gamma, beta, mean, var = bn
    s = gamma / jnp.sqrt(var + EPS)
    return w * s[None, :], b * s + beta - mean * s


def _row(b):
    return b.reshape(1, -1)


def _block_diag(a, b):
    ra, ca = a.shape
    rb, cb = b.shape
    out = jnp.zeros((ra + rb, ca + cb), a.dtype)
    out = out.at[:ra, :ca].set(a)
    out = out.at[ra:, ca:].set(b)
    return out


def _round_up(x, m):
    return ((x + m - 1) // m) * m


def _default_bf16_epilogue():
    """bf16 VALU is native on v6e / v7x; keep f32 epilogue on older chips."""
    try:
        kind = jax.devices()[0].device_kind.lower()
    except Exception:
        return False
    return any(tag in kind for tag in ("v6", "v7", "trillium"))


# ----------------------------------------------------------------------------
# Forward wrapper
# ----------------------------------------------------------------------------
def pointnet_vae_base_forward(x, raw, *, tile_n=None, bf16_epilogue=None):
    """x: (B, N, point_dim) float32 -> (m, v), each (B, ZDIM)."""
    B, N, _ = x.shape
    if bf16_epilogue is None:
        bf16_epilogue = _default_bf16_epilogue()
    cdt = jnp.bfloat16 if bf16_epilogue else jnp.float32
    sub = 16 if bf16_epilogue else 8           # native sublane packing per dtype

    if tile_n is None:
        # cap: 2048 on v6e/v7x (fits 32 MiB scoped VMEM with bf16 epilogue),
        # 1024 on v5e (f32 temporaries, 16 MiB default scoped).  Pick the tile
        # that keeps ragged padding small.
        cap = 2048 if bf16_epilogue else 1024
        n_tiles = max(1, -(-N // cap))
        tile_n = _round_up(-(-N // n_tiles), 256)
    assert tile_n % 256 == 0, "tile_n must be a multiple of 256"
    n_pad = _round_up(N, tile_n)
    if n_pad != N:
        # Pad with duplicates of point 0: duplicates are harmless under the
        # max-pool, so the kernel needs no -inf masking at all.
        pad = jnp.broadcast_to(x[:, :1, :], (B, n_pad - N, x.shape[-1]))
        x = jnp.concatenate([x, pad], axis=1)

    bf = jnp.bfloat16

    # fold BN (inference mode) into the preceding conv / fc weights
    w1, b1 = _fold_bn(raw["w1"], raw["cb1"], raw["bn1"])      # conv1 stays f32 (VPU)
    w2, b2 = _fold_bn(raw["w2"], raw["cb2"], raw["bn2"])
    w3, b3 = _fold_bn(raw["w3"], raw["cb3"], raw["bn3"])
    w4, b4 = _fold_bn(raw["w4"], raw["cb4"], raw["bn4"])

    w1m, b1m = _fold_bn(raw["w1m"], raw["b1m"], raw["fbn1m"])
    w2m, b2m = _fold_bn(raw["w2m"], raw["b2m"], raw["fbn2m"])
    w1v, b1v = _fold_bn(raw["w1v"], raw["b1v"], raw["fbn1v"])
    w2v, b2v = _fold_bn(raw["w2v"], raw["b2v"], raw["fbn2v"])

    # fuse the m & v branches into three matmuls (concat / block-diagonal)
    hw1 = jnp.concatenate([w1m, w1v], axis=1)                 # (512, 512)
    hb1 = jnp.concatenate([b1m, b1v])
    hw2 = _block_diag(w2m, w2v)                               # (512, 256)
    hb2 = jnp.concatenate([b2m, b2v])
    hw3 = _block_diag(raw["w3m"], raw["w3v"])                 # (256, 2*ZDIM)
    hb3 = jnp.concatenate([raw["b3m"], raw["b3v"]])

    weights = (
        w1, _row(b1),
        w2.astype(bf), _row(b2.astype(cdt)),
        w3.astype(bf), _row(b3.astype(cdt)),
        w4.astype(bf), _row(b4.astype(cdt)),
        hw1.astype(bf), _row(hb1), hw2.astype(bf), _row(hb2), hw3.astype(bf), _row(hb3),
    )

    # advisory cost estimate: per-point MLP + fused head
    flops = int(2 * B * n_pad * (POINT_DIM * 128 + 128 * 128 + 128 * 256 + 256 * 512)
                + 2 * B * (512 * 512 + 512 * 256 + 256 * 2 * ZDIM))
    bytes_accessed = int(
        x.size * 4
        + sum(int(np.prod(w.shape)) * jnp.dtype(w.dtype).itemsize for w in weights)
        + 2 * B * ZDIM * 4)
    cost = pl.CostEstimate(flops=flops, transcendentals=0,
                           bytes_accessed=bytes_accessed)

    kernel = _make_fused_kernel(n_pad // tile_n, tile_n, cdt, sub)
    m, v = pl.pallas_call(
        kernel,
        out_shape=(jax.ShapeDtypeStruct((B, 1, ZDIM), jnp.float32),
                   jax.ShapeDtypeStruct((B, 1, ZDIM), jnp.float32)),
        grid=(B, n_pad // tile_n),
        in_specs=[pl.BlockSpec((1, tile_n, POINT_DIM), lambda b, t: (b, t, 0))]
        + [_full_spec(w) for w in weights],
        out_specs=(pl.BlockSpec((1, 1, ZDIM), lambda b, t: (b, 0, 0)),
                   pl.BlockSpec((1, 1, ZDIM), lambda b, t: (b, 0, 0))),
        scratch_shapes=[pltpu.VMEM((sub, C4), cdt)],
        compiler_params=pltpu.CompilerParams(
            dimension_semantics=("parallel", "arbitrary"),
            vmem_limit_bytes=40 * 1024 * 1024),
        cost_estimate=cost,
    )(x, *weights)
    return m.reshape(B, ZDIM), v.reshape(B, ZDIM)


# ----------------------------------------------------------------------------
# Pure-JAX reference (un-folded BN, f32) for a correctness check
# ----------------------------------------------------------------------------
def reference_forward(x, p):
    def bn(y, stats):
        gamma, beta, mean, var = stats
        return (y - mean) / jnp.sqrt(var + EPS) * gamma + beta

    h = x
    h = jax.nn.relu(bn(h @ p["w1"] + p["cb1"], p["bn1"]))
    h = jax.nn.relu(bn(h @ p["w2"] + p["cb2"], p["bn2"]))
    h = jax.nn.relu(bn(h @ p["w3"] + p["cb3"], p["bn3"]))
    h = bn(h @ p["w4"] + p["cb4"], p["bn4"])
    g = jnp.max(h, axis=1)                                    # (B, 512)
    g = jnp.where(jnp.isneginf(g), 0.0, g)

    m = jax.nn.relu(bn(g @ p["w1m"] + p["b1m"], p["fbn1m"]))
    m = jax.nn.relu(bn(m @ p["w2m"] + p["b2m"], p["fbn2m"]))
    m = m @ p["w3m"] + p["b3m"]
    v = jax.nn.relu(bn(g @ p["w1v"] + p["b1v"], p["fbn1v"]))
    v = jax.nn.relu(bn(v @ p["w2v"] + p["b2v"], p["fbn2v"]))
    v = v @ p["w3v"] + p["b3v"]
    return m, v


def _assert_close(got, want, *, tol):
    got = np.asarray(got, dtype=np.float64)
    want = np.asarray(want, dtype=np.float64)
    scale = np.max(np.abs(want)) + 1e-6
    err = np.max(np.abs(got - want)) / scale
    assert err < tol, f"max error {err:.4g} (relative to scale {scale:.3g}) >= {tol}"


if __name__ == "__main__":
    B, N = 2, 1000            # ragged N exercises the duplicate-padded tail
    TILE_N = 512              # 2 point tiles -> exercises the running-max accumulator
    key = jax.random.PRNGKey(0)
    kx, kp = jax.random.split(key)
    x = jax.random.normal(kx, (B, N, POINT_DIM), dtype=jnp.float32)
    raw = init_params(kp)

    m, v = pointnet_vae_base_forward(x, raw, tile_n=TILE_N)
    jax.block_until_ready((m, v))

    m_ref, v_ref = reference_forward(x, raw)
    # bf16 MXU operands (f32 accumulation) across 7 stacked layers, plus a bf16
    # bias/ReLU/max epilogue on v6e/v7x -> ~1% error vs the f32 reference;
    # check against the output dynamic range.
    _assert_close(m, m_ref, tol=5e-2)
    _assert_close(v, v_ref, tol=5e-2)
    print("KERNEL_OK")
</pallas_src>

<mosaic_0001>
module attributes {stable_mosaic.version = 11 : i64} {
  func.func @kernel(%arg0: i32, %arg1: i32, %arg2: memref<1x512x3xf32, #tpu.memory_space<vmem>>, %arg3: memref<3x128xf32, #tpu.memory_space<vmem>>, %arg4: memref<1x128xf32, #tpu.memory_space<vmem>>, %arg5: memref<128x128xbf16, #tpu.memory_space<vmem>>, %arg6: memref<1x128xf32, #tpu.memory_space<vmem>>, %arg7: memref<128x256xbf16, #tpu.memory_space<vmem>>, %arg8: memref<1x256xf32, #tpu.memory_space<vmem>>, %arg9: memref<256x512xbf16, #tpu.memory_space<vmem>>, %arg10: memref<1x512xf32, #tpu.memory_space<vmem>>, %arg11: memref<512x512xbf16, #tpu.memory_space<vmem>>, %arg12: memref<1x512xf32, #tpu.memory_space<vmem>>, %arg13: memref<512x256xbf16, #tpu.memory_space<vmem>>, %arg14: memref<1x256xf32, #tpu.memory_space<vmem>>, %arg15: memref<256x2048xbf16, #tpu.memory_space<vmem>>, %arg16: memref<1x2048xf32, #tpu.memory_space<vmem>>, %arg17: memref<1x1x1024xf32, #tpu.memory_space<vmem>>, %arg18: memref<1x1x1024xf32, #tpu.memory_space<vmem>>, %arg19: memref<8x512xf32, #tpu.memory_space<vmem>>) attributes {dimension_semantics = [#tpu.dimension_semantics<parallel>, #tpu.dimension_semantics<arbitrary>], iteration_bounds = array<i64: 2, 2>, scalar_prefetch = 0 : i64, scratch_operands = 1 : i64, tpu.core_type = #tpu.core_type<tc>, window_params = [{transform_indices = @transform_0, window_bounds = array<i64: 1, 512, 3>}, {pipeline_mode = #tpu.pipeline_mode<synchronous>, transform_indices = @transform_1, window_bounds = array<i64: 3, 128>}, {pipeline_mode = #tpu.pipeline_mode<synchronous>, transform_indices = @transform_2, window_bounds = array<i64: 1, 128>}, {pipeline_mode = #tpu.pipeline_mode<synchronous>, transform_indices = @transform_3, window_bounds = array<i64: 128, 128>}, {pipeline_mode = #tpu.pipeline_mode<synchronous>, transform_indices = @transform_4, window_bounds = array<i64: 1, 128>}, {pipeline_mode = #tpu.pipeline_mode<synchronous>, transform_indices = @transform_5, window_bounds = array<i64: 128, 256>}, {pipeline_mode = #tpu.pipeline_mode<synchronous>, transform_indices = @transform_6, window_bounds = array<i64: 1, 256>}, {pipeline_mode = #tpu.pipeline_mode<synchronous>, transform_indices = @transform_7, window_bounds = array<i64: 256, 512>}, {pipeline_mode = #tpu.pipeline_mode<synchronous>, transform_indices = @transform_8, window_bounds = array<i64: 1, 512>}, {pipeline_mode = #tpu.pipeline_mode<synchronous>, transform_indices = @transform_9, window_bounds = array<i64: 512, 512>}, {pipeline_mode = #tpu.pipeline_mode<synchronous>, transform_indices = @transform_10, window_bounds = array<i64: 1, 512>}, {pipeline_mode = #tpu.pipeline_mode<synchronous>, transform_indices = @transform_11, window_bounds = array<i64: 512, 256>}, {pipeline_mode = #tpu.pipeline_mode<synchronous>, transform_indices = @transform_12, window_bounds = array<i64: 1, 256>}, {pipeline_mode = #tpu.pipeline_mode<synchronous>, transform_indices = @transform_13, window_bounds = array<i64: 256, 2048>}, {pipeline_mode = #tpu.pipeline_mode<synchronous>, transform_indices = @transform_14, window_bounds = array<i64: 1, 2048>}, {transform_indices = @transform_15, window_bounds = array<i64: 1, 1, 1024>}, {transform_indices = @transform_16, window_bounds = array<i64: 1, 1, 1024>}]} {
    %c0_i32 = arith.constant 0 : i32
    %0 = arith.cmpi eq, %arg1, %c0_i32 : i32
    %1 = arith.extui %0 : i1 to i32
    %c0_i32_0 = arith.constant 0 : i32
    %2 = arith.cmpi ne, %1, %c0_i32_0 : i32
    scf.if %2 {
      %cst_32 = arith.constant 0xFF800000 : f32
      %57 = vector.broadcast %cst_32 : f32 to vector<8x512xf32>
      %c0_33 = arith.constant 0 : index
      %c0_34 = arith.constant 0 : index
      %58 = vector.load %arg19[%c0_33, %c0_34] : memref<8x512xf32, #tpu.memory_space<vmem>>, vector<8x512xf32>
      tpu.vector_store %arg19[%c0_33, %c0_34], %57 {strides = array<i32>} : memref<8x512xf32, #tpu.memory_space<vmem>>, vector<8x512xf32>,
    } else {
    }
    %c0 = arith.constant 0 : index
    %c0_1 = arith.constant 0 : index
    %c0_2 = arith.constant 0 : index
    %3 = vector.load %arg2[%c0, %c0_1, %c0_2] : memref<1x512x3xf32, #tpu.memory_space<vmem>>, vector<1x512x3xf32>
    %4 = vector.shape_cast %3 : vector<1x512x3xf32> to vector<512x3xf32>
    %5 = vector.extract_strided_slice %4 {offsets = [0, 0], sizes = [512, 1], strides = [1, 1]} : vector<512x3xf32> to vector<512x1xf32>
    %c0_3 = arith.constant 0 : index
    %c0_4 = arith.constant 0 : index
    %6 = vector.load %arg3[%c0_3, %c0_4] : memref<3x128xf32, #tpu.memory_space<vmem>>, vector<1x128xf32>
    %7 = vector.broadcast %5 : vector<512x1xf32> to vector<512x128xf32>
    %8 = vector.broadcast %6 : vector<1x128xf32> to vector<512x128xf32>
    %9 = arith.mulf %7, %8 : vector<512x128xf32>
    %10 = vector.extract_strided_slice %4 {offsets = [0, 1], sizes = [512, 1], strides = [1, 1]} : vector<512x3xf32> to vector<512x1xf32>
    %c1 = arith.constant 1 : index
    %c0_5 = arith.constant 0 : index
    %11 = vector.load %arg3[%c1, %c0_5] : memref<3x128xf32, #tpu.memory_space<vmem>>, vector<1x128xf32>
    %12 = vector.broadcast %10 : vector<512x1xf32> to vector<512x128xf32>
    %13 = vector.broadcast %11 : vector<1x128xf32> to vector<512x128xf32>
    %14 = arith.mulf %12, %13 : vector<512x128xf32>
    %15 = arith.addf %9, %14 : vector<512x128xf32>
    %16 = vector.extract_strided_slice %4 {offsets = [0, 2], sizes = [512, 1], strides = [1, 1]} : vector<512x3xf32> to vector<512x1xf32>
    %c2 = arith.constant 2 : index
    %c0_6 = arith.constant 0 : index
    %17 = vector.load %arg3[%c2, %c0_6] : memref<3x128xf32, #tpu.memory_space<vmem>>, vector<1x128xf32>
    %18 = vector.broadcast %16 : vector<512x1xf32> to vector<512x128xf32>
    %19 = vector.broadcast %17 : vector<1x128xf32> to vector<512x128xf32>
    %20 = arith.mulf %18, %19 : vector<512x128xf32>
    %21 = arith.addf %15, %20 : vector<512x128xf32>
    %c0_7 = arith.constant 0 : index
    %c0_8 = arith.constant 0 : index
    %22 = vector.load %arg4[%c0_7, %c0_8] : memref<1x128xf32, #tpu.memory_space<vmem>>, vector<1x128xf32>
    %23 = vector.broadcast %22 : vector<1x128xf32> to vector<512x128xf32>
    %24 = arith.addf %21, %23 : vector<512x128xf32>
    %cst = arith.constant 0.000000e+00 : f32
    %25 = vector.broadcast %cst : f32 to vector<512x128xf32>
    %26 = arith.maximumf %24, %25 : vector<512x128xf32>
    %27 = arith.truncf %26 : vector<512x128xf32> to vector<512x128xbf16>
    %c0_9 = arith.constant 0 : index
    %c0_10 = arith.constant 0 : index
    %28 = vector.load %arg5[%c0_9, %c0_10] : memref<128x128xbf16, #tpu.memory_space<vmem>>, vector<128x128xbf16>
    %cst_11 = arith.constant dense<0.000000e+00> : vector<512x128xf32>
    %29 = tpu.matmul %27, %28, %cst_11 {dimension_numbers = #tpu.dot_dimension_numbers<[1], [0], [0], [1], [0, 0, 1, 1], [], []>} : vector<512x128xbf16>, vector<128x128xbf16>, vector<512x128xf32> -> vector<512x128xf32>
    %c0_12 = arith.constant 0 : index
    %c0_13 = arith.constant 0 : index
    %30 = vector.load %arg6[%c0_12, %c0_13] : memref<1x128xf32, #tpu.memory_space<vmem>>, vector<1x128xf32>
    %31 = vector.broadcast %30 : vector<1x128xf32> to vector<512x128xf32>
    %32 = arith.addf %29, %31 : vector<512x128xf32>
    %cst_14 = arith.constant 0.000000e+00 : f32
    %33 = vector.broadcast %cst_14 : f32 to vector<512x128xf32>
    %34 = arith.maximumf %32, %33 : vector<512x128xf32>
    %35 = arith.truncf %34 : vector<512x128xf32> to vector<512x128xbf16>
    %c0_15 = arith.constant 0 : index
    %c0_16 = arith.constant 0 : index
    %36 = vector.load %arg7[%c0_15, %c0_16] : memref<128x256xbf16, #tpu.memory_space<vmem>>, vector<128x256xbf16>
    %cst_17 = arith.constant dense<0.000000e+00> : vector<512x256xf32>
    %37 = tpu.matmul %35, %36, %cst_17 {dimension_numbers = #tpu.dot_dimension_numbers<[1], [0], [0], [1], [0, 0, 1, 1], [], []>} : vector<512x128xbf16>, vector<128x256xbf16>, vector<512x256xf32> -> vector<512x256xf32>
    %c0_18 = arith.constant 0 : index
    %c0_19 = arith.constant 0 : index
    %38 = vector.load %arg8[%c0_18, %c0_19] : memref<1x256xf32, #tpu.memory_space<vmem>>, vector<1x256xf32>
    %39 = vector.broadcast %38 : vector<1x256xf32> to vector<512x256xf32>
    %40 = arith.addf %37, %39 : vector<512x256xf32>
    %cst_20 = arith.constant 0.000000e+00 : f32
    %41 = vector.broadcast %cst_20 : f32 to vector<512x256xf32>
    %42 = arith.maximumf %40, %41 : vector<512x256xf32>
    %43 = arith.truncf %42 : vector<512x256xf32> to vector<512x256xbf16>
    %c0_21 = arith.constant 0 : index
    %c0_22 = arith.constant 0 : index
    %44 = vector.load %arg9[%c0_21, %c0_22] : memref<256x512xbf16, #tpu.memory_space<vmem>>, vector<256x512xbf16>
    %cst_23 = arith.constant dense<0.000000e+00> : vector<512x512xf32>
    %45 = tpu.matmul %43, %44, %cst_23 {dimension_numbers = #tpu.dot_dimension_numbers<[1], [0], [0], [1], [0, 0, 1, 1], [], []>} : vector<512x256xbf16>, vector<256x512xbf16>, vector<512x512xf32> -> vector<512x512xf32>
    %c0_24 = arith.constant 0 : index
    %c0_25 = arith.constant 0 : index
    %46 = vector.load %arg10[%c0_24, %c0_25] : memref<1x512xf32, #tpu.memory_space<vmem>>, vector<1x512xf32>
    %47 = vector.broadcast %46 : vector<1x512xf32> to vector<512x512xf32>
    %48 = arith.addf %45, %47 : vector<512x512xf32>
    %49 = vector.shape_cast %48 : vector<512x512xf32> to vector<64x8x512xf32>
    %cst_26 = arith.constant dense<0xFF800000> : vector<8x512xf32>
    %50 = vector.multi_reduction <maximumf>, %49, %cst_26 [0] : vector<64x8x512xf32> to vector<8x512xf32>
    %c0_27 = arith.constant 0 : index
    %c0_28 = arith.constant 0 : index
    %51 = vector.load %arg19[%c0_27, %c0_28] : memref<8x512xf32, #tpu.memory_space<vmem>>, vector<8x512xf32>
    %52 = arith.maximumf %51, %50 : vector<8x512xf32>
    %c0_29 = arith.constant 0 : index
    %c0_30 = arith.constant 0 : index
    %53 = vector.load %arg19[%c0_29, %c0_30] : memref<8x512xf32, #tpu.memory_space<vmem>>, vector<8x512xf32>
    tpu.vector_store %arg19[%c0_29, %c0_30], %52 {strides = array<i32>} : memref<8x512xf32, #tpu.memory_space<vmem>>, vector<8x512xf32>,
    %c1_i32 = arith.constant 1 : i32
    %54 = arith.cmpi eq, %arg1, %c1_i32 : i32
    %55 = arith.extui %54 : i1 to i32
    %c0_i32_31 = arith.constant 0 : i32
    %56 = arith.cmpi ne, %55, %c0_i32_31 : i32
    scf.if %56 {
      %c0_32 = arith.constant 0 : index
      %c0_33 = arith.constant 0 : index
      %57 = vector.load %arg19[%c0_32, %c0_33] : memref<8x512xf32, #tpu.memory_space<vmem>>, vector<8x512xf32>
      %cst_34 = arith.constant dense<0xFF800000> : vector<512xf32>
      %58 = vector.multi_reduction <maximumf>, %57, %cst_34 [0] : vector<8x512xf32> to vector<512xf32>
      %59 = vector.shape_cast %58 : vector<512xf32> to vector<1x512xf32>
      %cst_35 = arith.constant 0xFF800000 : f32
      %60 = vector.broadcast %cst_35 : f32 to vector<1x512xf32>
      %61 = arith.cmpf oeq, %59, %60 : vector<1x512xf32>
      %cst_36 = arith.constant 0.000000e+00 : f32
      %62 = vector.broadcast %cst_36 : f32 to vector<1x512xf32>
      %63 = arith.select %61, %62, %59 : vector<1x512xi1>, vector<1x512xf32>
      %64 = arith.truncf %63 : vector<1x512xf32> to vector<1x512xbf16>
      %c0_37 = arith.constant 0 : index
      %c0_38 = arith.constant 0 : index
      %65 = vector.load %arg11[%c0_37, %c0_38] : memref<512x512xbf16, #tpu.memory_space<vmem>>, vector<512x512xbf16>
      %cst_39 = arith.constant dense<0.000000e+00> : vector<1x512xf32>
      %66 = tpu.matmul %64, %65, %cst_39 {dimension_numbers = #tpu.dot_dimension_numbers<[1], [0], [0], [1], [0, 0, 1, 1], [], []>} : vector<1x512xbf16>, vector<512x512xbf16>, vector<1x512xf32> -> vector<1x512xf32>
      %c0_40 = arith.constant 0 : index
      %c0_41 = arith.constant 0 : index
      %67 = vector.load %arg12[%c0_40, %c0_41] : memref<1x512xf32, #tpu.memory_space<vmem>>, vector<1x512xf32>
      %68 = arith.addf %66, %67 : vector<1x512xf32>
      %cst_42 = arith.constant 0.000000e+00 : f32
      %69 = vector.broadcast %cst_42 : f32 to vector<1x512xf32>
      %70 = arith.maximumf %68, %69 : vector<1x512xf32>
      %71 = arith.truncf %70 : vector<1x512xf32> to vector<1x512xbf16>
      %c0_43 = arith.constant 0 : index
      %c0_44 = arith.constant 0 : index
      %72 = vector.load %arg13[%c0_43, %c0_44] : memref<512x256xbf16, #tpu.memory_space<vmem>>, vector<512x256xbf16>
      %cst_45 = arith.constant dense<0.000000e+00> : vector<1x256xf32>
      %73 = tpu.matmul %71, %72, %cst_45 {dimension_numbers = #tpu.dot_dimension_numbers<[1], [0], [0], [1], [0, 0, 1, 1], [], []>} : vector<1x512xbf16>, vector<512x256xbf16>, vector<1x256xf32> -> vector<1x256xf32>
      %c0_46 = arith.constant 0 : index
      %c0_47 = arith.constant 0 : index
      %74 = vector.load %arg14[%c0_46, %c0_47] : memref<1x256xf32, #tpu.memory_space<vmem>>, vector<1x256xf32>
      %75 = arith.addf %73, %74 : vector<1x256xf32>
      %cst_48 = arith.constant 0.000000e+00 : f32
      %76 = vector.broadcast %cst_48 : f32 to vector<1x256xf32>
      %77 = arith.maximumf %75, %76 : vector<1x256xf32>
      %78 = arith.truncf %77 : vector<1x256xf32> to vector<1x256xbf16>
      %c0_49 = arith.constant 0 : index
      %c0_50 = arith.constant 0 : index
      %79 = vector.load %arg15[%c0_49, %c0_50] : memref<256x2048xbf16, #tpu.memory_space<vmem>>, vector<256x2048xbf16>
      %cst_51 = arith.constant dense<0.000000e+00> : vector<1x2048xf32>
      %80 = tpu.matmul %78, %79, %cst_51 {dimension_numbers = #tpu.dot_dimension_numbers<[1], [0], [0], [1], [0, 0, 1, 1], [], []>} : vector<1x256xbf16>, vector<256x2048xbf16>, vector<1x2048xf32> -> vector<1x2048xf32>
      %c0_52 = arith.constant 0 : index
      %c0_53 = arith.constant 0 : index
      %81 = vector.load %arg16[%c0_52, %c0_53] : memref<1x2048xf32, #tpu.memory_space<vmem>>, vector<1x2048xf32>
      %82 = arith.addf %80, %81 : vector<1x2048xf32>
      %83 = vector.extract_strided_slice %82 {offsets = [0, 0], sizes = [1, 1024], strides = [1, 1]} : vector<1x2048xf32> to vector<1x1024xf32>
      %c0_54 = arith.constant 0 : index
      %c0_55 = arith.constant 0 : index
      %c0_56 = arith.constant 0 : index
      %84 = vector.load %arg17[%c0_54, %c0_55, %c0_56] : memref<1x1x1024xf32, #tpu.memory_space<vmem>>, vector<1x1x1024xf32>
      %85 = vector.shape_cast %84 : vector<1x1x1024xf32> to vector<1x1024xf32>
      %86 = vector.shape_cast %83 : vector<1x1024xf32> to vector<1x1x1024xf32>
      tpu.vector_store %arg17[%c0_54, %c0_55, %c0_56], %86 {strides = array<i32>} : memref<1x1x1024xf32, #tpu.memory_space<vmem>>, vector<1x1x1024xf32>,
      %87 = vector.extract_strided_slice %82 {offsets = [0, 1024], sizes = [1, 1024], strides = [1, 1]} : vector<1x2048xf32> to vector<1x1024xf32>
      %c0_57 = arith.constant 0 : index
      %c0_58 = arith.constant 0 : index
      %c0_59 = arith.constant 0 : index
      %88 = vector.load %arg18[%c0_57, %c0_58, %c0_59] : memref<1x1x1024xf32, #tpu.memory_space<vmem>>, vector<1x1x1024xf32>
      %89 = vector.shape_cast %88 : vector<1x1x1024xf32> to vector<1x1024xf32>
      %90 = vector.shape_cast %87 : vector<1x1024xf32> to vector<1x1x1024xf32>
      tpu.vector_store %arg18[%c0_57, %c0_58, %c0_59], %90 {strides = array<i32>} : memref<1x1x1024xf32, #tpu.memory_space<vmem>>, vector<1x1x1024xf32>,
    } else {
    }
    return
  }
  func.func @transform_0(%arg0: i32, %arg1: i32) -> (i32, i32, i32) {
    %c0_i32 = arith.constant 0 : i32
    %c0_i32_0 = arith.constant 0 : i32
    return %arg0, %arg1, %c0_i32 : i32, i32, i32
  }
  func.func @transform_1(%arg0: i32, %arg1: i32) -> (i32, i32) {
    %c0_i32 = arith.constant 0 : i32
    %c0_i32_0 = arith.constant 0 : i32
    %c0_i32_1 = arith.constant 0 : i32
    return %c0_i32, %c0_i32_0 : i32, i32
  }
  func.func @transform_2(%arg0: i32, %arg1: i32) -> (i32, i32) {
    %c0_i32 = arith.constant 0 : i32
    %c0_i32_0 = arith.constant 0 : i32
    %c0_i32_1 = arith.constant 0 : i32
    return %c0_i32, %c0_i32_0 : i32, i32
  }
  func.func @transform_3(%arg0: i32, %arg1: i32) -> (i32, i32) {
    %c0_i32 = arith.constant 0 : i32
    %c0_i32_0 = arith.constant 0 : i32
    %c0_i32_1 = arith.constant 0 : i32
    return %c0_i32, %c0_i32_0 : i32, i32
  }
  func.func @transform_4(%arg0: i32, %arg1: i32) -> (i32, i32) {
    %c0_i32 = arith.constant 0 : i32
    %c0_i32_0 = arith.constant 0 : i32
    %c0_i32_1 = arith.constant 0 : i32
    return %c0_i32, %c0_i32_0 : i32, i32
  }
  func.func @transform_5(%arg0: i32, %arg1: i32) -> (i32, i32) {
    %c0_i32 = arith.constant 0 : i32
    %c0_i32_0 = arith.constant 0 : i32
    %c0_i32_1 = arith.constant 0 : i32
    return %c0_i32, %c0_i32_0 : i32, i32
  }
  func.func @transform_6(%arg0: i32, %arg1: i32) -> (i32, i32) {
    %c0_i32 = arith.constant 0 : i32
    %c0_i32_0 = arith.constant 0 : i32
    %c0_i32_1 = arith.constant 0 : i32
    return %c0_i32, %c0_i32_0 : i32, i32
  }
  func.func @transform_7(%arg0: i32, %arg1: i32) -> (i32, i32) {
    %c0_i32 = arith.constant 0 : i32
    %c0_i32_0 = arith.constant 0 : i32
    %c0_i32_1 = arith.constant 0 : i32
    return %c0_i32, %c0_i32_0 : i32, i32
  }
  func.func @transform_8(%arg0: i32, %arg1: i32) -> (i32, i32) {
    %c0_i32 = arith.constant 0 : i32
    %c0_i32_0 = arith.constant 0 : i32
    %c0_i32_1 = arith.constant 0 : i32
    return %c0_i32, %c0_i32_0 : i32, i32
  }
  func.func @transform_9(%arg0: i32, %arg1: i32) -> (i32, i32) {
    %c0_i32 = arith.constant 0 : i32
    %c0_i32_0 = arith.constant 0 : i32
    %c0_i32_1 = arith.constant 0 : i32
    return %c0_i32, %c0_i32_0 : i32, i32
  }
  func.func @transform_10(%arg0: i32, %arg1: i32) -> (i32, i32) {
    %c0_i32 = arith.constant 0 : i32
    %c0_i32_0 = arith.constant 0 : i32
    %c0_i32_1 = arith.constant 0 : i32
    return %c0_i32, %c0_i32_0 : i32, i32
  }
  func.func @transform_11(%arg0: i32, %arg1: i32) -> (i32, i32) {
    %c0_i32 = arith.constant 0 : i32
    %c0_i32_0 = arith.constant 0 : i32
    %c0_i32_1 = arith.constant 0 : i32
    return %c0_i32, %c0_i32_0 : i32, i32
  }
  func.func @transform_12(%arg0: i32, %arg1: i32) -> (i32, i32) {
    %c0_i32 = arith.constant 0 : i32
    %c0_i32_0 = arith.constant 0 : i32
    %c0_i32_1 = arith.constant 0 : i32
    return %c0_i32, %c0_i32_0 : i32, i32
  }
  func.func @transform_13(%arg0: i32, %arg1: i32) -> (i32, i32) {
    %c0_i32 = arith.constant 0 : i32
    %c0_i32_0 = arith.constant 0 : i32
    %c0_i32_1 = arith.constant 0 : i32
    return %c0_i32, %c0_i32_0 : i32, i32
  }
  func.func @transform_14(%arg0: i32, %arg1: i32) -> (i32, i32) {
    %c0_i32 = arith.constant 0 : i32
    %c0_i32_0 = arith.constant 0 : i32
    %c0_i32_1 = arith.constant 0 : i32
    return %c0_i32, %c0_i32_0 : i32, i32
  }
  func.func @transform_15(%arg0: i32, %arg1: i32) -> (i32, i32, i32) {
    %c0_i32 = arith.constant 0 : i32
    %c0_i32_0 = arith.constant 0 : i32
    %c0_i32_1 = arith.constant 0 : i32
    return %arg0, %c0_i32, %c0_i32_0 : i32, i32, i32
  }
  func.func @transform_16(%arg0: i32, %arg1: i32) -> (i32, i32, i32) {
    %c0_i32 = arith.constant 0 : i32
    %c0_i32_0 = arith.constant 0 : i32
    %c0_i32_1 = arith.constant 0 : i32
    return %arg0, %c0_i32, %c0_i32_0 : i32, i32, i32
  }
}

</mosaic_0001>

<llo_original>
// kernel: tpu_custom_call.1
$region0: #{tpu_custom_call.1}
  #allocation0 [shape = 'u32[]', space=smem, size = 0x4, offset = 0x4, fixed_abs, tag = 'smem constant byte address 0x4 - core index']
  #allocation1 [shape = 'u32[144,128]{1,0:T(1,128)}', space=vmem, size = 0x12000, scoped, tag = 'internal scratch']
  #allocation2 [shape = 'f32[8,512]{1,0:T(8,128)}', space=vmem, size = 0x4000, scoped, tag = 'scratch operand']
  %s0 = inlined_call_operand.vmem [shape: f32[2,1024,3], index: 0, kind: input, shape index: {}]
  %s1 = inlined_call_operand.vmem [shape: f32[3,128], index: 1, kind: input, shape index: {}]
  %s2 = inlined_call_operand.vmem [shape: f32[1,128], index: 2, kind: input, shape index: {}]
  %s3 = inlined_call_operand.vmem [shape: bf16[128,128], index: 3, kind: input, shape index: {}]
  %s4 = inlined_call_operand.hbm [shape: f32[1,128], index: 4, kind: input, shape index: {}]
  %s5 = inlined_call_operand.hbm [shape: bf16[128,256], index: 5, kind: input, shape index: {}]
  %s6 = inlined_call_operand.vmem [shape: f32[1,256], index: 6, kind: input, shape index: {}]
  %s7 = inlined_call_operand.hbm [shape: bf16[256,512], index: 7, kind: input, shape index: {}]
  %s8 = inlined_call_operand.hbm [shape: f32[1,512], index: 8, kind: input, shape index: {}]
  %s9 = inlined_call_operand.hbm [shape: bf16[512,512], index: 9, kind: input, shape index: {}]
  %s10 = inlined_call_operand.hbm [shape: f32[1,512], index: 10, kind: input, shape index: {}]
  %s11 = inlined_call_operand.hbm [shape: bf16[512,256], index: 11, kind: input, shape index: {}]
  %s12 = inlined_call_operand.hbm [shape: f32[1,256], index: 12, kind: input, shape index: {}]
  %s13 = inlined_call_operand.vmem [shape: bf16[256,2048], index: 13, kind: input, shape index: {}]
  %s14 = inlined_call_operand.hbm [shape: f32[1,2048], index: 14, kind: input, shape index: {}]
  %s15 = inlined_call_operand.hbm [shape: f32[2,1,1024], index: 15, kind: output, shape index: {0}]
  %s16 = inlined_call_operand.hbm [shape: f32[2,1,1024], index: 16, kind: output, shape index: {1}]
  %17 = xla_tuple %s15, %s16
  %s18 = sld [smem:[#allocation0]]
  $region145: #{tpu_custom_call.1} parent=0
    _
  %s20 = ssub.s32 1, %s18
  %s21 = scalar_select 0, %s20, %s18
  $region1: #{tpu_custom_call.1} parent=0
    #allocation3 [shape = 'u8[512]{0}', space=vmem, size = 0x400, scoped, tag = 'input window, operand 4, single buffered']
    #allocation4 [shape = 's32[2]{0}', space=sflag, size = 0x8, scoped, tag = 'scoped memory for tpu_custom_call.1']
    #allocation5 [shape = 's32[2]{0}', space=sflag, size = 0x8, scoped, tag = 'scoped memory for tpu_custom_call.1']
    #allocation6 [shape = 'u8[65536]{0}', space=vmem, size = 0x10000, scoped, tag = 'input window, operand 5, single buffered']
    #allocation7 [shape = 's32[1]{0}', space=sflag, size = 0x4, scoped, tag = 'scoped memory for tpu_custom_call.1']
    #allocation8 [shape = 'u8[262144]{0}', space=vmem, size = 0x40000, scoped, tag = 'input window, operand 7, single buffered']
    #allocation9 [shape = 'u8[2048]{0}', space=vmem, size = 0x800, scoped, tag = 'input window, operand 8, single buffered']
    #allocation10 [shape = 's32[1]{0}', space=sflag, size = 0x4, scoped, tag = 'scoped memory for tpu_custom_call.1']
    #allocation11 [shape = 'u8[524288]{0}', space=vmem, size = 0x80000, scoped, tag = 'input window, operand 9, single buffered']
    #allocation12 [shape = 'u8[2048]{0}', space=vmem, size = 0x800, scoped, tag = 'input window, operand 10, single buffered']
    #allocation13 [shape = 's32[1]{0}', space=sflag, size = 0x4, scoped, tag = 'scoped memory for tpu_custom_call.1']
    #allocation14 [shape = 'u8[262144]{0}', space=vmem, size = 0x40000, scoped, tag = 'input window, operand 11, single buffered']
    #allocation15 [shape = 'u8[1024]{0}', space=vmem, size = 0x400, scoped, tag = 'input window, operand 12, single buffered']
    #allocation16 [shape = 's32[1]{0}', space=sflag, size = 0x4, scoped, tag = 'scoped memory for tpu_custom_call.1']
    #allocation17 [shape = 'u8[8192]{0}', space=vmem, size = 0x2000, scoped, tag = 'input window, operand 14, single buffered']
    #allocation18 [shape = 'u8[8192]{0}', space=vmem, size = 0x2000, scoped, tag = 'output window, operand 0']
    #allocation19 [shape = 'u8[8192]{0}', space=vmem, size = 0x2000, scoped, tag = 'output window, operand 1']
    #allocation20 [shape = 's32[2]{0}', space=sflag, size = 0x8, scoped, tag = 'scoped memory for tpu_custom_call.1']
    %22 = vsyncpa [#allocation4], 0
    %23 = vsyncpa [#allocation7], 0
    %24 = vsyncpa [#allocation10], 0
    %25 = vsyncpa [#allocation13], 0
    %26 = vsyncpa [#allocation16], 0
    %27 = vsyncpa [#allocation5], 0
    %s28 = scalar_lea.sflag [#allocation5], 1
    %29 = vsyncpa %s28, 0
    %30 = vsyncpa [#allocation20], 0
    %s31 = scalar_lea.sflag [#allocation20], 1
    %32 = vsyncpa %s31, 0
    loop: start=0, step=1, limit=6
    $region2: #{tpu_custom_call.1} parent=1 // loop_pre_header
      _
    $region3: #{tpu_custom_call.1} parent=1 // loop_header
      %s34 = sphi 0, %s38
      %p35 = scmp.ge.s32.totalorder %s34, 6
      %s41 = sphi 0, %s53
      %s42 = sphi 0, %s49
      %s43 = sphi 0, %s41
      %s44 = sphi 0, %s42
      %s45 = sphi 0, %s43
      %s46 = sphi 0, %s44
      %s58 = sphi 0, %s60
      %s61 = sphi 0, %s58
      %s62 = sphi 0, %s61
      %s78 = sphi 0, %s62
      %s82 = sphi 0, %s82
      %s84 = sphi 0, %s82
      %s85 = sphi 0, %s84
      %s99 = sphi 0, %s85
      %s103 = sphi 0, %s103
      %s105 = sphi 0, %s103
      %s106 = sphi 0, %s105
      %s120 = sphi 0, %s106
      %s124 = sphi 0, %s124
      %s126 = sphi 0, %s124
      %s127 = sphi 0, %s126
      %s141 = sphi 0, %s127
      %s145 = sphi 0, %s145
      %s147 = sphi 0, %s145
      %s148 = sphi 0, %s147
      %s162 = sphi 0, %s148
      %s166 = sphi 0, %s166
      %s168 = sphi 0, %s166
      %s169 = sphi 0, %s168
      %s183 = sphi 0, %s169
      %s187 = sphi 0, %s187
      %s189 = sphi 0, %s187
      %s190 = sphi 0, %s189
      %s204 = sphi 0, %s190
      %s208 = sphi 0, %s208
      %s210 = sphi 0, %s208
      %s211 = sphi 0, %s210
      %s225 = sphi 0, %s211
      %s229 = sphi 0, %s229
      %s231 = sphi 0, %s229
      %s232 = sphi 0, %s231
      %s246 = sphi 0, %s232
      %s250 = sphi 0, %s250
      %s252 = sphi 0, %s250
      %s253 = sphi 0, %s252
      %s267 = sphi 0, %s253
      %s271 = sphi 0, %s271
      %s273 = sphi 0, %s271
      %s274 = sphi 0, %s273
      %s288 = sphi 0, %s274
      %s292 = sphi 0, %s292
      %s294 = sphi 0, %s292
      %s295 = sphi 0, %s294
      %s309 = sphi 0, %s295
      %s313 = sphi 0, %s313
      %s315 = sphi 0, %s313
      %s316 = sphi 0, %s315
      %s330 = sphi 0, %s316
      %s334 = sphi 0, %s334
      %s336 = sphi 0, %s334
      %s337 = sphi 0, %s336
      %s351 = sphi 0, %s337
      %s355 = sphi 0, %s355
      %s357 = sphi 0, %s355
      %s358 = sphi 0, %s357
      %s372 = sphi 0, %s358
      %s378 = sphi 0, %s380
      %s381 = sphi 0, %s378
      %s382 = sphi 0, %s381
      %s398 = sphi 0, %s382
      %s404 = sphi 0, %s406
      %s407 = sphi 0, %s404
      %s408 = sphi 0, %s407
      %s424 = sphi 0, %s408
    $region4: #{tpu_custom_call.1} parent=1 // loop_header_branch
      %37 = sbr.rel (%p35) target = $region8
    $region5: #{tpu_custom_call.1} parent=1 // loop_body
      %s39 = ssub.s32 %s34, 1
      %s40 = ssub.s32 %s34, 2
      %s47 = sadd.s32 1, %s42
      %p48 = scmp.ge.s32.totalorder %s47, 2
      %s49 = scalar_select %p48, 0, %s47
      %s50 = sadd.s32 1, %s41
      %s51 = scalar_select %p48, %s50, %s41
      %p52 = scmp.ge.s32.totalorder %s51, 2
      %s53 = scalar_select %p52, 0, %s51
      %s54 = ssub.s32 %s41, %s53
      %s55 = ssub.s32 %s42, %s49
      %s56 = sor.u32 %s54, %s55
      %p57 = scmp.eq.s32.totalorder %s56, 0
      %s59 = sadd.s32 %s58, 1
      %s60 = scalar_select %p57, %s58, %s59
      %p63 = pneg %p57
      %p64 = scmp.eq.s32.totalorder %s34, 3
      %p65 = por %p63, %p64
      %p66 = scmp.ne.s32.totalorder %s58, %s61
      %p67 = scmp.eq.s32.totalorder %s34, 0
      %p68 = por %p66, %p67
      %p69 = scmp.ne.s32.totalorder %s58, %s61
      %p70 = scmp.eq.s32.totalorder %s39, 3
      %p71 = por %p69, %p70
      %p72 = scmp.ne.s32.totalorder %s61, %s62
      %p73 = scmp.eq.s32.totalorder %s39, 0
      %p74 = por %p72, %p73
      %p75 = scmp.ne.s32.totalorder %s61, %s62
      %p76 = scmp.eq.s32.totalorder %s40, 3
      %p77 = por %p75, %p76
      %p79 = scmp.ne.s32.totalorder %s62, %s78
      %p80 = scmp.eq.s32.totalorder %s40, 0
      %p81 = por %p79, %p80
      %s83 = sadd.s32 %s82, 1
      %p86 = scmp.eq.s32.totalorder %s34, 3
      %p87 = scmp.ne.s32.totalorder %s82, %s84
      %p88 = scmp.eq.s32.totalorder %s34, 0
      %p89 = por %p87, %p88
      %p90 = scmp.ne.s32.totalorder %s82, %s84
      %p91 = scmp.eq.s32.totalorder %s39, 3
      %p92 = por %p90, %p91
      %p93 = scmp.ne.s32.totalorder %s84, %s85
      %p94 = scmp.eq.s32.totalorder %s39, 0
      %p95 = por %p93, %p94
      %p96 = scmp.ne.s32.totalorder %s84, %s85
      %p97 = scmp.eq.s32.totalorder %s40, 3
      %p98 = por %p96, %p97
      %p100 = scmp.ne.s32.totalorder %s85, %s99
      %p101 = scmp.eq.s32.totalorder %s40, 0
      %p102 = por %p100, %p101
      %s104 = sadd.s32 %s103, 1
      %p107 = scmp.eq.s32.totalorder %s34, 3
      %p108 = scmp.ne.s32.totalorder %s103, %s105
      %p109 = scmp.eq.s32.totalorder %s34, 0
      %p110 = por %p108, %p109
      %p111 = scmp.ne.s32.totalorder %s103, %s105
      %p112 = scmp.eq.s32.totalorder %s39, 3
      %p113 = por %p111, %p112
      %p114 = scmp.ne.s32.totalorder %s105, %s106
      %p115 = scmp.eq.s32.totalorder %s39, 0
      %p116 = por %p114, %p115
      %p117 = scmp.ne.s32.totalorder %s105, %s106
      %p118 = scmp.eq.s32.totalorder %s40, 3
      %p119 = por %p117, %p118
      %p121 = scmp.ne.s32.totalorder %s106, %s120
      %p122 = scmp.eq.s32.totalorder %s40, 0
      %p123 = por %p121, %p122
      %s125 = sadd.s32 %s124, 1
      %p128 = scmp.eq.s32.totalorder %s34, 3
      %p129 = scmp.ne.s32.totalorder %s124, %s126
      %p130 = scmp.eq.s32.totalorder %s34, 0
      %p131 = por %p129, %p130
      %p132 = scmp.ne.s32.totalorder %s124, %s126
      %p133 = scmp.eq.s32.totalorder %s39, 3
      %p134 = por %p132, %p133
      %p135 = scmp.ne.s32.totalorder %s126, %s127
      %p136 = scmp.eq.s32.totalorder %s39, 0
      %p137 = por %p135, %p136
      %p138 = scmp.ne.s32.totalorder %s126, %s127
      %p139 = scmp.eq.s32.totalorder %s40, 3
      %p140 = por %p138, %p139
      %p142 = scmp.ne.s32.totalorder %s127, %s141
      %p143 = scmp.eq.s32.totalorder %s40, 0
      %p144 = por %p142, %p143
      %s146 = sadd.s32 %s145, 1
      %p149 = scmp.eq.s32.totalorder %s34, 3
      %p150 = scmp.ne.s32.totalorder %s145, %s147
      %p151 = scmp.eq.s32.totalorder %s34, 0
      %p152 = por %p150, %p151
      %p153 = scmp.ne.s32.totalorder %s145, %s147
      %p154 = scmp.eq.s32.totalorder %s39, 3
      %p155 = por %p153, %p154
      %p156 = scmp.ne.s32.totalorder %s147, %s148
      %p157 = scmp.eq.s32.totalorder %s39, 0
      %p158 = por %p156, %p157
      %p159 = scmp.ne.s32.totalorder %s147, %s148
      %p160 = scmp.eq.s32.totalorder %s40, 3
      %p161 = por %p159, %p160
      %p163 = scmp.ne.s32.totalorder %s148, %s162
      %p164 = scmp.eq.s32.totalorder %s40, 0
      %p165 = por %p163, %p164
      %s167 = sadd.s32 %s166, 1
      %p170 = scmp.eq.s32.totalorder %s34, 3
      %p171 = scmp.ne.s32.totalorder %s166, %s168
      %p172 = scmp.eq.s32.totalorder %s34, 0
      %p173 = por %p171, %p172
      %p174 = scmp.ne.s32.totalorder %s166, %s168
      %p175 = scmp.eq.s32.totalorder %s39, 3
      %p176 = por %p174, %p175
      %p177 = scmp.ne.s32.totalorder %s168, %s169
      %p178 = scmp.eq.s32.totalorder %s39, 0
      %p179 = por %p177, %p178
      %p180 = scmp.ne.s32.totalorder %s168, %s169
      %p181 = scmp.eq.s32.totalorder %s40, 3
      %p182 = por %p180, %p181
      %p184 = scmp.ne.s32.totalorder %s169, %s183
      %p185 = scmp.eq.s32.totalorder %s40, 0
      %p186 = por %p184, %p185
      %s188 = sadd.s32 %s187, 1
      %p191 = scmp.eq.s32.totalorder %s34, 3
      %p192 = scmp.ne.s32.totalorder %s187, %s189
      %p193 = scmp.eq.s32.totalorder %s34, 0
      %p194 = por %p192, %p193
      %p195 = scmp.ne.s32.totalorder %s187, %s189
      %p196 = scmp.eq.s32.totalorder %s39, 3
      %p197 = por %p195, %p196
      %p198 = scmp.ne.s32.totalorder %s189, %s190
      %p199 = scmp.eq.s32.totalorder %s39, 0
      %p200 = por %p198, %p199
      %p201 = scmp.ne.s32.totalorder %s189, %s190
      %p202 = scmp.eq.s32.totalorder %s40, 3
      %p203 = por %p201, %p202
      %p205 = scmp.ne.s32.totalorder %s190, %s204
      %p206 = scmp.eq.s32.totalorder %s40, 0
      %p207 = por %p205, %p206
      %s209 = sadd.s32 %s208, 1
      %p212 = scmp.eq.s32.totalorder %s34, 3
      %p213 = scmp.ne.s32.totalorder %s208, %s210
      %p214 = scmp.eq.s32.totalorder %s34, 0
      %p215 = por %p213, %p214
      %p216 = scmp.ne.s32.totalorder %s208, %s210
      %p217 = scmp.eq.s32.totalorder %s39, 3
      %p218 = por %p216, %p217
      %p219 = scmp.ne.s32.totalorder %s210, %s211
      %p220 = scmp.eq.s32.totalorder %s39, 0
      %p221 = por %p219, %p220
      %p222 = scmp.ne.s32.totalorder %s210, %s211
      %p223 = scmp.eq.s32.totalorder %s40, 3
      %p224 = por %p222, %p223
      %p226 = scmp.ne.s32.totalorder %s211, %s225
      %p227 = scmp.eq.s32.totalorder %s40, 0
      %p228 = por %p226, %p227
      %s230 = sadd.s32 %s229, 1
      %p233 = scmp.eq.s32.totalorder %s34, 3
      %p234 = scmp.ne.s32.totalorder %s229, %s231
      %p235 = scmp.eq.s32.totalorder %s34, 0
      %p236 = por %p234, %p235
      %p237 = scmp.ne.s32.totalorder %s229, %s231
      %p238 = scmp.eq.s32.totalorder %s39, 3
      %p239 = por %p237, %p238
      %p240 = scmp.ne.s32.totalorder %s231, %s232
      %p241 = scmp.eq.s32.totalorder %s39, 0
      %p242 = por %p240, %p241
      %p243 = scmp.ne.s32.totalorder %s231, %s232
      %p244 = scmp.eq.s32.totalorder %s40, 3
      %p245 = por %p243, %p244
      %p247 = scmp.ne.s32.totalorder %s232, %s246
      %p248 = scmp.eq.s32.totalorder %s40, 0
      %p249 = por %p247, %p248
      %s251 = sadd.s32 %s250, 1
      %p254 = scmp.eq.s32.totalorder %s34, 3
      %p255 = scmp.ne.s32.totalorder %s250, %s252
      %p256 = scmp.eq.s32.totalorder %s34, 0
      %p257 = por %p255, %p256
      %p258 = scmp.ne.s32.totalorder %s250, %s252
      %p259 = scmp.eq.s32.totalorder %s39, 3
      %p260 = por %p258, %p259
      %p261 = scmp.ne.s32.totalorder %s252, %s253
      %p262 = scmp.eq.s32.totalorder %s39, 0
      %p263 = por %p261, %p262
      %p264 = scmp.ne.s32.totalorder %s252, %s253
      %p265 = scmp.eq.s32.totalorder %s40, 3
      %p266 = por %p264, %p265
      %p268 = scmp.ne.s32.totalorder %s253, %s267
      %p269 = scmp.eq.s32.totalorder %s40, 0
      %p270 = por %p268, %p269
      %s272 = sadd.s32 %s271, 1
      %p275 = scmp.eq.s32.totalorder %s34, 3
      %p276 = scmp.ne.s32.totalorder %s271, %s273
      %p277 = scmp.eq.s32.totalorder %s34, 0
      %p278 = por %p276, %p277
      %p279 = scmp.ne.s32.totalorder %s271, %s273
      %p280 = scmp.eq.s32.totalorder %s39, 3
      %p281 = por %p279, %p280
      %p282 = scmp.ne.s32.totalorder %s273, %s274
      %p283 = scmp.eq.s32.totalorder %s39, 0
      %p284 = por %p282, %p283
      %p285 = scmp.ne.s32.totalorder %s273, %s274
      %p286 = scmp.eq.s32.totalorder %s40, 3
      %p287 = por %p285, %p286
      %p289 = scmp.ne.s32.totalorder %s274, %s288
      %p290 = scmp.eq.s32.totalorder %s40, 0
      %p291 = por %p289, %p290
      %s293 = sadd.s32 %s292, 1
      %p296 = scmp.eq.s32.totalorder %s34, 3
      %p297 = scmp.ne.s32.totalorder %s292, %s294
      %p298 = scmp.eq.s32.totalorder %s34, 0
      %p299 = por %p297, %p298
      %p300 = scmp.ne.s32.totalorder %s292, %s294
      %p301 = scmp.eq.s32.totalorder %s39, 3
      %p302 = por %p300, %p301
      %p303 = scmp.ne.s32.totalorder %s294, %s295
      %p304 = scmp.eq.s32.totalorder %s39, 0
      %p305 = por %p303, %p304
      %p306 = scmp.ne.s32.totalorder %s294, %s295
      %p307 = scmp.eq.s32.totalorder %s40, 3
      %p308 = por %p306, %p307
      %p310 = scmp.ne.s32.totalorder %s295, %s309
      %p311 = scmp.eq.s32.totalorder %s40, 0
      %p312 = por %p310, %p311
      %s314 = sadd.s32 %s313, 1
      %p317 = scmp.eq.s32.totalorder %s34, 3
      %p318 = scmp.ne.s32.totalorder %s313, %s315
      %p319 = scmp.eq.s32.totalorder %s34, 0
      %p320 = por %p318, %p319
      %p321 = scmp.ne.s32.totalorder %s313, %s315
      %p322 = scmp.eq.s32.totalorder %s39, 3
      %p323 = por %p321, %p322
      %p324 = scmp.ne.s32.totalorder %s315, %s316
      %p325 = scmp.eq.s32.totalorder %s39, 0
      %p326 = por %p324, %p325
      %p327 = scmp.ne.s32.totalorder %s315, %s316
      %p328 = scmp.eq.s32.totalorder %s40, 3
      %p329 = por %p327, %p328
      %p331 = scmp.ne.s32.totalorder %s316, %s330
      %p332 = scmp.eq.s32.totalorder %s40, 0
      %p333 = por %p331, %p332
      %s335 = sadd.s32 %s334, 1
      %p338 = scmp.eq.s32.totalorder %s34, 3
      %p339 = scmp.ne.s32.totalorder %s334, %s336
      %p340 = scmp.eq.s32.totalorder %s34, 0
      %p341 = por %p339, %p340
      %p342 = scmp.ne.s32.totalorder %s334, %s336
      %p343 = scmp.eq.s32.totalorder %s39, 3
      %p344 = por %p342, %p343
      %p345 = scmp.ne.s32.totalorder %s336, %s337
      %p346 = scmp.eq.s32.totalorder %s39, 0
      %p347 = por %p345, %p346
      %p348 = scmp.ne.s32.totalorder %s336, %s337
      %p349 = scmp.eq.s32.totalorder %s40, 3
      %p350 = por %p348, %p349
      %p352 = scmp.ne.s32.totalorder %s337, %s351
      %p353 = scmp.eq.s32.totalorder %s40, 0
      %p354 = por %p352, %p353
      %s356 = sadd.s32 %s355, 1
      %p359 = scmp.eq.s32.totalorder %s34, 3
      %p360 = scmp.ne.s32.totalorder %s355, %s357
      %p361 = scmp.eq.s32.totalorder %s34, 0
      %p362 = por %p360, %p361
      %p363 = scmp.ne.s32.totalorder %s355, %s357
      %p364 = scmp.eq.s32.totalorder %s39, 3
      %p365 = por %p363, %p364
      %p366 = scmp.ne.s32.totalorder %s357, %s358
      %p367 = scmp.eq.s32.totalorder %s39, 0
      %p368 = por %p366, %p367
      %p369 = scmp.ne.s32.totalorder %s357, %s358
      %p370 = scmp.eq.s32.totalorder %s40, 3
      %p371 = por %p369, %p370
      %p373 = scmp.ne.s32.totalorder %s358, %s372
      %p374 = scmp.eq.s32.totalorder %s40, 0
      %p375 = por %p373, %p374
      %s376 = ssub.s32 %s41, %s53
      %p377 = scmp.eq.s32.totalorder %s376, 0
      %s379 = sadd.s32 %s378, 1
      %s380 = scalar_select %p377, %s378, %s379
      %p383 = pneg %p377
      %p384 = scmp.eq.s32.totalorder %s34, 3
      %p385 = por %p383, %p384
      %p386 = scmp.ne.s32.totalorder %s378, %s381
      %p387 = scmp.eq.s32.totalorder %s34, 0
      %p388 = por %p386, %p387
      %p389 = scmp.ne.s32.totalorder %s378, %s381
      %p390 = scmp.eq.s32.totalorder %s39, 3
      %p391 = por %p389, %p390
      %p392 = scmp.ne.s32.totalorder %s381, %s382
      %p393 = scmp.eq.s32.totalorder %s39, 0
      %p394 = por %p392, %p393
      %p395 = scmp.ne.s32.totalorder %s381, %s382
      %p396 = scmp.eq.s32.totalorder %s40, 3
      %p397 = por %p395, %p396
      %p399 = scmp.ne.s32.totalorder %s382, %s398
      %p400 = scmp.eq.s32.totalorder %s40, 0
      %p401 = por %p399, %p400
      %s402 = ssub.s32 %s41, %s53
      %p403 = scmp.eq.s32.totalorder %s402, 0
      %s405 = sadd.s32 %s404, 1
      %s406 = scalar_select %p403, %s404, %s405
      %p409 = pneg %p403
      %p410 = scmp.eq.s32.totalorder %s34, 3
      %p411 = por %p409, %p410
      %p412 = scmp.ne.s32.totalorder %s404, %s407
      %p413 = scmp.eq.s32.totalorder %s34, 0
      %p414 = por %p412, %p413
      %p415 = scmp.ne.s32.totalorder %s404, %s407
      %p416 = scmp.eq.s32.totalorder %s39, 3
      %p417 = por %p415, %p416
      %p418 = scmp.ne.s32.totalorder %s407, %s408
      %p419 = scmp.eq.s32.totalorder %s39, 0
      %p420 = por %p418, %p419
      %p421 = scmp.ne.s32.totalorder %s407, %s408
      %p422 = scmp.eq.s32.totalorder %s40, 3
      %p423 = por %p421, %p422
      %p425 = scmp.ne.s32.totalorder %s408, %s424
      %p426 = scmp.eq.s32.totalorder %s40, 0
      %p427 = por %p425, %p426
      %p428 = scmp.le.s32.totalorder 1, %s34
      %p429 = scmp.lt.s32.totalorder %s34, 5
      %p430 = pnand %p428, %p429
      %p431 = pneg %p430
      // Predicated region
      $region9: #{tpu_custom_call.1} parent=5 // pred_check
        _
      $region10: #{tpu_custom_call.1} parent=5 // pred_check_branch
        %433 = sbr.rel (%p430) target = $region12
      $region11: #{tpu_custom_call.1} parent=5 // pred_region
        %s434 = ssub.s32 %s34, 1
        // Predicated region
        $region13: #{tpu_custom_call.1} parent=11 // pred_check
          %p435 = pneg %p95
        $region14: #{tpu_custom_call.1} parent=11 // pred_check_branch
          %437 = sbr.rel (%p435) target = $region16
        $region15: #{tpu_custom_call.1} parent=11 // pred_region
          _
        $region16: #{tpu_custom_call.1} parent=11 // pred_fallthru
          _
        // Predicated region
        $region17: #{tpu_custom_call.1} parent=11 // pred_check
          %p438 = pneg %p116
        $region18: #{tpu_custom_call.1} parent=11 // pred_check_branch
          %440 = sbr.rel (%p438) target = $region20
        $region19: #{tpu_custom_call.1} parent=11 // pred_region
          _
        $region20: #{tpu_custom_call.1} parent=11 // pred_fallthru
          _
        // Predicated region
        $region21: #{tpu_custom_call.1} parent=11 // pred_check
          %p441 = pneg %p137
        $region22: #{tpu_custom_call.1} parent=11 // pred_check_branch
          %443 = sbr.rel (%p441) target = $region24
        $region23: #{tpu_custom_call.1} parent=11 // pred_region
          _
        $region24: #{tpu_custom_call.1} parent=11 // pred_fallthru
          _
        // Predicated region
        $region25: #{tpu_custom_call.1} parent=11 // pred_check
          %p444 = pneg %p158
        $region26: #{tpu_custom_call.1} parent=11 // pred_check_branch
          %446 = sbr.rel (%p444) target = $region28
        $region27: #{tpu_custom_call.1} parent=11 // pred_region
          %s448 = ssub.s32 16, 16
          %449 = vsyncadd [#allocation4], %s448
          %s451 = sshll.u32 [#allocation3], 4
          %s452 = int_to_ptr.vmem [resolvable:$true] %s451
          %454 = dma.hbm_to_vmem [thread:$0]  %s4, 16, %s452, [#allocation4]
        $region28: #{tpu_custom_call.1} parent=11 // pred_fallthru
          _
        // Predicated region
        $region29: #{tpu_custom_call.1} parent=11 // pred_check
          %p455 = pneg %p179
        $region30: #{tpu_custom_call.1} parent=11 // pred_check_branch
          %457 = sbr.rel (%p455) target = $region32
        $region31: #{tpu_custom_call.1} parent=11 // pred_region
          %s459 = ssub.s32 2048, 2048
          %460 = vsyncadd [#allocation7], %s459
          %s461 = sshll.u32 [#allocation6], 4
          %s462 = int_to_ptr.vmem [resolvable:$true] %s461
          %467 = dma.hbm_to_vmem [thread:$0]  %s5, 2048, %s462, [#allocation7], 128, 128, 8
        $region32: #{tpu_custom_call.1} parent=11 // pred_fallthru
          _
        // Predicated region
        $region33: #{tpu_custom_call.1} parent=11 // pred_check
          %p468 = pneg %p200
        $region34: #{tpu_custom_call.1} parent=11 // pred_check_branch
          %470 = sbr.rel (%p468) target = $region36
        $region35: #{tpu_custom_call.1} parent=11 // pred_region
          _
        $region36: #{tpu_custom_call.1} parent=11 // pred_fallthru
          _
        // Predicated region
        $region37: #{tpu_custom_call.1} parent=11 // pred_check
          %p471 = pneg %p221
        $region38: #{tpu_custom_call.1} parent=11 // pred_check_branch
          %473 = sbr.rel (%p471) target = $region40
        $region39: #{tpu_custom_call.1} parent=11 // pred_region
          %s475 = ssub.s32 8192, 8192
          %476 = vsyncadd [#allocation7], %s475
          %s477 = sshll.u32 [#allocation8], 4
          %s478 = int_to_ptr.vmem [resolvable:$true] %s477
          %483 = dma.hbm_to_vmem [thread:$0]  %s7, 8192, %s478, [#allocation7], 256, 256, 16
        $region40: #{tpu_custom_call.1} parent=11 // pred_fallthru
          _
        // Predicated region
        $region41: #{tpu_custom_call.1} parent=11 // pred_check
          %p484 = pneg %p242
        $region42: #{tpu_custom_call.1} parent=11 // pred_check_branch
          %486 = sbr.rel (%p484) target = $region44
        $region43: #{tpu_custom_call.1} parent=11 // pred_region
          %s488 = ssub.s32 64, 64
          %489 = vsyncadd [#allocation10], %s488
          %s491 = sshll.u32 [#allocation9], 4
          %s492 = int_to_ptr.vmem [resolvable:$true] %s491
          %494 = dma.hbm_to_vmem [thread:$0]  %s8, 64, %s492, [#allocation10]
        $region44: #{tpu_custom_call.1} parent=11 // pred_fallthru
          _
        // Predicated region
        $region45: #{tpu_custom_call.1} parent=11 // pred_check
          %p495 = pneg %p263
        $region46: #{tpu_custom_call.1} parent=11 // pred_check_branch
          %497 = sbr.rel (%p495) target = $region48
        $region47: #{tpu_custom_call.1} parent=11 // pred_region
          %s499 = ssub.s32 16384, 16384
          %500 = vsyncadd [#allocation10], %s499
          %s501 = sshll.u32 [#allocation11], 4
          %s502 = int_to_ptr.vmem [resolvable:$true] %s501
          %507 = dma.hbm_to_vmem [thread:$0]  %s9, 16384, %s502, [#allocation10], 256, 256, 16
        $region48: #{tpu_custom_call.1} parent=11 // pred_fallthru
          _
        // Predicated region
        $region49: #{tpu_custom_call.1} parent=11 // pred_check
          %p508 = pneg %p284
        $region50: #{tpu_custom_call.1} parent=11 // pred_check_branch
          %510 = sbr.rel (%p508) target = $region52
        $region51: #{tpu_custom_call.1} parent=11 // pred_region
          %s512 = ssub.s32 64, 64
          %513 = vsyncadd [#allocation13], %s512
          %s515 = sshll.u32 [#allocation12], 4
          %s516 = int_to_ptr.vmem [resolvable:$true] %s515
          %518 = dma.hbm_to_vmem [thread:$0]  %s10, 64, %s516, [#allocation13]
        $region52: #{tpu_custom_call.1} parent=11 // pred_fallthru
          _
        // Predicated region
        $region53: #{tpu_custom_call.1} parent=11 // pred_check
          %p519 = pneg %p305
        $region54: #{tpu_custom_call.1} parent=11 // pred_check_branch
          %521 = sbr.rel (%p519) target = $region56
        $region55: #{tpu_custom_call.1} parent=11 // pred_region
          %s523 = ssub.s32 8192, 8192
          %524 = vsyncadd [#allocation13], %s523
          %s525 = sshll.u32 [#allocation14], 4
          %s526 = int_to_ptr.vmem [resolvable:$true] %s525
          %531 = dma.hbm_to_vmem [thread:$0]  %s11, 8192, %s526, [#allocation13], 128, 128, 8
        $region56: #{tpu_custom_call.1} parent=11 // pred_fallthru
          _
        // Predicated region
        $region57: #{tpu_custom_call.1} parent=11 // pred_check
          %p532 = pneg %p326
        $region58: #{tpu_custom_call.1} parent=11 // pred_check_branch
          %534 = sbr.rel (%p532) target = $region60
        $region59: #{tpu_custom_call.1} parent=11 // pred_region
          %s536 = ssub.s32 32, 32
          %537 = vsyncadd [#allocation16], %s536
          %s539 = sshll.u32 [#allocation15], 4
          %s540 = int_to_ptr.vmem [resolvable:$true] %s539
          %542 = dma.hbm_to_vmem [thread:$0]  %s12, 32, %s540, [#allocation16]
        $region60: #{tpu_custom_call.1} parent=11 // pred_fallthru
          _
        // Predicated region
        $region61: #{tpu_custom_call.1} parent=11 // pred_check
          %p543 = pneg %p347
        $region62: #{tpu_custom_call.1} parent=11 // pred_check_branch
          %545 = sbr.rel (%p543) target = $region64
        $region63: #{tpu_custom_call.1} parent=11 // pred_region
          _
        $region64: #{tpu_custom_call.1} parent=11 // pred_fallthru
          _
        // Predicated region
        $region65: #{tpu_custom_call.1} parent=11 // pred_check
          %p546 = pneg %p368
        $region66: #{tpu_custom_call.1} parent=11 // pred_check_branch
          %548 = sbr.rel (%p546) target = $region68
        $region67: #{tpu_custom_call.1} parent=11 // pred_region
          %s550 = ssub.s32 256, 256
          %551 = vsyncadd [#allocation16], %s550
          %s553 = sshll.u32 [#allocation17], 4
          %s554 = int_to_ptr.vmem [resolvable:$true] %s553
          %556 = dma.hbm_to_vmem [thread:$0]  %s14, 256, %s554, [#allocation16]
        $region68: #{tpu_custom_call.1} parent=11 // pred_fallthru
          _
      $region12: #{tpu_custom_call.1} parent=5 // pred_fallthru
        _
      %p557 = scmp.lt.s32.totalorder %s34, 4
      // Predicated region
      $region69: #{tpu_custom_call.1} parent=5 // pred_check
        %p558 = pneg %p557
      $region70: #{tpu_custom_call.1} parent=5 // pred_check_branch
        %560 = sbr.rel (%p558) target = $region72
      $region71: #{tpu_custom_call.1} parent=5 // pred_region
        // Predicated region
        $region73: #{tpu_custom_call.1} parent=71 // pred_check
          %p561 = pneg %p68
        $region74: #{tpu_custom_call.1} parent=71 // pred_check_branch
          %563 = sbr.rel (%p561) target = $region76
        $region75: #{tpu_custom_call.1} parent=71 // pred_region
          %s564 = smul.u32 64, %s42
          %p565 = scmp.lt.s32.totalorder %s41, 1
          %s566 = scalar_select %p565, %s41, 1
          %p567 = scmp.lt.s32.totalorder %s564, 127
          %s568 = scalar_select %p567, %s564, 127
          %s569 = smul.addr %s566, 128
          %s570 = sadd.s32 %s568, %s569
          %s571 = smul.addr %s570, 8
          %s572 = scalar_lea.vmem %s0, %s571
          %s573 = smul.u32 64, %s42
        $region76: #{tpu_custom_call.1} parent=71 // pred_fallthru
          _
      $region72: #{tpu_custom_call.1} parent=5 // pred_fallthru
        _
      %p574 = scmp.le.s32.totalorder 1, %s34
      %p575 = scmp.lt.s32.totalorder %s34, 5
      %p576 = pnand %p574, %p575
      %p577 = pneg %p576
      // Predicated region
      $region77: #{tpu_custom_call.1} parent=5 // pred_check
        _
      $region78: #{tpu_custom_call.1} parent=5 // pred_check_branch
        %579 = sbr.rel (%p576) target = $region80
      $region79: #{tpu_custom_call.1} parent=5 // pred_region
        %s580 = ssub.s32 %s34, 1
        // Predicated region
        $region81: #{tpu_custom_call.1} parent=79 // pred_check
          %p581 = pneg %p158
        $region82: #{tpu_custom_call.1} parent=79 // pred_check_branch
          %583 = sbr.rel (%p581) target = $region84
        $region83: #{tpu_custom_call.1} parent=79 // pred_region
          %584 = dma.done [#allocation4], 16
        $region84: #{tpu_custom_call.1} parent=79 // pred_fallthru
          _
        // Predicated region
        $region85: #{tpu_custom_call.1} parent=79 // pred_check
          %p585 = pneg %p179
        $region86: #{tpu_custom_call.1} parent=79 // pred_check_branch
          %587 = sbr.rel (%p585) target = $region88
        $region87: #{tpu_custom_call.1} parent=79 // pred_region
          %588 = dma.done [#allocation7], 2048
        $region88: #{tpu_custom_call.1} parent=79 // pred_fallthru
          _
        // Predicated region
        $region89: #{tpu_custom_call.1} parent=79 // pred_check
          %p589 = pneg %p221
        $region90: #{tpu_custom_call.1} parent=79 // pred_check_branch
          %591 = sbr.rel (%p589) target = $region92
        $region91: #{tpu_custom_call.1} parent=79 // pred_region
          %592 = dma.done [#allocation7], 8192
        $region92: #{tpu_custom_call.1} parent=79 // pred_fallthru
          _
        // Predicated region
        $region93: #{tpu_custom_call.1} parent=79 // pred_check
          %p593 = pneg %p242
        $region94: #{tpu_custom_call.1} parent=79 // pred_check_branch
          %595 = sbr.rel (%p593) target = $region96
        $region95: #{tpu_custom_call.1} parent=79 // pred_region
          %596 = dma.done [#allocation10], 64
        $region96: #{tpu_custom_call.1} parent=79 // pred_fallthru
          _
        // Predicated region
        $region97: #{tpu_custom_call.1} parent=79 // pred_check
          %p597 = pneg %p263
        $region98: #{tpu_custom_call.1} parent=79 // pred_check_branch
          %599 = sbr.rel (%p597) target = $region100
        $region99: #{tpu_custom_call.1} parent=79 // pred_region
          %600 = dma.done [#allocation10], 16384
        $region100: #{tpu_custom_call.1} parent=79 // pred_fallthru
          _
        // Predicated region
        $region101: #{tpu_custom_call.1} parent=79 // pred_check
          %p601 = pneg %p284
        $region102: #{tpu_custom_call.1} parent=79 // pred_check_branch
          %603 = sbr.rel (%p601) target = $region104
        $region103: #{tpu_custom_call.1} parent=79 // pred_region
          %604 = dma.done [#allocation13], 64
        $region104: #{tpu_custom_call.1} parent=79 // pred_fallthru
          _
        // Predicated region
        $region105: #{tpu_custom_call.1} parent=79 // pred_check
          %p605 = pneg %p305
        $region106: #{tpu_custom_call.1} parent=79 // pred_check_branch
          %607 = sbr.rel (%p605) target = $region108
        $region107: #{tpu_custom_call.1} parent=79 // pred_region
          %608 = dma.done [#allocation13], 8192
        $region108: #{tpu_custom_call.1} parent=79 // pred_fallthru
          _
        // Predicated region
        $region109: #{tpu_custom_call.1} parent=79 // pred_check
          %p609 = pneg %p326
        $region110: #{tpu_custom_call.1} parent=79 // pred_check_branch
          %611 = sbr.rel (%p609) target = $region112
        $region111: #{tpu_custom_call.1} parent=79 // pred_region
          %612 = dma.done [#allocation16], 32
        $region112: #{tpu_custom_call.1} parent=79 // pred_fallthru
          _
        // Predicated region
        $region113: #{tpu_custom_call.1} parent=79 // pred_check
          %p613 = pneg %p368
        $region114: #{tpu_custom_call.1} parent=79 // pred_check_branch
          %615 = sbr.rel (%p613) target = $region116
        $region115: #{tpu_custom_call.1} parent=79 // pred_region
          %616 = dma.done [#allocation16], 256
        $region116: #{tpu_custom_call.1} parent=79 // pred_fallthru
          _
        %s617 = smul.u32 64, %s44
        %p618 = scmp.lt.s32.totalorder %s43, 1
        %s619 = scalar_select %p618, %s43, 1
        %p620 = scmp.lt.s32.totalorder %s617, 127
        %s621 = scalar_select %p620, %s617, 127
        %s622 = smul.addr %s619, 128
        %s623 = sadd.s32 %s621, %s622
        %s624 = smul.addr %s623, 8
        %s625 = scalar_lea.vmem %s0, %s624
        %p626 = pneg %p74
        %p627 = pneg %p71
        %p628 = pneg %p95
        %p629 = pneg %p92
        %p630 = pneg %p116
        %p631 = pneg %p113
        %p632 = pneg %p137
        %p633 = pneg %p134
        %p634 = pneg %p158
        %p635 = pneg %p155
        %p636 = pneg %p179
        %p637 = pneg %p176
        %p638 = pneg %p200
        %p639 = pneg %p197
        %p640 = pneg %p221
        %p641 = pneg %p218
        %p642 = pneg %p242
        %p643 = pneg %p239
        %p644 = pneg %p263
        %p645 = pneg %p260
        %p646 = pneg %p284
        %p647 = pneg %p281
        %p648 = pneg %p305
        %p649 = pneg %p302
        %p650 = pneg %p326
        %p651 = pneg %p323
        %p652 = pneg %p347
        %p653 = pneg %p344
        %p654 = pneg %p368
        %p655 = pneg %p365
        %p656 = pneg %p394
        %p657 = pneg %p391
        %s658 = sand.u32 %s381, 1
        %s659 = scalar_lea.sflag [#allocation5], %s658
        %s660 = sand.u32 %s381, 1
        %s661 = smul.addr %s660, 8
        %s662 = scalar_lea.vmem [#allocation18], %s661
        %p663 = pneg %p420
        %p664 = pneg %p417
        %s665 = sand.u32 %s407, 1
        %s666 = scalar_lea.sflag [#allocation20], %s665
        %s667 = sand.u32 %s407, 1
        %s668 = smul.addr %s667, 8
        %s669 = scalar_lea.vmem [#allocation19], %s668
        %s670 = smul.u32 64, %s44
        %p671 = scmp.lt.s32.totalorder %s43, 1
        %s672 = scalar_select %p671, %s43, 1
        %p673 = scmp.lt.s32.totalorder %s670, 127
        %s674 = scalar_select %p673, %s670, 127
        %s675 = smul.addr %s672, 128
        %s676 = sadd.s32 %s674, %s675
        %s677 = smul.addr %s676, 8
        %s678 = scalar_lea.vmem %s0, %s677
        %s679 = smul.u32 64, %s44
        %p681 = scmp.eq.s32.totalorder %s44, 0
        // Predicated region
        $region117: #{tpu_custom_call.1} parent=79 // pred_check
          %p682 = pneg %p681
        $region118: #{tpu_custom_call.1} parent=79 // pred_check_branch
          %684 = sbr.rel (%p682) target = $region120
        $region119: #{tpu_custom_call.1} parent=79 // pred_region
          %685 = vst [vmem:[#allocation2] sm:$0xff] -inf
          %686 = vst [vmem:[#allocation2 + $0x8] sm:$0xff] -inf
          %687 = vst [vmem:[#allocation2 + $0x10] sm:$0xff] -inf
          %688 = vst [vmem:[#allocation2 + $0x18] sm:$0xff] -inf
        $region120: #{tpu_custom_call.1} parent=79 // pred_fallthru
          _
        %v689 = vld [vmem:[%s678] sm:$0xff]
        %v690 = vld [vmem:[%s678 + $0x8] sm:$0xff]
        %v691 = vld [vmem:[%s678 + $0x10] sm:$0xff]
        %v692 = vld [vmem:[%s678 + $0x18] sm:$0xff]
        %v693 = vld [vmem:[%s678 + $0x20] sm:$0xff]
        %v694 = vld [vmem:[%s678 + $0x28] sm:$0xff]
        %v695 = vld [vmem:[%s678 + $0x30] sm:$0xff]
        %v696 = vld [vmem:[%s678 + $0x38] sm:$0xff]
        %v697 = vld [vmem:[%s678 + $0x40] sm:$0xff]
        %v698 = vld [vmem:[%s678 + $0x48] sm:$0xff]
        %v699 = vld [vmem:[%s678 + $0x50] sm:$0xff]
        %v700 = vld [vmem:[%s678 + $0x58] sm:$0xff]
        %v701 = vld [vmem:[%s678 + $0x60] sm:$0xff]
        %v702 = vld [vmem:[%s678 + $0x68] sm:$0xff]
        %v703 = vld [vmem:[%s678 + $0x70] sm:$0xff]
        %v704 = vld [vmem:[%s678 + $0x78] sm:$0xff]
        %v705 = vld [vmem:[%s678 + $0x80] sm:$0xff]
        %v706 = vld [vmem:[%s678 + $0x88] sm:$0xff]
        %v707 = vld [vmem:[%s678 + $0x90] sm:$0xff]
        %v708 = vld [vmem:[%s678 + $0x98] sm:$0xff]
        %v709 = vld [vmem:[%s678 + $0xa0] sm:$0xff]
        %v710 = vld [vmem:[%s678 + $0xa8] sm:$0xff]
        %v711 = vld [vmem:[%s678 + $0xb0] sm:$0xff]
        %v712 = vld [vmem:[%s678 + $0xb8] sm:$0xff]
        %v713 = vld [vmem:[%s678 + $0xc0] sm:$0xff]
        %v714 = vld [vmem:[%s678 + $0xc8] sm:$0xff]
        %v715 = vld [vmem:[%s678 + $0xd0] sm:$0xff]
        %v716 = vld [vmem:[%s678 + $0xd8] sm:$0xff]
        %v717 = vld [vmem:[%s678 + $0xe0] sm:$0xff]
        %v718 = vld [vmem:[%s678 + $0xe8] sm:$0xff]
        %v719 = vld [vmem:[%s678 + $0xf0] sm:$0xff]
        %v720 = vld [vmem:[%s678 + $0xf8] sm:$0xff]
        %v721 = vld [vmem:[%s678 + $0x100] sm:$0xff]
        %v722 = vld [vmem:[%s678 + $0x108] sm:$0xff]
        %v723 = vld [vmem:[%s678 + $0x110] sm:$0xff]
        %v724 = vld [vmem:[%s678 + $0x118] sm:$0xff]
        %v725 = vld [vmem:[%s678 + $0x120] sm:$0xff]
        %v726 = vld [vmem:[%s678 + $0x128] sm:$0xff]
        %v727 = vld [vmem:[%s678 + $0x130] sm:$0xff]
        %v728 = vld [vmem:[%s678 + $0x138] sm:$0xff]
        %v729 = vld [vmem:[%s678 + $0x140] sm:$0xff]
        %v730 = vld [vmem:[%s678 + $0x148] sm:$0xff]
        %v731 = vld [vmem:[%s678 + $0x150] sm:$0xff]
        %v732 = vld [vmem:[%s678 + $0x158] sm:$0xff]
        %v733 = vld [vmem:[%s678 + $0x160] sm:$0xff]
        %v734 = vld [vmem:[%s678 + $0x168] sm:$0xff]
        %v735 = vld [vmem:[%s678 + $0x170] sm:$0xff]
        %v736 = vld [vmem:[%s678 + $0x178] sm:$0xff]
        %v737 = vld [vmem:[%s678 + $0x180] sm:$0xff]
        %v738 = vld [vmem:[%s678 + $0x188] sm:$0xff]
        %v739 = vld [vmem:[%s678 + $0x190] sm:$0xff]
        %v740 = vld [vmem:[%s678 + $0x198] sm:$0xff]
        %v741 = vld [vmem:[%s678 + $0x1a0] sm:$0xff]
        %v742 = vld [vmem:[%s678 + $0x1a8] sm:$0xff]
        %v743 = vld [vmem:[%s678 + $0x1b0] sm:$0xff]
        %v744 = vld [vmem:[%s678 + $0x1b8] sm:$0xff]
        %v745 = vld [vmem:[%s678 + $0x1c0] sm:$0xff]
        %v746 = vld [vmem:[%s678 + $0x1c8] sm:$0xff]
        %v747 = vld [vmem:[%s678 + $0x1d0] sm:$0xff]
        %v748 = vld [vmem:[%s678 + $0x1d8] sm:$0xff]
        %v749 = vld [vmem:[%s678 + $0x1e0] sm:$0xff]
        %v750 = vld [vmem:[%s678 + $0x1e8] sm:$0xff]
        %v751 = vld [vmem:[%s678 + $0x1f0] sm:$0xff]
        %v752 = vld [vmem:[%s678 + $0x1f8] sm:$0xff]
        %v753 = vld [vmem:[%s1] sm:$0x1]
        %755 = vset.pattern.permute.xlu0 0
        %756 = vperm.xlu0 %755, %v689
        %v757 = vpop.permute.xlu0 %756
        %760 = vset.pattern.permute.xlu0 0
        %761 = vperm.xlu0 %760, %v690
        %v762 = vpop.permute.xlu0 %761
        %765 = vset.pattern.permute.xlu0 0
        %766 = vperm.xlu0 %765, %v691
        %v767 = vpop.permute.xlu0 %766
        %770 = vset.pattern.permute.xlu0 0
        %771 = vperm.xlu0 %770, %v692
        %v772 = vpop.permute.xlu0 %771
        %775 = vset.pattern.permute.xlu0 0
        %776 = vperm.xlu0 %775, %v693
        %v777 = vpop.permute.xlu0 %776
        %780 = vset.pattern.permute.xlu0 0
        %781 = vperm.xlu0 %780, %v694
        %v782 = vpop.permute.xlu0 %781
        %785 = vset.pattern.permute.xlu0 0
        %786 = vperm.xlu0 %785, %v695
        %v787 = vpop.permute.xlu0 %786
        %790 = vset.pattern.permute.xlu0 0
        %791 = vperm.xlu0 %790, %v696
        %v792 = vpop.permute.xlu0 %791
        %795 = vset.pattern.permute.xlu0 0
        %796 = vperm.xlu0 %795, %v697
        %v797 = vpop.permute.xlu0 %796
        %800 = vset.pattern.permute.xlu0 0
        %801 = vperm.xlu0 %800, %v698
        %v802 = vpop.permute.xlu0 %801
        %805 = vset.pattern.permute.xlu0 0
        %806 = vperm.xlu0 %805, %v699
        %v807 = vpop.permute.xlu0 %806
        %810 = vset.pattern.permute.xlu0 0
        %811 = vperm.xlu0 %810, %v700
        %v812 = vpop.permute.xlu0 %811
        %815 = vset.pattern.permute.xlu0 0
        %816 = vperm.xlu0 %815, %v701
        %v817 = vpop.permute.xlu0 %816
        %820 = vset.pattern.permute.xlu0 0
        %821 = vperm.xlu0 %820, %v702
        %v822 = vpop.permute.xlu0 %821
        %825 = vset.pattern.permute.xlu0 0
        %826 = vperm.xlu0 %825, %v703
        %v827 = vpop.permute.xlu0 %826
        %830 = vset.pattern.permute.xlu0 0
        %831 = vperm.xlu0 %830, %v704
        %v832 = vpop.permute.xlu0 %831
        %835 = vset.pattern.permute.xlu0 0
        %836 = vperm.xlu0 %835, %v705
        %v837 = vpop.permute.xlu0 %836
        %840 = vset.pattern.permute.xlu0 0
        %841 = vperm.xlu0 %840, %v706
        %v842 = vpop.permute.xlu0 %841
        %845 = vset.pattern.permute.xlu0 0
        %846 = vperm.xlu0 %845, %v707
        %v847 = vpop.permute.xlu0 %846
        %850 = vset.pattern.permute.xlu0 0
        %851 = vperm.xlu0 %850, %v708
        %v852 = vpop.permute.xlu0 %851
        %855 = vset.pattern.permute.xlu0 0
        %856 = vperm.xlu0 %855, %v709
        %v857 = vpop.permute.xlu0 %856
        %860 = vset.pattern.permute.xlu0 0
        %861 = vperm.xlu0 %860, %v710
        %v862 = vpop.permute.xlu0 %861
        %865 = vset.pattern.permute.xlu0 0
        %866 = vperm.xlu0 %865, %v711
        %v867 = vpop.permute.xlu0 %866
        %870 = vset.pattern.permute.xlu0 0
        %871 = vperm.xlu0 %870, %v712
        %v872 = vpop.permute.xlu0 %871
        %875 = vset.pattern.permute.xlu0 0
        %876 = vperm.xlu0 %875, %v713
        %v877 = vpop.permute.xlu0 %876
        %880 = vset.pattern.permute.xlu0 0
        %881 = vperm.xlu0 %880, %v714
        %v882 = vpop.permute.xlu0 %881
        %885 = vset.pattern.permute.xlu0 0
        %886 = vperm.xlu0 %885, %v715
        %v887 = vpop.permute.xlu0 %886
        %890 = vset.pattern.permute.xlu0 0
        %891 = vperm.xlu0 %890, %v716
        %v892 = vpop.permute.xlu0 %891
        %895 = vset.pattern.permute.xlu0 0
        %896 = vperm.xlu0 %895, %v717
        %v897 = vpop.permute.xlu0 %896
        %900 = vset.pattern.permute.xlu0 0
        %901 = vperm.xlu0 %900, %v718
        %v902 = vpop.permute.xlu0 %901
        %905 = vset.pattern.permute.xlu0 0
        %906 = vperm.xlu0 %905, %v719
        %v907 = vpop.permute.xlu0 %906
        %910 = vset.pattern.permute.xlu0 0
        %911 = vperm.xlu0 %910, %v720
        %v912 = vpop.permute.xlu0 %911
        %915 = vset.pattern.permute.xlu0 0
        %916 = vperm.xlu0 %915, %v721
        %v917 = vpop.permute.xlu0 %916
        %920 = vset.pattern.permute.xlu0 0
        %921 = vperm.xlu0 %920, %v722
        %v922 = vpop.permute.xlu0 %921
        %925 = vset.pattern.permute.xlu0 0
        %926 = vperm.xlu0 %925, %v723
        %v927 = vpop.permute.xlu0 %926
        %930 = vset.pattern.permute.xlu0 0
        %931 = vperm.xlu0 %930, %v724
        %v932 = vpop.permute.xlu0 %931
        %935 = vset.pattern.permute.xlu0 0
        %936 = vperm.xlu0 %935, %v725
        %v937 = vpop.permute.xlu0 %936
        %940 = vset.pattern.permute.xlu0 0
        %941 = vperm.xlu0 %940, %v726
        %v942 = vpop.permute.xlu0 %941
        %945 = vset.pattern.permute.xlu0 0
        %946 = vperm.xlu0 %945, %v727
        %v947 = vpop.permute.xlu0 %946
        %950 = vset.pattern.permute.xlu0 0
        %951 = vperm.xlu0 %950, %v728
        %v952 = vpop.permute.xlu0 %951
        %955 = vset.pattern.permute.xlu0 0
        %956 = vperm.xlu0 %955, %v729
        %v957 = vpop.permute.xlu0 %956
        %960 = vset.pattern.permute.xlu0 0
        %961 = vperm.xlu0 %960, %v730
        %v962 = vpop.permute.xlu0 %961
        %965 = vset.pattern.permute.xlu0 0
        %966 = vperm.xlu0 %965, %v731
        %v967 = vpop.permute.xlu0 %966
        %970 = vset.pattern.permute.xlu0 0
        %971 = vperm.xlu0 %970, %v732
        %v972 = vpop.permute.xlu0 %971
        %975 = vset.pattern.permute.xlu0 0
        %976 = vperm.xlu0 %975, %v733
        %v977 = vpop.permute.xlu0 %976
        %980 = vset.pattern.permute.xlu0 0
        %981 = vperm.xlu0 %980, %v734
        %v982 = vpop.permute.xlu0 %981
        %985 = vset.pattern.permute.xlu0 0
        %986 = vperm.xlu0 %985, %v735
        %v987 = vpop.permute.xlu0 %986
        %990 = vset.pattern.permute.xlu0 0
        %991 = vperm.xlu0 %990, %v736
        %v992 = vpop.permute.xlu0 %991
        %995 = vset.pattern.permute.xlu0 0
        %996 = vperm.xlu0 %995, %v737
        %v997 = vpop.permute.xlu0 %996
        %1000 = vset.pattern.permute.xlu0 0
        %1001 = vperm.xlu0 %1000, %v738
        %v1002 = vpop.permute.xlu0 %1001
        %1005 = vset.pattern.permute.xlu0 0
        %1006 = vperm.xlu0 %1005, %v739
        %v1007 = vpop.permute.xlu0 %1006
        %1010 = vset.pattern.permute.xlu0 0
        %1011 = vperm.xlu0 %1010, %v740
        %v1012 = vpop.permute.xlu0 %1011
        %1015 = vset.pattern.permute.xlu0 0
        %1016 = vperm.xlu0 %1015, %v741
        %v1017 = vpop.permute.xlu0 %1016
        %1020 = vset.pattern.permute.xlu0 0
        %1021 = vperm.xlu0 %1020, %v742
        %v1022 = vpop.permute.xlu0 %1021
        %1025 = vset.pattern.permute.xlu0 0
        %1026 = vperm.xlu0 %1025, %v743
        %v1027 = vpop.permute.xlu0 %1026
        %1030 = vset.pattern.permute.xlu0 0
        %1031 = vperm.xlu0 %1030, %v744
        %v1032 = vpop.permute.xlu0 %1031
        %1035 = vset.pattern.permute.xlu0 0
        %1036 = vperm.xlu0 %1035, %v745
        %v1037 = vpop.permute.xlu0 %1036
        %1040 = vset.pattern.permute.xlu0 0
        %1041 = vperm.xlu0 %1040, %v746
        %v1042 = vpop.permute.xlu0 %1041
        %1045 = vset.pattern.permute.xlu0 0
        %1046 = vperm.xlu0 %1045, %v747
        %v1047 = vpop.permute.xlu0 %1046
        %1050 = vset.pattern.permute.xlu0 0
        %1051 = vperm.xlu0 %1050, %v748
        %v1052 = vpop.permute.xlu0 %1051
        %1055 = vset.pattern.permute.xlu0 0
        %1056 = vperm.xlu0 %1055, %v749
        %v1057 = vpop.permute.xlu0 %1056
        %1060 = vset.pattern.permute.xlu0 0
        %1061 = vperm.xlu0 %1060, %v750
        %v1062 = vpop.permute.xlu0 %1061
        %1065 = vset.pattern.permute.xlu0 0
        %1066 = vperm.xlu0 %1065, %v751
        %v1067 = vpop.permute.xlu0 %1066
        %1070 = vset.pattern.permute.xlu0 0
        %1071 = vperm.xlu0 %1070, %v752
        %v1072 = vpop.permute.xlu0 %1071
        %v1074 = vlaneseq
        %v1075 = vshrl.u32 %v1074, 7
        %v1076 = vsub.s32 0, %v1075
        %v1077 = vrot.slane %v753, %v1076
        %v1078 = vmul.f32 %v757, %v1077
        %v1079 = vmul.f32 %v762, %v1077
        %v1080 = vmul.f32 %v767, %v1077
        %v1081 = vmul.f32 %v772, %v1077
        %v1082 = vmul.f32 %v777, %v1077
        %v1083 = vmul.f32 %v782, %v1077
        %v1084 = vmul.f32 %v787, %v1077
        %v1085 = vmul.f32 %v792, %v1077
        %v1086 = vmul.f32 %v797, %v1077
        %v1087 = vmul.f32 %v802, %v1077
        %v1088 = vmul.f32 %v807, %v1077
        %v1089 = vmul.f32 %v812, %v1077
        %v1090 = vmul.f32 %v817, %v1077
        %v1091 = vmul.f32 %v822, %v1077
        %v1092 = vmul.f32 %v827, %v1077
        %v1093 = vmul.f32 %v832, %v1077
        %v1094 = vmul.f32 %v837, %v1077
        %v1095 = vmul.f32 %v842, %v1077
        %v1096 = vmul.f32 %v847, %v1077
        %v1097 = vmul.f32 %v852, %v1077
        %v1098 = vmul.f32 %v857, %v1077
        %v1099 = vmul.f32 %v862, %v1077
        %v1100 = vmul.f32 %v867, %v1077
        %v1101 = vmul.f32 %v872, %v1077
        %v1102 = vmul.f32 %v877, %v1077
        %v1103 = vmul.f32 %v882, %v1077
        %v1104 = vmul.f32 %v887, %v1077
        %v1105 = vmul.f32 %v892, %v1077
        %v1106 = vmul.f32 %v897, %v1077
        %v1107 = vmul.f32 %v902, %v1077
        %v1108 = vmul.f32 %v907, %v1077
        %v1109 = vmul.f32 %v912, %v1077
        %v1110 = vmul.f32 %v917, %v1077
        %v1111 = vmul.f32 %v922, %v1077
        %v1112 = vmul.f32 %v927, %v1077
        %v1113 = vmul.f32 %v932, %v1077
        %v1114 = vmul.f32 %v937, %v1077
        %v1115 = vmul.f32 %v942, %v1077
        %v1116 = vmul.f32 %v947, %v1077
        %v1117 = vmul.f32 %v952, %v1077
        %v1118 = vmul.f32 %v957, %v1077
        %v1119 = vmul.f32 %v962, %v1077
        %v1120 = vmul.f32 %v967, %v1077
        %v1121 = vmul.f32 %v972, %v1077
        %v1122 = vmul.f32 %v977, %v1077
        %v1123 = vmul.f32 %v982, %v1077
        %v1124 = vmul.f32 %v987, %v1077
        %v1125 = vmul.f32 %v992, %v1077
        %v1126 = vmul.f32 %v997, %v1077
        %v1127 = vmul.f32 %v1002, %v1077
        %v1128 = vmul.f32 %v1007, %v1077
        %v1129 = vmul.f32 %v1012, %v1077
        %v1130 = vmul.f32 %v1017, %v1077
        %v1131 = vmul.f32 %v1022, %v1077
        %v1132 = vmul.f32 %v1027, %v1077
        %v1133 = vmul.f32 %v1032, %v1077
        %v1134 = vmul.f32 %v1037, %v1077
        %v1135 = vmul.f32 %v1042, %v1077
        %v1136 = vmul.f32 %v1047, %v1077
        %v1137 = vmul.f32 %v1052, %v1077
        %v1138 = vmul.f32 %v1057, %v1077
        %v1139 = vmul.f32 %v1062, %v1077
        %v1140 = vmul.f32 %v1067, %v1077
        %v1141 = vmul.f32 %v1072, %v1077
        %v1142 = vld [vmem:[%s1 + $0x1] sm:$0x1]
        %1143 = vset.pattern.permute.xlu0 1
        %1144 = vperm.xlu0 %1143, %v689
        %v1145 = vpop.permute.xlu0 %1144
        %1147 = vset.pattern.permute.xlu0 1
        %1148 = vperm.xlu0 %1147, %v690
        %v1149 = vpop.permute.xlu0 %1148
        %1151 = vset.pattern.permute.xlu0 1
        %1152 = vperm.xlu0 %1151, %v691
        %v1153 = vpop.permute.xlu0 %1152
        %1155 = vset.pattern.permute.xlu0 1
        %1156 = vperm.xlu0 %1155, %v692
        %v1157 = vpop.permute.xlu0 %1156
        %1159 = vset.pattern.permute.xlu0 1
        %1160 = vperm.xlu0 %1159, %v693
        %v1161 = vpop.permute.xlu0 %1160
        %1163 = vset.pattern.permute.xlu0 1
        %1164 = vperm.xlu0 %1163, %v694
        %v1165 = vpop.permute.xlu0 %1164
        %1167 = vset.pattern.permute.xlu0 1
        %1168 = vperm.xlu0 %1167, %v695
        %v1169 = vpop.permute.xlu0 %1168
        %1171 = vset.pattern.permute.xlu0 1
        %1172 = vperm.xlu0 %1171, %v696
        %v1173 = vpop.permute.xlu0 %1172
        %1175 = vset.pattern.permute.xlu0 1
        %1176 = vperm.xlu0 %1175, %v697
        %v1177 = vpop.permute.xlu0 %1176
        %1179 = vset.pattern.permute.xlu0 1
        %1180 = vperm.xlu0 %1179, %v698
        %v1181 = vpop.permute.xlu0 %1180
        %1183 = vset.pattern.permute.xlu0 1
        %1184 = vperm.xlu0 %1183, %v699
        %v1185 = vpop.permute.xlu0 %1184
        %1187 = vset.pattern.permute.xlu0 1
        %1188 = vperm.xlu0 %1187, %v700
        %v1189 = vpop.permute.xlu0 %1188
        %1191 = vset.pattern.permute.xlu0 1
        %1192 = vperm.xlu0 %1191, %v701
        %v1193 = vpop.permute.xlu0 %1192
        %1195 = vset.pattern.permute.xlu0 1
        %1196 = vperm.xlu0 %1195, %v702
        %v1197 = vpop.permute.xlu0 %1196
        %1199 = vset.pattern.permute.xlu0 1
        %1200 = vperm.xlu0 %1199, %v703
        %v1201 = vpop.permute.xlu0 %1200
        %1203 = vset.pattern.permute.xlu0 1
        %1204 = vperm.xlu0 %1203, %v704
        %v1205 = vpop.permute.xlu0 %1204
        %1207 = vset.pattern.permute.xlu0 1
        %1208 = vperm.xlu0 %1207, %v705
        %v1209 = vpop.permute.xlu0 %1208
        %1211 = vset.pattern.permute.xlu0 1
        %1212 = vperm.xlu0 %1211, %v706
        %v1213 = vpop.permute.xlu0 %1212
        %1215 = vset.pattern.permute.xlu0 1
        %1216 = vperm.xlu0 %1215, %v707
        %v1217 = vpop.permute.xlu0 %1216
        %1219 = vset.pattern.permute.xlu0 1
        %1220 = vperm.xlu0 %1219, %v708
        %v1221 = vpop.permute.xlu0 %1220
        %1223 = vset.pattern.permute.xlu0 1
        %1224 = vperm.xlu0 %1223, %v709
        %v1225 = vpop.permute.xlu0 %1224
        %1227 = vset.pattern.permute.xlu0 1
        %1228 = vperm.xlu0 %1227, %v710
        %v1229 = vpop.permute.xlu0 %1228
        %1231 = vset.pattern.permute.xlu0 1
        %1232 = vperm.xlu0 %1231, %v711
        %v1233 = vpop.permute.xlu0 %1232
        %1235 = vset.pattern.permute.xlu0 1
        %1236 = vperm.xlu0 %1235, %v712
        %v1237 = vpop.permute.xlu0 %1236
        %1239 = vset.pattern.permute.xlu0 1
        %1240 = vperm.xlu0 %1239, %v713
        %v1241 = vpop.permute.xlu0 %1240
        %1243 = vset.pattern.permute.xlu0 1
        %1244 = vperm.xlu0 %1243, %v714
        %v1245 = vpop.permute.xlu0 %1244
        %1247 = vset.pattern.permute.xlu0 1
        %1248 = vperm.xlu0 %1247, %v715
        %v1249 = vpop.permute.xlu0 %1248
        %1251 = vset.pattern.permute.xlu0 1
        %1252 = vperm.xlu0 %1251, %v716
        %v1253 = vpop.permute.xlu0 %1252
        %1255 = vset.pattern.permute.xlu0 1
        %1256 = vperm.xlu0 %1255, %v717
        %v1257 = vpop.permute.xlu0 %1256
        %1259 = vset.pattern.permute.xlu0 1
        %1260 = vperm.xlu0 %1259, %v718
        %v1261 = vpop.permute.xlu0 %1260
        %1263 = vset.pattern.permute.xlu0 1
        %1264 = vperm.xlu0 %1263, %v719
        %v1265 = vpop.permute.xlu0 %1264
        %1267 = vset.pattern.permute.xlu0 1
        %1268 = vperm.xlu0 %1267, %v720
        %v1269 = vpop.permute.xlu0 %1268
        %1271 = vset.pattern.permute.xlu0 1
        %1272 = vperm.xlu0 %1271, %v721
        %v1273 = vpop.permute.xlu0 %1272
        %1275 = vset.pattern.permute.xlu0 1
        %1276 = vperm.xlu0 %1275, %v722
        %v1277 = vpop.permute.xlu0 %1276
        %1279 = vset.pattern.permute.xlu0 1
        %1280 = vperm.xlu0 %1279, %v723
        %v1281 = vpop.permute.xlu0 %1280
        %1283 = vset.pattern.permute.xlu0 1
        %1284 = vperm.xlu0 %1283, %v724
        %v1285 = vpop.permute.xlu0 %1284
        %1287 = vset.pattern.permute.xlu0 1
        %1288 = vperm.xlu0 %1287, %v725
        %v1289 = vpop.permute.xlu0 %1288
        %1291 = vset.pattern.permute.xlu0 1
        %1292 = vperm.xlu0 %1291, %v726
        %v1293 = vpop.permute.xlu0 %1292
        %1295 = vset.pattern.permute.xlu0 1
        %1296 = vperm.xlu0 %1295, %v727
        %v1297 = vpop.permute.xlu0 %1296
        %1299 = vset.pattern.permute.xlu0 1
        %1300 = vperm.xlu0 %1299, %v728
        %v1301 = vpop.permute.xlu0 %1300
        %1303 = vset.pattern.permute.xlu0 1
        %1304 = vperm.xlu0 %1303, %v729
        %v1305 = vpop.permute.xlu0 %1304
        %1307 = vset.pattern.permute.xlu0 1
        %1308 = vperm.xlu0 %1307, %v730
        %v1309 = vpop.permute.xlu0 %1308
        %1311 = vset.pattern.permute.xlu0 1
        %1312 = vperm.xlu0 %1311, %v731
        %v1313 = vpop.permute.xlu0 %1312
        %1315 = vset.pattern.permute.xlu0 1
        %1316 = vperm.xlu0 %1315, %v732
        %v1317 = vpop.permute.xlu0 %1316
        %1319 = vset.pattern.permute.xlu0 1
        %1320 = vperm.xlu0 %1319, %v733
        %v1321 = vpop.permute.xlu0 %1320
        %1323 = vset.pattern.permute.xlu0 1
        %1324 = vperm.xlu0 %1323, %v734
        %v1325 = vpop.permute.xlu0 %1324
        %1327 = vset.pattern.permute.xlu0 1
        %1328 = vperm.xlu0 %1327, %v735
        %v1329 = vpop.permute.xlu0 %1328
        %1331 = vset.pattern.permute.xlu0 1
        %1332 = vperm.xlu0 %1331, %v736
        %v1333 = vpop.permute.xlu0 %1332
        %1335 = vset.pattern.permute.xlu0 1
        %1336 = vperm.xlu0 %1335, %v737
        %v1337 = vpop.permute.xlu0 %1336
        %1339 = vset.pattern.permute.xlu0 1
        %1340 = vperm.xlu0 %1339, %v738
        %v1341 = vpop.permute.xlu0 %1340
        %1343 = vset.pattern.permute.xlu0 1
        %1344 = vperm.xlu0 %1343, %v739
        %v1345 = vpop.permute.xlu0 %1344
        %1347 = vset.pattern.permute.xlu0 1
        %1348 = vperm.xlu0 %1347, %v740
        %v1349 = vpop.permute.xlu0 %1348
        %1351 = vset.pattern.permute.xlu0 1
        %1352 = vperm.xlu0 %1351, %v741
        %v1353 = vpop.permute.xlu0 %1352
        %1355 = vset.pattern.permute.xlu0 1
        %1356 = vperm.xlu0 %1355, %v742
        %v1357 = vpop.permute.xlu0 %1356
        %1359 = vset.pattern.permute.xlu0 1
        %1360 = vperm.xlu0 %1359, %v743
        %v1361 = vpop.permute.xlu0 %1360
        %1363 = vset.pattern.permute.xlu0 1
        %1364 = vperm.xlu0 %1363, %v744
        %v1365 = vpop.permute.xlu0 %1364
        %1367 = vset.pattern.permute.xlu0 1
        %1368 = vperm.xlu0 %1367, %v745
        %v1369 = vpop.permute.xlu0 %1368
        %1371 = vset.pattern.permute.xlu0 1
        %1372 = vperm.xlu0 %1371, %v746
        %v1373 = vpop.permute.xlu0 %1372
        %1375 = vset.pattern.permute.xlu0 1
        %1376 = vperm.xlu0 %1375, %v747
        %v1377 = vpop.permute.xlu0 %1376
        %1379 = vset.pattern.permute.xlu0 1
        %1380 = vperm.xlu0 %1379, %v748
        %v1381 = vpop.permute.xlu0 %1380
        %1383 = vset.pattern.permute.xlu0 1
        %1384 = vperm.xlu0 %1383, %v749
        %v1385 = vpop.permute.xlu0 %1384
        %1387 = vset.pattern.permute.xlu0 1
        %1388 = vperm.xlu0 %1387, %v750
        %v1389 = vpop.permute.xlu0 %1388
        %1391 = vset.pattern.permute.xlu0 1
        %1392 = vperm.xlu0 %1391, %v751
        %v1393 = vpop.permute.xlu0 %1392
        %1395 = vset.pattern.permute.xlu0 1
        %1396 = vperm.xlu0 %1395, %v752
        %v1397 = vpop.permute.xlu0 %1396
        %v1399 = vlaneseq
        %v1400 = vshrl.u32 %v1399, 7
        %v1401 = vsub.s32 0, %v1400
        %v1402 = vrot.slane %v1142, %v1401
        %v1403 = vmul.f32 %v1145, %v1402
        %v1404 = vmul.f32 %v1149, %v1402
        %v1405 = vmul.f32 %v1153, %v1402
        %v1406 = vmul.f32 %v1157, %v1402
        %v1407 = vmul.f32 %v1161, %v1402
        %v1408 = vmul.f32 %v1165, %v1402
        %v1409 = vmul.f32 %v1169, %v1402
        %v1410 = vmul.f32 %v1173, %v1402
        %v1411 = vmul.f32 %v1177, %v1402
        %v1412 = vmul.f32 %v1181, %v1402
        %v1413 = vmul.f32 %v1185, %v1402
        %v1414 = vmul.f32 %v1189, %v1402
        %v1415 = vmul.f32 %v1193, %v1402
        %v1416 = vmul.f32 %v1197, %v1402
        %v1417 = vmul.f32 %v1201, %v1402
        %v1418 = vmul.f32 %v1205, %v1402
        %v1419 = vmul.f32 %v1209, %v1402
        %v1420 = vmul.f32 %v1213, %v1402
        %v1421 = vmul.f32 %v1217, %v1402
        %v1422 = vmul.f32 %v1221, %v1402
        %v1423 = vmul.f32 %v1225, %v1402
        %v1424 = vmul.f32 %v1229, %v1402
        %v1425 = vmul.f32 %v1233, %v1402
        %v1426 = vmul.f32 %v1237, %v1402
        %v1427 = vmul.f32 %v1241, %v1402
        %v1428 = vmul.f32 %v1245, %v1402
        %v1429 = vmul.f32 %v1249, %v1402
        %v1430 = vmul.f32 %v1253, %v1402
        %v1431 = vmul.f32 %v1257, %v1402
        %v1432 = vmul.f32 %v1261, %v1402
        %v1433 = vmul.f32 %v1265, %v1402
        %v1434 = vmul.f32 %v1269, %v1402
        %v1435 = vmul.f32 %v1273, %v1402
        %v1436 = vmul.f32 %v1277, %v1402
        %v1437 = vmul.f32 %v1281, %v1402
        %v1438 = vmul.f32 %v1285, %v1402
        %v1439 = vmul.f32 %v1289, %v1402
        %v1440 = vmul.f32 %v1293, %v1402
        %v1441 = vmul.f32 %v1297, %v1402
        %v1442 = vmul.f32 %v1301, %v1402
        %v1443 = vmul.f32 %v1305, %v1402
        %v1444 = vmul.f32 %v1309, %v1402
        %v1445 = vmul.f32 %v1313, %v1402
        %v1446 = vmul.f32 %v1317, %v1402
        %v1447 = vmul.f32 %v1321, %v1402
        %v1448 = vmul.f32 %v1325, %v1402
        %v1449 = vmul.f32 %v1329, %v1402
        %v1450 = vmul.f32 %v1333, %v1402
        %v1451 = vmul.f32 %v1337, %v1402
        %v1452 = vmul.f32 %v1341, %v1402
        %v1453 = vmul.f32 %v1345, %v1402
        %v1454 = vmul.f32 %v1349, %v1402
        %v1455 = vmul.f32 %v1353, %v1402
        %v1456 = vmul.f32 %v1357, %v1402
        %v1457 = vmul.f32 %v1361, %v1402
        %v1458 = vmul.f32 %v1365, %v1402
        %v1459 = vmul.f32 %v1369, %v1402
        %v1460 = vmul.f32 %v1373, %v1402
        %v1461 = vmul.f32 %v1377, %v1402
        %v1462 = vmul.f32 %v1381, %v1402
        %v1463 = vmul.f32 %v1385, %v1402
        %v1464 = vmul.f32 %v1389, %v1402
        %v1465 = vmul.f32 %v1393, %v1402
        %v1466 = vmul.f32 %v1397, %v1402
        %v1467 = vadd.f32 %v1078, %v1403
        %v1468 = vadd.f32 %v1079, %v1404
        %v1469 = vadd.f32 %v1080, %v1405
        %v1470 = vadd.f32 %v1081, %v1406
        %v1471 = vadd.f32 %v1082, %v1407
        %v1472 = vadd.f32 %v1083, %v1408
        %v1473 = vadd.f32 %v1084, %v1409
        %v1474 = vadd.f32 %v1085, %v1410
        %v1475 = vadd.f32 %v1086, %v1411
        %v1476 = vadd.f32 %v1087, %v1412
        %v1477 = vadd.f32 %v1088, %v1413
        %v1478 = vadd.f32 %v1089, %v1414
        %v1479 = vadd.f32 %v1090, %v1415
        %v1480 = vadd.f32 %v1091, %v1416
        %v1481 = vadd.f32 %v1092, %v1417
        %v1482 = vadd.f32 %v1093, %v1418
        %v1483 = vadd.f32 %v1094, %v1419
        %v1484 = vadd.f32 %v1095, %v1420
        %v1485 = vadd.f32 %v1096, %v1421
        %v1486 = vadd.f32 %v1097, %v1422
        %v1487 = vadd.f32 %v1098, %v1423
        %v1488 = vadd.f32 %v1099, %v1424
        %v1489 = vadd.f32 %v1100, %v1425
        %v1490 = vadd.f32 %v1101, %v1426
        %v1491 = vadd.f32 %v1102, %v1427
        %v1492 = vadd.f32 %v1103, %v1428
        %v1493 = vadd.f32 %v1104, %v1429
        %v1494 = vadd.f32 %v1105, %v1430
        %v1495 = vadd.f32 %v1106, %v1431
        %v1496 = vadd.f32 %v1107, %v1432
        %v1497 = vadd.f32 %v1108, %v1433
        %v1498 = vadd.f32 %v1109, %v1434
        %v1499 = vadd.f32 %v1110, %v1435
        %v1500 = vadd.f32 %v1111, %v1436
        %v1501 = vadd.f32 %v1112, %v1437
        %v1502 = vadd.f32 %v1113, %v1438
        %v1503 = vadd.f32 %v1114, %v1439
        %v1504 = vadd.f32 %v1115, %v1440
        %v1505 = vadd.f32 %v1116, %v1441
        %v1506 = vadd.f32 %v1117, %v1442
        %v1507 = vadd.f32 %v1118, %v1443
        %v1508 = vadd.f32 %v1119, %v1444
        %v1509 = vadd.f32 %v1120, %v1445
        %v1510 = vadd.f32 %v1121, %v1446
        %v1511 = vadd.f32 %v1122, %v1447
        %v1512 = vadd.f32 %v1123, %v1448
        %v1513 = vadd.f32 %v1124, %v1449
        %v1514 = vadd.f32 %v1125, %v1450
        %v1515 = vadd.f32 %v1126, %v1451
        %v1516 = vadd.f32 %v1127, %v1452
        %v1517 = vadd.f32 %v1128, %v1453
        %v1518 = vadd.f32 %v1129, %v1454
        %v1519 = vadd.f32 %v1130, %v1455
        %v1520 = vadd.f32 %v1131, %v1456
        %v1521 = vadd.f32 %v1132, %v1457
        %v1522 = vadd.f32 %v1133, %v1458
        %v1523 = vadd.f32 %v1134, %v1459
        %v1524 = vadd.f32 %v1135, %v1460
        %v1525 = vadd.f32 %v1136, %v1461
        %v1526 = vadd.f32 %v1137, %v1462
        %v1527 = vadd.f32 %v1138, %v1463
        %v1528 = vadd.f32 %v1139, %v1464
        %v1529 = vadd.f32 %v1140, %v1465
        %v1530 = vadd.f32 %v1141, %v1466
        %v1531 = vld [vmem:[%s1 + $0x2] sm:$0x1]
        %1532 = vset.pattern.permute.xlu0 2
        %1533 = vperm.xlu0 %1532, %v689
        %v1534 = vpop.permute.xlu0 %1533
        %1536 = vset.pattern.permute.xlu0 2
        %1537 = vperm.xlu0 %1536, %v690
        %v1538 = vpop.permute.xlu0 %1537
        %1540 = vset.pattern.permute.xlu0 2
        %1541 = vperm.xlu0 %1540, %v691
        %v1542 = vpop.permute.xlu0 %1541
        %1544 = vset.pattern.permute.xlu0 2
        %1545 = vperm.xlu0 %1544, %v692
        %v1546 = vpop.permute.xlu0 %1545
        %1548 = vset.pattern.permute.xlu0 2
        %1549 = vperm.xlu0 %1548, %v693
        %v1550 = vpop.permute.xlu0 %1549
        %1552 = vset.pattern.permute.xlu0 2
        %1553 = vperm.xlu0 %1552, %v694
        %v1554 = vpop.permute.xlu0 %1553
        %1556 = vset.pattern.permute.xlu0 2
        %1557 = vperm.xlu0 %1556, %v695
        %v1558 = vpop.permute.xlu0 %1557
        %1560 = vset.pattern.permute.xlu0 2
        %1561 = vperm.xlu0 %1560, %v696
        %v1562 = vpop.permute.xlu0 %1561
        %1564 = vset.pattern.permute.xlu0 2
        %1565 = vperm.xlu0 %1564, %v697
        %v1566 = vpop.permute.xlu0 %1565
        %1568 = vset.pattern.permute.xlu0 2
        %1569 = vperm.xlu0 %1568, %v698
        %v1570 = vpop.permute.xlu0 %1569
        %1572 = vset.pattern.permute.xlu0 2
        %1573 = vperm.xlu0 %1572, %v699
        %v1574 = vpop.permute.xlu0 %1573
        %1576 = vset.pattern.permute.xlu0 2
        %1577 = vperm.xlu0 %1576, %v700
        %v1578 = vpop.permute.xlu0 %1577
        %1580 = vset.pattern.permute.xlu0 2
        %1581 = vperm.xlu0 %1580, %v701
        %v1582 = vpop.permute.xlu0 %1581
        %1584 = vset.pattern.permute.xlu0 2
        %1585 = vperm.xlu0 %1584, %v702
        %v1586 = vpop.permute.xlu0 %1585
        %1588 = vset.pattern.permute.xlu0 2
        %1589 = vperm.xlu0 %1588, %v703
        %v1590 = vpop.permute.xlu0 %1589
        %1592 = vset.pattern.permute.xlu0 2
        %1593 = vperm.xlu0 %1592, %v704
        %v1594 = vpop.permute.xlu0 %1593
        %1596 = vset.pattern.permute.xlu0 2
        %1597 = vperm.xlu0 %1596, %v705
        %v1598 = vpop.permute.xlu0 %1597
        %1600 = vset.pattern.permute.xlu0 2
        %1601 = vperm.xlu0 %1600, %v706
        %v1602 = vpop.permute.xlu0 %1601
        %1604 = vset.pattern.permute.xlu0 2
        %1605 = vperm.xlu0 %1604, %v707
        %v1606 = vpop.permute.xlu0 %1605
        %1608 = vset.pattern.permute.xlu0 2
        %1609 = vperm.xlu0 %1608, %v708
        %v1610 = vpop.permute.xlu0 %1609
        %1612 = vset.pattern.permute.xlu0 2
        %1613 = vperm.xlu0 %1612, %v709
        %v1614 = vpop.permute.xlu0 %1613
        %1616 = vset.pattern.permute.xlu0 2
        %1617 = vperm.xlu0 %1616, %v710
        %v1618 = vpop.permute.xlu0 %1617
        %1620 = vset.pattern.permute.xlu0 2
        %1621 = vperm.xlu0 %1620, %v711
        %v1622 = vpop.permute.xlu0 %1621
        %1624 = vset.pattern.permute.xlu0 2
        %1625 = vperm.xlu0 %1624, %v712
        %v1626 = vpop.permute.xlu0 %1625
        %1628 = vset.pattern.permute.xlu0 2
        %1629 = vperm.xlu0 %1628, %v713
        %v1630 = vpop.permute.xlu0 %1629
        %1632 = vset.pattern.permute.xlu0 2
        %1633 = vperm.xlu0 %1632, %v714
        %v1634 = vpop.permute.xlu0 %1633
        %1636 = vset.pattern.permute.xlu0 2
        %1637 = vperm.xlu0 %1636, %v715
        %v1638 = vpop.permute.xlu0 %1637
        %1640 = vset.pattern.permute.xlu0 2
        %1641 = vperm.xlu0 %1640, %v716
        %v1642 = vpop.permute.xlu0 %1641
        %1644 = vset.pattern.permute.xlu0 2
        %1645 = vperm.xlu0 %1644, %v717
        %v1646 = vpop.permute.xlu0 %1645
        %1648 = vset.pattern.permute.xlu0 2
        %1649 = vperm.xlu0 %1648, %v718
        %v1650 = vpop.permute.xlu0 %1649
        %1652 = vset.pattern.permute.xlu0 2
        %1653 = vperm.xlu0 %1652, %v719
        %v1654 = vpop.permute.xlu0 %1653
        %1656 = vset.pattern.permute.xlu0 2
        %1657 = vperm.xlu0 %1656, %v720
        %v1658 = vpop.permute.xlu0 %1657
        %1660 = vset.pattern.permute.xlu0 2
        %1661 = vperm.xlu0 %1660, %v721
        %v1662 = vpop.permute.xlu0 %1661
        %1664 = vset.pattern.permute.xlu0 2
        %1665 = vperm.xlu0 %1664, %v722
        %v1666 = vpop.permute.xlu0 %1665
        %1668 = vset.pattern.permute.xlu0 2
        %1669 = vperm.xlu0 %1668, %v723
        %v1670 = vpop.permute.xlu0 %1669
        %1672 = vset.pattern.permute.xlu0 2
        %1673 = vperm.xlu0 %1672, %v724
        %v1674 = vpop.permute.xlu0 %1673
        %1676 = vset.pattern.permute.xlu0 2
        %1677 = vperm.xlu0 %1676, %v725
        %v1678 = vpop.permute.xlu0 %1677
        %1680 = vset.pattern.permute.xlu0 2
        %1681 = vperm.xlu0 %1680, %v726
        %v1682 = vpop.permute.xlu0 %1681
        %1684 = vset.pattern.permute.xlu0 2
        %1685 = vperm.xlu0 %1684, %v727
        %v1686 = vpop.permute.xlu0 %1685
        %1688 = vset.pattern.permute.xlu0 2
        %1689 = vperm.xlu0 %1688, %v728
        %v1690 = vpop.permute.xlu0 %1689
        %1692 = vset.pattern.permute.xlu0 2
        %1693 = vperm.xlu0 %1692, %v729
        %v1694 = vpop.permute.xlu0 %1693
        %1696 = vset.pattern.permute.xlu0 2
        %1697 = vperm.xlu0 %1696, %v730
        %v1698 = vpop.permute.xlu0 %1697
        %1700 = vset.pattern.permute.xlu0 2
        %1701 = vperm.xlu0 %1700, %v731
        %v1702 = vpop.permute.xlu0 %1701
        %1704 = vset.pattern.permute.xlu0 2
        %1705 = vperm.xlu0 %1704, %v732
        %v1706 = vpop.permute.xlu0 %1705
        %1708 = vset.pattern.permute.xlu0 2
        %1709 = vperm.xlu0 %1708, %v733
        %v1710 = vpop.permute.xlu0 %1709
        %1712 = vset.pattern.permute.xlu0 2
        %1713 = vperm.xlu0 %1712, %v734
        %v1714 = vpop.permute.xlu0 %1713
        %1716 = vset.pattern.permute.xlu0 2
        %1717 = vperm.xlu0 %1716, %v735
        %v1718 = vpop.permute.xlu0 %1717
        %1720 = vset.pattern.permute.xlu0 2
        %1721 = vperm.xlu0 %1720, %v736
        %v1722 = vpop.permute.xlu0 %1721
        %1724 = vset.pattern.permute.xlu0 2
        %1725 = vperm.xlu0 %1724, %v737
        %v1726 = vpop.permute.xlu0 %1725
        %1728 = vset.pattern.permute.xlu0 2
        %1729 = vperm.xlu0 %1728, %v738
        %v1730 = vpop.permute.xlu0 %1729
        %1732 = vset.pattern.permute.xlu0 2
        %1733 = vperm.xlu0 %1732, %v739
        %v1734 = vpop.permute.xlu0 %1733
        %1736 = vset.pattern.permute.xlu0 2
        %1737 = vperm.xlu0 %1736, %v740
        %v1738 = vpop.permute.xlu0 %1737
        %1740 = vset.pattern.permute.xlu0 2
        %1741 = vperm.xlu0 %1740, %v741
        %v1742 = vpop.permute.xlu0 %1741
        %1744 = vset.pattern.permute.xlu0 2
        %1745 = vperm.xlu0 %1744, %v742
        %v1746 = vpop.permute.xlu0 %1745
        %1748 = vset.pattern.permute.xlu0 2
        %1749 = vperm.xlu0 %1748, %v743
        %v1750 = vpop.permute.xlu0 %1749
        %1752 = vset.pattern.permute.xlu0 2
        %1753 = vperm.xlu0 %1752, %v744
        %v1754 = vpop.permute.xlu0 %1753
        %1756 = vset.pattern.permute.xlu0 2
        %1757 = vperm.xlu0 %1756, %v745
        %v1758 = vpop.permute.xlu0 %1757
        %1760 = vset.pattern.permute.xlu0 2
        %1761 = vperm.xlu0 %1760, %v746
        %v1762 = vpop.permute.xlu0 %1761
        %1764 = vset.pattern.permute.xlu0 2
        %1765 = vperm.xlu0 %1764, %v747
        %v1766 = vpop.permute.xlu0 %1765
        %1768 = vset.pattern.permute.xlu0 2
        %1769 = vperm.xlu0 %1768, %v748
        %v1770 = vpop.permute.xlu0 %1769
        %1772 = vset.pattern.permute.xlu0 2
        %1773 = vperm.xlu0 %1772, %v749
        %v1774 = vpop.permute.xlu0 %1773
        %1776 = vset.pattern.permute.xlu0 2
        %1777 = vperm.xlu0 %1776, %v750
        %v1778 = vpop.permute.xlu0 %1777
        %1780 = vset.pattern.permute.xlu0 2
        %1781 = vperm.xlu0 %1780, %v751
        %v1782 = vpop.permute.xlu0 %1781
        %1784 = vset.pattern.permute.xlu0 2
        %1785 = vperm.xlu0 %1784, %v752
        %v1786 = vpop.permute.xlu0 %1785
        %v1788 = vlaneseq
        %v1789 = vshrl.u32 %v1788, 7
        %v1790 = vsub.s32 0, %v1789
        %v1791 = vrot.slane %v1531, %v1790
        %v1792 = vmul.f32 %v1534, %v1791
        %v1793 = vmul.f32 %v1538, %v1791
        %v1794 = vmul.f32 %v1542, %v1791
        %v1795 = vmul.f32 %v1546, %v1791
        %v1796 = vmul.f32 %v1550, %v1791
        %v1797 = vmul.f32 %v1554, %v1791
        %v1798 = vmul.f32 %v1558, %v1791
        %v1799 = vmul.f32 %v1562, %v1791
        %v1800 = vmul.f32 %v1566, %v1791
        %v1801 = vmul.f32 %v1570, %v1791
        %v1802 = vmul.f32 %v1574, %v1791
        %v1803 = vmul.f32 %v1578, %v1791
        %v1804 = vmul.f32 %v1582, %v1791
        %v1805 = vmul.f32 %v1586, %v1791
        %v1806 = vmul.f32 %v1590, %v1791
        %v1807 = vmul.f32 %v1594, %v1791
        %v1808 = vmul.f32 %v1598, %v1791
        %v1809 = vmul.f32 %v1602, %v1791
        %v1810 = vmul.f32 %v1606, %v1791
        %v1811 = vmul.f32 %v1610, %v1791
        %v1812 = vmul.f32 %v1614, %v1791
        %v1813 = vmul.f32 %v1618, %v1791
        %v1814 = vmul.f32 %v1622, %v1791
        %v1815 = vmul.f32 %v1626, %v1791
        %v1816 = vmul.f32 %v1630, %v1791
        %v1817 = vmul.f32 %v1634, %v1791
        %v1818 = vmul.f32 %v1638, %v1791
        %v1819 = vmul.f32 %v1642, %v1791
        %v1820 = vmul.f32 %v1646, %v1791
        %v1821 = vmul.f32 %v1650, %v1791
        %v1822 = vmul.f32 %v1654, %v1791
        %v1823 = vmul.f32 %v1658, %v1791
        %v1824 = vmul.f32 %v1662, %v1791
        %v1825 = vmul.f32 %v1666, %v1791
        %v1826 = vmul.f32 %v1670, %v1791
        %v1827 = vmul.f32 %v1674, %v1791
        %v1828 = vmul.f32 %v1678, %v1791
        %v1829 = vmul.f32 %v1682, %v1791
        %v1830 = vmul.f32 %v1686, %v1791
        %v1831 = vmul.f32 %v1690, %v1791
        %v1832 = vmul.f32 %v1694, %v1791
        %v1833 = vmul.f32 %v1698, %v1791
        %v1834 = vmul.f32 %v1702, %v1791
        %v1835 = vmul.f32 %v1706, %v1791
        %v1836 = vmul.f32 %v1710, %v1791
        %v1837 = vmul.f32 %v1714, %v1791
        %v1838 = vmul.f32 %v1718, %v1791
        %v1839 = vmul.f32 %v1722, %v1791
        %v1840 = vmul.f32 %v1726, %v1791
        %v1841 = vmul.f32 %v1730, %v1791
        %v1842 = vmul.f32 %v1734, %v1791
        %v1843 = vmul.f32 %v1738, %v1791
        %v1844 = vmul.f32 %v1742, %v1791
        %v1845 = vmul.f32 %v1746, %v1791
        %v1846 = vmul.f32 %v1750, %v1791
        %v1847 = vmul.f32 %v1754, %v1791
        %v1848 = vmul.f32 %v1758, %v1791
        %v1849 = vmul.f32 %v1762, %v1791
        %v1850 = vmul.f32 %v1766, %v1791
        %v1851 = vmul.f32 %v1770, %v1791
        %v1852 = vmul.f32 %v1774, %v1791
        %v1853 = vmul.f32 %v1778, %v1791
        %v1854 = vmul.f32 %v1782, %v1791
        %v1855 = vmul.f32 %v1786, %v1791
        %v1856 = vadd.f32 %v1467, %v1792
        %v1857 = vadd.f32 %v1468, %v1793
        %v1858 = vadd.f32 %v1469, %v1794
        %v1859 = vadd.f32 %v1470, %v1795
        %v1860 = vadd.f32 %v1471, %v1796
        %v1861 = vadd.f32 %v1472, %v1797
        %v1862 = vadd.f32 %v1473, %v1798
        %v1863 = vadd.f32 %v1474, %v1799
        %v1864 = vadd.f32 %v1475, %v1800
        %v1865 = vadd.f32 %v1476, %v1801
        %v1866 = vadd.f32 %v1477, %v1802
        %v1867 = vadd.f32 %v1478, %v1803
        %v1868 = vadd.f32 %v1479, %v1804
        %v1869 = vadd.f32 %v1480, %v1805
        %v1870 = vadd.f32 %v1481, %v1806
        %v1871 = vadd.f32 %v1482, %v1807
        %v1872 = vadd.f32 %v1483, %v1808
        %v1873 = vadd.f32 %v1484, %v1809
        %v1874 = vadd.f32 %v1485, %v1810
        %v1875 = vadd.f32 %v1486, %v1811
        %v1876 = vadd.f32 %v1487, %v1812
        %v1877 = vadd.f32 %v1488, %v1813
        %v1878 = vadd.f32 %v1489, %v1814
        %v1879 = vadd.f32 %v1490, %v1815
        %v1880 = vadd.f32 %v1491, %v1816
        %v1881 = vadd.f32 %v1492, %v1817
        %v1882 = vadd.f32 %v1493, %v1818
        %v1883 = vadd.f32 %v1494, %v1819
        %v1884 = vadd.f32 %v1495, %v1820
        %v1885 = vadd.f32 %v1496, %v1821
        %v1886 = vadd.f32 %v1497, %v1822
        %v1887 = vadd.f32 %v1498, %v1823
        %v1888 = vadd.f32 %v1499, %v1824
        %v1889 = vadd.f32 %v1500, %v1825
        %v1890 = vadd.f32 %v1501, %v1826
        %v1891 = vadd.f32 %v1502, %v1827
        %v1892 = vadd.f32 %v1503, %v1828
        %v1893 = vadd.f32 %v1504, %v1829
        %v1894 = vadd.f32 %v1505, %v1830
        %v1895 = vadd.f32 %v1506, %v1831
        %v1896 = vadd.f32 %v1507, %v1832
        %v1897 = vadd.f32 %v1508, %v1833
        %v1898 = vadd.f32 %v1509, %v1834
        %v1899 = vadd.f32 %v1510, %v1835
        %v1900 = vadd.f32 %v1511, %v1836
        %v1901 = vadd.f32 %v1512, %v1837
        %v1902 = vadd.f32 %v1513, %v1838
        %v1903 = vadd.f32 %v1514, %v1839
        %v1904 = vadd.f32 %v1515, %v1840
        %v1905 = vadd.f32 %v1516, %v1841
        %v1906 = vadd.f32 %v1517, %v1842
        %v1907 = vadd.f32 %v1518, %v1843
        %v1908 = vadd.f32 %v1519, %v1844
        %v1909 = vadd.f32 %v1520, %v1845
        %v1910 = vadd.f32 %v1521, %v1846
        %v1911 = vadd.f32 %v1522, %v1847
        %v1912 = vadd.f32 %v1523, %v1848
        %v1913 = vadd.f32 %v1524, %v1849
        %v1914 = vadd.f32 %v1525, %v1850
        %v1915 = vadd.f32 %v1526, %v1851
        %v1916 = vadd.f32 %v1527, %v1852
        %v1917 = vadd.f32 %v1528, %v1853
        %v1918 = vadd.f32 %v1529, %v1854
        %v1919 = vadd.f32 %v1530, %v1855
        %v1920 = vld [vmem:[%s2] sm:$0x1]
        %v1922 = vlaneseq
        %v1923 = vshrl.u32 %v1922, 7
        %v1924 = vsub.s32 0, %v1923
        %v1925 = vrot.slane %v1920, %v1924
        %v1927 = vadd.f32 %v1856, %v1925
        %v1928 = vadd.f32 %v1857, %v1925
        %v1929 = vadd.f32 %v1858, %v1925
        %v1930 = vadd.f32 %v1859, %v1925
        %v1931 = vadd.f32 %v1860, %v1925
        %v1932 = vadd.f32 %v1861, %v1925
        %v1933 = vadd.f32 %v1862, %v1925
        %v1934 = vadd.f32 %v1863, %v1925
        %v1935 = vadd.f32 %v1864, %v1925
        %v1936 = vadd.f32 %v1865, %v1925
        %v1937 = vadd.f32 %v1866, %v1925
        %v1938 = vadd.f32 %v1867, %v1925
        %v1939 = vadd.f32 %v1868, %v1925
        %v1940 = vadd.f32 %v1869, %v1925
        %v1941 = vadd.f32 %v1870, %v1925
        %v1942 = vadd.f32 %v1871, %v1925
        %v1943 = vadd.f32 %v1872, %v1925
        %v1944 = vadd.f32 %v1873, %v1925
        %v1945 = vadd.f32 %v1874, %v1925
        %v1946 = vadd.f32 %v1875, %v1925
        %v1947 = vadd.f32 %v1876, %v1925
        %v1948 = vadd.f32 %v1877, %v1925
        %v1949 = vadd.f32 %v1878, %v1925
        %v1950 = vadd.f32 %v1879, %v1925
        %v1951 = vadd.f32 %v1880, %v1925
        %v1952 = vadd.f32 %v1881, %v1925
        %v1953 = vadd.f32 %v1882, %v1925
        %v1954 = vadd.f32 %v1883, %v1925
        %v1955 = vadd.f32 %v1884, %v1925
        %v1956 = vadd.f32 %v1885, %v1925
        %v1957 = vadd.f32 %v1886, %v1925
        %v1958 = vadd.f32 %v1887, %v1925
        %v1959 = vadd.f32 %v1888, %v1925
        %v1960 = vadd.f32 %v1889, %v1925
        %v1961 = vadd.f32 %v1890, %v1925
        %v1962 = vadd.f32 %v1891, %v1925
        %v1963 = vadd.f32 %v1892, %v1925
        %v1964 = vadd.f32 %v1893, %v1925
        %v1965 = vadd.f32 %v1894, %v1925
        %v1966 = vadd.f32 %v1895, %v1925
        %v1967 = vadd.f32 %v1896, %v1925
        %v1968 = vadd.f32 %v1897, %v1925
        %v1969 = vadd.f32 %v1898, %v1925
        %v1970 = vadd.f32 %v1899, %v1925
        %v1971 = vadd.f32 %v1900, %v1925
        %v1972 = vadd.f32 %v1901, %v1925
        %v1973 = vadd.f32 %v1902, %v1925
        %v1974 = vadd.f32 %v1903, %v1925
        %v1975 = vadd.f32 %v1904, %v1925
        %v1976 = vadd.f32 %v1905, %v1925
        %v1977 = vadd.f32 %v1906, %v1925
        %v1978 = vadd.f32 %v1907, %v1925
        %v1979 = vadd.f32 %v1908, %v1925
        %v1980 = vadd.f32 %v1909, %v1925
        %v1981 = vadd.f32 %v1910, %v1925
        %v1982 = vadd.f32 %v1911, %v1925
        %v1983 = vadd.f32 %v1912, %v1925
        %v1984 = vadd.f32 %v1913, %v1925
        %v1985 = vadd.f32 %v1914, %v1925
        %v1986 = vadd.f32 %v1915, %v1925
        %v1987 = vadd.f32 %v1916, %v1925
        %v1988 = vadd.f32 %v1917, %v1925
        %v1989 = vadd.f32 %v1918, %v1925
        %v1990 = vadd.f32 %v1919, %v1925
        %v1991 = vmax.f32 %v1927, 0.0
        %v1992 = vmax.f32 %v1928, 0.0
        %v1993 = vmax.f32 %v1929, 0.0
        %v1994 = vmax.f32 %v1930, 0.0
        %v1995 = vmax.f32 %v1931, 0.0
        %v1996 = vmax.f32 %v1932, 0.0
        %v1997 = vmax.f32 %v1933, 0.0
        %v1998 = vmax.f32 %v1934, 0.0
        %v1999 = vmax.f32 %v1935, 0.0
        %v2000 = vmax.f32 %v1936, 0.0
        %v2001 = vmax.f32 %v1937, 0.0
        %v2002 = vmax.f32 %v1938, 0.0
        %v2003 = vmax.f32 %v1939, 0.0
        %v2004 = vmax.f32 %v1940, 0.0
        %v2005 = vmax.f32 %v1941, 0.0
        %v2006 = vmax.f32 %v1942, 0.0
        %v2007 = vmax.f32 %v1943, 0.0
        %v2008 = vmax.f32 %v1944, 0.0
        %v2009 = vmax.f32 %v1945, 0.0
        %v2010 = vmax.f32 %v1946, 0.0
        %v2011 = vmax.f32 %v1947, 0.0
        %v2012 = vmax.f32 %v1948, 0.0
        %v2013 = vmax.f32 %v1949, 0.0
        %v2014 = vmax.f32 %v1950, 0.0
        %v2015 = vmax.f32 %v1951, 0.0
        %v2016 = vmax.f32 %v1952, 0.0
        %v2017 = vmax.f32 %v1953, 0.0
        %v2018 = vmax.f32 %v1954, 0.0
        %v2019 = vmax.f32 %v1955, 0.0
        %v2020 = vmax.f32 %v1956, 0.0
        %v2021 = vmax.f32 %v1957, 0.0
        %v2022 = vmax.f32 %v1958, 0.0
        %v2023 = vmax.f32 %v1959, 0.0
        %v2024 = vmax.f32 %v1960, 0.0
        %v2025 = vmax.f32 %v1961, 0.0
        %v2026 = vmax.f32 %v1962, 0.0
        %v2027 = vmax.f32 %v1963, 0.0
        %v2028 = vmax.f32 %v1964, 0.0
        %v2029 = vmax.f32 %v1965, 0.0
        %v2030 = vmax.f32 %v1966, 0.0
        %v2031 = vmax.f32 %v1967, 0.0
        %v2032 = vmax.f32 %v1968, 0.0
        %v2033 = vmax.f32 %v1969, 0.0
        %v2034 = vmax.f32 %v1970, 0.0
        %v2035 = vmax.f32 %v1971, 0.0
        %v2036 = vmax.f32 %v1972, 0.0
        %v2037 = vmax.f32 %v1973, 0.0
        %v2038 = vmax.f32 %v1974, 0.0
        %v2039 = vmax.f32 %v1975, 0.0
        %v2040 = vmax.f32 %v1976, 0.0
        %v2041 = vmax.f32 %v1977, 0.0
        %v2042 = vmax.f32 %v1978, 0.0
        %v2043 = vmax.f32 %v1979, 0.0
        %v2044 = vmax.f32 %v1980, 0.0
        %v2045 = vmax.f32 %v1981, 0.0
        %v2046 = vmax.f32 %v1982, 0.0
        %v2047 = vmax.f32 %v1983, 0.0
        %v2048 = vmax.f32 %v1984, 0.0
        %v2049 = vmax.f32 %v1985, 0.0
        %v2050 = vmax.f32 %v1986, 0.0
        %v2051 = vmax.f32 %v1987, 0.0
        %v2052 = vmax.f32 %v1988, 0.0
        %v2053 = vmax.f32 %v1989, 0.0
        %v2054 = vmax.f32 %v1990, 0.0
        %v2055 = vpack.c.bf16 %v1992, %v1991
        %v2056 = vpack.c.bf16 %v1994, %v1993
        %v2057 = vpack.c.bf16 %v1996, %v1995
        %v2058 = vpack.c.bf16 %v1998, %v1997
        %v2059 = vpack.c.bf16 %v2000, %v1999
        %v2060 = vpack.c.bf16 %v2002, %v2001
        %v2061 = vpack.c.bf16 %v2004, %v2003
        %v2062 = vpack.c.bf16 %v2006, %v2005
        %v2063 = vpack.c.bf16 %v2008, %v2007
        %v2064 = vpack.c.bf16 %v2010, %v2009
        %v2065 = vpack.c.bf16 %v2012, %v2011
        %v2066 = vpack.c.bf16 %v2014, %v2013
        %v2067 = vpack.c.bf16 %v2016, %v2015
        %v2068 = vpack.c.bf16 %v2018, %v2017
        %v2069 = vpack.c.bf16 %v2020, %v2019
        %v2070 = vpack.c.bf16 %v2022, %v2021
        %v2071 = vpack.c.bf16 %v2024, %v2023
        %v2072 = vpack.c.bf16 %v2026, %v2025
        %v2073 = vpack.c.bf16 %v2028, %v2027
        %v2074 = vpack.c.bf16 %v2030, %v2029
        %v2075 = vpack.c.bf16 %v2032, %v2031
        %v2076 = vpack.c.bf16 %v2034, %v2033
        %v2077 = vpack.c.bf16 %v2036, %v2035
        %v2078 = vpack.c.bf16 %v2038, %v2037
        %v2079 = vpack.c.bf16 %v2040, %v2039
        %v2080 = vpack.c.bf16 %v2042, %v2041
        %v2081 = vpack.c.bf16 %v2044, %v2043
        %v2082 = vpack.c.bf16 %v2046, %v2045
        %v2083 = vpack.c.bf16 %v2048, %v2047
        %v2084 = vpack.c.bf16 %v2050, %v2049
        %v2085 = vpack.c.bf16 %v2052, %v2051
        %v2086 = vpack.c.bf16 %v2054, %v2053
        %v2087 = vld [vmem:[%s3] sm:$0xf]
        %v2088 = vld [vmem:[%s3 + $0x4] sm:$0xf]
        %v2089 = vld [vmem:[%s3 + $0x8] sm:$0xf]
        %v2090 = vld [vmem:[%s3 + $0xc] sm:$0xf]
        %v2091 = vld [vmem:[%s3 + $0x10] sm:$0xf]
        %v2092 = vld [vmem:[%s3 + $0x14] sm:$0xf]
        %v2093 = vld [vmem:[%s3 + $0x18] sm:$0xf]
        %v2094 = vld [vmem:[%s3 + $0x1c] sm:$0xf]
        %v2095 = vld [vmem:[%s3 + $0x20] sm:$0xf]
        %v2096 = vld [vmem:[%s3 + $0x24] sm:$0xf]
        %v2097 = vld [vmem:[%s3 + $0x28] sm:$0xf]
        %v2098 = vld [vmem:[%s3 + $0x2c] sm:$0xf]
        %v2099 = vld [vmem:[%s3 + $0x30] sm:$0xf]
        %v2100 = vld [vmem:[%s3 + $0x34] sm:$0xf]
        %v2101 = vld [vmem:[%s3 + $0x38] sm:$0xf]
        %v2102 = vld [vmem:[%s3 + $0x3c] sm:$0xf]
        %v2103 = vld [vmem:[#allocation3] sm:$0x1]
        %v2105 = vlaneseq
        %v2106 = vshrl.u32 %v2105, 7
        %v2107 = vsub.s32 0, %v2106
        %v2108 = vrot.slane %v2103, %v2107
        %v2126 = vunpack.c.l.b16 %v2087
        %v2127 = vunpack.c.l.b16 %v2088
        %v2128 = vunpack.c.l.b16 %v2089
        %v2129 = vunpack.c.l.b16 %v2090
        %v2130 = vunpack.c.l.b16 %v2091
        %v2131 = vunpack.c.l.b16 %v2092
        %v2132 = vunpack.c.l.b16 %v2093
        %v2133 = vunpack.c.l.b16 %v2094
        %v2134 = vunpack.c.l.b16 %v2095
        %v2135 = vunpack.c.l.b16 %v2096
        %v2136 = vunpack.c.l.b16 %v2097
        %v2137 = vunpack.c.l.b16 %v2098
        %v2138 = vunpack.c.l.b16 %v2099
        %v2139 = vunpack.c.l.b16 %v2100
        %v2140 = vunpack.c.l.b16 %v2101
        %v2141 = vunpack.c.l.b16 %v2102
        %v2142 = vpack.c.b16 %v2127, %v2126
        %v2143 = vpack.c.b16 %v2129, %v2128
        %v2144 = vpack.c.b16 %v2131, %v2130
        %v2145 = vpack.c.b16 %v2133, %v2132
        %v2146 = vpack.c.b16 %v2135, %v2134
        %v2147 = vpack.c.b16 %v2137, %v2136
        %v2148 = vpack.c.b16 %v2139, %v2138
        %v2149 = vpack.c.b16 %v2141, %v2140
        %2158 = vmatprep.subr.bf16.mxu0 0
        %2159 = vmatpush1.bf16.msra.mxu0 %v2149
        %2160 = vmatprep.subr.bf16.mxu0 0
        %2161 = vmatpush1.bf16.msra.mxu0 %v2148
        %2162 = vmatprep.subr.bf16.mxu0 0
        %2163 = vmatpush1.bf16.msra.mxu0 %v2147
        %2164 = vmatprep.subr.bf16.mxu0 0
        %2165 = vmatpush1.bf16.msra.mxu0 %v2146
        %2166 = vmatprep.subr.bf16.mxu0 0
        %2167 = vmatpush1.bf16.msra.mxu0 %v2145
        %2168 = vmatprep.subr.bf16.mxu0 0
        %2169 = vmatpush1.bf16.msra.mxu0 %v2144
        %2170 = vmatprep.subr.bf16.mxu0 0
        %2171 = vmatpush1.bf16.msra.mxu0 %v2143
        %2172 = vmatprep.subr.bf16.mxu0 0
        %2173 = vmatpush1.bf16.msra.mxu0 %v2142
        %2174 = vmatprep.subr.bf16.mxu0 0
        %2175 = vmatpush2.bf16.msra.mxu0 0
        %2176 = vmatprep.subr.bf16.mxu0 0
        %2177 = vmatpush2.bf16.msra.mxu0 0
        %2178 = vmatprep.subr.bf16.mxu0 0
        %2179 = vmatpush2.bf16.msra.mxu0 0
        %2180 = vmatprep.subr.bf16.mxu0 0
        %2181 = vmatpush2.bf16.msra.mxu0 0
        %2182 = vmatprep.subr.bf16.mxu0 0
        %2183 = vmatpush2.bf16.msra.mxu0 0
        %2184 = vmatprep.subr.bf16.mxu0 0
        %2185 = vmatpush2.bf16.msra.mxu0 0
        %2186 = vmatprep.subr.bf16.mxu0 0
        %2187 = vmatpush2.bf16.msra.mxu0 0
        %2188 = vmatprep.subr.bf16.mxu0 0
        %2189 = vmatpush2.bf16.msra.mxu0 0
        %2190 = vmatprep.mubr.bf16.mxu0 0
        %2191 = vmatmul.mubr.bf16.gmra.mxu0 %v2055
        %v2192 = vpop.f32.mrf.mxu0
        %v2193 = vadd.f32 %v2108, %v2192
        %v2194 = vpop.f32.mrf.mxu0
        %v2195 = vpop.f32.mrf.mxu0
        %v2196 = vadd.f32 %v2108, %v2195
        %v2197 = vpop.f32.mrf.mxu0
        %2198 = vmatprep.mubr.bf16.mxu0 0
        %2199 = vmatmul.mubr.bf16.gmra.mxu0 %v2056
        %v2200 = vpop.f32.mrf.mxu0
        %v2201 = vadd.f32 %v2108, %v2200
        %v2202 = vpop.f32.mrf.mxu0
        %v2203 = vpop.f32.mrf.mxu0
        %v2204 = vadd.f32 %v2108, %v2203
        %v2205 = vpop.f32.mrf.mxu0
        %2206 = vmatprep.mubr.bf16.mxu0 0
        %2207 = vmatmul.mubr.bf16.gmra.mxu0 %v2057
        %v2208 = vpop.f32.mrf.mxu0
        %v2209 = vadd.f32 %v2108, %v2208
        %v2210 = vpop.f32.mrf.mxu0
        %v2211 = vpop.f32.mrf.mxu0
        %v2212 = vadd.f32 %v2108, %v2211
        %v2213 = vpop.f32.mrf.mxu0
        %2214 = vmatprep.mubr.bf16.mxu0 0
        %2215 = vmatmul.mubr.bf16.gmra.mxu0 %v2058
        %v2216 = vpop.f32.mrf.mxu0
        %v2217 = vadd.f32 %v2108, %v2216
        %v2218 = vpop.f32.mrf.mxu0
        %v2219 = vpop.f32.mrf.mxu0
        %v2220 = vadd.f32 %v2108, %v2219
        %v2221 = vpop.f32.mrf.mxu0
        %2222 = vmatprep.mubr.bf16.mxu0 0
        %2223 = vmatmul.mubr.bf16.gmra.mxu0 %v2059
        %v2224 = vpop.f32.mrf.mxu0
        %v2225 = vadd.f32 %v2108, %v2224
        %v2226 = vpop.f32.mrf.mxu0
        %v2227 = vpop.f32.mrf.mxu0
        %v2228 = vadd.f32 %v2108, %v2227
        %v2229 = vpop.f32.mrf.mxu0
        %2230 = vmatprep.mubr.bf16.mxu0 0
        %2231 = vmatmul.mubr.bf16.gmra.mxu0 %v2060
        %v2232 = vpop.f32.mrf.mxu0
        %v2233 = vadd.f32 %v2108, %v2232
        %v2234 = vpop.f32.mrf.mxu0
        %v2235 = vpop.f32.mrf.mxu0
        %v2236 = vadd.f32 %v2108, %v2235
        %v2237 = vpop.f32.mrf.mxu0
        %2238 = vmatprep.mubr.bf16.mxu0 0
        %2239 = vmatmul.mubr.bf16.gmra.mxu0 %v2061
        %v2240 = vpop.f32.mrf.mxu0
        %v2241 = vadd.f32 %v2108, %v2240
        %v2242 = vpop.f32.mrf.mxu0
        %v2243 = vpop.f32.mrf.mxu0
        %v2244 = vadd.f32 %v2108, %v2243
        %v2245 = vpop.f32.mrf.mxu0
        %2246 = vmatprep.mubr.bf16.mxu0 0
        %2247 = vmatmul.mubr.bf16.gmra.mxu0 %v2062
        %v2248 = vpop.f32.mrf.mxu0
        %v2249 = vadd.f32 %v2108, %v2248
        %v2250 = vpop.f32.mrf.mxu0
        %v2251 = vpop.f32.mrf.mxu0
        %v2252 = vadd.f32 %v2108, %v2251
        %v2253 = vpop.f32.mrf.mxu0
        %2254 = vmatprep.mubr.bf16.mxu0 0
        %2255 = vmatmul.mubr.bf16.gmra.mxu0 %v2063
        %v2256 = vpop.f32.mrf.mxu0
        %v2257 = vadd.f32 %v2108, %v2256
        %v2258 = vpop.f32.mrf.mxu0
        %v2259 = vpop.f32.mrf.mxu0
        %v2260 = vadd.f32 %v2108, %v2259
        %v2261 = vpop.f32.mrf.mxu0
        %2262 = vmatprep.mubr.bf16.mxu0 0
        %2263 = vmatmul.mubr.bf16.gmra.mxu0 %v2064
        %v2264 = vpop.f32.mrf.mxu0
        %v2265 = vadd.f32 %v2108, %v2264
        %v2266 = vpop.f32.mrf.mxu0
        %v2267 = vpop.f32.mrf.mxu0
        %v2268 = vadd.f32 %v2108, %v2267
        %v2269 = vpop.f32.mrf.mxu0
        %2270 = vmatprep.mubr.bf16.mxu0 0
        %2271 = vmatmul.mubr.bf16.gmra.mxu0 %v2065
        %v2272 = vpop.f32.mrf.mxu0
        %v2273 = vadd.f32 %v2108, %v2272
        %v2274 = vpop.f32.mrf.mxu0
        %v2275 = vpop.f32.mrf.mxu0
        %v2276 = vadd.f32 %v2108, %v2275
        %v2277 = vpop.f32.mrf.mxu0
        %2278 = vmatprep.mubr.bf16.mxu0 0
        %2279 = vmatmul.mubr.bf16.gmra.mxu0 %v2066
        %v2280 = vpop.f32.mrf.mxu0
        %v2281 = vadd.f32 %v2108, %v2280
        %v2282 = vpop.f32.mrf.mxu0
        %v2283 = vpop.f32.mrf.mxu0
        %v2284 = vadd.f32 %v2108, %v2283
        %v2285 = vpop.f32.mrf.mxu0
        %2286 = vmatprep.mubr.bf16.mxu0 0
        %2287 = vmatmul.mubr.bf16.gmra.mxu0 %v2067
        %v2288 = vpop.f32.mrf.mxu0
        %v2289 = vadd.f32 %v2108, %v2288
        %v2290 = vpop.f32.mrf.mxu0
        %v2291 = vpop.f32.mrf.mxu0
        %v2292 = vadd.f32 %v2108, %v2291
        %v2293 = vpop.f32.mrf.mxu0
        %2294 = vmatprep.mubr.bf16.mxu0 0
        %2295 = vmatmul.mubr.bf16.gmra.mxu0 %v2068
        %v2296 = vpop.f32.mrf.mxu0
        %v2297 = vadd.f32 %v2108, %v2296
        %v2298 = vpop.f32.mrf.mxu0
        %v2299 = vpop.f32.mrf.mxu0
        %v2300 = vadd.f32 %v2108, %v2299
        %v2301 = vpop.f32.mrf.mxu0
        %2302 = vmatprep.mubr.bf16.mxu0 0
        %2303 = vmatmul.mubr.bf16.gmra.mxu0 %v2069
        %v2304 = vpop.f32.mrf.mxu0
        %v2305 = vadd.f32 %v2108, %v2304
        %v2306 = vpop.f32.mrf.mxu0
        %v2307 = vpop.f32.mrf.mxu0
        %v2308 = vadd.f32 %v2108, %v2307
        %v2309 = vpop.f32.mrf.mxu0
        %2310 = vmatprep.mubr.bf16.mxu0 0
        %2311 = vmatmul.mubr.bf16.gmra.mxu0 %v2070
        %v2312 = vpop.f32.mrf.mxu0
        %v2313 = vadd.f32 %v2108, %v2312
        %v2314 = vpop.f32.mrf.mxu0
        %v2315 = vpop.f32.mrf.mxu0
        %v2316 = vadd.f32 %v2108, %v2315
        %v2317 = vpop.f32.mrf.mxu0
        %2318 = vmatprep.mubr.bf16.mxu0 0
        %2319 = vmatmul.mubr.bf16.gmra.mxu0 %v2071
        %v2320 = vpop.f32.mrf.mxu0
        %v2321 = vadd.f32 %v2108, %v2320
        %v2322 = vpop.f32.mrf.mxu0
        %v2323 = vpop.f32.mrf.mxu0
        %v2324 = vadd.f32 %v2108, %v2323
        %v2325 = vpop.f32.mrf.mxu0
        %2326 = vmatprep.mubr.bf16.mxu0 0
        %2327 = vmatmul.mubr.bf16.gmra.mxu0 %v2072
        %v2328 = vpop.f32.mrf.mxu0
        %v2329 = vadd.f32 %v2108, %v2328
        %v2330 = vpop.f32.mrf.mxu0
        %v2331 = vpop.f32.mrf.mxu0
        %v2332 = vadd.f32 %v2108, %v2331
        %v2333 = vpop.f32.mrf.mxu0
        %2334 = vmatprep.mubr.bf16.mxu0 0
        %2335 = vmatmul.mubr.bf16.gmra.mxu0 %v2073
        %v2336 = vpop.f32.mrf.mxu0
        %v2337 = vadd.f32 %v2108, %v2336
        %v2338 = vpop.f32.mrf.mxu0
        %v2339 = vpop.f32.mrf.mxu0
        %v2340 = vadd.f32 %v2108, %v2339
        %v2341 = vpop.f32.mrf.mxu0
        %2342 = vmatprep.mubr.bf16.mxu0 0
        %2343 = vmatmul.mubr.bf16.gmra.mxu0 %v2074
        %v2344 = vpop.f32.mrf.mxu0
        %v2345 = vadd.f32 %v2108, %v2344
        %v2346 = vpop.f32.mrf.mxu0
        %v2347 = vpop.f32.mrf.mxu0
        %v2348 = vadd.f32 %v2108, %v2347
        %v2349 = vpop.f32.mrf.mxu0
        %2350 = vmatprep.mubr.bf16.mxu0 0
        %2351 = vmatmul.mubr.bf16.gmra.mxu0 %v2075
        %v2352 = vpop.f32.mrf.mxu0
        %v2353 = vadd.f32 %v2108, %v2352
        %v2354 = vpop.f32.mrf.mxu0
        %v2355 = vpop.f32.mrf.mxu0
        %v2356 = vadd.f32 %v2108, %v2355
        %v2357 = vpop.f32.mrf.mxu0
        %2358 = vmatprep.mubr.bf16.mxu0 0
        %2359 = vmatmul.mubr.bf16.gmra.mxu0 %v2076
        %v2360 = vpop.f32.mrf.mxu0
        %v2361 = vadd.f32 %v2108, %v2360
        %v2362 = vpop.f32.mrf.mxu0
        %v2363 = vpop.f32.mrf.mxu0
        %v2364 = vadd.f32 %v2108, %v2363
        %v2365 = vpop.f32.mrf.mxu0
        %2366 = vmatprep.mubr.bf16.mxu0 0
        %2367 = vmatmul.mubr.bf16.gmra.mxu0 %v2077
        %v2368 = vpop.f32.mrf.mxu0
        %v2369 = vadd.f32 %v2108, %v2368
        %v2370 = vpop.f32.mrf.mxu0
        %v2371 = vpop.f32.mrf.mxu0
        %v2372 = vadd.f32 %v2108, %v2371
        %v2373 = vpop.f32.mrf.mxu0
        %2374 = vmatprep.mubr.bf16.mxu0 0
        %2375 = vmatmul.mubr.bf16.gmra.mxu0 %v2078
        %v2376 = vpop.f32.mrf.mxu0
        %v2377 = vadd.f32 %v2108, %v2376
        %v2378 = vpop.f32.mrf.mxu0
        %v2379 = vpop.f32.mrf.mxu0
        %v2380 = vadd.f32 %v2108, %v2379
        %v2381 = vpop.f32.mrf.mxu0
        %2382 = vmatprep.mubr.bf16.mxu0 0
        %2383 = vmatmul.mubr.bf16.gmra.mxu0 %v2079
        %v2384 = vpop.f32.mrf.mxu0
        %v2385 = vadd.f32 %v2108, %v2384
        %v2386 = vpop.f32.mrf.mxu0
        %v2387 = vpop.f32.mrf.mxu0
        %v2388 = vadd.f32 %v2108, %v2387
        %v2389 = vpop.f32.mrf.mxu0
        %2390 = vmatprep.mubr.bf16.mxu0 0
        %2391 = vmatmul.mubr.bf16.gmra.mxu0 %v2080
        %v2392 = vpop.f32.mrf.mxu0
        %v2393 = vadd.f32 %v2108, %v2392
        %v2394 = vpop.f32.mrf.mxu0
        %v2395 = vpop.f32.mrf.mxu0
        %v2396 = vadd.f32 %v2108, %v2395
        %v2397 = vpop.f32.mrf.mxu0
        %2398 = vmatprep.mubr.bf16.mxu0 0
        %2399 = vmatmul.mubr.bf16.gmra.mxu0 %v2081
        %v2400 = vpop.f32.mrf.mxu0
        %v2401 = vadd.f32 %v2108, %v2400
        %v2402 = vpop.f32.mrf.mxu0
        %v2403 = vpop.f32.mrf.mxu0
        %v2404 = vadd.f32 %v2108, %v2403
        %v2405 = vpop.f32.mrf.mxu0
        %2406 = vmatprep.mubr.bf16.mxu0 0
        %2407 = vmatmul.mubr.bf16.gmra.mxu0 %v2082
        %v2408 = vpop.f32.mrf.mxu0
        %v2409 = vadd.f32 %v2108, %v2408
        %v2410 = vpop.f32.mrf.mxu0
        %v2411 = vpop.f32.mrf.mxu0
        %v2412 = vadd.f32 %v2108, %v2411
        %v2413 = vpop.f32.mrf.mxu0
        %2414 = vmatprep.mubr.bf16.mxu0 0
        %2415 = vmatmul.mubr.bf16.gmra.mxu0 %v2083
        %v2416 = vpop.f32.mrf.mxu0
        %v2417 = vadd.f32 %v2108, %v2416
        %v2418 = vpop.f32.mrf.mxu0
        %v2419 = vpop.f32.mrf.mxu0
        %v2420 = vadd.f32 %v2108, %v2419
        %v2421 = vpop.f32.mrf.mxu0
        %2422 = vmatprep.mubr.bf16.mxu0 0
        %2423 = vmatmul.mubr.bf16.gmra.mxu0 %v2084
        %v2424 = vpop.f32.mrf.mxu0
        %v2425 = vadd.f32 %v2108, %v2424
        %v2426 = vpop.f32.mrf.mxu0
        %v2427 = vpop.f32.mrf.mxu0
        %v2428 = vadd.f32 %v2108, %v2427
        %v2429 = vpop.f32.mrf.mxu0
        %2430 = vmatprep.mubr.bf16.mxu0 0
        %2431 = vmatmul.mubr.bf16.gmra.mxu0 %v2085
        %v2432 = vpop.f32.mrf.mxu0
        %v2433 = vadd.f32 %v2108, %v2432
        %v2434 = vpop.f32.mrf.mxu0
        %v2435 = vpop.f32.mrf.mxu0
        %v2436 = vadd.f32 %v2108, %v2435
        %v2437 = vpop.f32.mrf.mxu0
        %2438 = vmatprep.mubr.bf16.mxu0 0
        %2439 = vmatmul.mubr.bf16.gmra.mxu0 %v2086
        %v2440 = vpop.f32.mrf.mxu0
        %v2441 = vadd.f32 %v2108, %v2440
        %v2442 = vpop.f32.mrf.mxu0
        %v2443 = vpop.f32.mrf.mxu0
        %v2444 = vadd.f32 %v2108, %v2443
        %v2445 = vpop.f32.mrf.mxu0
        %2446 = vdwg.mxu0
        %v2447 = vmax.f32 %v2193, 0.0
        %v2448 = vmax.f32 %v2196, 0.0
        %v2449 = vmax.f32 %v2201, 0.0
        %v2450 = vmax.f32 %v2204, 0.0
        %v2451 = vmax.f32 %v2209, 0.0
        %v2452 = vmax.f32 %v2212, 0.0
        %v2453 = vmax.f32 %v2217, 0.0
        %v2454 = vmax.f32 %v2220, 0.0
        %v2455 = vmax.f32 %v2225, 0.0
        %v2456 = vmax.f32 %v2228, 0.0
        %v2457 = vmax.f32 %v2233, 0.0
        %v2458 = vmax.f32 %v2236, 0.0
        %v2459 = vmax.f32 %v2241, 0.0
        %v2460 = vmax.f32 %v2244, 0.0
        %v2461 = vmax.f32 %v2249, 0.0
        %v2462 = vmax.f32 %v2252, 0.0
        %v2463 = vmax.f32 %v2257, 0.0
        %v2464 = vmax.f32 %v2260, 0.0
        %v2465 = vmax.f32 %v2265, 0.0
        %v2466 = vmax.f32 %v2268, 0.0
        %v2467 = vmax.f32 %v2273, 0.0
        %v2468 = vmax.f32 %v2276, 0.0
        %v2469 = vmax.f32 %v2281, 0.0
        %v2470 = vmax.f32 %v2284, 0.0
        %v2471 = vmax.f32 %v2289, 0.0
        %v2472 = vmax.f32 %v2292, 0.0
        %v2473 = vmax.f32 %v2297, 0.0
        %v2474 = vmax.f32 %v2300, 0.0
        %v2475 = vmax.f32 %v2305, 0.0
        %v2476 = vmax.f32 %v2308, 0.0
        %v2477 = vmax.f32 %v2313, 0.0
        %v2478 = vmax.f32 %v2316, 0.0
        %v2479 = vmax.f32 %v2321, 0.0
        %v2480 = vmax.f32 %v2324, 0.0
        %v2481 = vmax.f32 %v2329, 0.0
        %v2482 = vmax.f32 %v2332, 0.0
        %v2483 = vmax.f32 %v2337, 0.0
        %v2484 = vmax.f32 %v2340, 0.0
        %v2485 = vmax.f32 %v2345, 0.0
        %v2486 = vmax.f32 %v2348, 0.0
        %v2487 = vmax.f32 %v2353, 0.0
        %v2488 = vmax.f32 %v2356, 0.0
        %v2489 = vmax.f32 %v2361, 0.0
        %v2490 = vmax.f32 %v2364, 0.0
        %v2491 = vmax.f32 %v2369, 0.0
        %v2492 = vmax.f32 %v2372, 0.0
        %v2493 = vmax.f32 %v2377, 0.0
        %v2494 = vmax.f32 %v2380, 0.0
        %v2495 = vmax.f32 %v2385, 0.0
        %v2496 = vmax.f32 %v2388, 0.0
        %v2497 = vmax.f32 %v2393, 0.0
        %v2498 = vmax.f32 %v2396, 0.0
        %v2499 = vmax.f32 %v2401, 0.0
        %v2500 = vmax.f32 %v2404, 0.0
        %v2501 = vmax.f32 %v2409, 0.0
        %v2502 = vmax.f32 %v2412, 0.0
        %v2503 = vmax.f32 %v2417, 0.0
        %v2504 = vmax.f32 %v2420, 0.0
        %v2505 = vmax.f32 %v2425, 0.0
        %v2506 = vmax.f32 %v2428, 0.0
        %v2507 = vmax.f32 %v2433, 0.0
        %v2508 = vmax.f32 %v2436, 0.0
        %v2509 = vmax.f32 %v2441, 0.0
        %v2510 = vmax.f32 %v2444, 0.0
        %v2511 = vpack.c.bf16 %v2448, %v2447
        %v2512 = vpack.c.bf16 %v2450, %v2449
        %v2513 = vpack.c.bf16 %v2452, %v2451
        %v2514 = vpack.c.bf16 %v2454, %v2453
        %v2515 = vpack.c.bf16 %v2456, %v2455
        %v2516 = vpack.c.bf16 %v2458, %v2457
        %v2517 = vpack.c.bf16 %v2460, %v2459
        %v2518 = vpack.c.bf16 %v2462, %v2461
        %v2519 = vpack.c.bf16 %v2464, %v2463
        %v2520 = vpack.c.bf16 %v2466, %v2465
        %v2521 = vpack.c.bf16 %v2468, %v2467
        %v2522 = vpack.c.bf16 %v2470, %v2469
        %v2523 = vpack.c.bf16 %v2472, %v2471
        %v2524 = vpack.c.bf16 %v2474, %v2473
        %v2525 = vpack.c.bf16 %v2476, %v2475
        %v2526 = vpack.c.bf16 %v2478, %v2477
        %v2527 = vpack.c.bf16 %v2480, %v2479
        %v2528 = vpack.c.bf16 %v2482, %v2481
        %v2529 = vpack.c.bf16 %v2484, %v2483
        %v2530 = vpack.c.bf16 %v2486, %v2485
        %v2531 = vpack.c.bf16 %v2488, %v2487
        %v2532 = vpack.c.bf16 %v2490, %v2489
        %v2533 = vpack.c.bf16 %v2492, %v2491
        %v2534 = vpack.c.bf16 %v2494, %v2493
        %v2535 = vpack.c.bf16 %v2496, %v2495
        %v2536 = vpack.c.bf16 %v2498, %v2497
        %v2537 = vpack.c.bf16 %v2500, %v2499
        %v2538 = vpack.c.bf16 %v2502, %v2501
        %v2539 = vpack.c.bf16 %v2504, %v2503
        %v2540 = vpack.c.bf16 %v2506, %v2505
        %v2541 = vpack.c.bf16 %v2508, %v2507
        %v2542 = vpack.c.bf16 %v2510, %v2509
        %v2543 = vld [vmem:[#allocation6] sm:$0xff]
        %v2544 = vld [vmem:[#allocation6 + $0x8] sm:$0xff]
        %v2545 = vld [vmem:[#allocation6 + $0x10] sm:$0xff]
        %v2546 = vld [vmem:[#allocation6 + $0x18] sm:$0xff]
        %v2547 = vld [vmem:[#allocation6 + $0x20] sm:$0xff]
        %v2548 = vld [vmem:[#allocation6 + $0x28] sm:$0xff]
        %v2549 = vld [vmem:[#allocation6 + $0x30] sm:$0xff]
        %v2550 = vld [vmem:[#allocation6 + $0x38] sm:$0xff]
        %v2551 = vld [vmem:[#allocation6 + $0x40] sm:$0xff]
        %v2552 = vld [vmem:[#allocation6 + $0x48] sm:$0xff]
        %v2553 = vld [vmem:[#allocation6 + $0x50] sm:$0xff]
        %v2554 = vld [vmem:[#allocation6 + $0x58] sm:$0xff]
        %v2555 = vld [vmem:[#allocation6 + $0x60] sm:$0xff]
        %v2556 = vld [vmem:[#allocation6 + $0x68] sm:$0xff]
        %v2557 = vld [vmem:[#allocation6 + $0x70] sm:$0xff]
        %v2558 = vld [vmem:[#allocation6 + $0x78] sm:$0xff]
        %v2559 = vld [vmem:[%s6] sm:$0x3]
        %v2561 = vlaneseq
        %v2562 = vshrl.u32 %v2561, 7
        %v2563 = vsub.s32 0, %v2562
        %v2564 = vrot.slane %v2559, %v2563
        %v2565 = vlaneseq
        %v2566 = vshrl.u32 %v2565, 7
        %v2567 = vsub.s32 1, %v2566
        %v2568 = vrot.slane %v2559, %v2567
        %v2587 = vunpack.c.l.b16 %v2543
        %v2588 = vunpack.c.h.b16 %v2543
        %v2589 = vunpack.c.l.b16 %v2544
        %v2590 = vunpack.c.h.b16 %v2544
        %v2591 = vunpack.c.l.b16 %v2545
        %v2592 = vunpack.c.h.b16 %v2545
        %v2593 = vunpack.c.l.b16 %v2546
        %v2594 = vunpack.c.h.b16 %v2546
        %v2595 = vunpack.c.l.b16 %v2547
        %v2596 = vunpack.c.h.b16 %v2547
        %v2597 = vunpack.c.l.b16 %v2548
        %v2598 = vunpack.c.h.b16 %v2548
        %v2599 = vunpack.c.l.b16 %v2549
        %v2600 = vunpack.c.h.b16 %v2549
        %v2601 = vunpack.c.l.b16 %v2550
        %v2602 = vunpack.c.h.b16 %v2550
        %v2603 = vunpack.c.l.b16 %v2551
        %v2604 = vunpack.c.h.b16 %v2551
        %v2605 = vunpack.c.l.b16 %v2552
        %v2606 = vunpack.c.h.b16 %v2552
        %v2607 = vunpack.c.l.b16 %v2553
        %v2608 = vunpack.c.h.b16 %v2553
        %v2609 = vunpack.c.l.b16 %v2554
        %v2610 = vunpack.c.h.b16 %v2554
        %v2611 = vunpack.c.l.b16 %v2555
        %v2612 = vunpack.c.h.b16 %v2555
        %v2613 = vunpack.c.l.b16 %v2556
        %v2614 = vunpack.c.h.b16 %v2556
        %v2615 = vunpack.c.l.b16 %v2557
        %v2616 = vunpack.c.h.b16 %v2557
        %v2617 = vunpack.c.l.b16 %v2558
        %v2618 = vunpack.c.h.b16 %v2558
        %v2619 = vpack.c.b16 %v2589, %v2587
        %v2620 = vpack.c.b16 %v2590, %v2588
        %v2621 = vpack.c.b16 %v2593, %v2591
        %v2622 = vpack.c.b16 %v2594, %v2592
        %v2623 = vpack.c.b16 %v2597, %v2595
        %v2624 = vpack.c.b16 %v2598, %v2596
        %v2625 = vpack.c.b16 %v2601, %v2599
        %v2626 = vpack.c.b16 %v2602, %v2600
        %v2627 = vpack.c.b16 %v2605, %v2603
        %v2628 = vpack.c.b16 %v2606, %v2604
        %v2629 = vpack.c.b16 %v2609, %v2607
        %v2630 = vpack.c.b16 %v2610, %v2608
        %v2631 = vpack.c.b16 %v2613, %v2611
        %v2632 = vpack.c.b16 %v2614, %v2612
        %v2633 = vpack.c.b16 %v2617, %v2615
        %v2634 = vpack.c.b16 %v2618, %v2616
        %2651 = vmatprep.subr.bf16.mxu0 %v2634
        %2652 = vmatpush1.bf16.msra.mxu0 %v2633
        %2653 = vmatprep.subr.bf16.mxu0 %v2632
        %2654 = vmatpush1.bf16.msra.mxu0 %v2631
        %2655 = vmatprep.subr.bf16.mxu0 %v2630
        %2656 = vmatpush1.bf16.msra.mxu0 %v2629
        %2657 = vmatprep.subr.bf16.mxu0 %v2628
        %2658 = vmatpush1.bf16.msra.mxu0 %v2627
        %2659 = vmatprep.subr.bf16.mxu0 %v2626
        %2660 = vmatpush1.bf16.msra.mxu0 %v2625
        %2661 = vmatprep.subr.bf16.mxu0 %v2624
        %2662 = vmatpush1.bf16.msra.mxu0 %v2623
        %2663 = vmatprep.subr.bf16.mxu0 %v2622
        %2664 = vmatpush1.bf16.msra.mxu0 %v2621
        %2665 = vmatprep.subr.bf16.mxu0 %v2620
        %2666 = vmatpush1.bf16.msra.mxu0 %v2619
        %2667 = vmatprep.subr.bf16.mxu0 0
        %2668 = vmatpush2.bf16.msra.mxu0 0
        %2669 = vmatprep.subr.bf16.mxu0 0
        %2670 = vmatpush2.bf16.msra.mxu0 0
        %2671 = vmatprep.subr.bf16.mxu0 0
        %2672 = vmatpush2.bf16.msra.mxu0 0
        %2673 = vmatprep.subr.bf16.mxu0 0
        %2674 = vmatpush2.bf16.msra.mxu0 0
        %2675 = vmatprep.subr.bf16.mxu0 0
        %2676 = vmatpush2.bf16.msra.mxu0 0
        %2677 = vmatprep.subr.bf16.mxu0 0
        %2678 = vmatpush2.bf16.msra.mxu0 0
        %2679 = vmatprep.subr.bf16.mxu0 0
        %2680 = vmatpush2.bf16.msra.mxu0 0
        %2681 = vmatprep.subr.bf16.mxu0 0
        %2682 = vmatpush2.bf16.msra.mxu0 0
        %2683 = vmatprep.mubr.bf16.mxu0 0
        %2684 = vmatmul.mubr.bf16.gmra.mxu0 %v2511
        %v2685 = vpop.f32.mrf.mxu0
        %v2686 = vadd.f32 %v2564, %v2685
        %v2687 = vpop.f32.mrf.mxu0
        %v2688 = vadd.f32 %v2568, %v2687
        %v2689 = vpop.f32.mrf.mxu0
        %v2690 = vadd.f32 %v2564, %v2689
        %v2691 = vpop.f32.mrf.mxu0
        %v2692 = vadd.f32 %v2568, %v2691
        %2693 = vmatprep.mubr.bf16.mxu0 0
        %2694 = vmatmul.mubr.bf16.gmra.mxu0 %v2512
        %v2695 = vpop.f32.mrf.mxu0
        %v2696 = vadd.f32 %v2564, %v2695
        %v2697 = vpop.f32.mrf.mxu0
        %v2698 = vadd.f32 %v2568, %v2697
        %v2699 = vpop.f32.mrf.mxu0
        %v2700 = vadd.f32 %v2564, %v2699
        %v2701 = vpop.f32.mrf.mxu0
        %v2702 = vadd.f32 %v2568, %v2701
        %2703 = vmatprep.mubr.bf16.mxu0 0
        %2704 = vmatmul.mubr.bf16.gmra.mxu0 %v2513
        %v2705 = vpop.f32.mrf.mxu0
        %v2706 = vadd.f32 %v2564, %v2705
        %v2707 = vpop.f32.mrf.mxu0
        %v2708 = vadd.f32 %v2568, %v2707
        %v2709 = vpop.f32.mrf.mxu0
        %v2710 = vadd.f32 %v2564, %v2709
        %v2711 = vpop.f32.mrf.mxu0
        %v2712 = vadd.f32 %v2568, %v2711
        %2713 = vmatprep.mubr.bf16.mxu0 0
        %2714 = vmatmul.mubr.bf16.gmra.mxu0 %v2514
        %v2715 = vpop.f32.mrf.mxu0
        %v2716 = vadd.f32 %v2564, %v2715
        %v2717 = vpop.f32.mrf.mxu0
        %v2718 = vadd.f32 %v2568, %v2717
        %v2719 = vpop.f32.mrf.mxu0
        %v2720 = vadd.f32 %v2564, %v2719
        %v2721 = vpop.f32.mrf.mxu0
        %v2722 = vadd.f32 %v2568, %v2721
        %2723 = vmatprep.mubr.bf16.mxu0 0
        %2724 = vmatmul.mubr.bf16.gmra.mxu0 %v2515
        %v2725 = vpop.f32.mrf.mxu0
        %v2726 = vadd.f32 %v2564, %v2725
        %v2727 = vpop.f32.mrf.mxu0
        %v2728 = vadd.f32 %v2568, %v2727
        %v2729 = vpop.f32.mrf.mxu0
        %v2730 = vadd.f32 %v2564, %v2729
        %v2731 = vpop.f32.mrf.mxu0
        %v2732 = vadd.f32 %v2568, %v2731
        %2733 = vmatprep.mubr.bf16.mxu0 0
        %2734 = vmatmul.mubr.bf16.gmra.mxu0 %v2516
        %v2735 = vpop.f32.mrf.mxu0
        %v2736 = vadd.f32 %v2564, %v2735
        %v2737 = vpop.f32.mrf.mxu0
        %v2738 = vadd.f32 %v2568, %v2737
        %v2739 = vpop.f32.mrf.mxu0
        %v2740 = vadd.f32 %v2564, %v2739
        %v2741 = vpop.f32.mrf.mxu0
        %v2742 = vadd.f32 %v2568, %v2741
        %2743 = vmatprep.mubr.bf16.mxu0 0
        %2744 = vmatmul.mubr.bf16.gmra.mxu0 %v2517
        %v2745 = vpop.f32.mrf.mxu0
        %v2746 = vadd.f32 %v2564, %v2745
        %v2747 = vpop.f32.mrf.mxu0
        %v2748 = vadd.f32 %v2568, %v2747
        %v2749 = vpop.f32.mrf.mxu0
        %v2750 = vadd.f32 %v2564, %v2749
        %v2751 = vpop.f32.mrf.mxu0
        %v2752 = vadd.f32 %v2568, %v2751
        %2753 = vmatprep.mubr.bf16.mxu0 0
        %2754 = vmatmul.mubr.bf16.gmra.mxu0 %v2518
        %v2755 = vpop.f32.mrf.mxu0
        %v2756 = vadd.f32 %v2564, %v2755
        %v2757 = vpop.f32.mrf.mxu0
        %v2758 = vadd.f32 %v2568, %v2757
        %v2759 = vpop.f32.mrf.mxu0
        %v2760 = vadd.f32 %v2564, %v2759
        %v2761 = vpop.f32.mrf.mxu0
        %v2762 = vadd.f32 %v2568, %v2761
        %2763 = vmatprep.mubr.bf16.mxu0 0
        %2764 = vmatmul.mubr.bf16.gmra.mxu0 %v2519
        %v2765 = vpop.f32.mrf.mxu0
        %v2766 = vadd.f32 %v2564, %v2765
        %v2767 = vpop.f32.mrf.mxu0
        %v2768 = vadd.f32 %v2568, %v2767
        %v2769 = vpop.f32.mrf.mxu0
        %v2770 = vadd.f32 %v2564, %v2769
        %v2771 = vpop.f32.mrf.mxu0
        %v2772 = vadd.f32 %v2568, %v2771
        %2773 = vmatprep.mubr.bf16.mxu0 0
        %2774 = vmatmul.mubr.bf16.gmra.mxu0 %v2520
        %v2775 = vpop.f32.mrf.mxu0
        %v2776 = vadd.f32 %v2564, %v2775
        %v2777 = vpop.f32.mrf.mxu0
        %v2778 = vadd.f32 %v2568, %v2777
        %v2779 = vpop.f32.mrf.mxu0
        %v2780 = vadd.f32 %v2564, %v2779
        %v2781 = vpop.f32.mrf.mxu0
        %v2782 = vadd.f32 %v2568, %v2781
        %2783 = vmatprep.mubr.bf16.mxu0 0
        %2784 = vmatmul.mubr.bf16.gmra.mxu0 %v2521
        %v2785 = vpop.f32.mrf.mxu0
        %v2786 = vadd.f32 %v2564, %v2785
        %v2787 = vpop.f32.mrf.mxu0
        %v2788 = vadd.f32 %v2568, %v2787
        %v2789 = vpop.f32.mrf.mxu0
        %v2790 = vadd.f32 %v2564, %v2789
        %v2791 = vpop.f32.mrf.mxu0
        %v2792 = vadd.f32 %v2568, %v2791
        %2793 = vmatprep.mubr.bf16.mxu0 0
        %2794 = vmatmul.mubr.bf16.gmra.mxu0 %v2522
        %v2795 = vpop.f32.mrf.mxu0
        %v2796 = vadd.f32 %v2564, %v2795
        %v2797 = vpop.f32.mrf.mxu0
        %v2798 = vadd.f32 %v2568, %v2797
        %v2799 = vpop.f32.mrf.mxu0
        %v2800 = vadd.f32 %v2564, %v2799
        %v2801 = vpop.f32.mrf.mxu0
        %v2802 = vadd.f32 %v2568, %v2801
        %2803 = vmatprep.mubr.bf16.mxu0 0
        %2804 = vmatmul.mubr.bf16.gmra.mxu0 %v2523
        %v2805 = vpop.f32.mrf.mxu0
        %v2806 = vadd.f32 %v2564, %v2805
        %v2807 = vpop.f32.mrf.mxu0
        %v2808 = vadd.f32 %v2568, %v2807
        %v2809 = vpop.f32.mrf.mxu0
        %v2810 = vadd.f32 %v2564, %v2809
        %v2811 = vpop.f32.mrf.mxu0
        %v2812 = vadd.f32 %v2568, %v2811
        %2813 = vmatprep.mubr.bf16.mxu0 0
        %2814 = vmatmul.mubr.bf16.gmra.mxu0 %v2524
        %v2815 = vpop.f32.mrf.mxu0
        %v2816 = vadd.f32 %v2564, %v2815
        %v2817 = vpop.f32.mrf.mxu0
        %v2818 = vadd.f32 %v2568, %v2817
        %v2819 = vpop.f32.mrf.mxu0
        %v2820 = vadd.f32 %v2564, %v2819
        %v2821 = vpop.f32.mrf.mxu0
        %v2822 = vadd.f32 %v2568, %v2821
        %2823 = vmatprep.mubr.bf16.mxu0 0
        %2824 = vmatmul.mubr.bf16.gmra.mxu0 %v2525
        %v2825 = vpop.f32.mrf.mxu0
        %v2826 = vadd.f32 %v2564, %v2825
        %v2827 = vpop.f32.mrf.mxu0
        %v2828 = vadd.f32 %v2568, %v2827
        %v2829 = vpop.f32.mrf.mxu0
        %v2830 = vadd.f32 %v2564, %v2829
        %v2831 = vpop.f32.mrf.mxu0
        %v2832 = vadd.f32 %v2568, %v2831
        %2833 = vmatprep.mubr.bf16.mxu0 0
        %2834 = vmatmul.mubr.bf16.gmra.mxu0 %v2526
        %v2835 = vpop.f32.mrf.mxu0
        %v2836 = vadd.f32 %v2564, %v2835
        %v2837 = vpop.f32.mrf.mxu0
        %v2838 = vadd.f32 %v2568, %v2837
        %v2839 = vpop.f32.mrf.mxu0
        %v2840 = vadd.f32 %v2564, %v2839
        %v2841 = vpop.f32.mrf.mxu0
        %v2842 = vadd.f32 %v2568, %v2841
        %2843 = vmatprep.mubr.bf16.mxu0 0
        %2844 = vmatmul.mubr.bf16.gmra.mxu0 %v2527
        %v2845 = vpop.f32.mrf.mxu0
        %v2846 = vadd.f32 %v2564, %v2845
        %v2847 = vpop.f32.mrf.mxu0
        %v2848 = vadd.f32 %v2568, %v2847
        %v2849 = vpop.f32.mrf.mxu0
        %v2850 = vadd.f32 %v2564, %v2849
        %v2851 = vpop.f32.mrf.mxu0
        %v2852 = vadd.f32 %v2568, %v2851
        %2853 = vmatprep.mubr.bf16.mxu0 0
        %2854 = vmatmul.mubr.bf16.gmra.mxu0 %v2528
        %v2855 = vpop.f32.mrf.mxu0
        %v2856 = vadd.f32 %v2564, %v2855
        %v2857 = vpop.f32.mrf.mxu0
        %v2858 = vadd.f32 %v2568, %v2857
        %v2859 = vpop.f32.mrf.mxu0
        %v2860 = vadd.f32 %v2564, %v2859
        %v2861 = vpop.f32.mrf.mxu0
        %v2862 = vadd.f32 %v2568, %v2861
        %2863 = vmatprep.mubr.bf16.mxu0 0
        %2864 = vmatmul.mubr.bf16.gmra.mxu0 %v2529
        %v2865 = vpop.f32.mrf.mxu0
        %v2866 = vadd.f32 %v2564, %v2865
        %v2867 = vpop.f32.mrf.mxu0
        %v2868 = vadd.f32 %v2568, %v2867
        %v2869 = vpop.f32.mrf.mxu0
        %v2870 = vadd.f32 %v2564, %v2869
        %v2871 = vpop.f32.mrf.mxu0
        %v2872 = vadd.f32 %v2568, %v2871
        %2873 = vmatprep.mubr.bf16.mxu0 0
        %2874 = vmatmul.mubr.bf16.gmra.mxu0 %v2530
        %v2875 = vpop.f32.mrf.mxu0
        %v2876 = vadd.f32 %v2564, %v2875
        %v2877 = vpop.f32.mrf.mxu0
        %v2878 = vadd.f32 %v2568, %v2877
        %v2879 = vpop.f32.mrf.mxu0
        %v2880 = vadd.f32 %v2564, %v2879
        %v2881 = vpop.f32.mrf.mxu0
        %v2882 = vadd.f32 %v2568, %v2881
        %2883 = vmatprep.mubr.bf16.mxu0 0
        %2884 = vmatmul.mubr.bf16.gmra.mxu0 %v2531
        %v2885 = vpop.f32.mrf.mxu0
        %v2886 = vadd.f32 %v2564, %v2885
        %v2887 = vpop.f32.mrf.mxu0
        %v2888 = vadd.f32 %v2568, %v2887
        %v2889 = vpop.f32.mrf.mxu0
        %v2890 = vadd.f32 %v2564, %v2889
        %v2891 = vpop.f32.mrf.mxu0
        %v2892 = vadd.f32 %v2568, %v2891
        %2893 = vmatprep.mubr.bf16.mxu0 0
        %2894 = vmatmul.mubr.bf16.gmra.mxu0 %v2532
        %v2895 = vpop.f32.mrf.mxu0
        %v2896 = vadd.f32 %v2564, %v2895
        %v2897 = vpop.f32.mrf.mxu0
        %v2898 = vadd.f32 %v2568, %v2897
        %v2899 = vpop.f32.mrf.mxu0
        %v2900 = vadd.f32 %v2564, %v2899
        %v2901 = vpop.f32.mrf.mxu0
        %v2902 = vadd.f32 %v2568, %v2901
        %2903 = vmatprep.mubr.bf16.mxu0 0
        %2904 = vmatmul.mubr.bf16.gmra.mxu0 %v2533
        %v2905 = vpop.f32.mrf.mxu0
        %v2906 = vadd.f32 %v2564, %v2905
        %v2907 = vpop.f32.mrf.mxu0
        %v2908 = vadd.f32 %v2568, %v2907
        %v2909 = vpop.f32.mrf.mxu0
        %v2910 = vadd.f32 %v2564, %v2909
        %v2911 = vpop.f32.mrf.mxu0
        %v2912 = vadd.f32 %v2568, %v2911
        %2913 = vmatprep.mubr.bf16.mxu0 0
        %2914 = vmatmul.mubr.bf16.gmra.mxu0 %v2534
        %v2915 = vpop.f32.mrf.mxu0
        %v2916 = vadd.f32 %v2564, %v2915
        %v2917 = vpop.f32.mrf.mxu0
        %v2918 = vadd.f32 %v2568, %v2917
        %v2919 = vpop.f32.mrf.mxu0
        %v2920 = vadd.f32 %v2564, %v2919
        %v2921 = vpop.f32.mrf.mxu0
        %v2922 = vadd.f32 %v2568, %v2921
        %2923 = vmatprep.mubr.bf16.mxu0 0
        %2924 = vmatmul.mubr.bf16.gmra.mxu0 %v2535
        %v2925 = vpop.f32.mrf.mxu0
        %v2926 = vadd.f32 %v2564, %v2925
        %v2927 = vpop.f32.mrf.mxu0
        %v2928 = vadd.f32 %v2568, %v2927
        %v2929 = vpop.f32.mrf.mxu0
        %v2930 = vadd.f32 %v2564, %v2929
        %v2931 = vpop.f32.mrf.mxu0
        %v2932 = vadd.f32 %v2568, %v2931
        %2933 = vmatprep.mubr.bf16.mxu0 0
        %2934 = vmatmul.mubr.bf16.gmra.mxu0 %v2536
        %v2935 = vpop.f32.mrf.mxu0
        %v2936 = vadd.f32 %v2564, %v2935
        %v2937 = vpop.f32.mrf.mxu0
        %v2938 = vadd.f32 %v2568, %v2937
        %v2939 = vpop.f32.mrf.mxu0
        %v2940 = vadd.f32 %v2564, %v2939
        %v2941 = vpop.f32.mrf.mxu0
        %v2942 = vadd.f32 %v2568, %v2941
        %2943 = vmatprep.mubr.bf16.mxu0 0
        %2944 = vmatmul.mubr.bf16.gmra.mxu0 %v2537
        %v2945 = vpop.f32.mrf.mxu0
        %v2946 = vadd.f32 %v2564, %v2945
        %v2947 = vpop.f32.mrf.mxu0
        %v2948 = vadd.f32 %v2568, %v2947
        %v2949 = vpop.f32.mrf.mxu0
        %v2950 = vadd.f32 %v2564, %v2949
        %v2951 = vpop.f32.mrf.mxu0
        %v2952 = vadd.f32 %v2568, %v2951
        %2953 = vmatprep.mubr.bf16.mxu0 0
        %2954 = vmatmul.mubr.bf16.gmra.mxu0 %v2538
        %v2955 = vpop.f32.mrf.mxu0
        %v2956 = vadd.f32 %v2564, %v2955
        %v2957 = vpop.f32.mrf.mxu0
        %v2958 = vadd.f32 %v2568, %v2957
        %v2959 = vpop.f32.mrf.mxu0
        %v2960 = vadd.f32 %v2564, %v2959
        %v2961 = vpop.f32.mrf.mxu0
        %v2962 = vadd.f32 %v2568, %v2961
        %2963 = vmatprep.mubr.bf16.mxu0 0
        %2964 = vmatmul.mubr.bf16.gmra.mxu0 %v2539
        %v2965 = vpop.f32.mrf.mxu0
        %v2966 = vadd.f32 %v2564, %v2965
        %v2967 = vpop.f32.mrf.mxu0
        %v2968 = vadd.f32 %v2568, %v2967
        %v2969 = vpop.f32.mrf.mxu0
        %v2970 = vadd.f32 %v2564, %v2969
        %v2971 = vpop.f32.mrf.mxu0
        %v2972 = vadd.f32 %v2568, %v2971
        %2973 = vmatprep.mubr.bf16.mxu0 0
        %2974 = vmatmul.mubr.bf16.gmra.mxu0 %v2540
        %v2975 = vpop.f32.mrf.mxu0
        %v2976 = vadd.f32 %v2564, %v2975
        %v2977 = vpop.f32.mrf.mxu0
        %v2978 = vadd.f32 %v2568, %v2977
        %v2979 = vpop.f32.mrf.mxu0
        %v2980 = vadd.f32 %v2564, %v2979
        %v2981 = vpop.f32.mrf.mxu0
        %v2982 = vadd.f32 %v2568, %v2981
        %2983 = vmatprep.mubr.bf16.mxu0 0
        %2984 = vmatmul.mubr.bf16.gmra.mxu0 %v2541
        %v2985 = vpop.f32.mrf.mxu0
        %v2986 = vadd.f32 %v2564, %v2985
        %v2987 = vpop.f32.mrf.mxu0
        %v2988 = vadd.f32 %v2568, %v2987
        %v2989 = vpop.f32.mrf.mxu0
        %v2990 = vadd.f32 %v2564, %v2989
        %v2991 = vpop.f32.mrf.mxu0
        %v2992 = vadd.f32 %v2568, %v2991
        %2993 = vmatprep.mubr.bf16.mxu0 0
        %2994 = vmatmul.mubr.bf16.gmra.mxu0 %v2542
        %v2995 = vpop.f32.mrf.mxu0
        %v2996 = vadd.f32 %v2564, %v2995
        %v2997 = vpop.f32.mrf.mxu0
        %v2998 = vadd.f32 %v2568, %v2997
        %v2999 = vpop.f32.mrf.mxu0
        %v3000 = vadd.f32 %v2564, %v2999
        %v3001 = vpop.f32.mrf.mxu0
        %v3002 = vadd.f32 %v2568, %v3001
        %3003 = vdwg.mxu0
        %v3004 = vmax.f32 %v2686, 0.0
        %v3005 = vmax.f32 %v2688, 0.0
        %v3006 = vmax.f32 %v2690, 0.0
        %v3007 = vmax.f32 %v2692, 0.0
        %v3008 = vmax.f32 %v2696, 0.0
        %v3009 = vmax.f32 %v2698, 0.0
        %v3010 = vmax.f32 %v2700, 0.0
        %v3011 = vmax.f32 %v2702, 0.0
        %v3012 = vmax.f32 %v2706, 0.0
        %v3013 = vmax.f32 %v2708, 0.0
        %v3014 = vmax.f32 %v2710, 0.0
        %v3015 = vmax.f32 %v2712, 0.0
        %v3016 = vmax.f32 %v2716, 0.0
        %v3017 = vmax.f32 %v2718, 0.0
        %v3018 = vmax.f32 %v2720, 0.0
        %v3019 = vmax.f32 %v2722, 0.0
        %v3020 = vmax.f32 %v2726, 0.0
        %v3021 = vmax.f32 %v2728, 0.0
        %v3022 = vmax.f32 %v2730, 0.0
        %v3023 = vmax.f32 %v2732, 0.0
        %v3024 = vmax.f32 %v2736, 0.0
        %v3025 = vmax.f32 %v2738, 0.0
        %v3026 = vmax.f32 %v2740, 0.0
        %v3027 = vmax.f32 %v2742, 0.0
        %v3028 = vmax.f32 %v2746, 0.0
        %v3029 = vmax.f32 %v2748, 0.0
        %v3030 = vmax.f32 %v2750, 0.0
        %v3031 = vmax.f32 %v2752, 0.0
        %v3032 = vmax.f32 %v2756, 0.0
        %v3033 = vmax.f32 %v2758, 0.0
        %v3034 = vmax.f32 %v2760, 0.0
        %v3035 = vmax.f32 %v2762, 0.0
        %v3036 = vmax.f32 %v2766, 0.0
        %v3037 = vmax.f32 %v2768, 0.0
        %v3038 = vmax.f32 %v2770, 0.0
        %v3039 = vmax.f32 %v2772, 0.0
        %v3040 = vmax.f32 %v2776, 0.0
        %v3041 = vmax.f32 %v2778, 0.0
        %v3042 = vmax.f32 %v2780, 0.0
        %v3043 = vmax.f32 %v2782, 0.0
        %v3044 = vmax.f32 %v2786, 0.0
        %v3045 = vmax.f32 %v2788, 0.0
        %v3046 = vmax.f32 %v2790, 0.0
        %v3047 = vmax.f32 %v2792, 0.0
        %v3048 = vmax.f32 %v2796, 0.0
        %v3049 = vmax.f32 %v2798, 0.0
        %v3050 = vmax.f32 %v2800, 0.0
        %v3051 = vmax.f32 %v2802, 0.0
        %v3052 = vmax.f32 %v2806, 0.0
        %v3053 = vmax.f32 %v2808, 0.0
        %v3054 = vmax.f32 %v2810, 0.0
        %v3055 = vmax.f32 %v2812, 0.0
        %v3056 = vmax.f32 %v2816, 0.0
        %v3057 = vmax.f32 %v2818, 0.0
        %v3058 = vmax.f32 %v2820, 0.0
        %v3059 = vmax.f32 %v2822, 0.0
        %v3060 = vmax.f32 %v2826, 0.0
        %v3061 = vmax.f32 %v2828, 0.0
        %v3062 = vmax.f32 %v2830, 0.0
        %v3063 = vmax.f32 %v2832, 0.0
        %v3064 = vmax.f32 %v2836, 0.0
        %v3065 = vmax.f32 %v2838, 0.0
        %v3066 = vmax.f32 %v2840, 0.0
        %v3067 = vmax.f32 %v2842, 0.0
        %v3068 = vmax.f32 %v2846, 0.0
        %v3069 = vmax.f32 %v2848, 0.0
        %v3070 = vmax.f32 %v2850, 0.0
        %v3071 = vmax.f32 %v2852, 0.0
        %v3072 = vmax.f32 %v2856, 0.0
        %v3073 = vmax.f32 %v2858, 0.0
        %v3074 = vmax.f32 %v2860, 0.0
        %v3075 = vmax.f32 %v2862, 0.0
        %v3076 = vmax.f32 %v2866, 0.0
        %v3077 = vmax.f32 %v2868, 0.0
        %v3078 = vmax.f32 %v2870, 0.0
        %v3079 = vmax.f32 %v2872, 0.0
        %v3080 = vmax.f32 %v2876, 0.0
        %v3081 = vmax.f32 %v2878, 0.0
        %v3082 = vmax.f32 %v2880, 0.0
        %v3083 = vmax.f32 %v2882, 0.0
        %v3084 = vmax.f32 %v2886, 0.0
        %v3085 = vmax.f32 %v2888, 0.0
        %v3086 = vmax.f32 %v2890, 0.0
        %v3087 = vmax.f32 %v2892, 0.0
        %v3088 = vmax.f32 %v2896, 0.0
        %v3089 = vmax.f32 %v2898, 0.0
        %v3090 = vmax.f32 %v2900, 0.0
        %v3091 = vmax.f32 %v2902, 0.0
        %v3092 = vmax.f32 %v2906, 0.0
        %v3093 = vmax.f32 %v2908, 0.0
        %v3094 = vmax.f32 %v2910, 0.0
        %v3095 = vmax.f32 %v2912, 0.0
        %v3096 = vmax.f32 %v2916, 0.0
        %v3097 = vmax.f32 %v2918, 0.0
        %v3098 = vmax.f32 %v2920, 0.0
        %v3099 = vmax.f32 %v2922, 0.0
        %v3100 = vmax.f32 %v2926, 0.0
        %v3101 = vmax.f32 %v2928, 0.0
        %v3102 = vmax.f32 %v2930, 0.0
        %v3103 = vmax.f32 %v2932, 0.0
        %v3104 = vmax.f32 %v2936, 0.0
        %v3105 = vmax.f32 %v2938, 0.0
        %v3106 = vmax.f32 %v2940, 0.0
        %v3107 = vmax.f32 %v2942, 0.0
        %v3108 = vmax.f32 %v2946, 0.0
        %v3109 = vmax.f32 %v2948, 0.0
        %v3110 = vmax.f32 %v2950, 0.0
        %v3111 = vmax.f32 %v2952, 0.0
        %v3112 = vmax.f32 %v2956, 0.0
        %v3113 = vmax.f32 %v2958, 0.0
        %v3114 = vmax.f32 %v2960, 0.0
        %v3115 = vmax.f32 %v2962, 0.0
        %v3116 = vmax.f32 %v2966, 0.0
        %v3117 = vmax.f32 %v2968, 0.0
        %v3118 = vmax.f32 %v2970, 0.0
        %v3119 = vmax.f32 %v2972, 0.0
        %v3120 = vmax.f32 %v2976, 0.0
        %v3121 = vmax.f32 %v2978, 0.0
        %v3122 = vmax.f32 %v2980, 0.0
        %v3123 = vmax.f32 %v2982, 0.0
        %v3124 = vmax.f32 %v2986, 0.0
        %v3125 = vmax.f32 %v2988, 0.0
        %v3126 = vmax.f32 %v2990, 0.0
        %v3127 = vmax.f32 %v2992, 0.0
        %v3128 = vmax.f32 %v2996, 0.0
        %v3129 = vmax.f32 %v2998, 0.0
        %v3130 = vmax.f32 %v3000, 0.0
        %v3131 = vmax.f32 %v3002, 0.0
        %v3132 = vpack.c.bf16 %v3006, %v3004
        %v3133 = vpack.c.bf16 %v3007, %v3005
        %v3134 = vpack.c.bf16 %v3010, %v3008
        %v3135 = vpack.c.bf16 %v3011, %v3009
        %v3136 = vpack.c.bf16 %v3014, %v3012
        %v3137 = vpack.c.bf16 %v3015, %v3013
        %v3138 = vpack.c.bf16 %v3018, %v3016
        %v3139 = vpack.c.bf16 %v3019, %v3017
        %v3140 = vpack.c.bf16 %v3022, %v3020
        %v3141 = vpack.c.bf16 %v3023, %v3021
        %v3142 = vpack.c.bf16 %v3026, %v3024
        %v3143 = vpack.c.bf16 %v3027, %v3025
        %v3144 = vpack.c.bf16 %v3030, %v3028
        %v3145 = vpack.c.bf16 %v3031, %v3029
        %v3146 = vpack.c.bf16 %v3034, %v3032
        %v3147 = vpack.c.bf16 %v3035, %v3033
        %v3148 = vpack.c.bf16 %v3038, %v3036
        %v3149 = vpack.c.bf16 %v3039, %v3037
        %v3150 = vpack.c.bf16 %v3042, %v3040
        %v3151 = vpack.c.bf16 %v3043, %v3041
        %v3152 = vpack.c.bf16 %v3046, %v3044
        %v3153 = vpack.c.bf16 %v3047, %v3045
        %v3154 = vpack.c.bf16 %v3050, %v3048
        %v3155 = vpack.c.bf16 %v3051, %v3049
        %v3156 = vpack.c.bf16 %v3054, %v3052
        %v3157 = vpack.c.bf16 %v3055, %v3053
        %v3158 = vpack.c.bf16 %v3058, %v3056
        %v3159 = vpack.c.bf16 %v3059, %v3057
        %v3160 = vpack.c.bf16 %v3062, %v3060
        %v3161 = vpack.c.bf16 %v3063, %v3061
        %v3162 = vpack.c.bf16 %v3066, %v3064
        %v3163 = vpack.c.bf16 %v3067, %v3065
        %v3164 = vpack.c.bf16 %v3070, %v3068
        %v3165 = vpack.c.bf16 %v3071, %v3069
        %v3166 = vpack.c.bf16 %v3074, %v3072
        %v3167 = vpack.c.bf16 %v3075, %v3073
        %v3168 = vpack.c.bf16 %v3078, %v3076
        %v3169 = vpack.c.bf16 %v3079, %v3077
        %v3170 = vpack.c.bf16 %v3082, %v3080
        %v3171 = vpack.c.bf16 %v3083, %v3081
        %v3172 = vpack.c.bf16 %v3086, %v3084
        %v3173 = vpack.c.bf16 %v3087, %v3085
        %v3174 = vpack.c.bf16 %v3090, %v3088
        %v3175 = vpack.c.bf16 %v3091, %v3089
        %v3176 = vpack.c.bf16 %v3094, %v3092
        %v3177 = vpack.c.bf16 %v3095, %v3093
        %v3178 = vpack.c.bf16 %v3098, %v3096
        %v3179 = vpack.c.bf16 %v3099, %v3097
        %v3180 = vpack.c.bf16 %v3102, %v3100
        %v3181 = vpack.c.bf16 %v3103, %v3101
        %v3182 = vpack.c.bf16 %v3106, %v3104
        %v3183 = vpack.c.bf16 %v3107, %v3105
        %v3184 = vpack.c.bf16 %v3110, %v3108
        %v3185 = vpack.c.bf16 %v3111, %v3109
        %v3186 = vpack.c.bf16 %v3114, %v3112
        %v3187 = vpack.c.bf16 %v3115, %v3113
        %v3188 = vpack.c.bf16 %v3118, %v3116
        %v3189 = vpack.c.bf16 %v3119, %v3117
        %v3190 = vpack.c.bf16 %v3122, %v3120
        %v3191 = vpack.c.bf16 %v3123, %v3121
        %v3192 = vpack.c.bf16 %v3126, %v3124
        %v3193 = vpack.c.bf16 %v3127, %v3125
        %v3194 = vpack.c.bf16 %v3130, %v3128
        %v3195 = vpack.c.bf16 %v3131, %v3129
        %v3196 = vld [vmem:[#allocation8] sm:$0xff]
        %v3197 = vld [vmem:[#allocation8 + $0x8] sm:$0xff]
        %v3198 = vld [vmem:[#allocation8 + $0x10] sm:$0xff]
        %v3199 = vld [vmem:[#allocation8 + $0x18] sm:$0xff]
        %v3200 = vld [vmem:[#allocation8 + $0x20] sm:$0xff]
        %v3201 = vld [vmem:[#allocation8 + $0x28] sm:$0xff]
        %v3202 = vld [vmem:[#allocation8 + $0x30] sm:$0xff]
        %v3203 = vld [vmem:[#allocation8 + $0x38] sm:$0xff]
        %v3204 = vld [vmem:[#allocation8 + $0x40] sm:$0xff]
        %v3205 = vld [vmem:[#allocation8 + $0x48] sm:$0xff]
        %v3206 = vld [vmem:[#allocation8 + $0x50] sm:$0xff]
        %v3207 = vld [vmem:[#allocation8 + $0x58] sm:$0xff]
        %v3208 = vld [vmem:[#allocation8 + $0x60] sm:$0xff]
        %v3209 = vld [vmem:[#allocation8 + $0x68] sm:$0xff]
        %v3210 = vld [vmem:[#allocation8 + $0x70] sm:$0xff]
        %v3211 = vld [vmem:[#allocation8 + $0x78] sm:$0xff]
        %v3212 = vld [vmem:[#allocation8 + $0x80] sm:$0xff]
        %v3213 = vld [vmem:[#allocation8 + $0x88] sm:$0xff]
        %v3214 = vld [vmem:[#allocation8 + $0x90] sm:$0xff]
        %v3215 = vld [vmem:[#allocation8 + $0x98] sm:$0xff]
        %v3216 = vld [vmem:[#allocation8 + $0xa0] sm:$0xff]
        %v3217 = vld [vmem:[#allocation8 + $0xa8] sm:$0xff]
        %v3218 = vld [vmem:[#allocation8 + $0xb0] sm:$0xff]
        %v3219 = vld [vmem:[#allocation8 + $0xb8] sm:$0xff]
        %v3220 = vld [vmem:[#allocation8 + $0xc0] sm:$0xff]
        %v3221 = vld [vmem:[#allocation8 + $0xc8] sm:$0xff]
        %v3222 = vld [vmem:[#allocation8 + $0xd0] sm:$0xff]
        %v3223 = vld [vmem:[#allocation8 + $0xd8] sm:$0xff]
        %v3224 = vld [vmem:[#allocation8 + $0xe0] sm:$0xff]
        %v3225 = vld [vmem:[#allocation8 + $0xe8] sm:$0xff]
        %v3226 = vld [vmem:[#allocation8 + $0xf0] sm:$0xff]
        %v3227 = vld [vmem:[#allocation8 + $0xf8] sm:$0xff]
        %v3228 = vld [vmem:[#allocation8 + $0x100] sm:$0xff]
        %v3229 = vld [vmem:[#allocation8 + $0x108] sm:$0xff]
        %v3230 = vld [vmem:[#allocation8 + $0x110] sm:$0xff]
        %v3231 = vld [vmem:[#allocation8 + $0x118] sm:$0xff]
        %v3232 = vld [vmem:[#allocation8 + $0x120] sm:$0xff]
        %v3233 = vld [vmem:[#allocation8 + $0x128] sm:$0xff]
        %v3234 = vld [vmem:[#allocation8 + $0x130] sm:$0xff]
        %v3235 = vld [vmem:[#allocation8 + $0x138] sm:$0xff]
        %v3236 = vld [vmem:[#allocation8 + $0x140] sm:$0xff]
        %v3237 = vld [vmem:[#allocation8 + $0x148] sm:$0xff]
        %v3238 = vld [vmem:[#allocation8 + $0x150] sm:$0xff]
        %v3239 = vld [vmem:[#allocation8 + $0x158] sm:$0xff]
        %v3240 = vld [vmem:[#allocation8 + $0x160] sm:$0xff]
        %v3241 = vld [vmem:[#allocation8 + $0x168] sm:$0xff]
        %v3242 = vld [vmem:[#allocation8 + $0x170] sm:$0xff]
        %v3243 = vld [vmem:[#allocation8 + $0x178] sm:$0xff]
        %v3244 = vld [vmem:[#allocation8 + $0x180] sm:$0xff]
        %v3245 = vld [vmem:[#allocation8 + $0x188] sm:$0xff]
        %v3246 = vld [vmem:[#allocation8 + $0x190] sm:$0xff]
        %v3247 = vld [vmem:[#allocation8 + $0x198] sm:$0xff]
        %v3248 = vld [vmem:[#allocation8 + $0x1a0] sm:$0xff]
        %v3249 = vld [vmem:[#allocation8 + $0x1a8] sm:$0xff]
        %v3250 = vld [vmem:[#allocation8 + $0x1b0] sm:$0xff]
        %v3251 = vld [vmem:[#allocation8 + $0x1b8] sm:$0xff]
        %v3252 = vld [vmem:[#allocation8 + $0x1c0] sm:$0xff]
        %v3253 = vld [vmem:[#allocation8 + $0x1c8] sm:$0xff]
        %v3254 = vld [vmem:[#allocation8 + $0x1d0] sm:$0xff]
        %v3255 = vld [vmem:[#allocation8 + $0x1d8] sm:$0xff]
        %v3256 = vld [vmem:[#allocation8 + $0x1e0] sm:$0xff]
        %v3257 = vld [vmem:[#allocation8 + $0x1e8] sm:$0xff]
        %v3258 = vld [vmem:[#allocation8 + $0x1f0] sm:$0xff]
        %v3259 = vld [vmem:[#allocation8 + $0x1f8] sm:$0xff]
        %v3260 = vld [vmem:[#allocation9] sm:$0xf]
        %v3262 = vlaneseq
        %v3263 = vshrl.u32 %v3262, 7
        %v3264 = vsub.s32 0, %v3263
        %v3265 = vrot.slane %v3260, %v3264
        %v3266 = vlaneseq
        %v3267 = vshrl.u32 %v3266, 7
        %v3268 = vsub.s32 1, %v3267
        %v3269 = vrot.slane %v3260, %v3268
        %v3270 = vlaneseq
        %v3271 = vshrl.u32 %v3270, 7
        %v3272 = vsub.s32 2, %v3271
        %v3273 = vrot.slane %v3260, %v3272
        %v3274 = vlaneseq
        %v3275 = vshrl.u32 %v3274, 7
        %v3276 = vsub.s32 3, %v3275
        %v3277 = vrot.slane %v3260, %v3276
        %v3346 = vunpack.c.l.b16 %v3196
        %v3347 = vunpack.c.h.b16 %v3196
        %v3348 = vunpack.c.l.b16 %v3197
        %v3349 = vunpack.c.h.b16 %v3197
        %v3350 = vunpack.c.l.b16 %v3198
        %v3351 = vunpack.c.h.b16 %v3198
        %v3352 = vunpack.c.l.b16 %v3199
        %v3353 = vunpack.c.h.b16 %v3199
        %v3354 = vunpack.c.l.b16 %v3200
        %v3355 = vunpack.c.h.b16 %v3200
        %v3356 = vunpack.c.l.b16 %v3201
        %v3357 = vunpack.c.h.b16 %v3201
        %v3358 = vunpack.c.l.b16 %v3202
        %v3359 = vunpack.c.h.b16 %v3202
        %v3360 = vunpack.c.l.b16 %v3203
        %v3361 = vunpack.c.h.b16 %v3203
        %v3362 = vunpack.c.l.b16 %v3204
        %v3363 = vunpack.c.h.b16 %v3204
        %v3364 = vunpack.c.l.b16 %v3205
        %v3365 = vunpack.c.h.b16 %v3205
        %v3366 = vunpack.c.l.b16 %v3206
        %v3367 = vunpack.c.h.b16 %v3206
        %v3368 = vunpack.c.l.b16 %v3207
        %v3369 = vunpack.c.h.b16 %v3207
        %v3370 = vunpack.c.l.b16 %v3208
        %v3371 = vunpack.c.h.b16 %v3208
        %v3372 = vunpack.c.l.b16 %v3209
        %v3373 = vunpack.c.h.b16 %v3209
        %v3374 = vunpack.c.l.b16 %v3210
        %v3375 = vunpack.c.h.b16 %v3210
        %v3376 = vunpack.c.l.b16 %v3211
        %v3377 = vunpack.c.h.b16 %v3211
        %v3378 = vunpack.c.l.b16 %v3212
        %v3379 = vunpack.c.h.b16 %v3212
        %v3380 = vunpack.c.l.b16 %v3213
        %v3381 = vunpack.c.h.b16 %v3213
        %v3382 = vunpack.c.l.b16 %v3214
        %v3383 = vunpack.c.h.b16 %v3214
        %v3384 = vunpack.c.l.b16 %v3215
        %v3385 = vunpack.c.h.b16 %v3215
        %v3386 = vunpack.c.l.b16 %v3216
        %v3387 = vunpack.c.h.b16 %v3216
        %v3388 = vunpack.c.l.b16 %v3217
        %v3389 = vunpack.c.h.b16 %v3217
        %v3390 = vunpack.c.l.b16 %v3218
        %v3391 = vunpack.c.h.b16 %v3218
        %v3392 = vunpack.c.l.b16 %v3219
        %v3393 = vunpack.c.h.b16 %v3219
        %v3394 = vunpack.c.l.b16 %v3220
        %v3395 = vunpack.c.h.b16 %v3220
        %v3396 = vunpack.c.l.b16 %v3221
        %v3397 = vunpack.c.h.b16 %v3221
        %v3398 = vunpack.c.l.b16 %v3222
        %v3399 = vunpack.c.h.b16 %v3222
        %v3400 = vunpack.c.l.b16 %v3223
        %v3401 = vunpack.c.h.b16 %v3223
        %v3402 = vunpack.c.l.b16 %v3224
        %v3403 = vunpack.c.h.b16 %v3224
        %v3404 = vunpack.c.l.b16 %v3225
        %v3405 = vunpack.c.h.b16 %v3225
        %v3406 = vunpack.c.l.b16 %v3226
        %v3407 = vunpack.c.h.b16 %v3226
        %v3408 = vunpack.c.l.b16 %v3227
        %v3409 = vunpack.c.h.b16 %v3227
        %v3410 = vunpack.c.l.b16 %v3228
        %v3411 = vunpack.c.h.b16 %v3228
        %v3412 = vunpack.c.l.b16 %v3229
        %v3413 = vunpack.c.h.b16 %v3229
        %v3414 = vunpack.c.l.b16 %v3230
        %v3415 = vunpack.c.h.b16 %v3230
        %v3416 = vunpack.c.l.b16 %v3231
        %v3417 = vunpack.c.h.b16 %v3231
        %v3418 = vunpack.c.l.b16 %v3232
        %v3419 = vunpack.c.h.b16 %v3232
        %v3420 = vunpack.c.l.b16 %v3233
        %v3421 = vunpack.c.h.b16 %v3233
        %v3422 = vunpack.c.l.b16 %v3234
        %v3423 = vunpack.c.h.b16 %v3234
        %v3424 = vunpack.c.l.b16 %v3235
        %v3425 = vunpack.c.h.b16 %v3235
        %v3426 = vunpack.c.l.b16 %v3236
        %v3427 = vunpack.c.h.b16 %v3236
        %v3428 = vunpack.c.l.b16 %v3237
        %v3429 = vunpack.c.h.b16 %v3237
        %v3430 = vunpack.c.l.b16 %v3238
        %v3431 = vunpack.c.h.b16 %v3238
        %v3432 = vunpack.c.l.b16 %v3239
        %v3433 = vunpack.c.h.b16 %v3239
        %v3434 = vunpack.c.l.b16 %v3240
        %v3435 = vunpack.c.h.b16 %v3240
        %v3436 = vunpack.c.l.b16 %v3241
        %v3437 = vunpack.c.h.b16 %v3241
        %v3438 = vunpack.c.l.b16 %v3242
        %v3439 = vunpack.c.h.b16 %v3242
        %v3440 = vunpack.c.l.b16 %v3243
        %v3441 = vunpack.c.h.b16 %v3243
        %v3442 = vunpack.c.l.b16 %v3244
        %v3443 = vunpack.c.h.b16 %v3244
        %v3444 = vunpack.c.l.b16 %v3245
        %v3445 = vunpack.c.h.b16 %v3245
        %v3446 = vunpack.c.l.b16 %v3246
        %v3447 = vunpack.c.h.b16 %v3246
        %v3448 = vunpack.c.l.b16 %v3247
        %v3449 = vunpack.c.h.b16 %v3247
        %v3450 = vunpack.c.l.b16 %v3248
        %v3451 = vunpack.c.h.b16 %v3248
        %v3452 = vunpack.c.l.b16 %v3249
        %v3453 = vunpack.c.h.b16 %v3249
        %v3454 = vunpack.c.l.b16 %v3250
        %v3455 = vunpack.c.h.b16 %v3250
        %v3456 = vunpack.c.l.b16 %v3251
        %v3457 = vunpack.c.h.b16 %v3251
        %v3458 = vunpack.c.l.b16 %v3252
        %v3459 = vunpack.c.h.b16 %v3252
        %v3460 = vunpack.c.l.b16 %v3253
        %v3461 = vunpack.c.h.b16 %v3253
        %v3462 = vunpack.c.l.b16 %v3254
        %v3463 = vunpack.c.h.b16 %v3254
        %v3464 = vunpack.c.l.b16 %v3255
        %v3465 = vunpack.c.h.b16 %v3255
        %v3466 = vunpack.c.l.b16 %v3256
        %v3467 = vunpack.c.h.b16 %v3256
        %v3468 = vunpack.c.l.b16 %v3257
        %v3469 = vunpack.c.h.b16 %v3257
        %v3470 = vunpack.c.l.b16 %v3258
        %v3471 = vunpack.c.h.b16 %v3258
        %v3472 = vunpack.c.l.b16 %v3259
        %v3473 = vunpack.c.h.b16 %v3259
        %v3474 = vpack.c.b16 %v3350, %v3346
        %v3475 = vpack.c.b16 %v3351, %v3347
        %v3476 = vpack.c.b16 %v3352, %v3348
        %v3477 = vpack.c.b16 %v3353, %v3349
        %v3478 = vpack.c.b16 %v3358, %v3354
        %v3479 = vpack.c.b16 %v3359, %v3355
        %v3480 = vpack.c.b16 %v3360, %v3356
        %v3481 = vpack.c.b16 %v3361, %v3357
        %v3482 = vpack.c.b16 %v3366, %v3362
        %v3483 = vpack.c.b16 %v3367, %v3363
        %v3484 = vpack.c.b16 %v3368, %v3364
        %v3485 = vpack.c.b16 %v3369, %v3365
        %v3486 = vpack.c.b16 %v3374, %v3370
        %v3487 = vpack.c.b16 %v3375, %v3371
        %v3488 = vpack.c.b16 %v3376, %v3372
        %v3489 = vpack.c.b16 %v3377, %v3373
        %v3490 = vpack.c.b16 %v3382, %v3378
        %v3491 = vpack.c.b16 %v3383, %v3379
        %v3492 = vpack.c.b16 %v3384, %v3380
        %v3493 = vpack.c.b16 %v3385, %v3381
        %v3494 = vpack.c.b16 %v3390, %v3386
        %v3495 = vpack.c.b16 %v3391, %v3387
        %v3496 = vpack.c.b16 %v3392, %v3388
        %v3497 = vpack.c.b16 %v3393, %v3389
        %v3498 = vpack.c.b16 %v3398, %v3394
        %v3499 = vpack.c.b16 %v3399, %v3395
        %v3500 = vpack.c.b16 %v3400, %v3396
        %v3501 = vpack.c.b16 %v3401, %v3397
        %v3502 = vpack.c.b16 %v3406, %v3402
        %v3503 = vpack.c.b16 %v3407, %v3403
        %v3504 = vpack.c.b16 %v3408, %v3404
        %v3505 = vpack.c.b16 %v3409, %v3405
        %v3506 = vpack.c.b16 %v3414, %v3410
        %v3507 = vpack.c.b16 %v3415, %v3411
        %v3508 = vpack.c.b16 %v3416, %v3412
        %v3509 = vpack.c.b16 %v3417, %v3413
        %v3510 = vpack.c.b16 %v3422, %v3418
        %v3511 = vpack.c.b16 %v3423, %v3419
        %v3512 = vpack.c.b16 %v3424, %v3420
        %v3513 = vpack.c.b16 %v3425, %v3421
        %v3514 = vpack.c.b16 %v3430, %v3426
        %v3515 = vpack.c.b16 %v3431, %v3427
        %v3516 = vpack.c.b16 %v3432, %v3428
        %v3517 = vpack.c.b16 %v3433, %v3429
        %v3518 = vpack.c.b16 %v3438, %v3434
        %v3519 = vpack.c.b16 %v3439, %v3435
        %v3520 = vpack.c.b16 %v3440, %v3436
        %v3521 = vpack.c.b16 %v3441, %v3437
        %v3522 = vpack.c.b16 %v3446, %v3442
        %v3523 = vpack.c.b16 %v3447, %v3443
        %v3524 = vpack.c.b16 %v3448, %v3444
        %v3525 = vpack.c.b16 %v3449, %v3445
        %v3526 = vpack.c.b16 %v3454, %v3450
        %v3527 = vpack.c.b16 %v3455, %v3451
        %v3528 = vpack.c.b16 %v3456, %v3452
        %v3529 = vpack.c.b16 %v3457, %v3453
        %v3530 = vpack.c.b16 %v3462, %v3458
        %v3531 = vpack.c.b16 %v3463, %v3459
        %v3532 = vpack.c.b16 %v3464, %v3460
        %v3533 = vpack.c.b16 %v3465, %v3461
        %v3534 = vpack.c.b16 %v3470, %v3466
        %v3535 = vpack.c.b16 %v3471, %v3467
        %v3536 = vpack.c.b16 %v3472, %v3468
        %v3537 = vpack.c.b16 %v3473, %v3469
        %3602 = vmatprep.subr.bf16.mxu0 %v3503
        %3603 = vmatpush1.bf16.msra.mxu0 %v3502
        %3604 = vmatprep.subr.bf16.mxu0 %v3499
        %3605 = vmatpush1.bf16.msra.mxu0 %v3498
        %3606 = vmatprep.subr.bf16.mxu0 %v3495
        %3607 = vmatpush1.bf16.msra.mxu0 %v3494
        %3608 = vmatprep.subr.bf16.mxu0 %v3491
        %3609 = vmatpush1.bf16.msra.mxu0 %v3490
        %3610 = vmatprep.subr.bf16.mxu0 %v3487
        %3611 = vmatpush1.bf16.msra.mxu0 %v3486
        %3612 = vmatprep.subr.bf16.mxu0 %v3483
        %3613 = vmatpush1.bf16.msra.mxu0 %v3482
        %3614 = vmatprep.subr.bf16.mxu0 %v3479
        %3615 = vmatpush1.bf16.msra.mxu0 %v3478
        %3616 = vmatprep.subr.bf16.mxu0 %v3475
        %3617 = vmatpush1.bf16.msra.mxu0 %v3474
        %3618 = vmatprep.subr.bf16.mxu0 %v3535
        %3619 = vmatpush2.bf16.msra.mxu0 %v3534
        %3620 = vmatprep.subr.bf16.mxu0 %v3531
        %3621 = vmatpush2.bf16.msra.mxu0 %v3530
        %3622 = vmatprep.subr.bf16.mxu0 %v3527
        %3623 = vmatpush2.bf16.msra.mxu0 %v3526
        %3624 = vmatprep.subr.bf16.mxu0 %v3523
        %3625 = vmatpush2.bf16.msra.mxu0 %v3522
        %3626 = vmatprep.subr.bf16.mxu0 %v3519
        %3627 = vmatpush2.bf16.msra.mxu0 %v3518
        %3628 = vmatprep.subr.bf16.mxu0 %v3515
        %3629 = vmatpush2.bf16.msra.mxu0 %v3514
        %3630 = vmatprep.subr.bf16.mxu0 %v3511
        %3631 = vmatpush2.bf16.msra.mxu0 %v3510
        %3632 = vmatprep.subr.bf16.mxu0 %v3507
        %3633 = vmatpush2.bf16.msra.mxu0 %v3506
        %3634 = vmatprep.mubr.bf16.mxu0 %v3133
        %3635 = vmatmul.mubr.bf16.gmra.mxu0 %v3132
        %v3636 = vpop.f32.mrf.mxu0
        %v3637 = vadd.f32 %v3265, %v3636
        %v3638 = vpop.f32.mrf.mxu0
        %v3639 = vadd.f32 %v3269, %v3638
        %v3640 = vpop.f32.mrf.mxu0
        %v3641 = vadd.f32 %v3265, %v3640
        %v3642 = vpop.f32.mrf.mxu0
        %v3643 = vadd.f32 %v3269, %v3642
        %3644 = vmatprep.mubr.bf16.mxu0 %v3135
        %3645 = vmatmul.mubr.bf16.gmra.mxu0 %v3134
        %v3646 = vpop.f32.mrf.mxu0
        %v3647 = vadd.f32 %v3265, %v3646
        %v3648 = vpop.f32.mrf.mxu0
        %v3649 = vadd.f32 %v3269, %v3648
        %v3650 = vpop.f32.mrf.mxu0
        %v3651 = vadd.f32 %v3265, %v3650
        %v3652 = vpop.f32.mrf.mxu0
        %v3653 = vadd.f32 %v3269, %v3652
        %3654 = vmatprep.mubr.bf16.mxu0 %v3137
        %3655 = vmatmul.mubr.bf16.gmra.mxu0 %v3136
        %v3656 = vpop.f32.mrf.mxu0
        %v3657 = vadd.f32 %v3265, %v3656
        %v3658 = vpop.f32.mrf.mxu0
        %v3659 = vadd.f32 %v3269, %v3658
        %v3660 = vpop.f32.mrf.mxu0
        %v3661 = vadd.f32 %v3265, %v3660
        %v3662 = vpop.f32.mrf.mxu0
        %v3663 = vadd.f32 %v3269, %v3662
        %3664 = vmatprep.mubr.bf16.mxu0 %v3139
        %3665 = vmatmul.mubr.bf16.gmra.mxu0 %v3138
        %v3666 = vpop.f32.mrf.mxu0
        %v3667 = vadd.f32 %v3265, %v3666
        %v3668 = vpop.f32.mrf.mxu0
        %v3669 = vadd.f32 %v3269, %v3668
        %v3670 = vpop.f32.mrf.mxu0
        %v3671 = vadd.f32 %v3265, %v3670
        %v3672 = vpop.f32.mrf.mxu0
        %v3673 = vadd.f32 %v3269, %v3672
        %3674 = vmatprep.mubr.bf16.mxu0 %v3141
        %3675 = vmatmul.mubr.bf16.gmra.mxu0 %v3140
        %v3676 = vpop.f32.mrf.mxu0
        %v3677 = vadd.f32 %v3265, %v3676
        %v3678 = vpop.f32.mrf.mxu0
        %v3679 = vadd.f32 %v3269, %v3678
        %v3680 = vpop.f32.mrf.mxu0
        %v3681 = vadd.f32 %v3265, %v3680
        %v3682 = vpop.f32.mrf.mxu0
        %v3683 = vadd.f32 %v3269, %v3682
        %3684 = vmatprep.mubr.bf16.mxu0 %v3143
        %3685 = vmatmul.mubr.bf16.gmra.mxu0 %v3142
        %v3686 = vpop.f32.mrf.mxu0
        %v3687 = vadd.f32 %v3265, %v3686
        %v3688 = vpop.f32.mrf.mxu0
        %v3689 = vadd.f32 %v3269, %v3688
        %v3690 = vpop.f32.mrf.mxu0
        %v3691 = vadd.f32 %v3265, %v3690
        %v3692 = vpop.f32.mrf.mxu0
        %v3693 = vadd.f32 %v3269, %v3692
        %3694 = vmatprep.mubr.bf16.mxu0 %v3145
        %3695 = vmatmul.mubr.bf16.gmra.mxu0 %v3144
        %v3696 = vpop.f32.mrf.mxu0
        %v3697 = vadd.f32 %v3265, %v3696
        %v3698 = vpop.f32.mrf.mxu0
        %v3699 = vadd.f32 %v3269, %v3698
        %v3700 = vpop.f32.mrf.mxu0
        %v3701 = vadd.f32 %v3265, %v3700
        %v3702 = vpop.f32.mrf.mxu0
        %v3703 = vadd.f32 %v3269, %v3702
        %3704 = vmatprep.mubr.bf16.mxu0 %v3147
        %3705 = vmatmul.mubr.bf16.gmra.mxu0 %v3146
        %v3706 = vpop.f32.mrf.mxu0
        %v3707 = vadd.f32 %v3265, %v3706
        %v3708 = vpop.f32.mrf.mxu0
        %v3709 = vadd.f32 %v3269, %v3708
        %v3710 = vpop.f32.mrf.mxu0
        %v3711 = vadd.f32 %v3265, %v3710
        %v3712 = vpop.f32.mrf.mxu0
        %v3713 = vadd.f32 %v3269, %v3712
        %3714 = vmatprep.mubr.bf16.mxu0 %v3149
        %3715 = vmatmul.mubr.bf16.gmra.mxu0 %v3148
        %v3716 = vpop.f32.mrf.mxu0
        %v3717 = vadd.f32 %v3265, %v3716
        %v3718 = vpop.f32.mrf.mxu0
        %v3719 = vadd.f32 %v3269, %v3718
        %v3720 = vpop.f32.mrf.mxu0
        %v3721 = vadd.f32 %v3265, %v3720
        %v3722 = vpop.f32.mrf.mxu0
        %v3723 = vadd.f32 %v3269, %v3722
        %3724 = vmatprep.mubr.bf16.mxu0 %v3151
        %3725 = vmatmul.mubr.bf16.gmra.mxu0 %v3150
        %v3726 = vpop.f32.mrf.mxu0
        %v3727 = vadd.f32 %v3265, %v3726
        %v3728 = vpop.f32.mrf.mxu0
        %v3729 = vadd.f32 %v3269, %v3728
        %v3730 = vpop.f32.mrf.mxu0
        %v3731 = vadd.f32 %v3265, %v3730
        %v3732 = vpop.f32.mrf.mxu0
        %v3733 = vadd.f32 %v3269, %v3732
        %3734 = vmatprep.mubr.bf16.mxu0 %v3153
        %3735 = vmatmul.mubr.bf16.gmra.mxu0 %v3152
        %v3736 = vpop.f32.mrf.mxu0
        %v3737 = vadd.f32 %v3265, %v3736
        %v3738 = vpop.f32.mrf.mxu0
        %v3739 = vadd.f32 %v3269, %v3738
        %v3740 = vpop.f32.mrf.mxu0
        %v3741 = vadd.f32 %v3265, %v3740
        %v3742 = vpop.f32.mrf.mxu0
        %v3743 = vadd.f32 %v3269, %v3742
        %3744 = vmatprep.mubr.bf16.mxu0 %v3155
        %3745 = vmatmul.mubr.bf16.gmra.mxu0 %v3154
        %v3746 = vpop.f32.mrf.mxu0
        %v3747 = vadd.f32 %v3265, %v3746
        %v3748 = vpop.f32.mrf.mxu0
        %v3749 = vadd.f32 %v3269, %v3748
        %v3750 = vpop.f32.mrf.mxu0
        %v3751 = vadd.f32 %v3265, %v3750
        %v3752 = vpop.f32.mrf.mxu0
        %v3753 = vadd.f32 %v3269, %v3752
        %3754 = vmatprep.mubr.bf16.mxu0 %v3157
        %3755 = vmatmul.mubr.bf16.gmra.mxu0 %v3156
        %v3756 = vpop.f32.mrf.mxu0
        %v3757 = vadd.f32 %v3265, %v3756
        %v3758 = vpop.f32.mrf.mxu0
        %v3759 = vadd.f32 %v3269, %v3758
        %v3760 = vpop.f32.mrf.mxu0
        %v3761 = vadd.f32 %v3265, %v3760
        %v3762 = vpop.f32.mrf.mxu0
        %v3763 = vadd.f32 %v3269, %v3762
        %3764 = vmatprep.mubr.bf16.mxu0 %v3159
        %3765 = vmatmul.mubr.bf16.gmra.mxu0 %v3158
        %v3766 = vpop.f32.mrf.mxu0
        %v3767 = vadd.f32 %v3265, %v3766
        %v3768 = vpop.f32.mrf.mxu0
        %v3769 = vadd.f32 %v3269, %v3768
        %v3770 = vpop.f32.mrf.mxu0
        %v3771 = vadd.f32 %v3265, %v3770
        %v3772 = vpop.f32.mrf.mxu0
        %v3773 = vadd.f32 %v3269, %v3772
        %3774 = vmatprep.mubr.bf16.mxu0 %v3161
        %3775 = vmatmul.mubr.bf16.gmra.mxu0 %v3160
        %v3776 = vpop.f32.mrf.mxu0
        %v3777 = vadd.f32 %v3265, %v3776
        %v3778 = vpop.f32.mrf.mxu0
        %v3779 = vadd.f32 %v3269, %v3778
        %v3780 = vpop.f32.mrf.mxu0
        %v3781 = vadd.f32 %v3265, %v3780
        %v3782 = vpop.f32.mrf.mxu0
        %v3783 = vadd.f32 %v3269, %v3782
        %3784 = vmatprep.mubr.bf16.mxu0 %v3163
        %3785 = vmatmul.mubr.bf16.gmra.mxu0 %v3162
        %v3786 = vpop.f32.mrf.mxu0
        %v3787 = vadd.f32 %v3265, %v3786
        %v3788 = vpop.f32.mrf.mxu0
        %v3789 = vadd.f32 %v3269, %v3788
        %v3790 = vpop.f32.mrf.mxu0
        %v3791 = vadd.f32 %v3265, %v3790
        %v3792 = vpop.f32.mrf.mxu0
        %v3793 = vadd.f32 %v3269, %v3792
        %3794 = vmatprep.mubr.bf16.mxu0 %v3165
        %3795 = vmatmul.mubr.bf16.gmra.mxu0 %v3164
        %v3796 = vpop.f32.mrf.mxu0
        %v3797 = vadd.f32 %v3265, %v3796
        %v3798 = vpop.f32.mrf.mxu0
        %v3799 = vadd.f32 %v3269, %v3798
        %v3800 = vpop.f32.mrf.mxu0
        %v3801 = vadd.f32 %v3265, %v3800
        %v3802 = vpop.f32.mrf.mxu0
        %v3803 = vadd.f32 %v3269, %v3802
        %3804 = vmatprep.mubr.bf16.mxu0 %v3167
        %3805 = vmatmul.mubr.bf16.gmra.mxu0 %v3166
        %v3806 = vpop.f32.mrf.mxu0
        %v3807 = vadd.f32 %v3265, %v3806
        %v3808 = vpop.f32.mrf.mxu0
        %v3809 = vadd.f32 %v3269, %v3808
        %v3810 = vpop.f32.mrf.mxu0
        %v3811 = vadd.f32 %v3265, %v3810
        %v3812 = vpop.f32.mrf.mxu0
        %v3813 = vadd.f32 %v3269, %v3812
        %3814 = vmatprep.mubr.bf16.mxu0 %v3169
        %3815 = vmatmul.mubr.bf16.gmra.mxu0 %v3168
        %v3816 = vpop.f32.mrf.mxu0
        %v3817 = vadd.f32 %v3265, %v3816
        %v3818 = vpop.f32.mrf.mxu0
        %v3819 = vadd.f32 %v3269, %v3818
        %v3820 = vpop.f32.mrf.mxu0
        %v3821 = vadd.f32 %v3265, %v3820
        %v3822 = vpop.f32.mrf.mxu0
        %v3823 = vadd.f32 %v3269, %v3822
        %3824 = vmatprep.mubr.bf16.mxu0 %v3171
        %3825 = vmatmul.mubr.bf16.gmra.mxu0 %v3170
        %v3826 = vpop.f32.mrf.mxu0
        %v3827 = vadd.f32 %v3265, %v3826
        %v3828 = vpop.f32.mrf.mxu0
        %v3829 = vadd.f32 %v3269, %v3828
        %v3830 = vpop.f32.mrf.mxu0
        %v3831 = vadd.f32 %v3265, %v3830
        %v3832 = vpop.f32.mrf.mxu0
        %v3833 = vadd.f32 %v3269, %v3832
        %3834 = vmatprep.mubr.bf16.mxu0 %v3173
        %3835 = vmatmul.mubr.bf16.gmra.mxu0 %v3172
        %v3836 = vpop.f32.mrf.mxu0
        %v3837 = vadd.f32 %v3265, %v3836
        %v3838 = vpop.f32.mrf.mxu0
        %v3839 = vadd.f32 %v3269, %v3838
        %v3840 = vpop.f32.mrf.mxu0
        %v3841 = vadd.f32 %v3265, %v3840
        %v3842 = vpop.f32.mrf.mxu0
        %v3843 = vadd.f32 %v3269, %v3842
        %3844 = vmatprep.mubr.bf16.mxu0 %v3175
        %3845 = vmatmul.mubr.bf16.gmra.mxu0 %v3174
        %v3846 = vpop.f32.mrf.mxu0
        %v3847 = vadd.f32 %v3265, %v3846
        %v3848 = vpop.f32.mrf.mxu0
        %v3849 = vadd.f32 %v3269, %v3848
        %v3850 = vpop.f32.mrf.mxu0
        %v3851 = vadd.f32 %v3265, %v3850
        %v3852 = vpop.f32.mrf.mxu0
        %v3853 = vadd.f32 %v3269, %v3852
        %3854 = vmatprep.mubr.bf16.mxu0 %v3177
        %3855 = vmatmul.mubr.bf16.gmra.mxu0 %v3176
        %v3856 = vpop.f32.mrf.mxu0
        %v3857 = vadd.f32 %v3265, %v3856
        %v3858 = vpop.f32.mrf.mxu0
        %v3859 = vadd.f32 %v3269, %v3858
        %v3860 = vpop.f32.mrf.mxu0
        %v3861 = vadd.f32 %v3265, %v3860
        %v3862 = vpop.f32.mrf.mxu0
        %v3863 = vadd.f32 %v3269, %v3862
        %3864 = vmatprep.mubr.bf16.mxu0 %v3179
        %3865 = vmatmul.mubr.bf16.gmra.mxu0 %v3178
        %v3866 = vpop.f32.mrf.mxu0
        %v3867 = vadd.f32 %v3265, %v3866
        %v3868 = vpop.f32.mrf.mxu0
        %v3869 = vadd.f32 %v3269, %v3868
        %v3870 = vpop.f32.mrf.mxu0
        %v3871 = vadd.f32 %v3265, %v3870
        %v3872 = vpop.f32.mrf.mxu0
        %v3873 = vadd.f32 %v3269, %v3872
        %3874 = vmatprep.mubr.bf16.mxu0 %v3181
        %3875 = vmatmul.mubr.bf16.gmra.mxu0 %v3180
        %v3876 = vpop.f32.mrf.mxu0
        %v3877 = vadd.f32 %v3265, %v3876
        %v3878 = vpop.f32.mrf.mxu0
        %v3879 = vadd.f32 %v3269, %v3878
        %v3880 = vpop.f32.mrf.mxu0
        %v3881 = vadd.f32 %v3265, %v3880
        %v3882 = vpop.f32.mrf.mxu0
        %v3883 = vadd.f32 %v3269, %v3882
        %3884 = vmatprep.mubr.bf16.mxu0 %v3183
        %3885 = vmatmul.mubr.bf16.gmra.mxu0 %v3182
        %v3886 = vpop.f32.mrf.mxu0
        %v3887 = vadd.f32 %v3265, %v3886
        %v3888 = vpop.f32.mrf.mxu0
        %v3889 = vadd.f32 %v3269, %v3888
        %v3890 = vpop.f32.mrf.mxu0
        %v3891 = vadd.f32 %v3265, %v3890
        %v3892 = vpop.f32.mrf.mxu0
        %v3893 = vadd.f32 %v3269, %v3892
        %3894 = vmatprep.mubr.bf16.mxu0 %v3185
        %3895 = vmatmul.mubr.bf16.gmra.mxu0 %v3184
        %v3896 = vpop.f32.mrf.mxu0
        %v3897 = vadd.f32 %v3265, %v3896
        %v3898 = vpop.f32.mrf.mxu0
        %v3899 = vadd.f32 %v3269, %v3898
        %v3900 = vpop.f32.mrf.mxu0
        %v3901 = vadd.f32 %v3265, %v3900
        %v3902 = vpop.f32.mrf.mxu0
        %v3903 = vadd.f32 %v3269, %v3902
        %3904 = vmatprep.mubr.bf16.mxu0 %v3187
        %3905 = vmatmul.mubr.bf16.gmra.mxu0 %v3186
        %v3906 = vpop.f32.mrf.mxu0
        %v3907 = vadd.f32 %v3265, %v3906
        %v3908 = vpop.f32.mrf.mxu0
        %v3909 = vadd.f32 %v3269, %v3908
        %v3910 = vpop.f32.mrf.mxu0
        %v3911 = vadd.f32 %v3265, %v3910
        %v3912 = vpop.f32.mrf.mxu0
        %v3913 = vadd.f32 %v3269, %v3912
        %3914 = vmatprep.mubr.bf16.mxu0 %v3189
        %3915 = vmatmul.mubr.bf16.gmra.mxu0 %v3188
        %v3916 = vpop.f32.mrf.mxu0
        %v3917 = vadd.f32 %v3265, %v3916
        %v3918 = vpop.f32.mrf.mxu0
        %v3919 = vadd.f32 %v3269, %v3918
        %v3920 = vpop.f32.mrf.mxu0
        %v3921 = vadd.f32 %v3265, %v3920
        %v3922 = vpop.f32.mrf.mxu0
        %v3923 = vadd.f32 %v3269, %v3922
        %3924 = vmatprep.mubr.bf16.mxu0 %v3191
        %3925 = vmatmul.mubr.bf16.gmra.mxu0 %v3190
        %v3926 = vpop.f32.mrf.mxu0
        %v3927 = vadd.f32 %v3265, %v3926
        %v3928 = vpop.f32.mrf.mxu0
        %v3929 = vadd.f32 %v3269, %v3928
        %v3930 = vpop.f32.mrf.mxu0
        %v3931 = vadd.f32 %v3265, %v3930
        %v3932 = vpop.f32.mrf.mxu0
        %v3933 = vadd.f32 %v3269, %v3932
        %3934 = vmatprep.mubr.bf16.mxu0 %v3193
        %3935 = vmatmul.mubr.bf16.gmra.mxu0 %v3192
        %v3936 = vpop.f32.mrf.mxu0
        %v3937 = vadd.f32 %v3265, %v3936
        %v3938 = vpop.f32.mrf.mxu0
        %v3939 = vadd.f32 %v3269, %v3938
        %v3940 = vpop.f32.mrf.mxu0
        %v3941 = vadd.f32 %v3265, %v3940
        %v3942 = vpop.f32.mrf.mxu0
        %v3943 = vadd.f32 %v3269, %v3942
        %3944 = vmatprep.mubr.bf16.mxu0 %v3195
        %3945 = vmatmul.mubr.bf16.gmra.mxu0 %v3194
        %v3946 = vpop.f32.mrf.mxu0
        %v3947 = vadd.f32 %v3265, %v3946
        %v3948 = vpop.f32.mrf.mxu0
        %v3949 = vadd.f32 %v3269, %v3948
        %v3950 = vpop.f32.mrf.mxu0
        %v3951 = vadd.f32 %v3265, %v3950
        %v3952 = vpop.f32.mrf.mxu0
        %v3953 = vadd.f32 %v3269, %v3952
        %3954 = vdwg.mxu0
        %3955 = vmatprep.subr.bf16.mxu0 %v3505
        %3956 = vmatpush1.bf16.msra.mxu0 %v3504
        %3957 = vmatprep.subr.bf16.mxu0 %v3501
        %3958 = vmatpush1.bf16.msra.mxu0 %v3500
        %3959 = vmatprep.subr.bf16.mxu0 %v3497
        %3960 = vmatpush1.bf16.msra.mxu0 %v3496
        %3961 = vmatprep.subr.bf16.mxu0 %v3493
        %3962 = vmatpush1.bf16.msra.mxu0 %v3492
        %3963 = vmatprep.subr.bf16.mxu0 %v3489
        %3964 = vmatpush1.bf16.msra.mxu0 %v3488
        %3965 = vmatprep.subr.bf16.mxu0 %v3485
        %3966 = vmatpush1.bf16.msra.mxu0 %v3484
        %3967 = vmatprep.subr.bf16.mxu0 %v3481
        %3968 = vmatpush1.bf16.msra.mxu0 %v3480
        %3969 = vmatprep.subr.bf16.mxu0 %v3477
        %3970 = vmatpush1.bf16.msra.mxu0 %v3476
        %3971 = vmatprep.subr.bf16.mxu0 %v3537
        %3972 = vmatpush2.bf16.msra.mxu0 %v3536
        %3973 = vmatprep.subr.bf16.mxu0 %v3533
        %3974 = vmatpush2.bf16.msra.mxu0 %v3532
        %3975 = vmatprep.subr.bf16.mxu0 %v3529
        %3976 = vmatpush2.bf16.msra.mxu0 %v3528
        %3977 = vmatprep.subr.bf16.mxu0 %v3525
        %3978 = vmatpush2.bf16.msra.mxu0 %v3524
        %3979 = vmatprep.subr.bf16.mxu0 %v3521
        %3980 = vmatpush2.bf16.msra.mxu0 %v3520
        %3981 = vmatprep.subr.bf16.mxu0 %v3517
        %3982 = vmatpush2.bf16.msra.mxu0 %v3516
        %3983 = vmatprep.subr.bf16.mxu0 %v3513
        %3984 = vmatpush2.bf16.msra.mxu0 %v3512
        %3985 = vmatprep.subr.bf16.mxu0 %v3509
        %3986 = vmatpush2.bf16.msra.mxu0 %v3508
        %3987 = vmatprep.mubr.bf16.mxu0 %v3133
        %3988 = vmatmul.mubr.bf16.gmra.mxu0 %v3132
        %v3989 = vpop.f32.mrf.mxu0
        %v3990 = vadd.f32 %v3273, %v3989
        %v3991 = vpop.f32.mrf.mxu0
        %v3992 = vadd.f32 %v3277, %v3991
        %v3993 = vpop.f32.mrf.mxu0
        %v3994 = vadd.f32 %v3273, %v3993
        %v3995 = vpop.f32.mrf.mxu0
        %v3996 = vadd.f32 %v3277, %v3995
        %3997 = vmatprep.mubr.bf16.mxu0 %v3135
        %3998 = vmatmul.mubr.bf16.gmra.mxu0 %v3134
        %v3999 = vpop.f32.mrf.mxu0
        %v4000 = vadd.f32 %v3273, %v3999
        %v4001 = vpop.f32.mrf.mxu0
        %v4002 = vadd.f32 %v3277, %v4001
        %v4003 = vpop.f32.mrf.mxu0
        %v4004 = vadd.f32 %v3273, %v4003
        %v4005 = vpop.f32.mrf.mxu0
        %v4006 = vadd.f32 %v3277, %v4005
        %4007 = vmatprep.mubr.bf16.mxu0 %v3137
        %4008 = vmatmul.mubr.bf16.gmra.mxu0 %v3136
        %v4009 = vpop.f32.mrf.mxu0
        %v4010 = vadd.f32 %v3273, %v4009
        %v4011 = vpop.f32.mrf.mxu0
        %v4012 = vadd.f32 %v3277, %v4011
        %v4013 = vpop.f32.mrf.mxu0
        %v4014 = vadd.f32 %v3273, %v4013
        %v4015 = vpop.f32.mrf.mxu0
        %v4016 = vadd.f32 %v3277, %v4015
        %4017 = vmatprep.mubr.bf16.mxu0 %v3139
        %4018 = vmatmul.mubr.bf16.gmra.mxu0 %v3138
        %v4019 = vpop.f32.mrf.mxu0
        %v4020 = vadd.f32 %v3273, %v4019
        %v4021 = vpop.f32.mrf.mxu0
        %v4022 = vadd.f32 %v3277, %v4021
        %v4023 = vpop.f32.mrf.mxu0
        %v4024 = vadd.f32 %v3273, %v4023
        %v4025 = vpop.f32.mrf.mxu0
        %v4026 = vadd.f32 %v3277, %v4025
        %4027 = vmatprep.mubr.bf16.mxu0 %v3141
        %4028 = vmatmul.mubr.bf16.gmra.mxu0 %v3140
        %v4029 = vpop.f32.mrf.mxu0
        %v4030 = vadd.f32 %v3273, %v4029
        %v4031 = vpop.f32.mrf.mxu0
        %v4032 = vadd.f32 %v3277, %v4031
        %v4033 = vpop.f32.mrf.mxu0
        %v4034 = vadd.f32 %v3273, %v4033
        %v4035 = vpop.f32.mrf.mxu0
        %v4036 = vadd.f32 %v3277, %v4035
        %4037 = vmatprep.mubr.bf16.mxu0 %v3143
        %4038 = vmatmul.mubr.bf16.gmra.mxu0 %v3142
        %v4039 = vpop.f32.mrf.mxu0
        %v4040 = vadd.f32 %v3273, %v4039
        %v4041 = vpop.f32.mrf.mxu0
        %v4042 = vadd.f32 %v3277, %v4041
        %v4043 = vpop.f32.mrf.mxu0
        %v4044 = vadd.f32 %v3273, %v4043
        %v4045 = vpop.f32.mrf.mxu0
        %v4046 = vadd.f32 %v3277, %v4045
        %4047 = vmatprep.mubr.bf16.mxu0 %v3145
        %4048 = vmatmul.mubr.bf16.gmra.mxu0 %v3144
        %v4049 = vpop.f32.mrf.mxu0
        %v4050 = vadd.f32 %v3273, %v4049
        %v4051 = vpop.f32.mrf.mxu0
        %v4052 = vadd.f32 %v3277, %v4051
        %v4053 = vpop.f32.mrf.mxu0
        %v4054 = vadd.f32 %v3273, %v4053
        %v4055 = vpop.f32.mrf.mxu0
        %v4056 = vadd.f32 %v3277, %v4055
        %4057 = vmatprep.mubr.bf16.mxu0 %v3147
        %4058 = vmatmul.mubr.bf16.gmra.mxu0 %v3146
        %v4059 = vpop.f32.mrf.mxu0
        %v4060 = vadd.f32 %v3273, %v4059
        %v4061 = vpop.f32.mrf.mxu0
        %v4062 = vadd.f32 %v3277, %v4061
        %v4063 = vpop.f32.mrf.mxu0
        %v4064 = vadd.f32 %v3273, %v4063
        %v4065 = vpop.f32.mrf.mxu0
        %v4066 = vadd.f32 %v3277, %v4065
        %4067 = vmatprep.mubr.bf16.mxu0 %v3149
        %4068 = vmatmul.mubr.bf16.gmra.mxu0 %v3148
        %v4069 = vpop.f32.mrf.mxu0
        %v4070 = vadd.f32 %v3273, %v4069
        %v4071 = vpop.f32.mrf.mxu0
        %v4072 = vadd.f32 %v3277, %v4071
        %v4073 = vpop.f32.mrf.mxu0
        %v4074 = vadd.f32 %v3273, %v4073
        %v4075 = vpop.f32.mrf.mxu0
        %v4076 = vadd.f32 %v3277, %v4075
        %4077 = vmatprep.mubr.bf16.mxu0 %v3151
        %4078 = vmatmul.mubr.bf16.gmra.mxu0 %v3150
        %v4079 = vpop.f32.mrf.mxu0
        %v4080 = vadd.f32 %v3273, %v4079
        %v4081 = vpop.f32.mrf.mxu0
        %v4082 = vadd.f32 %v3277, %v4081
        %v4083 = vpop.f32.mrf.mxu0
        %v4084 = vadd.f32 %v3273, %v4083
        %v4085 = vpop.f32.mrf.mxu0
        %v4086 = vadd.f32 %v3277, %v4085
        %4087 = vmatprep.mubr.bf16.mxu0 %v3153
        %4088 = vmatmul.mubr.bf16.gmra.mxu0 %v3152
        %v4089 = vpop.f32.mrf.mxu0
        %v4090 = vadd.f32 %v3273, %v4089
        %v4091 = vpop.f32.mrf.mxu0
        %v4092 = vadd.f32 %v3277, %v4091
        %v4093 = vpop.f32.mrf.mxu0
        %v4094 = vadd.f32 %v3273, %v4093
        %v4095 = vpop.f32.mrf.mxu0
        %v4096 = vadd.f32 %v3277, %v4095
        %4097 = vmatprep.mubr.bf16.mxu0 %v3155
        %4098 = vmatmul.mubr.bf16.gmra.mxu0 %v3154
        %v4099 = vpop.f32.mrf.mxu0
        %v4100 = vadd.f32 %v3273, %v4099
        %v4101 = vpop.f32.mrf.mxu0
        %v4102 = vadd.f32 %v3277, %v4101
        %v4103 = vpop.f32.mrf.mxu0
        %v4104 = vadd.f32 %v3273, %v4103
        %v4105 = vpop.f32.mrf.mxu0
        %v4106 = vadd.f32 %v3277, %v4105
        %4107 = vmatprep.mubr.bf16.mxu0 %v3157
        %4108 = vmatmul.mubr.bf16.gmra.mxu0 %v3156
        %v4109 = vpop.f32.mrf.mxu0
        %v4110 = vadd.f32 %v3273, %v4109
        %v4111 = vpop.f32.mrf.mxu0
        %v4112 = vadd.f32 %v3277, %v4111
        %v4113 = vpop.f32.mrf.mxu0
        %v4114 = vadd.f32 %v3273, %v4113
        %v4115 = vpop.f32.mrf.mxu0
        %v4116 = vadd.f32 %v3277, %v4115
        %4117 = vmatprep.mubr.bf16.mxu0 %v3159
        %4118 = vmatmul.mubr.bf16.gmra.mxu0 %v3158
        %v4119 = vpop.f32.mrf.mxu0
        %v4120 = vadd.f32 %v3273, %v4119
        %v4121 = vpop.f32.mrf.mxu0
        %v4122 = vadd.f32 %v3277, %v4121
        %v4123 = vpop.f32.mrf.mxu0
        %v4124 = vadd.f32 %v3273, %v4123
        %v4125 = vpop.f32.mrf.mxu0
        %v4126 = vadd.f32 %v3277, %v4125
        %4127 = vmatprep.mubr.bf16.mxu0 %v3161
        %4128 = vmatmul.mubr.bf16.gmra.mxu0 %v3160
        %v4129 = vpop.f32.mrf.mxu0
        %v4130 = vadd.f32 %v3273, %v4129
        %v4131 = vpop.f32.mrf.mxu0
        %v4132 = vadd.f32 %v3277, %v4131
        %v4133 = vpop.f32.mrf.mxu0
        %v4134 = vadd.f32 %v3273, %v4133
        %v4135 = vpop.f32.mrf.mxu0
        %v4136 = vadd.f32 %v3277, %v4135
        %4137 = vmatprep.mubr.bf16.mxu0 %v3163
        %4138 = vmatmul.mubr.bf16.gmra.mxu0 %v3162
        %v4139 = vpop.f32.mrf.mxu0
        %v4140 = vadd.f32 %v3273, %v4139
        %v4141 = vpop.f32.mrf.mxu0
        %v4142 = vadd.f32 %v3277, %v4141
        %v4143 = vpop.f32.mrf.mxu0
        %v4144 = vadd.f32 %v3273, %v4143
        %v4145 = vpop.f32.mrf.mxu0
        %v4146 = vadd.f32 %v3277, %v4145
        %4147 = vmatprep.mubr.bf16.mxu0 %v3165
        %4148 = vmatmul.mubr.bf16.gmra.mxu0 %v3164
        %v4149 = vpop.f32.mrf.mxu0
        %v4150 = vadd.f32 %v3273, %v4149
        %v4151 = vpop.f32.mrf.mxu0
        %v4152 = vadd.f32 %v3277, %v4151
        %v4153 = vpop.f32.mrf.mxu0
        %v4154 = vadd.f32 %v3273, %v4153
        %v4155 = vpop.f32.mrf.mxu0
        %v4156 = vadd.f32 %v3277, %v4155
        %4157 = vmatprep.mubr.bf16.mxu0 %v3167
        %4158 = vmatmul.mubr.bf16.gmra.mxu0 %v3166
        %v4159 = vpop.f32.mrf.mxu0
        %v4160 = vadd.f32 %v3273, %v4159
        %v4161 = vpop.f32.mrf.mxu0
        %v4162 = vadd.f32 %v3277, %v4161
        %v4163 = vpop.f32.mrf.mxu0
        %v4164 = vadd.f32 %v3273, %v4163
        %v4165 = vpop.f32.mrf.mxu0
        %v4166 = vadd.f32 %v3277, %v4165
        %4167 = vmatprep.mubr.bf16.mxu0 %v3169
        %4168 = vmatmul.mubr.bf16.gmra.mxu0 %v3168
        %v4169 = vpop.f32.mrf.mxu0
        %v4170 = vadd.f32 %v3273, %v4169
        %v4171 = vpop.f32.mrf.mxu0
        %v4172 = vadd.f32 %v3277, %v4171
        %v4173 = vpop.f32.mrf.mxu0
        %v4174 = vadd.f32 %v3273, %v4173
        %v4175 = vpop.f32.mrf.mxu0
        %v4176 = vadd.f32 %v3277, %v4175
        %4177 = vmatprep.mubr.bf16.mxu0 %v3171
        %4178 = vmatmul.mubr.bf16.gmra.mxu0 %v3170
        %v4179 = vpop.f32.mrf.mxu0
        %v4180 = vadd.f32 %v3273, %v4179
        %v4181 = vpop.f32.mrf.mxu0
        %v4182 = vadd.f32 %v3277, %v4181
        %v4183 = vpop.f32.mrf.mxu0
        %v4184 = vadd.f32 %v3273, %v4183
        %v4185 = vpop.f32.mrf.mxu0
        %v4186 = vadd.f32 %v3277, %v4185
        %4187 = vmatprep.mubr.bf16.mxu0 %v3173
        %4188 = vmatmul.mubr.bf16.gmra.mxu0 %v3172
        %v4189 = vpop.f32.mrf.mxu0
        %v4190 = vadd.f32 %v3273, %v4189
        %v4191 = vpop.f32.mrf.mxu0
        %v4192 = vadd.f32 %v3277, %v4191
        %v4193 = vpop.f32.mrf.mxu0
        %v4194 = vadd.f32 %v3273, %v4193
        %v4195 = vpop.f32.mrf.mxu0
        %v4196 = vadd.f32 %v3277, %v4195
        %4197 = vmatprep.mubr.bf16.mxu0 %v3175
        %4198 = vmatmul.mubr.bf16.gmra.mxu0 %v3174
        %v4199 = vpop.f32.mrf.mxu0
        %v4200 = vadd.f32 %v3273, %v4199
        %v4201 = vpop.f32.mrf.mxu0
        %v4202 = vadd.f32 %v3277, %v4201
        %v4203 = vpop.f32.mrf.mxu0
        %v4204 = vadd.f32 %v3273, %v4203
        %v4205 = vpop.f32.mrf.mxu0
        %v4206 = vadd.f32 %v3277, %v4205
        %4207 = vmatprep.mubr.bf16.mxu0 %v3177
        %4208 = vmatmul.mubr.bf16.gmra.mxu0 %v3176
        %v4209 = vpop.f32.mrf.mxu0
        %v4210 = vadd.f32 %v3273, %v4209
        %v4211 = vpop.f32.mrf.mxu0
        %v4212 = vadd.f32 %v3277, %v4211
        %v4213 = vpop.f32.mrf.mxu0
        %v4214 = vadd.f32 %v3273, %v4213
        %v4215 = vpop.f32.mrf.mxu0
        %v4216 = vadd.f32 %v3277, %v4215
        %4217 = vmatprep.mubr.bf16.mxu0 %v3179
        %4218 = vmatmul.mubr.bf16.gmra.mxu0 %v3178
        %v4219 = vpop.f32.mrf.mxu0
        %v4220 = vadd.f32 %v3273, %v4219
        %v4221 = vpop.f32.mrf.mxu0
        %v4222 = vadd.f32 %v3277, %v4221
        %v4223 = vpop.f32.mrf.mxu0
        %v4224 = vadd.f32 %v3273, %v4223
        %v4225 = vpop.f32.mrf.mxu0
        %v4226 = vadd.f32 %v3277, %v4225
        %4227 = vmatprep.mubr.bf16.mxu0 %v3181
        %4228 = vmatmul.mubr.bf16.gmra.mxu0 %v3180
        %v4229 = vpop.f32.mrf.mxu0
        %v4230 = vadd.f32 %v3273, %v4229
        %v4231 = vpop.f32.mrf.mxu0
        %v4232 = vadd.f32 %v3277, %v4231
        %v4233 = vpop.f32.mrf.mxu0
        %v4234 = vadd.f32 %v3273, %v4233
        %v4235 = vpop.f32.mrf.mxu0
        %v4236 = vadd.f32 %v3277, %v4235
        %4237 = vmatprep.mubr.bf16.mxu0 %v3183
        %4238 = vmatmul.mubr.bf16.gmra.mxu0 %v3182
        %v4239 = vpop.f32.mrf.mxu0
        %v4240 = vadd.f32 %v3273, %v4239
        %v4241 = vpop.f32.mrf.mxu0
        %v4242 = vadd.f32 %v3277, %v4241
        %v4243 = vpop.f32.mrf.mxu0
        %v4244 = vadd.f32 %v3273, %v4243
        %v4245 = vpop.f32.mrf.mxu0
        %v4246 = vadd.f32 %v3277, %v4245
        %4247 = vmatprep.mubr.bf16.mxu0 %v3185
        %4248 = vmatmul.mubr.bf16.gmra.mxu0 %v3184
        %v4249 = vpop.f32.mrf.mxu0
        %v4250 = vadd.f32 %v3273, %v4249
        %v4251 = vpop.f32.mrf.mxu0
        %v4252 = vadd.f32 %v3277, %v4251
        %v4253 = vpop.f32.mrf.mxu0
        %v4254 = vadd.f32 %v3273, %v4253
        %v4255 = vpop.f32.mrf.mxu0
        %v4256 = vadd.f32 %v3277, %v4255
        %4257 = vmatprep.mubr.bf16.mxu0 %v3187
        %4258 = vmatmul.mubr.bf16.gmra.mxu0 %v3186
        %v4259 = vpop.f32.mrf.mxu0
        %v4260 = vadd.f32 %v3273, %v4259
        %v4261 = vpop.f32.mrf.mxu0
        %v4262 = vadd.f32 %v3277, %v4261
        %v4263 = vpop.f32.mrf.mxu0
        %v4264 = vadd.f32 %v3273, %v4263
        %v4265 = vpop.f32.mrf.mxu0
        %v4266 = vadd.f32 %v3277, %v4265
        %4267 = vmatprep.mubr.bf16.mxu0 %v3189
        %4268 = vmatmul.mubr.bf16.gmra.mxu0 %v3188
        %v4269 = vpop.f32.mrf.mxu0
        %v4270 = vadd.f32 %v3273, %v4269
        %v4271 = vpop.f32.mrf.mxu0
        %v4272 = vadd.f32 %v3277, %v4271
        %v4273 = vpop.f32.mrf.mxu0
        %v4274 = vadd.f32 %v3273, %v4273
        %v4275 = vpop.f32.mrf.mxu0
        %v4276 = vadd.f32 %v3277, %v4275
        %4277 = vmatprep.mubr.bf16.mxu0 %v3191
        %4278 = vmatmul.mubr.bf16.gmra.mxu0 %v3190
        %v4279 = vpop.f32.mrf.mxu0
        %v4280 = vadd.f32 %v3273, %v4279
        %v4281 = vpop.f32.mrf.mxu0
        %v4282 = vadd.f32 %v3277, %v4281
        %v4283 = vpop.f32.mrf.mxu0
        %v4284 = vadd.f32 %v3273, %v4283
        %v4285 = vpop.f32.mrf.mxu0
        %v4286 = vadd.f32 %v3277, %v4285
        %4287 = vmatprep.mubr.bf16.mxu0 %v3193
        %4288 = vmatmul.mubr.bf16.gmra.mxu0 %v3192
        %v4289 = vpop.f32.mrf.mxu0
        %v4290 = vadd.f32 %v3273, %v4289
        %v4291 = vpop.f32.mrf.mxu0
        %v4292 = vadd.f32 %v3277, %v4291
        %v4293 = vpop.f32.mrf.mxu0
        %v4294 = vadd.f32 %v3273, %v4293
        %v4295 = vpop.f32.mrf.mxu0
        %v4296 = vadd.f32 %v3277, %v4295
        %4297 = vmatprep.mubr.bf16.mxu0 %v3195
        %4298 = vmatmul.mubr.bf16.gmra.mxu0 %v3194
        %v4299 = vpop.f32.mrf.mxu0
        %v4300 = vadd.f32 %v3273, %v4299
        %v4301 = vpop.f32.mrf.mxu0
        %v4302 = vadd.f32 %v3277, %v4301
        %v4303 = vpop.f32.mrf.mxu0
        %v4304 = vadd.f32 %v3273, %v4303
        %v4305 = vpop.f32.mrf.mxu0
        %v4306 = vadd.f32 %v3277, %v4305
        %4307 = vdwg.mxu0
        %v4308 = vmax.f32 %v3637, %v3641
        %v4309 = vmax.f32 %v4308, %v3647
        %v4310 = vmax.f32 %v4309, %v3651
        %v4311 = vmax.f32 %v4310, %v3657
        %v4312 = vmax.f32 %v4311, %v3661
        %v4313 = vmax.f32 %v4312, %v3667
        %v4314 = vmax.f32 %v4313, %v3671
        %v4315 = vmax.f32 %v4314, %v3677
        %v4316 = vmax.f32 %v4315, %v3681
        %v4317 = vmax.f32 %v4316, %v3687
        %v4318 = vmax.f32 %v4317, %v3691
        %v4319 = vmax.f32 %v4318, %v3697
        %v4320 = vmax.f32 %v4319, %v3701
        %v4321 = vmax.f32 %v4320, %v3707
        %v4322 = vmax.f32 %v4321, %v3711
        %v4323 = vmax.f32 %v4322, %v3717
        %v4324 = vmax.f32 %v4323, %v3721
        %v4325 = vmax.f32 %v4324, %v3727
        %v4326 = vmax.f32 %v4325, %v3731
        %v4327 = vmax.f32 %v4326, %v3737
        %v4328 = vmax.f32 %v4327, %v3741
        %v4329 = vmax.f32 %v4328, %v3747
        %v4330 = vmax.f32 %v4329, %v3751
        %v4331 = vmax.f32 %v4330, %v3757
        %v4332 = vmax.f32 %v4331, %v3761
        %v4333 = vmax.f32 %v4332, %v3767
        %v4334 = vmax.f32 %v4333, %v3771
        %v4335 = vmax.f32 %v4334, %v3777
        %v4336 = vmax.f32 %v4335, %v3781
        %v4337 = vmax.f32 %v4336, %v3787
        %v4338 = vmax.f32 %v4337, %v3791
        %v4339 = vmax.f32 %v4338, %v3797
        %v4340 = vmax.f32 %v4339, %v3801
        %v4341 = vmax.f32 %v4340, %v3807
        %v4342 = vmax.f32 %v4341, %v3811
        %v4343 = vmax.f32 %v4342, %v3817
        %v4344 = vmax.f32 %v4343, %v3821
        %v4345 = vmax.f32 %v4344, %v3827
        %v4346 = vmax.f32 %v4345, %v3831
        %v4347 = vmax.f32 %v4346, %v3837
        %v4348 = vmax.f32 %v4347, %v3841
        %v4349 = vmax.f32 %v4348, %v3847
        %v4350 = vmax.f32 %v4349, %v3851
        %v4351 = vmax.f32 %v4350, %v3857
        %v4352 = vmax.f32 %v4351, %v3861
        %v4353 = vmax.f32 %v4352, %v3867
        %v4354 = vmax.f32 %v4353, %v3871
        %v4355 = vmax.f32 %v4354, %v3877
        %v4356 = vmax.f32 %v4355, %v3881
        %v4357 = vmax.f32 %v4356, %v3887
        %v4358 = vmax.f32 %v4357, %v3891
        %v4359 = vmax.f32 %v4358, %v3897
        %v4360 = vmax.f32 %v4359, %v3901
        %v4361 = vmax.f32 %v4360, %v3907
        %v4362 = vmax.f32 %v4361, %v3911
        %v4363 = vmax.f32 %v4362, %v3917
        %v4364 = vmax.f32 %v4363, %v3921
        %v4365 = vmax.f32 %v4364, %v3927
        %v4366 = vmax.f32 %v4365, %v3931
        %v4367 = vmax.f32 %v4366, %v3937
        %v4368 = vmax.f32 %v4367, %v3941
        %v4369 = vmax.f32 %v4368, %v3947
        %v4370 = vmax.f32 %v4369, %v3951
        %v4371 = vmax.f32 %v3639, %v3643
        %v4372 = vmax.f32 %v4371, %v3649
        %v4373 = vmax.f32 %v4372, %v3653
        %v4374 = vmax.f32 %v4373, %v3659
        %v4375 = vmax.f32 %v4374, %v3663
        %v4376 = vmax.f32 %v4375, %v3669
        %v4377 = vmax.f32 %v4376, %v3673
        %v4378 = vmax.f32 %v4377, %v3679
        %v4379 = vmax.f32 %v4378, %v3683
        %v4380 = vmax.f32 %v4379, %v3689
        %v4381 = vmax.f32 %v4380, %v3693
        %v4382 = vmax.f32 %v4381, %v3699
        %v4383 = vmax.f32 %v4382, %v3703
        %v4384 = vmax.f32 %v4383, %v3709
        %v4385 = vmax.f32 %v4384, %v3713
        %v4386 = vmax.f32 %v4385, %v3719
        %v4387 = vmax.f32 %v4386, %v3723
        %v4388 = vmax.f32 %v4387, %v3729
        %v4389 = vmax.f32 %v4388, %v3733
        %v4390 = vmax.f32 %v4389, %v3739
        %v4391 = vmax.f32 %v4390, %v3743
        %v4392 = vmax.f32 %v4391, %v3749
        %v4393 = vmax.f32 %v4392, %v3753
        %v4394 = vmax.f32 %v4393, %v3759
        %v4395 = vmax.f32 %v4394, %v3763
        %v4396 = vmax.f32 %v4395, %v3769
        %v4397 = vmax.f32 %v4396, %v3773
        %v4398 = vmax.f32 %v4397, %v3779
        %v4399 = vmax.f32 %v4398, %v3783
        %v4400 = vmax.f32 %v4399, %v3789
        %v4401 = vmax.f32 %v4400, %v3793
        %v4402 = vmax.f32 %v4401, %v3799
        %v4403 = vmax.f32 %v4402, %v3803
        %v4404 = vmax.f32 %v4403, %v3809
        %v4405 = vmax.f32 %v4404, %v3813
        %v4406 = vmax.f32 %v4405, %v3819
        %v4407 = vmax.f32 %v4406, %v3823
        %v4408 = vmax.f32 %v4407, %v3829
        %v4409 = vmax.f32 %v4408, %v3833
        %v4410 = vmax.f32 %v4409, %v3839
        %v4411 = vmax.f32 %v4410, %v3843
        %v4412 = vmax.f32 %v4411, %v3849
        %v4413 = vmax.f32 %v4412, %v3853
        %v4414 = vmax.f32 %v4413, %v3859
        %v4415 = vmax.f32 %v4414, %v3863
        %v4416 = vmax.f32 %v4415, %v3869
        %v4417 = vmax.f32 %v4416, %v3873
        %v4418 = vmax.f32 %v4417, %v3879
        %v4419 = vmax.f32 %v4418, %v3883
        %v4420 = vmax.f32 %v4419, %v3889
        %v4421 = vmax.f32 %v4420, %v3893
        %v4422 = vmax.f32 %v4421, %v3899
        %v4423 = vmax.f32 %v4422, %v3903
        %v4424 = vmax.f32 %v4423, %v3909
        %v4425 = vmax.f32 %v4424, %v3913
        %v4426 = vmax.f32 %v4425, %v3919
        %v4427 = vmax.f32 %v4426, %v3923
        %v4428 = vmax.f32 %v4427, %v3929
        %v4429 = vmax.f32 %v4428, %v3933
        %v4430 = vmax.f32 %v4429, %v3939
        %v4431 = vmax.f32 %v4430, %v3943
        %v4432 = vmax.f32 %v4431, %v3949
        %v4433 = vmax.f32 %v4432, %v3953
        %v4434 = vmax.f32 %v3990, %v3994
        %v4435 = vmax.f32 %v4434, %v4000
        %v4436 = vmax.f32 %v4435, %v4004
        %v4437 = vmax.f32 %v4436, %v4010
        %v4438 = vmax.f32 %v4437, %v4014
        %v4439 = vmax.f32 %v4438, %v4020
        %v4440 = vmax.f32 %v4439, %v4024
        %v4441 = vmax.f32 %v4440, %v4030
        %v4442 = vmax.f32 %v4441, %v4034
        %v4443 = vmax.f32 %v4442, %v4040
        %v4444 = vmax.f32 %v4443, %v4044
        %v4445 = vmax.f32 %v4444, %v4050
        %v4446 = vmax.f32 %v4445, %v4054
        %v4447 = vmax.f32 %v4446, %v4060
        %v4448 = vmax.f32 %v4447, %v4064
        %v4449 = vmax.f32 %v4448, %v4070
        %v4450 = vmax.f32 %v4449, %v4074
        %v4451 = vmax.f32 %v4450, %v4080
        %v4452 = vmax.f32 %v4451, %v4084
        %v4453 = vmax.f32 %v4452, %v4090
        %v4454 = vmax.f32 %v4453, %v4094
        %v4455 = vmax.f32 %v4454, %v4100
        %v4456 = vmax.f32 %v4455, %v4104
        %v4457 = vmax.f32 %v4456, %v4110
        %v4458 = vmax.f32 %v4457, %v4114
        %v4459 = vmax.f32 %v4458, %v4120
        %v4460 = vmax.f32 %v4459, %v4124
        %v4461 = vmax.f32 %v4460, %v4130
        %v4462 = vmax.f32 %v4461, %v4134
        %v4463 = vmax.f32 %v4462, %v4140
        %v4464 = vmax.f32 %v4463, %v4144
        %v4465 = vmax.f32 %v4464, %v4150
        %v4466 = vmax.f32 %v4465, %v4154
        %v4467 = vmax.f32 %v4466, %v4160
        %v4468 = vmax.f32 %v4467, %v4164
        %v4469 = vmax.f32 %v4468, %v4170
        %v4470 = vmax.f32 %v4469, %v4174
        %v4471 = vmax.f32 %v4470, %v4180
        %v4472 = vmax.f32 %v4471, %v4184
        %v4473 = vmax.f32 %v4472, %v4190
        %v4474 = vmax.f32 %v4473, %v4194
        %v4475 = vmax.f32 %v4474, %v4200
        %v4476 = vmax.f32 %v4475, %v4204
        %v4477 = vmax.f32 %v4476, %v4210
        %v4478 = vmax.f32 %v4477, %v4214
        %v4479 = vmax.f32 %v4478, %v4220
        %v4480 = vmax.f32 %v4479, %v4224
        %v4481 = vmax.f32 %v4480, %v4230
        %v4482 = vmax.f32 %v4481, %v4234
        %v4483 = vmax.f32 %v4482, %v4240
        %v4484 = vmax.f32 %v4483, %v4244
        %v4485 = vmax.f32 %v4484, %v4250
        %v4486 = vmax.f32 %v4485, %v4254
        %v4487 = vmax.f32 %v4486, %v4260
        %v4488 = vmax.f32 %v4487, %v4264
        %v4489 = vmax.f32 %v4488, %v4270
        %v4490 = vmax.f32 %v4489, %v4274
        %v4491 = vmax.f32 %v4490, %v4280
        %v4492 = vmax.f32 %v4491, %v4284
        %v4493 = vmax.f32 %v4492, %v4290
        %v4494 = vmax.f32 %v4493, %v4294
        %v4495 = vmax.f32 %v4494, %v4300
        %v4496 = vmax.f32 %v4495, %v4304
        %v4497 = vmax.f32 %v3992, %v3996
        %v4498 = vmax.f32 %v4497, %v4002
        %v4499 = vmax.f32 %v4498, %v4006
        %v4500 = vmax.f32 %v4499, %v4012
        %v4501 = vmax.f32 %v4500, %v4016
        %v4502 = vmax.f32 %v4501, %v4022
        %v4503 = vmax.f32 %v4502, %v4026
        %v4504 = vmax.f32 %v4503, %v4032
        %v4505 = vmax.f32 %v4504, %v4036
        %v4506 = vmax.f32 %v4505, %v4042
        %v4507 = vmax.f32 %v4506, %v4046
        %v4508 = vmax.f32 %v4507, %v4052
        %v4509 = vmax.f32 %v4508, %v4056
        %v4510 = vmax.f32 %v4509, %v4062
        %v4511 = vmax.f32 %v4510, %v4066
        %v4512 = vmax.f32 %v4511, %v4072
        %v4513 = vmax.f32 %v4512, %v4076
        %v4514 = vmax.f32 %v4513, %v4082
        %v4515 = vmax.f32 %v4514, %v4086
        %v4516 = vmax.f32 %v4515, %v4092
        %v4517 = vmax.f32 %v4516, %v4096
        %v4518 = vmax.f32 %v4517, %v4102
        %v4519 = vmax.f32 %v4518, %v4106
        %v4520 = vmax.f32 %v4519, %v4112
        %v4521 = vmax.f32 %v4520, %v4116
        %v4522 = vmax.f32 %v4521, %v4122
        %v4523 = vmax.f32 %v4522, %v4126
        %v4524 = vmax.f32 %v4523, %v4132
        %v4525 = vmax.f32 %v4524, %v4136
        %v4526 = vmax.f32 %v4525, %v4142
        %v4527 = vmax.f32 %v4526, %v4146
        %v4528 = vmax.f32 %v4527, %v4152
        %v4529 = vmax.f32 %v4528, %v4156
        %v4530 = vmax.f32 %v4529, %v4162
        %v4531 = vmax.f32 %v4530, %v4166
        %v4532 = vmax.f32 %v4531, %v4172
        %v4533 = vmax.f32 %v4532, %v4176
        %v4534 = vmax.f32 %v4533, %v4182
        %v4535 = vmax.f32 %v4534, %v4186
        %v4536 = vmax.f32 %v4535, %v4192
        %v4537 = vmax.f32 %v4536, %v4196
        %v4538 = vmax.f32 %v4537, %v4202
        %v4539 = vmax.f32 %v4538, %v4206
        %v4540 = vmax.f32 %v4539, %v4212
        %v4541 = vmax.f32 %v4540, %v4216
        %v4542 = vmax.f32 %v4541, %v4222
        %v4543 = vmax.f32 %v4542, %v4226
        %v4544 = vmax.f32 %v4543, %v4232
        %v4545 = vmax.f32 %v4544, %v4236
        %v4546 = vmax.f32 %v4545, %v4242
        %v4547 = vmax.f32 %v4546, %v4246
        %v4548 = vmax.f32 %v4547, %v4252
        %v4549 = vmax.f32 %v4548, %v4256
        %v4550 = vmax.f32 %v4549, %v4262
        %v4551 = vmax.f32 %v4550, %v4266
        %v4552 = vmax.f32 %v4551, %v4272
        %v4553 = vmax.f32 %v4552, %v4276
        %v4554 = vmax.f32 %v4553, %v4282
        %v4555 = vmax.f32 %v4554, %v4286
        %v4556 = vmax.f32 %v4555, %v4292
        %v4557 = vmax.f32 %v4556, %v4296
        %v4558 = vmax.f32 %v4557, %v4302
        %v4559 = vmax.f32 %v4558, %v4306
        %v4560 = vld [vmem:[#allocation2] sm:$0xff]
        %v4561 = vld [vmem:[#allocation2 + $0x8] sm:$0xff]
        %v4562 = vld [vmem:[#allocation2 + $0x10] sm:$0xff]
        %v4563 = vld [vmem:[#allocation2 + $0x18] sm:$0xff]
        %v4564 = vmax.f32 %v4560, %v4370
        %v4565 = vmax.f32 %v4561, %v4433
        %v4566 = vmax.f32 %v4562, %v4496
        %v4567 = vmax.f32 %v4563, %v4559
        %4568 = vst [vmem:[#allocation2] sm:$0xff] %v4564
        %4569 = vst [vmem:[#allocation2 + $0x8] sm:$0xff] %v4565
        %4570 = vst [vmem:[#allocation2 + $0x10] sm:$0xff] %v4566
        %4571 = vst [vmem:[#allocation2 + $0x18] sm:$0xff] %v4567
        %p4572 = scmp.eq.s32.totalorder %s44, 1
        // Predicated region
        $region121: #{tpu_custom_call.1} parent=79 // pred_check
          %p4573 = pneg %p4572
        $region122: #{tpu_custom_call.1} parent=79 // pred_check_branch
          %4575 = sbr.rel (%p4573) target = $region124
        $region123: #{tpu_custom_call.1} parent=79 // pred_region
          %v4576 = vld [vmem:[#allocation2] sm:$0xff]
          %v4577 = vld [vmem:[#allocation2 + $0x8] sm:$0xff]
          %v4578 = vld [vmem:[#allocation2 + $0x10] sm:$0xff]
          %v4579 = vld [vmem:[#allocation2 + $0x18] sm:$0xff]
          %v4580 = vrot.slane %v4576, 4
          %v4581 = vmax.f32 %v4576, %v4580
          %v4582 = vrot.slane %v4581, 2
          %v4583 = vmax.f32 %v4581, %v4582
          %v4584 = vrot.slane %v4583, 1
          %v4585 = vmax.f32 %v4583, %v4584
          %v4586 = vrot.slane %v4577, 4
          %v4587 = vmax.f32 %v4577, %v4586
          %v4588 = vrot.slane %v4587, 2
          %v4589 = vmax.f32 %v4587, %v4588
          %v4590 = vrot.slane %v4589, 1
          %v4591 = vmax.f32 %v4589, %v4590
          %v4592 = vrot.slane %v4578, 4
          %v4593 = vmax.f32 %v4578, %v4592
          %v4594 = vrot.slane %v4593, 2
          %v4595 = vmax.f32 %v4593, %v4594
          %v4596 = vrot.slane %v4595, 1
          %v4597 = vmax.f32 %v4595, %v4596
          %v4598 = vrot.slane %v4579, 4
          %v4599 = vmax.f32 %v4579, %v4598
          %v4600 = vrot.slane %v4599, 2
          %v4601 = vmax.f32 %v4599, %v4600
          %v4602 = vrot.slane %v4601, 1
          %v4603 = vmax.f32 %v4601, %v4602
          %vm4604 = vcmp.eq.f32.partialorder %v4585, -inf
          %vm4605 = vcmp.eq.f32.partialorder %v4591, -inf
          %vm4606 = vcmp.eq.f32.partialorder %v4597, -inf
          %vm4607 = vcmp.eq.f32.partialorder %v4603, -inf
          %v4608 = vsel %vm4604, 0.0, %v4585
          %v4609 = vsel %vm4605, 0.0, %v4591
          %v4610 = vsel %vm4606, 0.0, %v4597
          %v4611 = vsel %vm4607, 0.0, %v4603
          %v4612 = vpack.c.bf16 %v4608, %v4608
          %v4613 = vpack.c.bf16 %v4609, %v4609
          %v4614 = vpack.c.bf16 %v4610, %v4610
          %v4615 = vpack.c.bf16 %v4611, %v4611
          %v4616 = vld [vmem:[#allocation11] sm:$0xff]
          %v4617 = vld [vmem:[#allocation11 + $0x8] sm:$0xff]
          %v4618 = vld [vmem:[#allocation11 + $0x10] sm:$0xff]
          %v4619 = vld [vmem:[#allocation11 + $0x18] sm:$0xff]
          %v4620 = vld [vmem:[#allocation11 + $0x20] sm:$0xff]
          %v4621 = vld [vmem:[#allocation11 + $0x28] sm:$0xff]
          %v4622 = vld [vmem:[#allocation11 + $0x30] sm:$0xff]
          %v4623 = vld [vmem:[#allocation11 + $0x38] sm:$0xff]
          %v4624 = vld [vmem:[#allocation11 + $0x40] sm:$0xff]
          %v4625 = vld [vmem:[#allocation11 + $0x48] sm:$0xff]
          %v4626 = vld [vmem:[#allocation11 + $0x50] sm:$0xff]
          %v4627 = vld [vmem:[#allocation11 + $0x58] sm:$0xff]
          %v4628 = vld [vmem:[#allocation11 + $0x60] sm:$0xff]
          %v4629 = vld [vmem:[#allocation11 + $0x68] sm:$0xff]
          %v4630 = vld [vmem:[#allocation11 + $0x70] sm:$0xff]
          %v4631 = vld [vmem:[#allocation11 + $0x78] sm:$0xff]
          %v4632 = vld [vmem:[#allocation11 + $0x80] sm:$0xff]
          %v4633 = vld [vmem:[#allocation11 + $0x88] sm:$0xff]
          %v4634 = vld [vmem:[#allocation11 + $0x90] sm:$0xff]
          %v4635 = vld [vmem:[#allocation11 + $0x98] sm:$0xff]
          %v4636 = vld [vmem:[#allocation11 + $0xa0] sm:$0xff]
          %v4637 = vld [vmem:[#allocation11 + $0xa8] sm:$0xff]
          %v4638 = vld [vmem:[#allocation11 + $0xb0] sm:$0xff]
          %v4639 = vld [vmem:[#allocation11 + $0xb8] sm:$0xff]
          %v4640 = vld [vmem:[#allocation11 + $0xc0] sm:$0xff]
          %v4641 = vld [vmem:[#allocation11 + $0xc8] sm:$0xff]
          %v4642 = vld [vmem:[#allocation11 + $0xd0] sm:$0xff]
          %v4643 = vld [vmem:[#allocation11 + $0xd8] sm:$0xff]
          %v4644 = vld [vmem:[#allocation11 + $0xe0] sm:$0xff]
          %v4645 = vld [vmem:[#allocation11 + $0xe8] sm:$0xff]
          %v4646 = vld [vmem:[#allocation11 + $0xf0] sm:$0xff]
          %v4647 = vld [vmem:[#allocation11 + $0xf8] sm:$0xff]
          %v4648 = vld [vmem:[#allocation11 + $0x100] sm:$0xff]
          %v4649 = vld [vmem:[#allocation11 + $0x108] sm:$0xff]
          %v4650 = vld [vmem:[#allocation11 + $0x110] sm:$0xff]
          %v4651 = vld [vmem:[#allocation11 + $0x118] sm:$0xff]
          %v4652 = vld [vmem:[#allocation11 + $0x120] sm:$0xff]
          %v4653 = vld [vmem:[#allocation11 + $0x128] sm:$0xff]
          %v4654 = vld [vmem:[#allocation11 + $0x130] sm:$0xff]
          %v4655 = vld [vmem:[#allocation11 + $0x138] sm:$0xff]
          %v4656 = vld [vmem:[#allocation11 + $0x140] sm:$0xff]
          %v4657 = vld [vmem:[#allocation11 + $0x148] sm:$0xff]
          %v4658 = vld [vmem:[#allocation11 + $0x150] sm:$0xff]
          %v4659 = vld [vmem:[#allocation11 + $0x158] sm:$0xff]
          %v4660 = vld [vmem:[#allocation11 + $0x160] sm:$0xff]
          %v4661 = vld [vmem:[#allocation11 + $0x168] sm:$0xff]
          %v4662 = vld [vmem:[#allocation11 + $0x170] sm:$0xff]
          %v4663 = vld [vmem:[#allocation11 + $0x178] sm:$0xff]
          %v4664 = vld [vmem:[#allocation11 + $0x180] sm:$0xff]
          %v4665 = vld [vmem:[#allocation11 + $0x188] sm:$0xff]
          %v4666 = vld [vmem:[#allocation11 + $0x190] sm:$0xff]
          %v4667 = vld [vmem:[#allocation11 + $0x198] sm:$0xff]
          %v4668 = vld [vmem:[#allocation11 + $0x1a0] sm:$0xff]
          %v4669 = vld [vmem:[#allocation11 + $0x1a8] sm:$0xff]
          %v4670 = vld [vmem:[#allocation11 + $0x1b0] sm:$0xff]
          %v4671 = vld [vmem:[#allocation11 + $0x1b8] sm:$0xff]
          %v4672 = vld [vmem:[#allocation11 + $0x1c0] sm:$0xff]
          %v4673 = vld [vmem:[#allocation11 + $0x1c8] sm:$0xff]
          %v4674 = vld [vmem:[#allocation11 + $0x1d0] sm:$0xff]
          %v4675 = vld [vmem:[#allocation11 + $0x1d8] sm:$0xff]
          %v4676 = vld [vmem:[#allocation11 + $0x1e0] sm:$0xff]
          %v4677 = vld [vmem:[#allocation11 + $0x1e8] sm:$0xff]
          %v4678 = vld [vmem:[#allocation11 + $0x1f0] sm:$0xff]
          %v4679 = vld [vmem:[#allocation11 + $0x1f8] sm:$0xff]
          %v4680 = vld [vmem:[#allocation11 + $0x200] sm:$0xff]
          %v4681 = vld [vmem:[#allocation11 + $0x208] sm:$0xff]
          %v4682 = vld [vmem:[#allocation11 + $0x210] sm:$0xff]
          %v4683 = vld [vmem:[#allocation11 + $0x218] sm:$0xff]
          %v4684 = vld [vmem:[#allocation11 + $0x220] sm:$0xff]
          %v4685 = vld [vmem:[#allocation11 + $0x228] sm:$0xff]
          %v4686 = vld [vmem:[#allocation11 + $0x230] sm:$0xff]
          %v4687 = vld [vmem:[#allocation11 + $0x238] sm:$0xff]
          %v4688 = vld [vmem:[#allocation11 + $0x240] sm:$0xff]
          %v4689 = vld [vmem:[#allocation11 + $0x248] sm:$0xff]
          %v4690 = vld [vmem:[#allocation11 + $0x250] sm:$0xff]
          %v4691 = vld [vmem:[#allocation11 + $0x258] sm:$0xff]
          %v4692 = vld [vmem:[#allocation11 + $0x260] sm:$0xff]
          %v4693 = vld [vmem:[#allocation11 + $0x268] sm:$0xff]
          %v4694 = vld [vmem:[#allocation11 + $0x270] sm:$0xff]
          %v4695 = vld [vmem:[#allocation11 + $0x278] sm:$0xff]
          %v4696 = vld [vmem:[#allocation11 + $0x280] sm:$0xff]
          %v4697 = vld [vmem:[#allocation11 + $0x288] sm:$0xff]
          %v4698 = vld [vmem:[#allocation11 + $0x290] sm:$0xff]
          %v4699 = vld [vmem:[#allocation11 + $0x298] sm:$0xff]
          %v4700 = vld [vmem:[#allocation11 + $0x2a0] sm:$0xff]
          %v4701 = vld [vmem:[#allocation11 + $0x2a8] sm:$0xff]
          %v4702 = vld [vmem:[#allocation11 + $0x2b0] sm:$0xff]
          %v4703 = vld [vmem:[#allocation11 + $0x2b8] sm:$0xff]
          %v4704 = vld [vmem:[#allocation11 + $0x2c0] sm:$0xff]
          %v4705 = vld [vmem:[#allocation11 + $0x2c8] sm:$0xff]
          %v4706 = vld [vmem:[#allocation11 + $0x2d0] sm:$0xff]
          %v4707 = vld [vmem:[#allocation11 + $0x2d8] sm:$0xff]
          %v4708 = vld [vmem:[#allocation11 + $0x2e0] sm:$0xff]
          %v4709 = vld [vmem:[#allocation11 + $0x2e8] sm:$0xff]
          %v4710 = vld [vmem:[#allocation11 + $0x2f0] sm:$0xff]
          %v4711 = vld [vmem:[#allocation11 + $0x2f8] sm:$0xff]
          %v4712 = vld [vmem:[#allocation11 + $0x300] sm:$0xff]
          %v4713 = vld [vmem:[#allocation11 + $0x308] sm:$0xff]
          %v4714 = vld [vmem:[#allocation11 + $0x310] sm:$0xff]
          %v4715 = vld [vmem:[#allocation11 + $0x318] sm:$0xff]
          %v4716 = vld [vmem:[#allocation11 + $0x320] sm:$0xff]
          %v4717 = vld [vmem:[#allocation11 + $0x328] sm:$0xff]
          %v4718 = vld [vmem:[#allocation11 + $0x330] sm:$0xff]
          %v4719 = vld [vmem:[#allocation11 + $0x338] sm:$0xff]
          %v4720 = vld [vmem:[#allocation11 + $0x340] sm:$0xff]
          %v4721 = vld [vmem:[#allocation11 + $0x348] sm:$0xff]
          %v4722 = vld [vmem:[#allocation11 + $0x350] sm:$0xff]
          %v4723 = vld [vmem:[#allocation11 + $0x358] sm:$0xff]
          %v4724 = vld [vmem:[#allocation11 + $0x360] sm:$0xff]
          %v4725 = vld [vmem:[#allocation11 + $0x368] sm:$0xff]
          %v4726 = vld [vmem:[#allocation11 + $0x370] sm:$0xff]
          %v4727 = vld [vmem:[#allocation11 + $0x378] sm:$0xff]
          %v4728 = vld [vmem:[#allocation11 + $0x380] sm:$0xff]
          %v4729 = vld [vmem:[#allocation11 + $0x388] sm:$0xff]
          %v4730 = vld [vmem:[#allocation11 + $0x390] sm:$0xff]
          %v4731 = vld [vmem:[#allocation11 + $0x398] sm:$0xff]
          %v4732 = vld [vmem:[#allocation11 + $0x3a0] sm:$0xff]
          %v4733 = vld [vmem:[#allocation11 + $0x3a8] sm:$0xff]
          %v4734 = vld [vmem:[#allocation11 + $0x3b0] sm:$0xff]
          %v4735 = vld [vmem:[#allocation11 + $0x3b8] sm:$0xff]
          %v4736 = vld [vmem:[#allocation11 + $0x3c0] sm:$0xff]
          %v4737 = vld [vmem:[#allocation11 + $0x3c8] sm:$0xff]
          %v4738 = vld [vmem:[#allocation11 + $0x3d0] sm:$0xff]
          %v4739 = vld [vmem:[#allocation11 + $0x3d8] sm:$0xff]
          %v4740 = vld [vmem:[#allocation11 + $0x3e0] sm:$0xff]
          %v4741 = vld [vmem:[#allocation11 + $0x3e8] sm:$0xff]
          %v4742 = vld [vmem:[#allocation11 + $0x3f0] sm:$0xff]
          %v4743 = vld [vmem:[#allocation11 + $0x3f8] sm:$0xff]
          %v4744 = vld [vmem:[#allocation12] sm:$0xf]
          %v4873 = vunpack.c.l.b16 %v4616
          %v4874 = vunpack.c.h.b16 %v4616
          %v4875 = vunpack.c.l.b16 %v4617
          %v4876 = vunpack.c.h.b16 %v4617
          %v4877 = vunpack.c.l.b16 %v4618
          %v4878 = vunpack.c.h.b16 %v4618
          %v4879 = vunpack.c.l.b16 %v4619
          %v4880 = vunpack.c.h.b16 %v4619
          %v4881 = vunpack.c.l.b16 %v4620
          %v4882 = vunpack.c.h.b16 %v4620
          %v4883 = vunpack.c.l.b16 %v4621
          %v4884 = vunpack.c.h.b16 %v4621
          %v4885 = vunpack.c.l.b16 %v4622
          %v4886 = vunpack.c.h.b16 %v4622
          %v4887 = vunpack.c.l.b16 %v4623
          %v4888 = vunpack.c.h.b16 %v4623
          %v4889 = vunpack.c.l.b16 %v4624
          %v4890 = vunpack.c.h.b16 %v4624
          %v4891 = vunpack.c.l.b16 %v4625
          %v4892 = vunpack.c.h.b16 %v4625
          %v4893 = vunpack.c.l.b16 %v4626
          %v4894 = vunpack.c.h.b16 %v4626
          %v4895 = vunpack.c.l.b16 %v4627
          %v4896 = vunpack.c.h.b16 %v4627
          %v4897 = vunpack.c.l.b16 %v4628
          %v4898 = vunpack.c.h.b16 %v4628
          %v4899 = vunpack.c.l.b16 %v4629
          %v4900 = vunpack.c.h.b16 %v4629
          %v4901 = vunpack.c.l.b16 %v4630
          %v4902 = vunpack.c.h.b16 %v4630
          %v4903 = vunpack.c.l.b16 %v4631
          %v4904 = vunpack.c.h.b16 %v4631
          %v4905 = vunpack.c.l.b16 %v4632
          %v4906 = vunpack.c.h.b16 %v4632
          %v4907 = vunpack.c.l.b16 %v4633
          %v4908 = vunpack.c.h.b16 %v4633
          %v4909 = vunpack.c.l.b16 %v4634
          %v4910 = vunpack.c.h.b16 %v4634
          %v4911 = vunpack.c.l.b16 %v4635
          %v4912 = vunpack.c.h.b16 %v4635
          %v4913 = vunpack.c.l.b16 %v4636
          %v4914 = vunpack.c.h.b16 %v4636
          %v4915 = vunpack.c.l.b16 %v4637
          %v4916 = vunpack.c.h.b16 %v4637
          %v4917 = vunpack.c.l.b16 %v4638
          %v4918 = vunpack.c.h.b16 %v4638
          %v4919 = vunpack.c.l.b16 %v4639
          %v4920 = vunpack.c.h.b16 %v4639
          %v4921 = vunpack.c.l.b16 %v4640
          %v4922 = vunpack.c.h.b16 %v4640
          %v4923 = vunpack.c.l.b16 %v4641
          %v4924 = vunpack.c.h.b16 %v4641
          %v4925 = vunpack.c.l.b16 %v4642
          %v4926 = vunpack.c.h.b16 %v4642
          %v4927 = vunpack.c.l.b16 %v4643
          %v4928 = vunpack.c.h.b16 %v4643
          %v4929 = vunpack.c.l.b16 %v4644
          %v4930 = vunpack.c.h.b16 %v4644
          %v4931 = vunpack.c.l.b16 %v4645
          %v4932 = vunpack.c.h.b16 %v4645
          %v4933 = vunpack.c.l.b16 %v4646
          %v4934 = vunpack.c.h.b16 %v4646
          %v4935 = vunpack.c.l.b16 %v4647
          %v4936 = vunpack.c.h.b16 %v4647
          %v4937 = vunpack.c.l.b16 %v4648
          %v4938 = vunpack.c.h.b16 %v4648
          %v4939 = vunpack.c.l.b16 %v4649
          %v4940 = vunpack.c.h.b16 %v4649
          %v4941 = vunpack.c.l.b16 %v4650
          %v4942 = vunpack.c.h.b16 %v4650
          %v4943 = vunpack.c.l.b16 %v4651
          %v4944 = vunpack.c.h.b16 %v4651
          %v4945 = vunpack.c.l.b16 %v4652
          %v4946 = vunpack.c.h.b16 %v4652
          %v4947 = vunpack.c.l.b16 %v4653
          %v4948 = vunpack.c.h.b16 %v4653
          %v4949 = vunpack.c.l.b16 %v4654
          %v4950 = vunpack.c.h.b16 %v4654
          %v4951 = vunpack.c.l.b16 %v4655
          %v4952 = vunpack.c.h.b16 %v4655
          %v4953 = vunpack.c.l.b16 %v4656
          %v4954 = vunpack.c.h.b16 %v4656
          %v4955 = vunpack.c.l.b16 %v4657
          %v4956 = vunpack.c.h.b16 %v4657
          %v4957 = vunpack.c.l.b16 %v4658
          %v4958 = vunpack.c.h.b16 %v4658
          %v4959 = vunpack.c.l.b16 %v4659
          %v4960 = vunpack.c.h.b16 %v4659
          %v4961 = vunpack.c.l.b16 %v4660
          %v4962 = vunpack.c.h.b16 %v4660
          %v4963 = vunpack.c.l.b16 %v4661
          %v4964 = vunpack.c.h.b16 %v4661
          %v4965 = vunpack.c.l.b16 %v4662
          %v4966 = vunpack.c.h.b16 %v4662
          %v4967 = vunpack.c.l.b16 %v4663
          %v4968 = vunpack.c.h.b16 %v4663
          %v4969 = vunpack.c.l.b16 %v4664
          %v4970 = vunpack.c.h.b16 %v4664
          %v4971 = vunpack.c.l.b16 %v4665
          %v4972 = vunpack.c.h.b16 %v4665
          %v4973 = vunpack.c.l.b16 %v4666
          %v4974 = vunpack.c.h.b16 %v4666
          %v4975 = vunpack.c.l.b16 %v4667
          %v4976 = vunpack.c.h.b16 %v4667
          %v4977 = vunpack.c.l.b16 %v4668
          %v4978 = vunpack.c.h.b16 %v4668
          %v4979 = vunpack.c.l.b16 %v4669
          %v4980 = vunpack.c.h.b16 %v4669
          %v4981 = vunpack.c.l.b16 %v4670
          %v4982 = vunpack.c.h.b16 %v4670
          %v4983 = vunpack.c.l.b16 %v4671
          %v4984 = vunpack.c.h.b16 %v4671
          %v4985 = vunpack.c.l.b16 %v4672
          %v4986 = vunpack.c.h.b16 %v4672
          %v4987 = vunpack.c.l.b16 %v4673
          %v4988 = vunpack.c.h.b16 %v4673
          %v4989 = vunpack.c.l.b16 %v4674
          %v4990 = vunpack.c.h.b16 %v4674
          %v4991 = vunpack.c.l.b16 %v4675
          %v4992 = vunpack.c.h.b16 %v4675
          %v4993 = vunpack.c.l.b16 %v4676
          %v4994 = vunpack.c.h.b16 %v4676
          %v4995 = vunpack.c.l.b16 %v4677
          %v4996 = vunpack.c.h.b16 %v4677
          %v4997 = vunpack.c.l.b16 %v4678
          %v4998 = vunpack.c.h.b16 %v4678
          %v4999 = vunpack.c.l.b16 %v4679
          %v5000 = vunpack.c.h.b16 %v4679
          %v5001 = vunpack.c.l.b16 %v4680
          %v5002 = vunpack.c.h.b16 %v4680
          %v5003 = vunpack.c.l.b16 %v4681
          %v5004 = vunpack.c.h.b16 %v4681
          %v5005 = vunpack.c.l.b16 %v4682
          %v5006 = vunpack.c.h.b16 %v4682
          %v5007 = vunpack.c.l.b16 %v4683
          %v5008 = vunpack.c.h.b16 %v4683
          %v5009 = vunpack.c.l.b16 %v4684
          %v5010 = vunpack.c.h.b16 %v4684
          %v5011 = vunpack.c.l.b16 %v4685
          %v5012 = vunpack.c.h.b16 %v4685
          %v5013 = vunpack.c.l.b16 %v4686
          %v5014 = vunpack.c.h.b16 %v4686
          %v5015 = vunpack.c.l.b16 %v4687
          %v5016 = vunpack.c.h.b16 %v4687
          %v5017 = vunpack.c.l.b16 %v4688
          %v5018 = vunpack.c.h.b16 %v4688
          %v5019 = vunpack.c.l.b16 %v4689
          %v5020 = vunpack.c.h.b16 %v4689
          %v5021 = vunpack.c.l.b16 %v4690
          %v5022 = vunpack.c.h.b16 %v4690
          %v5023 = vunpack.c.l.b16 %v4691
          %v5024 = vunpack.c.h.b16 %v4691
          %v5025 = vunpack.c.l.b16 %v4692
          %v5026 = vunpack.c.h.b16 %v4692
          %v5027 = vunpack.c.l.b16 %v4693
          %v5028 = vunpack.c.h.b16 %v4693
          %v5029 = vunpack.c.l.b16 %v4694
          %v5030 = vunpack.c.h.b16 %v4694
          %v5031 = vunpack.c.l.b16 %v4695
          %v5032 = vunpack.c.h.b16 %v4695
          %v5033 = vunpack.c.l.b16 %v4696
          %v5034 = vunpack.c.h.b16 %v4696
          %v5035 = vunpack.c.l.b16 %v4697
          %v5036 = vunpack.c.h.b16 %v4697
          %v5037 = vunpack.c.l.b16 %v4698
          %v5038 = vunpack.c.h.b16 %v4698
          %v5039 = vunpack.c.l.b16 %v4699
          %v5040 = vunpack.c.h.b16 %v4699
          %v5041 = vunpack.c.l.b16 %v4700
          %v5042 = vunpack.c.h.b16 %v4700
          %v5043 = vunpack.c.l.b16 %v4701
          %v5044 = vunpack.c.h.b16 %v4701
          %v5045 = vunpack.c.l.b16 %v4702
          %v5046 = vunpack.c.h.b16 %v4702
          %v5047 = vunpack.c.l.b16 %v4703
          %v5048 = vunpack.c.h.b16 %v4703
          %v5049 = vunpack.c.l.b16 %v4704
          %v5050 = vunpack.c.h.b16 %v4704
          %v5051 = vunpack.c.l.b16 %v4705
          %v5052 = vunpack.c.h.b16 %v4705
          %v5053 = vunpack.c.l.b16 %v4706
          %v5054 = vunpack.c.h.b16 %v4706
          %v5055 = vunpack.c.l.b16 %v4707
          %v5056 = vunpack.c.h.b16 %v4707
          %v5057 = vunpack.c.l.b16 %v4708
          %v5058 = vunpack.c.h.b16 %v4708
          %v5059 = vunpack.c.l.b16 %v4709
          %v5060 = vunpack.c.h.b16 %v4709
          %v5061 = vunpack.c.l.b16 %v4710
          %v5062 = vunpack.c.h.b16 %v4710
          %v5063 = vunpack.c.l.b16 %v4711
          %v5064 = vunpack.c.h.b16 %v4711
          %v5065 = vunpack.c.l.b16 %v4712
          %v5066 = vunpack.c.h.b16 %v4712
          %v5067 = vunpack.c.l.b16 %v4713
          %v5068 = vunpack.c.h.b16 %v4713
          %v5069 = vunpack.c.l.b16 %v4714
          %v5070 = vunpack.c.h.b16 %v4714
          %v5071 = vunpack.c.l.b16 %v4715
          %v5072 = vunpack.c.h.b16 %v4715
          %v5073 = vunpack.c.l.b16 %v4716
          %v5074 = vunpack.c.h.b16 %v4716
          %v5075 = vunpack.c.l.b16 %v4717
          %v5076 = vunpack.c.h.b16 %v4717
          %v5077 = vunpack.c.l.b16 %v4718
          %v5078 = vunpack.c.h.b16 %v4718
          %v5079 = vunpack.c.l.b16 %v4719
          %v5080 = vunpack.c.h.b16 %v4719
          %v5081 = vunpack.c.l.b16 %v4720
          %v5082 = vunpack.c.h.b16 %v4720
          %v5083 = vunpack.c.l.b16 %v4721
          %v5084 = vunpack.c.h.b16 %v4721
          %v5085 = vunpack.c.l.b16 %v4722
          %v5086 = vunpack.c.h.b16 %v4722
          %v5087 = vunpack.c.l.b16 %v4723
          %v5088 = vunpack.c.h.b16 %v4723
          %v5089 = vunpack.c.l.b16 %v4724
          %v5090 = vunpack.c.h.b16 %v4724
          %v5091 = vunpack.c.l.b16 %v4725
          %v5092 = vunpack.c.h.b16 %v4725
          %v5093 = vunpack.c.l.b16 %v4726
          %v5094 = vunpack.c.h.b16 %v4726
          %v5095 = vunpack.c.l.b16 %v4727
          %v5096 = vunpack.c.h.b16 %v4727
          %v5097 = vunpack.c.l.b16 %v4728
          %v5098 = vunpack.c.h.b16 %v4728
          %v5099 = vunpack.c.l.b16 %v4729
          %v5100 = vunpack.c.h.b16 %v4729
          %v5101 = vunpack.c.l.b16 %v4730
          %v5102 = vunpack.c.h.b16 %v4730
          %v5103 = vunpack.c.l.b16 %v4731
          %v5104 = vunpack.c.h.b16 %v4731
          %v5105 = vunpack.c.l.b16 %v4732
          %v5106 = vunpack.c.h.b16 %v4732
          %v5107 = vunpack.c.l.b16 %v4733
          %v5108 = vunpack.c.h.b16 %v4733
          %v5109 = vunpack.c.l.b16 %v4734
          %v5110 = vunpack.c.h.b16 %v4734
          %v5111 = vunpack.c.l.b16 %v4735
          %v5112 = vunpack.c.h.b16 %v4735
          %v5113 = vunpack.c.l.b16 %v4736
          %v5114 = vunpack.c.h.b16 %v4736
          %v5115 = vunpack.c.l.b16 %v4737
          %v5116 = vunpack.c.h.b16 %v4737
          %v5117 = vunpack.c.l.b16 %v4738
          %v5118 = vunpack.c.h.b16 %v4738
          %v5119 = vunpack.c.l.b16 %v4739
          %v5120 = vunpack.c.h.b16 %v4739
          %v5121 = vunpack.c.l.b16 %v4740
          %v5122 = vunpack.c.h.b16 %v4740
          %v5123 = vunpack.c.l.b16 %v4741
          %v5124 = vunpack.c.h.b16 %v4741
          %v5125 = vunpack.c.l.b16 %v4742
          %v5126 = vunpack.c.h.b16 %v4742
          %v5127 = vunpack.c.l.b16 %v4743
          %v5128 = vunpack.c.h.b16 %v4743
          %v5129 = vpack.c.b16 %v4877, %v4873
          %v5130 = vpack.c.b16 %v4878, %v4874
          %v5131 = vpack.c.b16 %v4879, %v4875
          %v5132 = vpack.c.b16 %v4880, %v4876
          %v5133 = vpack.c.b16 %v4885, %v4881
          %v5134 = vpack.c.b16 %v4886, %v4882
          %v5135 = vpack.c.b16 %v4887, %v4883
          %v5136 = vpack.c.b16 %v4888, %v4884
          %v5137 = vpack.c.b16 %v4893, %v4889
          %v5138 = vpack.c.b16 %v4894, %v4890
          %v5139 = vpack.c.b16 %v4895, %v4891
          %v5140 = vpack.c.b16 %v4896, %v4892
          %v5141 = vpack.c.b16 %v4901, %v4897
          %v5142 = vpack.c.b16 %v4902, %v4898
          %v5143 = vpack.c.b16 %v4903, %v4899
          %v5144 = vpack.c.b16 %v4904, %v4900
          %v5145 = vpack.c.b16 %v4909, %v4905
          %v5146 = vpack.c.b16 %v4910, %v4906
          %v5147 = vpack.c.b16 %v4911, %v4907
          %v5148 = vpack.c.b16 %v4912, %v4908
          %v5149 = vpack.c.b16 %v4917, %v4913
          %v5150 = vpack.c.b16 %v4918, %v4914
          %v5151 = vpack.c.b16 %v4919, %v4915
          %v5152 = vpack.c.b16 %v4920, %v4916
          %v5153 = vpack.c.b16 %v4925, %v4921
          %v5154 = vpack.c.b16 %v4926, %v4922
          %v5155 = vpack.c.b16 %v4927, %v4923
          %v5156 = vpack.c.b16 %v4928, %v4924
          %v5157 = vpack.c.b16 %v4933, %v4929
          %v5158 = vpack.c.b16 %v4934, %v4930
          %v5159 = vpack.c.b16 %v4935, %v4931
          %v5160 = vpack.c.b16 %v4936, %v4932
          %v5161 = vpack.c.b16 %v4941, %v4937
          %v5162 = vpack.c.b16 %v4942, %v4938
          %v5163 = vpack.c.b16 %v4943, %v4939
          %v5164 = vpack.c.b16 %v4944, %v4940
          %v5165 = vpack.c.b16 %v4949, %v4945
          %v5166 = vpack.c.b16 %v4950, %v4946
          %v5167 = vpack.c.b16 %v4951, %v4947
          %v5168 = vpack.c.b16 %v4952, %v4948
          %v5169 = vpack.c.b16 %v4957, %v4953
          %v5170 = vpack.c.b16 %v4958, %v4954
          %v5171 = vpack.c.b16 %v4959, %v4955
          %v5172 = vpack.c.b16 %v4960, %v4956
          %v5173 = vpack.c.b16 %v4965, %v4961
          %v5174 = vpack.c.b16 %v4966, %v4962
          %v5175 = vpack.c.b16 %v4967, %v4963
          %v5176 = vpack.c.b16 %v4968, %v4964
          %v5177 = vpack.c.b16 %v4973, %v4969
          %v5178 = vpack.c.b16 %v4974, %v4970
          %v5179 = vpack.c.b16 %v4975, %v4971
          %v5180 = vpack.c.b16 %v4976, %v4972
          %v5181 = vpack.c.b16 %v4981, %v4977
          %v5182 = vpack.c.b16 %v4982, %v4978
          %v5183 = vpack.c.b16 %v4983, %v4979
          %v5184 = vpack.c.b16 %v4984, %v4980
          %v5185 = vpack.c.b16 %v4989, %v4985
          %v5186 = vpack.c.b16 %v4990, %v4986
          %v5187 = vpack.c.b16 %v4991, %v4987
          %v5188 = vpack.c.b16 %v4992, %v4988
          %v5189 = vpack.c.b16 %v4997, %v4993
          %v5190 = vpack.c.b16 %v4998, %v4994
          %v5191 = vpack.c.b16 %v4999, %v4995
          %v5192 = vpack.c.b16 %v5000, %v4996
          %v5193 = vpack.c.b16 %v5005, %v5001
          %v5194 = vpack.c.b16 %v5006, %v5002
          %v5195 = vpack.c.b16 %v5007, %v5003
          %v5196 = vpack.c.b16 %v5008, %v5004
          %v5197 = vpack.c.b16 %v5013, %v5009
          %v5198 = vpack.c.b16 %v5014, %v5010
          %v5199 = vpack.c.b16 %v5015, %v5011
          %v5200 = vpack.c.b16 %v5016, %v5012
          %v5201 = vpack.c.b16 %v5021, %v5017
          %v5202 = vpack.c.b16 %v5022, %v5018
          %v5203 = vpack.c.b16 %v5023, %v5019
          %v5204 = vpack.c.b16 %v5024, %v5020
          %v5205 = vpack.c.b16 %v5029, %v5025
          %v5206 = vpack.c.b16 %v5030, %v5026
          %v5207 = vpack.c.b16 %v5031, %v5027
          %v5208 = vpack.c.b16 %v5032, %v5028
          %v5209 = vpack.c.b16 %v5037, %v5033
          %v5210 = vpack.c.b16 %v5038, %v5034
          %v5211 = vpack.c.b16 %v5039, %v5035
          %v5212 = vpack.c.b16 %v5040, %v5036
          %v5213 = vpack.c.b16 %v5045, %v5041
          %v5214 = vpack.c.b16 %v5046, %v5042
          %v5215 = vpack.c.b16 %v5047, %v5043
          %v5216 = vpack.c.b16 %v5048, %v5044
          %v5217 = vpack.c.b16 %v5053, %v5049
          %v5218 = vpack.c.b16 %v5054, %v5050
          %v5219 = vpack.c.b16 %v5055, %v5051
          %v5220 = vpack.c.b16 %v5056, %v5052
          %v5221 = vpack.c.b16 %v5061, %v5057
          %v5222 = vpack.c.b16 %v5062, %v5058
          %v5223 = vpack.c.b16 %v5063, %v5059
          %v5224 = vpack.c.b16 %v5064, %v5060
          %v5225 = vpack.c.b16 %v5069, %v5065
          %v5226 = vpack.c.b16 %v5070, %v5066
          %v5227 = vpack.c.b16 %v5071, %v5067
          %v5228 = vpack.c.b16 %v5072, %v5068
          %v5229 = vpack.c.b16 %v5077, %v5073
          %v5230 = vpack.c.b16 %v5078, %v5074
          %v5231 = vpack.c.b16 %v5079, %v5075
          %v5232 = vpack.c.b16 %v5080, %v5076
          %v5233 = vpack.c.b16 %v5085, %v5081
          %v5234 = vpack.c.b16 %v5086, %v5082
          %v5235 = vpack.c.b16 %v5087, %v5083
          %v5236 = vpack.c.b16 %v5088, %v5084
          %v5237 = vpack.c.b16 %v5093, %v5089
          %v5238 = vpack.c.b16 %v5094, %v5090
          %v5239 = vpack.c.b16 %v5095, %v5091
          %v5240 = vpack.c.b16 %v5096, %v5092
          %v5241 = vpack.c.b16 %v5101, %v5097
          %v5242 = vpack.c.b16 %v5102, %v5098
          %v5243 = vpack.c.b16 %v5103, %v5099
          %v5244 = vpack.c.b16 %v5104, %v5100
          %v5245 = vpack.c.b16 %v5109, %v5105
          %v5246 = vpack.c.b16 %v5110, %v5106
          %v5247 = vpack.c.b16 %v5111, %v5107
          %v5248 = vpack.c.b16 %v5112, %v5108
          %v5249 = vpack.c.b16 %v5117, %v5113
          %v5250 = vpack.c.b16 %v5118, %v5114
          %v5251 = vpack.c.b16 %v5119, %v5115
          %v5252 = vpack.c.b16 %v5120, %v5116
          %v5253 = vpack.c.b16 %v5125, %v5121
          %v5254 = vpack.c.b16 %v5126, %v5122
          %v5255 = vpack.c.b16 %v5127, %v5123
          %v5256 = vpack.c.b16 %v5128, %v5124
          %v5386 = vlaneseq
          %v5387 = vshrl.u32 %v5386, 7
          %v5388 = vsub.s32 0, %v5387
          %v5389 = vrot.slane %v4744, %v5388
          %v5390 = vlaneseq
          %v5391 = vshrl.u32 %v5390, 7
          %v5392 = vsub.s32 1, %v5391
          %v5393 = vrot.slane %v4744, %v5392
          %v5394 = vlaneseq
          %v5395 = vshrl.u32 %v5394, 7
          %v5396 = vsub.s32 2, %v5395
          %v5397 = vrot.slane %v4744, %v5396
          %v5398 = vlaneseq
          %v5399 = vshrl.u32 %v5398, 7
          %v5400 = vsub.s32 3, %v5399
          %v5401 = vrot.slane %v4744, %v5400
          %5406 = vmatprep.subr.bf16.mxu0 %v5158
          %5407 = vmatpush1.bf16.msra.mxu0 %v5157
          %5408 = vmatprep.subr.bf16.mxu0 %v5154
          %5409 = vmatpush1.bf16.msra.mxu0 %v5153
          %5410 = vmatprep.subr.bf16.mxu0 %v5150
          %5411 = vmatpush1.bf16.msra.mxu0 %v5149
          %5412 = vmatprep.subr.bf16.mxu0 %v5146
          %5413 = vmatpush1.bf16.msra.mxu0 %v5145
          %5414 = vmatprep.subr.bf16.mxu0 %v5142
          %5415 = vmatpush1.bf16.msra.mxu0 %v5141
          %5416 = vmatprep.subr.bf16.mxu0 %v5138
          %5417 = vmatpush1.bf16.msra.mxu0 %v5137
          %5418 = vmatprep.subr.bf16.mxu0 %v5134
          %5419 = vmatpush1.bf16.msra.mxu0 %v5133
          %5420 = vmatprep.subr.bf16.mxu0 %v5130
          %5421 = vmatpush1.bf16.msra.mxu0 %v5129
          %5422 = vmatprep.subr.bf16.mxu0 %v5190
          %5423 = vmatpush2.bf16.msra.mxu0 %v5189
          %5424 = vmatprep.subr.bf16.mxu0 %v5186
          %5425 = vmatpush2.bf16.msra.mxu0 %v5185
          %5426 = vmatprep.subr.bf16.mxu0 %v5182
          %5427 = vmatpush2.bf16.msra.mxu0 %v5181
          %5428 = vmatprep.subr.bf16.mxu0 %v5178
          %5429 = vmatpush2.bf16.msra.mxu0 %v5177
          %5430 = vmatprep.subr.bf16.mxu0 %v5174
          %5431 = vmatpush2.bf16.msra.mxu0 %v5173
          %5432 = vmatprep.subr.bf16.mxu0 %v5170
          %5433 = vmatpush2.bf16.msra.mxu0 %v5169
          %5434 = vmatprep.subr.bf16.mxu0 %v5166
          %5435 = vmatpush2.bf16.msra.mxu0 %v5165
          %5436 = vmatprep.subr.bf16.mxu0 %v5162
          %5437 = vmatpush2.bf16.msra.mxu0 %v5161
          %5438 = vmatprep.mubr.bf16.mxu0 %v4613
          %5439 = vmatmul.mubr.bf16.gmra.mxu0 %v4612
          %v5440 = vpop.f32.mrf.mxu0
          %v5441 = vadd.f32 %v5389, %v5440
          %v5442 = vpop.f32.mrf.mxu0
          %v5443 = vadd.f32 %v5393, %v5442
          %v5444 = vpop.f32.mrf.mxu0
          %v5445 = vpop.f32.mrf.mxu0
          %5446 = vdwg.mxu0
          %5447 = vmatprep.subr.bf16.mxu0 %v5222
          %5448 = vmatpush1.bf16.msra.mxu0 %v5221
          %5449 = vmatprep.subr.bf16.mxu0 %v5218
          %5450 = vmatpush1.bf16.msra.mxu0 %v5217
          %5451 = vmatprep.subr.bf16.mxu0 %v5214
          %5452 = vmatpush1.bf16.msra.mxu0 %v5213
          %5453 = vmatprep.subr.bf16.mxu0 %v5210
          %5454 = vmatpush1.bf16.msra.mxu0 %v5209
          %5455 = vmatprep.subr.bf16.mxu0 %v5206
          %5456 = vmatpush1.bf16.msra.mxu0 %v5205
          %5457 = vmatprep.subr.bf16.mxu0 %v5202
          %5458 = vmatpush1.bf16.msra.mxu0 %v5201
          %5459 = vmatprep.subr.bf16.mxu0 %v5198
          %5460 = vmatpush1.bf16.msra.mxu0 %v5197
          %5461 = vmatprep.subr.bf16.mxu0 %v5194
          %5462 = vmatpush1.bf16.msra.mxu0 %v5193
          %5463 = vmatprep.subr.bf16.mxu0 %v5254
          %5464 = vmatpush2.bf16.msra.mxu0 %v5253
          %5465 = vmatprep.subr.bf16.mxu0 %v5250
          %5466 = vmatpush2.bf16.msra.mxu0 %v5249
          %5467 = vmatprep.subr.bf16.mxu0 %v5246
          %5468 = vmatpush2.bf16.msra.mxu0 %v5245
          %5469 = vmatprep.subr.bf16.mxu0 %v5242
          %5470 = vmatpush2.bf16.msra.mxu0 %v5241
          %5471 = vmatprep.subr.bf16.mxu0 %v5238
          %5472 = vmatpush2.bf16.msra.mxu0 %v5237
          %5473 = vmatprep.subr.bf16.mxu0 %v5234
          %5474 = vmatpush2.bf16.msra.mxu0 %v5233
          %5475 = vmatprep.subr.bf16.mxu0 %v5230
          %5476 = vmatpush2.bf16.msra.mxu0 %v5229
          %5477 = vmatprep.subr.bf16.mxu0 %v5226
          %5478 = vmatpush2.bf16.msra.mxu0 %v5225
          %5479 = vmatprep.mubr.bf16.mxu0 %v4615
          %5480 = vmatmul.mubr.bf16.gmra.mxu0 %v4614
          %v5481 = vpop.f32.mrf.mxu0
          %v5482 = vadd.f32 %v5441, %v5481
          %v5483 = vpop.f32.mrf.mxu0
          %v5484 = vadd.f32 %v5443, %v5483
          %v5485 = vpop.f32.mrf.mxu0
          %v5486 = vpop.f32.mrf.mxu0
          %5487 = vdwg.mxu0
          %5488 = vmatprep.subr.bf16.mxu0 %v5160
          %5489 = vmatpush1.bf16.msra.mxu0 %v5159
          %5490 = vmatprep.subr.bf16.mxu0 %v5156
          %5491 = vmatpush1.bf16.msra.mxu0 %v5155
          %5492 = vmatprep.subr.bf16.mxu0 %v5152
          %5493 = vmatpush1.bf16.msra.mxu0 %v5151
          %5494 = vmatprep.subr.bf16.mxu0 %v5148
          %5495 = vmatpush1.bf16.msra.mxu0 %v5147
          %5496 = vmatprep.subr.bf16.mxu0 %v5144
          %5497 = vmatpush1.bf16.msra.mxu0 %v5143
          %5498 = vmatprep.subr.bf16.mxu0 %v5140
          %5499 = vmatpush1.bf16.msra.mxu0 %v5139
          %5500 = vmatprep.subr.bf16.mxu0 %v5136
          %5501 = vmatpush1.bf16.msra.mxu0 %v5135
          %5502 = vmatprep.subr.bf16.mxu0 %v5132
          %5503 = vmatpush1.bf16.msra.mxu0 %v5131
          %5504 = vmatprep.subr.bf16.mxu0 %v5192
          %5505 = vmatpush2.bf16.msra.mxu0 %v5191
          %5506 = vmatprep.subr.bf16.mxu0 %v5188
          %5507 = vmatpush2.bf16.msra.mxu0 %v5187
          %5508 = vmatprep.subr.bf16.mxu0 %v5184
          %5509 = vmatpush2.bf16.msra.mxu0 %v5183
          %5510 = vmatprep.subr.bf16.mxu0 %v5180
          %5511 = vmatpush2.bf16.msra.mxu0 %v5179
          %5512 = vmatprep.subr.bf16.mxu0 %v5176
          %5513 = vmatpush2.bf16.msra.mxu0 %v5175
          %5514 = vmatprep.subr.bf16.mxu0 %v5172
          %5515 = vmatpush2.bf16.msra.mxu0 %v5171
          %5516 = vmatprep.subr.bf16.mxu0 %v5168
          %5517 = vmatpush2.bf16.msra.mxu0 %v5167
          %5518 = vmatprep.subr.bf16.mxu0 %v5164
          %5519 = vmatpush2.bf16.msra.mxu0 %v5163
          %5520 = vmatprep.mubr.bf16.mxu0 %v4613
          %5521 = vmatmul.mubr.bf16.gmra.mxu0 %v4612
          %v5522 = vpop.f32.mrf.mxu0
          %v5523 = vadd.f32 %v5397, %v5522
          %v5524 = vpop.f32.mrf.mxu0
          %v5525 = vadd.f32 %v5401, %v5524
          %v5526 = vpop.f32.mrf.mxu0
          %v5527 = vpop.f32.mrf.mxu0
          %5528 = vdwg.mxu0
          %5529 = vmatprep.subr.bf16.mxu0 %v5224
          %5530 = vmatpush1.bf16.msra.mxu0 %v5223
          %5531 = vmatprep.subr.bf16.mxu0 %v5220
          %5532 = vmatpush1.bf16.msra.mxu0 %v5219
          %5533 = vmatprep.subr.bf16.mxu0 %v5216
          %5534 = vmatpush1.bf16.msra.mxu0 %v5215
          %5535 = vmatprep.subr.bf16.mxu0 %v5212
          %5536 = vmatpush1.bf16.msra.mxu0 %v5211
          %5537 = vmatprep.subr.bf16.mxu0 %v5208
          %5538 = vmatpush1.bf16.msra.mxu0 %v5207
          %5539 = vmatprep.subr.bf16.mxu0 %v5204
          %5540 = vmatpush1.bf16.msra.mxu0 %v5203
          %5541 = vmatprep.subr.bf16.mxu0 %v5200
          %5542 = vmatpush1.bf16.msra.mxu0 %v5199
          %5543 = vmatprep.subr.bf16.mxu0 %v5196
          %5544 = vmatpush1.bf16.msra.mxu0 %v5195
          %5545 = vmatprep.subr.bf16.mxu0 %v5256
          %5546 = vmatpush2.bf16.msra.mxu0 %v5255
          %5547 = vmatprep.subr.bf16.mxu0 %v5252
          %5548 = vmatpush2.bf16.msra.mxu0 %v5251
          %5549 = vmatprep.subr.bf16.mxu0 %v5248
          %5550 = vmatpush2.bf16.msra.mxu0 %v5247
          %5551 = vmatprep.subr.bf16.mxu0 %v5244
          %5552 = vmatpush2.bf16.msra.mxu0 %v5243
          %5553 = vmatprep.subr.bf16.mxu0 %v5240
          %5554 = vmatpush2.bf16.msra.mxu0 %v5239
          %5555 = vmatprep.subr.bf16.mxu0 %v5236
          %5556 = vmatpush2.bf16.msra.mxu0 %v5235
          %5557 = vmatprep.subr.bf16.mxu0 %v5232
          %5558 = vmatpush2.bf16.msra.mxu0 %v5231
          %5559 = vmatprep.subr.bf16.mxu0 %v5228
          %5560 = vmatpush2.bf16.msra.mxu0 %v5227
          %5561 = vmatprep.mubr.bf16.mxu0 %v4615
          %5562 = vmatmul.mubr.bf16.gmra.mxu0 %v4614
          %v5563 = vpop.f32.mrf.mxu0
          %v5564 = vadd.f32 %v5523, %v5563
          %v5565 = vpop.f32.mrf.mxu0
          %v5566 = vadd.f32 %v5525, %v5565
          %v5567 = vpop.f32.mrf.mxu0
          %v5568 = vpop.f32.mrf.mxu0
          %5569 = vdwg.mxu0
          %v5570 = vmax.f32 %v5482, 0.0
          %v5571 = vmax.f32 %v5484, 0.0
          %v5572 = vmax.f32 %v5564, 0.0
          %v5573 = vmax.f32 %v5566, 0.0
          %v5574 = vpack.c.bf16 %v5570, %v5570
          %v5575 = vpack.c.bf16 %v5571, %v5571
          %v5576 = vpack.c.bf16 %v5572, %v5572
          %v5577 = vpack.c.bf16 %v5573, %v5573
          %v5578 = vld [vmem:[#allocation14] sm:$0xff]
          %v5579 = vld [vmem:[#allocation14 + $0x8] sm:$0xff]
          %v5580 = vld [vmem:[#allocation14 + $0x10] sm:$0xff]
          %v5581 = vld [vmem:[#allocation14 + $0x18] sm:$0xff]
          %v5582 = vld [vmem:[#allocation14 + $0x20] sm:$0xff]
          %v5583 = vld [vmem:[#allocation14 + $0x28] sm:$0xff]
          %v5584 = vld [vmem:[#allocation14 + $0x30] sm:$0xff]
          %v5585 = vld [vmem:[#allocation14 + $0x38] sm:$0xff]
          %v5586 = vld [vmem:[#allocation14 + $0x40] sm:$0xff]
          %v5587 = vld [vmem:[#allocation14 + $0x48] sm:$0xff]
          %v5588 = vld [vmem:[#allocation14 + $0x50] sm:$0xff]
          %v5589 = vld [vmem:[#allocation14 + $0x58] sm:$0xff]
          %v5590 = vld [vmem:[#allocation14 + $0x60] sm:$0xff]
          %v5591 = vld [vmem:[#allocation14 + $0x68] sm:$0xff]
          %v5592 = vld [vmem:[#allocation14 + $0x70] sm:$0xff]
          %v5593 = vld [vmem:[#allocation14 + $0x78] sm:$0xff]
          %v5594 = vld [vmem:[#allocation14 + $0x80] sm:$0xff]
          %v5595 = vld [vmem:[#allocation14 + $0x88] sm:$0xff]
          %v5596 = vld [vmem:[#allocation14 + $0x90] sm:$0xff]
          %v5597 = vld [vmem:[#allocation14 + $0x98] sm:$0xff]
          %v5598 = vld [vmem:[#allocation14 + $0xa0] sm:$0xff]
          %v5599 = vld [vmem:[#allocation14 + $0xa8] sm:$0xff]
          %v5600 = vld [vmem:[#allocation14 + $0xb0] sm:$0xff]
          %v5601 = vld [vmem:[#allocation14 + $0xb8] sm:$0xff]
          %v5602 = vld [vmem:[#allocation14 + $0xc0] sm:$0xff]
          %v5603 = vld [vmem:[#allocation14 + $0xc8] sm:$0xff]
          %v5604 = vld [vmem:[#allocation14 + $0xd0] sm:$0xff]
          %v5605 = vld [vmem:[#allocation14 + $0xd8] sm:$0xff]
          %v5606 = vld [vmem:[#allocation14 + $0xe0] sm:$0xff]
          %v5607 = vld [vmem:[#allocation14 + $0xe8] sm:$0xff]
          %v5608 = vld [vmem:[#allocation14 + $0xf0] sm:$0xff]
          %v5609 = vld [vmem:[#allocation14 + $0xf8] sm:$0xff]
          %v5610 = vld [vmem:[#allocation14 + $0x100] sm:$0xff]
          %v5611 = vld [vmem:[#allocation14 + $0x108] sm:$0xff]
          %v5612 = vld [vmem:[#allocation14 + $0x110] sm:$0xff]
          %v5613 = vld [vmem:[#allocation14 + $0x118] sm:$0xff]
          %v5614 = vld [vmem:[#allocation14 + $0x120] sm:$0xff]
          %v5615 = vld [vmem:[#allocation14 + $0x128] sm:$0xff]
          %v5616 = vld [vmem:[#allocation14 + $0x130] sm:$0xff]
          %v5617 = vld [vmem:[#allocation14 + $0x138] sm:$0xff]
          %v5618 = vld [vmem:[#allocation14 + $0x140] sm:$0xff]
          %v5619 = vld [vmem:[#allocation14 + $0x148] sm:$0xff]
          %v5620 = vld [vmem:[#allocation14 + $0x150] sm:$0xff]
          %v5621 = vld [vmem:[#allocation14 + $0x158] sm:$0xff]
          %v5622 = vld [vmem:[#allocation14 + $0x160] sm:$0xff]
          %v5623 = vld [vmem:[#allocation14 + $0x168] sm:$0xff]
          %v5624 = vld [vmem:[#allocation14 + $0x170] sm:$0xff]
          %v5625 = vld [vmem:[#allocation14 + $0x178] sm:$0xff]
          %v5626 = vld [vmem:[#allocation14 + $0x180] sm:$0xff]
          %v5627 = vld [vmem:[#allocation14 + $0x188] sm:$0xff]
          %v5628 = vld [vmem:[#allocation14 + $0x190] sm:$0xff]
          %v5629 = vld [vmem:[#allocation14 + $0x198] sm:$0xff]
          %v5630 = vld [vmem:[#allocation14 + $0x1a0] sm:$0xff]
          %v5631 = vld [vmem:[#allocation14 + $0x1a8] sm:$0xff]
          %v5632 = vld [vmem:[#allocation14 + $0x1b0] sm:$0xff]
          %v5633 = vld [vmem:[#allocation14 + $0x1b8] sm:$0xff]
          %v5634 = vld [vmem:[#allocation14 + $0x1c0] sm:$0xff]
          %v5635 = vld [vmem:[#allocation14 + $0x1c8] sm:$0xff]
          %v5636 = vld [vmem:[#allocation14 + $0x1d0] sm:$0xff]
          %v5637 = vld [vmem:[#allocation14 + $0x1d8] sm:$0xff]
          %v5638 = vld [vmem:[#allocation14 + $0x1e0] sm:$0xff]
          %v5639 = vld [vmem:[#allocation14 + $0x1e8] sm:$0xff]
          %v5640 = vld [vmem:[#allocation14 + $0x1f0] sm:$0xff]
          %v5641 = vld [vmem:[#allocation14 + $0x1f8] sm:$0xff]
          %v5642 = vld [vmem:[#allocation15] sm:$0x3]
          %v5707 = vunpack.c.l.b16 %v5578
          %v5708 = vunpack.c.h.b16 %v5578
          %v5709 = vunpack.c.l.b16 %v5579
          %v5710 = vunpack.c.h.b16 %v5579
          %v5711 = vunpack.c.l.b16 %v5580
          %v5712 = vunpack.c.h.b16 %v5580
          %v5713 = vunpack.c.l.b16 %v5581
          %v5714 = vunpack.c.h.b16 %v5581
          %v5715 = vunpack.c.l.b16 %v5582
          %v5716 = vunpack.c.h.b16 %v5582
          %v5717 = vunpack.c.l.b16 %v5583
          %v5718 = vunpack.c.h.b16 %v5583
          %v5719 = vunpack.c.l.b16 %v5584
          %v5720 = vunpack.c.h.b16 %v5584
          %v5721 = vunpack.c.l.b16 %v5585
          %v5722 = vunpack.c.h.b16 %v5585
          %v5723 = vunpack.c.l.b16 %v5586
          %v5724 = vunpack.c.h.b16 %v5586
          %v5725 = vunpack.c.l.b16 %v5587
          %v5726 = vunpack.c.h.b16 %v5587
          %v5727 = vunpack.c.l.b16 %v5588
          %v5728 = vunpack.c.h.b16 %v5588
          %v5729 = vunpack.c.l.b16 %v5589
          %v5730 = vunpack.c.h.b16 %v5589
          %v5731 = vunpack.c.l.b16 %v5590
          %v5732 = vunpack.c.h.b16 %v5590
          %v5733 = vunpack.c.l.b16 %v5591
          %v5734 = vunpack.c.h.b16 %v5591
          %v5735 = vunpack.c.l.b16 %v5592
          %v5736 = vunpack.c.h.b16 %v5592
          %v5737 = vunpack.c.l.b16 %v5593
          %v5738 = vunpack.c.h.b16 %v5593
          %v5739 = vunpack.c.l.b16 %v5594
          %v5740 = vunpack.c.h.b16 %v5594
          %v5741 = vunpack.c.l.b16 %v5595
          %v5742 = vunpack.c.h.b16 %v5595
          %v5743 = vunpack.c.l.b16 %v5596
          %v5744 = vunpack.c.h.b16 %v5596
          %v5745 = vunpack.c.l.b16 %v5597
          %v5746 = vunpack.c.h.b16 %v5597
          %v5747 = vunpack.c.l.b16 %v5598
          %v5748 = vunpack.c.h.b16 %v5598
          %v5749 = vunpack.c.l.b16 %v5599
          %v5750 = vunpack.c.h.b16 %v5599
          %v5751 = vunpack.c.l.b16 %v5600
          %v5752 = vunpack.c.h.b16 %v5600
          %v5753 = vunpack.c.l.b16 %v5601
          %v5754 = vunpack.c.h.b16 %v5601
          %v5755 = vunpack.c.l.b16 %v5602
          %v5756 = vunpack.c.h.b16 %v5602
          %v5757 = vunpack.c.l.b16 %v5603
          %v5758 = vunpack.c.h.b16 %v5603
          %v5759 = vunpack.c.l.b16 %v5604
          %v5760 = vunpack.c.h.b16 %v5604
          %v5761 = vunpack.c.l.b16 %v5605
          %v5762 = vunpack.c.h.b16 %v5605
          %v5763 = vunpack.c.l.b16 %v5606
          %v5764 = vunpack.c.h.b16 %v5606
          %v5765 = vunpack.c.l.b16 %v5607
          %v5766 = vunpack.c.h.b16 %v5607
          %v5767 = vunpack.c.l.b16 %v5608
          %v5768 = vunpack.c.h.b16 %v5608
          %v5769 = vunpack.c.l.b16 %v5609
          %v5770 = vunpack.c.h.b16 %v5609
          %v5771 = vunpack.c.l.b16 %v5610
          %v5772 = vunpack.c.h.b16 %v5610
          %v5773 = vunpack.c.l.b16 %v5611
          %v5774 = vunpack.c.h.b16 %v5611
          %v5775 = vunpack.c.l.b16 %v5612
          %v5776 = vunpack.c.h.b16 %v5612
          %v5777 = vunpack.c.l.b16 %v5613
          %v5778 = vunpack.c.h.b16 %v5613
          %v5779 = vunpack.c.l.b16 %v5614
          %v5780 = vunpack.c.h.b16 %v5614
          %v5781 = vunpack.c.l.b16 %v5615
          %v5782 = vunpack.c.h.b16 %v5615
          %v5783 = vunpack.c.l.b16 %v5616
          %v5784 = vunpack.c.h.b16 %v5616
          %v5785 = vunpack.c.l.b16 %v5617
          %v5786 = vunpack.c.h.b16 %v5617
          %v5787 = vunpack.c.l.b16 %v5618
          %v5788 = vunpack.c.h.b16 %v5618
          %v5789 = vunpack.c.l.b16 %v5619
          %v5790 = vunpack.c.h.b16 %v5619
          %v5791 = vunpack.c.l.b16 %v5620
          %v5792 = vunpack.c.h.b16 %v5620
          %v5793 = vunpack.c.l.b16 %v5621
          %v5794 = vunpack.c.h.b16 %v5621
          %v5795 = vunpack.c.l.b16 %v5622
          %v5796 = vunpack.c.h.b16 %v5622
          %v5797 = vunpack.c.l.b16 %v5623
          %v5798 = vunpack.c.h.b16 %v5623
          %v5799 = vunpack.c.l.b16 %v5624
          %v5800 = vunpack.c.h.b16 %v5624
          %v5801 = vunpack.c.l.b16 %v5625
          %v5802 = vunpack.c.h.b16 %v5625
          %v5803 = vunpack.c.l.b16 %v5626
          %v5804 = vunpack.c.h.b16 %v5626
          %v5805 = vunpack.c.l.b16 %v5627
          %v5806 = vunpack.c.h.b16 %v5627
          %v5807 = vunpack.c.l.b16 %v5628
          %v5808 = vunpack.c.h.b16 %v5628
          %v5809 = vunpack.c.l.b16 %v5629
          %v5810 = vunpack.c.h.b16 %v5629
          %v5811 = vunpack.c.l.b16 %v5630
          %v5812 = vunpack.c.h.b16 %v5630
          %v5813 = vunpack.c.l.b16 %v5631
          %v5814 = vunpack.c.h.b16 %v5631
          %v5815 = vunpack.c.l.b16 %v5632
          %v5816 = vunpack.c.h.b16 %v5632
          %v5817 = vunpack.c.l.b16 %v5633
          %v5818 = vunpack.c.h.b16 %v5633
          %v5819 = vunpack.c.l.b16 %v5634
          %v5820 = vunpack.c.h.b16 %v5634
          %v5821 = vunpack.c.l.b16 %v5635
          %v5822 = vunpack.c.h.b16 %v5635
          %v5823 = vunpack.c.l.b16 %v5636
          %v5824 = vunpack.c.h.b16 %v5636
          %v5825 = vunpack.c.l.b16 %v5637
          %v5826 = vunpack.c.h.b16 %v5637
          %v5827 = vunpack.c.l.b16 %v5638
          %v5828 = vunpack.c.h.b16 %v5638
          %v5829 = vunpack.c.l.b16 %v5639
          %v5830 = vunpack.c.h.b16 %v5639
          %v5831 = vunpack.c.l.b16 %v5640
          %v5832 = vunpack.c.h.b16 %v5640
          %v5833 = vunpack.c.l.b16 %v5641
          %v5834 = vunpack.c.h.b16 %v5641
          %v5835 = vpack.c.b16 %v5709, %v5707
          %v5836 = vpack.c.b16 %v5710, %v5708
          %v5837 = vpack.c.b16 %v5713, %v5711
          %v5838 = vpack.c.b16 %v5714, %v5712
          %v5839 = vpack.c.b16 %v5717, %v5715
          %v5840 = vpack.c.b16 %v5718, %v5716
          %v5841 = vpack.c.b16 %v5721, %v5719
          %v5842 = vpack.c.b16 %v5722, %v5720
          %v5843 = vpack.c.b16 %v5725, %v5723
          %v5844 = vpack.c.b16 %v5726, %v5724
          %v5845 = vpack.c.b16 %v5729, %v5727
          %v5846 = vpack.c.b16 %v5730, %v5728
          %v5847 = vpack.c.b16 %v5733, %v5731
          %v5848 = vpack.c.b16 %v5734, %v5732
          %v5849 = vpack.c.b16 %v5737, %v5735
          %v5850 = vpack.c.b16 %v5738, %v5736
          %v5851 = vpack.c.b16 %v5741, %v5739
          %v5852 = vpack.c.b16 %v5742, %v5740
          %v5853 = vpack.c.b16 %v5745, %v5743
          %v5854 = vpack.c.b16 %v5746, %v5744
          %v5855 = vpack.c.b16 %v5749, %v5747
          %v5856 = vpack.c.b16 %v5750, %v5748
          %v5857 = vpack.c.b16 %v5753, %v5751
          %v5858 = vpack.c.b16 %v5754, %v5752
          %v5859 = vpack.c.b16 %v5757, %v5755
          %v5860 = vpack.c.b16 %v5758, %v5756
          %v5861 = vpack.c.b16 %v5761, %v5759
          %v5862 = vpack.c.b16 %v5762, %v5760
          %v5863 = vpack.c.b16 %v5765, %v5763
          %v5864 = vpack.c.b16 %v5766, %v5764
          %v5865 = vpack.c.b16 %v5769, %v5767
          %v5866 = vpack.c.b16 %v5770, %v5768
          %v5867 = vpack.c.b16 %v5773, %v5771
          %v5868 = vpack.c.b16 %v5774, %v5772
          %v5869 = vpack.c.b16 %v5777, %v5775
          %v5870 = vpack.c.b16 %v5778, %v5776
          %v5871 = vpack.c.b16 %v5781, %v5779
          %v5872 = vpack.c.b16 %v5782, %v5780
          %v5873 = vpack.c.b16 %v5785, %v5783
          %v5874 = vpack.c.b16 %v5786, %v5784
          %v5875 = vpack.c.b16 %v5789, %v5787
          %v5876 = vpack.c.b16 %v5790, %v5788
          %v5877 = vpack.c.b16 %v5793, %v5791
          %v5878 = vpack.c.b16 %v5794, %v5792
          %v5879 = vpack.c.b16 %v5797, %v5795
          %v5880 = vpack.c.b16 %v5798, %v5796
          %v5881 = vpack.c.b16 %v5801, %v5799
          %v5882 = vpack.c.b16 %v5802, %v5800
          %v5883 = vpack.c.b16 %v5805, %v5803
          %v5884 = vpack.c.b16 %v5806, %v5804
          %v5885 = vpack.c.b16 %v5809, %v5807
          %v5886 = vpack.c.b16 %v5810, %v5808
          %v5887 = vpack.c.b16 %v5813, %v5811
          %v5888 = vpack.c.b16 %v5814, %v5812
          %v5889 = vpack.c.b16 %v5817, %v5815
          %v5890 = vpack.c.b16 %v5818, %v5816
          %v5891 = vpack.c.b16 %v5821, %v5819
          %v5892 = vpack.c.b16 %v5822, %v5820
          %v5893 = vpack.c.b16 %v5825, %v5823
          %v5894 = vpack.c.b16 %v5826, %v5824
          %v5895 = vpack.c.b16 %v5829, %v5827
          %v5896 = vpack.c.b16 %v5830, %v5828
          %v5897 = vpack.c.b16 %v5833, %v5831
          %v5898 = vpack.c.b16 %v5834, %v5832
          %v5964 = vlaneseq
          %v5965 = vshrl.u32 %v5964, 7
          %v5966 = vsub.s32 0, %v5965
          %v5967 = vrot.slane %v5642, %v5966
          %v5968 = vlaneseq
          %v5969 = vshrl.u32 %v5968, 7
          %v5970 = vsub.s32 1, %v5969
          %v5971 = vrot.slane %v5642, %v5970
          %5974 = vmatprep.subr.bf16.mxu0 %v5850
          %5975 = vmatpush1.bf16.msra.mxu0 %v5849
          %5976 = vmatprep.subr.bf16.mxu0 %v5848
          %5977 = vmatpush1.bf16.msra.mxu0 %v5847
          %5978 = vmatprep.subr.bf16.mxu0 %v5846
          %5979 = vmatpush1.bf16.msra.mxu0 %v5845
          %5980 = vmatprep.subr.bf16.mxu0 %v5844
          %5981 = vmatpush1.bf16.msra.mxu0 %v5843
          %5982 = vmatprep.subr.bf16.mxu0 %v5842
          %5983 = vmatpush1.bf16.msra.mxu0 %v5841
          %5984 = vmatprep.subr.bf16.mxu0 %v5840
          %5985 = vmatpush1.bf16.msra.mxu0 %v5839
          %5986 = vmatprep.subr.bf16.mxu0 %v5838
          %5987 = vmatpush1.bf16.msra.mxu0 %v5837
          %5988 = vmatprep.subr.bf16.mxu0 %v5836
          %5989 = vmatpush1.bf16.msra.mxu0 %v5835
          %5990 = vmatprep.subr.bf16.mxu0 %v5866
          %5991 = vmatpush2.bf16.msra.mxu0 %v5865
          %5992 = vmatprep.subr.bf16.mxu0 %v5864
          %5993 = vmatpush2.bf16.msra.mxu0 %v5863
          %5994 = vmatprep.subr.bf16.mxu0 %v5862
          %5995 = vmatpush2.bf16.msra.mxu0 %v5861
          %5996 = vmatprep.subr.bf16.mxu0 %v5860
          %5997 = vmatpush2.bf16.msra.mxu0 %v5859
          %5998 = vmatprep.subr.bf16.mxu0 %v5858
          %5999 = vmatpush2.bf16.msra.mxu0 %v5857
          %6000 = vmatprep.subr.bf16.mxu0 %v5856
          %6001 = vmatpush2.bf16.msra.mxu0 %v5855
          %6002 = vmatprep.subr.bf16.mxu0 %v5854
          %6003 = vmatpush2.bf16.msra.mxu0 %v5853
          %6004 = vmatprep.subr.bf16.mxu0 %v5852
          %6005 = vmatpush2.bf16.msra.mxu0 %v5851
          %6006 = vmatprep.mubr.bf16.mxu0 %v5575
          %6007 = vmatmul.mubr.bf16.gmra.mxu0 %v5574
          %v6008 = vpop.f32.mrf.mxu0
          %v6009 = vadd.f32 %v5967, %v6008
          %v6010 = vpop.f32.mrf.mxu0
          %v6011 = vadd.f32 %v5971, %v6010
          %v6012 = vpop.f32.mrf.mxu0
          %v6013 = vpop.f32.mrf.mxu0
          %6014 = vdwg.mxu0
          %6015 = vmatprep.subr.bf16.mxu0 %v5882
          %6016 = vmatpush1.bf16.msra.mxu0 %v5881
          %6017 = vmatprep.subr.bf16.mxu0 %v5880
          %6018 = vmatpush1.bf16.msra.mxu0 %v5879
          %6019 = vmatprep.subr.bf16.mxu0 %v5878
          %6020 = vmatpush1.bf16.msra.mxu0 %v5877
          %6021 = vmatprep.subr.bf16.mxu0 %v5876
          %6022 = vmatpush1.bf16.msra.mxu0 %v5875
          %6023 = vmatprep.subr.bf16.mxu0 %v5874
          %6024 = vmatpush1.bf16.msra.mxu0 %v5873
          %6025 = vmatprep.subr.bf16.mxu0 %v5872
          %6026 = vmatpush1.bf16.msra.mxu0 %v5871
          %6027 = vmatprep.subr.bf16.mxu0 %v5870
          %6028 = vmatpush1.bf16.msra.mxu0 %v5869
          %6029 = vmatprep.subr.bf16.mxu0 %v5868
          %6030 = vmatpush1.bf16.msra.mxu0 %v5867
          %6031 = vmatprep.subr.bf16.mxu0 %v5898
          %6032 = vmatpush2.bf16.msra.mxu0 %v5897
          %6033 = vmatprep.subr.bf16.mxu0 %v5896
          %6034 = vmatpush2.bf16.msra.mxu0 %v5895
          %6035 = vmatprep.subr.bf16.mxu0 %v5894
          %6036 = vmatpush2.bf16.msra.mxu0 %v5893
          %6037 = vmatprep.subr.bf16.mxu0 %v5892
          %6038 = vmatpush2.bf16.msra.mxu0 %v5891
          %6039 = vmatprep.subr.bf16.mxu0 %v5890
          %6040 = vmatpush2.bf16.msra.mxu0 %v5889
          %6041 = vmatprep.subr.bf16.mxu0 %v5888
          %6042 = vmatpush2.bf16.msra.mxu0 %v5887
          %6043 = vmatprep.subr.bf16.mxu0 %v5886
          %6044 = vmatpush2.bf16.msra.mxu0 %v5885
          %6045 = vmatprep.subr.bf16.mxu0 %v5884
          %6046 = vmatpush2.bf16.msra.mxu0 %v5883
          %6047 = vmatprep.mubr.bf16.mxu0 %v5577
          %6048 = vmatmul.mubr.bf16.gmra.mxu0 %v5576
          %v6049 = vpop.f32.mrf.mxu0
          %v6050 = vadd.f32 %v6009, %v6049
          %v6051 = vpop.f32.mrf.mxu0
          %v6052 = vadd.f32 %v6011, %v6051
          %v6053 = vpop.f32.mrf.mxu0
          %v6054 = vpop.f32.mrf.mxu0
          %6055 = vdwg.mxu0
          %v6056 = vmax.f32 %v6050, 0.0
          %v6057 = vmax.f32 %v6052, 0.0
          %v6058 = vpack.c.bf16 %v6056, %v6056
          %v6059 = vpack.c.bf16 %v6057, %v6057
          %v6060 = vld [vmem:[%s13] sm:$0xff]
          %v6061 = vld [vmem:[%s13 + $0x8] sm:$0xff]
          %v6062 = vld [vmem:[%s13 + $0x10] sm:$0xff]
          %v6063 = vld [vmem:[%s13 + $0x18] sm:$0xff]
          %v6064 = vld [vmem:[%s13 + $0x20] sm:$0xff]
          %v6065 = vld [vmem:[%s13 + $0x28] sm:$0xff]
          %v6066 = vld [vmem:[%s13 + $0x30] sm:$0xff]
          %v6067 = vld [vmem:[%s13 + $0x38] sm:$0xff]
          %v6068 = vld [vmem:[%s13 + $0x40] sm:$0xff]
          %v6069 = vld [vmem:[%s13 + $0x48] sm:$0xff]
          %v6070 = vld [vmem:[%s13 + $0x50] sm:$0xff]
          %v6071 = vld [vmem:[%s13 + $0x58] sm:$0xff]
          %v6072 = vld [vmem:[%s13 + $0x60] sm:$0xff]
          %v6073 = vld [vmem:[%s13 + $0x68] sm:$0xff]
          %v6074 = vld [vmem:[%s13 + $0x70] sm:$0xff]
          %v6075 = vld [vmem:[%s13 + $0x78] sm:$0xff]
          %v6076 = vld [vmem:[%s13 + $0x80] sm:$0xff]
          %v6077 = vld [vmem:[%s13 + $0x88] sm:$0xff]
          %v6078 = vld [vmem:[%s13 + $0x90] sm:$0xff]
          %v6079 = vld [vmem:[%s13 + $0x98] sm:$0xff]
          %v6080 = vld [vmem:[%s13 + $0xa0] sm:$0xff]
          %v6081 = vld [vmem:[%s13 + $0xa8] sm:$0xff]
          %v6082 = vld [vmem:[%s13 + $0xb0] sm:$0xff]
          %v6083 = vld [vmem:[%s13 + $0xb8] sm:$0xff]
          %v6084 = vld [vmem:[%s13 + $0xc0] sm:$0xff]
          %v6085 = vld [vmem:[%s13 + $0xc8] sm:$0xff]
          %v6086 = vld [vmem:[%s13 + $0xd0] sm:$0xff]
          %v6087 = vld [vmem:[%s13 + $0xd8] sm:$0xff]
          %v6088 = vld [vmem:[%s13 + $0xe0] sm:$0xff]
          %v6089 = vld [vmem:[%s13 + $0xe8] sm:$0xff]
          %v6090 = vld [vmem:[%s13 + $0xf0] sm:$0xff]
          %v6091 = vld [vmem:[%s13 + $0xf8] sm:$0xff]
          %v6092 = vld [vmem:[%s13 + $0x100] sm:$0xff]
          %v6093 = vld [vmem:[%s13 + $0x108] sm:$0xff]
          %v6094 = vld [vmem:[%s13 + $0x110] sm:$0xff]
          %v6095 = vld [vmem:[%s13 + $0x118] sm:$0xff]
          %v6096 = vld [vmem:[%s13 + $0x120] sm:$0xff]
          %v6097 = vld [vmem:[%s13 + $0x128] sm:$0xff]
          %v6098 = vld [vmem:[%s13 + $0x130] sm:$0xff]
          %v6099 = vld [vmem:[%s13 + $0x138] sm:$0xff]
          %v6100 = vld [vmem:[%s13 + $0x140] sm:$0xff]
          %v6101 = vld [vmem:[%s13 + $0x148] sm:$0xff]
          %v6102 = vld [vmem:[%s13 + $0x150] sm:$0xff]
          %v6103 = vld [vmem:[%s13 + $0x158] sm:$0xff]
          %v6104 = vld [vmem:[%s13 + $0x160] sm:$0xff]
          %v6105 = vld [vmem:[%s13 + $0x168] sm:$0xff]
          %v6106 = vld [vmem:[%s13 + $0x170] sm:$0xff]
          %v6107 = vld [vmem:[%s13 + $0x178] sm:$0xff]
          %v6108 = vld [vmem:[%s13 + $0x180] sm:$0xff]
          %v6109 = vld [vmem:[%s13 + $0x188] sm:$0xff]
          %v6110 = vld [vmem:[%s13 + $0x190] sm:$0xff]
          %v6111 = vld [vmem:[%s13 + $0x198] sm:$0xff]
          %v6112 = vld [vmem:[%s13 + $0x1a0] sm:$0xff]
          %v6113 = vld [vmem:[%s13 + $0x1a8] sm:$0xff]
          %v6114 = vld [vmem:[%s13 + $0x1b0] sm:$0xff]
          %v6115 = vld [vmem:[%s13 + $0x1b8] sm:$0xff]
          %v6116 = vld [vmem:[%s13 + $0x1c0] sm:$0xff]
          %v6117 = vld [vmem:[%s13 + $0x1c8] sm:$0xff]
          %v6118 = vld [vmem:[%s13 + $0x1d0] sm:$0xff]
          %v6119 = vld [vmem:[%s13 + $0x1d8] sm:$0xff]
          %v6120 = vld [vmem:[%s13 + $0x1e0] sm:$0xff]
          %v6121 = vld [vmem:[%s13 + $0x1e8] sm:$0xff]
          %v6122 = vld [vmem:[%s13 + $0x1f0] sm:$0xff]
          %v6123 = vld [vmem:[%s13 + $0x1f8] sm:$0xff]
          %v6124 = vld [vmem:[%s13 + $0x200] sm:$0xff]
          %v6125 = vld [vmem:[%s13 + $0x208] sm:$0xff]
          %v6126 = vld [vmem:[%s13 + $0x210] sm:$0xff]
          %v6127 = vld [vmem:[%s13 + $0x218] sm:$0xff]
          %v6128 = vld [vmem:[%s13 + $0x220] sm:$0xff]
          %v6129 = vld [vmem:[%s13 + $0x228] sm:$0xff]
          %v6130 = vld [vmem:[%s13 + $0x230] sm:$0xff]
          %v6131 = vld [vmem:[%s13 + $0x238] sm:$0xff]
          %v6132 = vld [vmem:[%s13 + $0x240] sm:$0xff]
          %v6133 = vld [vmem:[%s13 + $0x248] sm:$0xff]
          %v6134 = vld [vmem:[%s13 + $0x250] sm:$0xff]
          %v6135 = vld [vmem:[%s13 + $0x258] sm:$0xff]
          %v6136 = vld [vmem:[%s13 + $0x260] sm:$0xff]
          %v6137 = vld [vmem:[%s13 + $0x268] sm:$0xff]
          %v6138 = vld [vmem:[%s13 + $0x270] sm:$0xff]
          %v6139 = vld [vmem:[%s13 + $0x278] sm:$0xff]
          %v6140 = vld [vmem:[%s13 + $0x280] sm:$0xff]
          %v6141 = vld [vmem:[%s13 + $0x288] sm:$0xff]
          %v6142 = vld [vmem:[%s13 + $0x290] sm:$0xff]
          %v6143 = vld [vmem:[%s13 + $0x298] sm:$0xff]
          %v6144 = vld [vmem:[%s13 + $0x2a0] sm:$0xff]
          %v6145 = vld [vmem:[%s13 + $0x2a8] sm:$0xff]
          %v6146 = vld [vmem:[%s13 + $0x2b0] sm:$0xff]
          %v6147 = vld [vmem:[%s13 + $0x2b8] sm:$0xff]
          %v6148 = vld [vmem:[%s13 + $0x2c0] sm:$0xff]
          %v6149 = vld [vmem:[%s13 + $0x2c8] sm:$0xff]
          %v6150 = vld [vmem:[%s13 + $0x2d0] sm:$0xff]
          %v6151 = vld [vmem:[%s13 + $0x2d8] sm:$0xff]
          %v6152 = vld [vmem:[%s13 + $0x2e0] sm:$0xff]
          %v6153 = vld [vmem:[%s13 + $0x2e8] sm:$0xff]
          %v6154 = vld [vmem:[%s13 + $0x2f0] sm:$0xff]
          %v6155 = vld [vmem:[%s13 + $0x2f8] sm:$0xff]
          %v6156 = vld [vmem:[%s13 + $0x300] sm:$0xff]
          %v6157 = vld [vmem:[%s13 + $0x308] sm:$0xff]
          %v6158 = vld [vmem:[%s13 + $0x310] sm:$0xff]
          %v6159 = vld [vmem:[%s13 + $0x318] sm:$0xff]
          %v6160 = vld [vmem:[%s13 + $0x320] sm:$0xff]
          %v6161 = vld [vmem:[%s13 + $0x328] sm:$0xff]
          %v6162 = vld [vmem:[%s13 + $0x330] sm:$0xff]
          %v6163 = vld [vmem:[%s13 + $0x338] sm:$0xff]
          %v6164 = vld [vmem:[%s13 + $0x340] sm:$0xff]
          %v6165 = vld [vmem:[%s13 + $0x348] sm:$0xff]
          %v6166 = vld [vmem:[%s13 + $0x350] sm:$0xff]
          %v6167 = vld [vmem:[%s13 + $0x358] sm:$0xff]
          %v6168 = vld [vmem:[%s13 + $0x360] sm:$0xff]
          %v6169 = vld [vmem:[%s13 + $0x368] sm:$0xff]
          %v6170 = vld [vmem:[%s13 + $0x370] sm:$0xff]
          %v6171 = vld [vmem:[%s13 + $0x378] sm:$0xff]
          %v6172 = vld [vmem:[%s13 + $0x380] sm:$0xff]
          %v6173 = vld [vmem:[%s13 + $0x388] sm:$0xff]
          %v6174 = vld [vmem:[%s13 + $0x390] sm:$0xff]
          %v6175 = vld [vmem:[%s13 + $0x398] sm:$0xff]
          %v6176 = vld [vmem:[%s13 + $0x3a0] sm:$0xff]
          %v6177 = vld [vmem:[%s13 + $0x3a8] sm:$0xff]
          %v6178 = vld [vmem:[%s13 + $0x3b0] sm:$0xff]
          %v6179 = vld [vmem:[%s13 + $0x3b8] sm:$0xff]
          %v6180 = vld [vmem:[%s13 + $0x3c0] sm:$0xff]
          %v6181 = vld [vmem:[%s13 + $0x3c8] sm:$0xff]
          %v6182 = vld [vmem:[%s13 + $0x3d0] sm:$0xff]
          %v6183 = vld [vmem:[%s13 + $0x3d8] sm:$0xff]
          %v6184 = vld [vmem:[%s13 + $0x3e0] sm:$0xff]
          %v6185 = vld [vmem:[%s13 + $0x3e8] sm:$0xff]
          %v6186 = vld [vmem:[%s13 + $0x3f0] sm:$0xff]
          %v6187 = vld [vmem:[%s13 + $0x3f8] sm:$0xff]
          %v6188 = vld [vmem:[%s13 + $0x400] sm:$0xff]
          %v6189 = vld [vmem:[%s13 + $0x408] sm:$0xff]
          %v6190 = vld [vmem:[%s13 + $0x410] sm:$0xff]
          %v6191 = vld [vmem:[%s13 + $0x418] sm:$0xff]
          %v6192 = vld [vmem:[%s13 + $0x420] sm:$0xff]
          %v6193 = vld [vmem:[%s13 + $0x428] sm:$0xff]
          %v6194 = vld [vmem:[%s13 + $0x430] sm:$0xff]
          %v6195 = vld [vmem:[%s13 + $0x438] sm:$0xff]
          %v6196 = vld [vmem:[%s13 + $0x440] sm:$0xff]
          %v6197 = vld [vmem:[%s13 + $0x448] sm:$0xff]
          %v6198 = vld [vmem:[%s13 + $0x450] sm:$0xff]
          %v6199 = vld [vmem:[%s13 + $0x458] sm:$0xff]
          %v6200 = vld [vmem:[%s13 + $0x460] sm:$0xff]
          %v6201 = vld [vmem:[%s13 + $0x468] sm:$0xff]
          %v6202 = vld [vmem:[%s13 + $0x470] sm:$0xff]
          %v6203 = vld [vmem:[%s13 + $0x478] sm:$0xff]
          %v6204 = vld [vmem:[%s13 + $0x480] sm:$0xff]
          %v6205 = vld [vmem:[%s13 + $0x488] sm:$0xff]
          %v6206 = vld [vmem:[%s13 + $0x490] sm:$0xff]
          %v6207 = vld [vmem:[%s13 + $0x498] sm:$0xff]
          %v6208 = vld [vmem:[%s13 + $0x4a0] sm:$0xff]
          %v6209 = vld [vmem:[%s13 + $0x4a8] sm:$0xff]
          %v6210 = vld [vmem:[%s13 + $0x4b0] sm:$0xff]
          %v6211 = vld [vmem:[%s13 + $0x4b8] sm:$0xff]
          %v6212 = vld [vmem:[%s13 + $0x4c0] sm:$0xff]
          %v6213 = vld [vmem:[%s13 + $0x4c8] sm:$0xff]
          %v6214 = vld [vmem:[%s13 + $0x4d0] sm:$0xff]
          %v6215 = vld [vmem:[%s13 + $0x4d8] sm:$0xff]
          %v6216 = vld [vmem:[%s13 + $0x4e0] sm:$0xff]
          %v6217 = vld [vmem:[%s13 + $0x4e8] sm:$0xff]
          %v6218 = vld [vmem:[%s13 + $0x4f0] sm:$0xff]
          %v6219 = vld [vmem:[%s13 + $0x4f8] sm:$0xff]
          %v6220 = vld [vmem:[%s13 + $0x500] sm:$0xff]
          %v6221 = vld [vmem:[%s13 + $0x508] sm:$0xff]
          %v6222 = vld [vmem:[%s13 + $0x510] sm:$0xff]
          %v6223 = vld [vmem:[%s13 + $0x518] sm:$0xff]
          %v6224 = vld [vmem:[%s13 + $0x520] sm:$0xff]
          %v6225 = vld [vmem:[%s13 + $0x528] sm:$0xff]
          %v6226 = vld [vmem:[%s13 + $0x530] sm:$0xff]
          %v6227 = vld [vmem:[%s13 + $0x538] sm:$0xff]
          %v6228 = vld [vmem:[%s13 + $0x540] sm:$0xff]
          %v6229 = vld [vmem:[%s13 + $0x548] sm:$0xff]
          %v6230 = vld [vmem:[%s13 + $0x550] sm:$0xff]
          %v6231 = vld [vmem:[%s13 + $0x558] sm:$0xff]
          %v6232 = vld [vmem:[%s13 + $0x560] sm:$0xff]
          %v6233 = vld [vmem:[%s13 + $0x568] sm:$0xff]
          %v6234 = vld [vmem:[%s13 + $0x570] sm:$0xff]
          %v6235 = vld [vmem:[%s13 + $0x578] sm:$0xff]
          %v6236 = vld [vmem:[%s13 + $0x580] sm:$0xff]
          %v6237 = vld [vmem:[%s13 + $0x588] sm:$0xff]
          %v6238 = vld [vmem:[%s13 + $0x590] sm:$0xff]
          %v6239 = vld [vmem:[%s13 + $0x598] sm:$0xff]
          %v6240 = vld [vmem:[%s13 + $0x5a0] sm:$0xff]
          %v6241 = vld [vmem:[%s13 + $0x5a8] sm:$0xff]
          %v6242 = vld [vmem:[%s13 + $0x5b0] sm:$0xff]
          %v6243 = vld [vmem:[%s13 + $0x5b8] sm:$0xff]
          %v6244 = vld [vmem:[%s13 + $0x5c0] sm:$0xff]
          %v6245 = vld [vmem:[%s13 + $0x5c8] sm:$0xff]
          %v6246 = vld [vmem:[%s13 + $0x5d0] sm:$0xff]
          %v6247 = vld [vmem:[%s13 + $0x5d8] sm:$0xff]
          %v6248 = vld [vmem:[%s13 + $0x5e0] sm:$0xff]
          %v6249 = vld [vmem:[%s13 + $0x5e8] sm:$0xff]
          %v6250 = vld [vmem:[%s13 + $0x5f0] sm:$0xff]
          %v6251 = vld [vmem:[%s13 + $0x5f8] sm:$0xff]
          %v6252 = vld [vmem:[%s13 + $0x600] sm:$0xff]
          %v6253 = vld [vmem:[%s13 + $0x608] sm:$0xff]
          %v6254 = vld [vmem:[%s13 + $0x610] sm:$0xff]
          %v6255 = vld [vmem:[%s13 + $0x618] sm:$0xff]
          %v6256 = vld [vmem:[%s13 + $0x620] sm:$0xff]
          %v6257 = vld [vmem:[%s13 + $0x628] sm:$0xff]
          %v6258 = vld [vmem:[%s13 + $0x630] sm:$0xff]
          %v6259 = vld [vmem:[%s13 + $0x638] sm:$0xff]
          %v6260 = vld [vmem:[%s13 + $0x640] sm:$0xff]
          %v6261 = vld [vmem:[%s13 + $0x648] sm:$0xff]
          %v6262 = vld [vmem:[%s13 + $0x650] sm:$0xff]
          %v6263 = vld [vmem:[%s13 + $0x658] sm:$0xff]
          %v6264 = vld [vmem:[%s13 + $0x660] sm:$0xff]
          %v6265 = vld [vmem:[%s13 + $0x668] sm:$0xff]
          %v6266 = vld [vmem:[%s13 + $0x670] sm:$0xff]
          %v6267 = vld [vmem:[%s13 + $0x678] sm:$0xff]
          %v6268 = vld [vmem:[%s13 + $0x680] sm:$0xff]
          %v6269 = vld [vmem:[%s13 + $0x688] sm:$0xff]
          %v6270 = vld [vmem:[%s13 + $0x690] sm:$0xff]
          %v6271 = vld [vmem:[%s13 + $0x698] sm:$0xff]
          %v6272 = vld [vmem:[%s13 + $0x6a0] sm:$0xff]
          %v6273 = vld [vmem:[%s13 + $0x6a8] sm:$0xff]
          %v6274 = vld [vmem:[%s13 + $0x6b0] sm:$0xff]
          %v6275 = vld [vmem:[%s13 + $0x6b8] sm:$0xff]
          %v6276 = vld [vmem:[%s13 + $0x6c0] sm:$0xff]
          %v6277 = vld [vmem:[%s13 + $0x6c8] sm:$0xff]
          %v6278 = vld [vmem:[%s13 + $0x6d0] sm:$0xff]
          %v6279 = vld [vmem:[%s13 + $0x6d8] sm:$0xff]
          %v6280 = vld [vmem:[%s13 + $0x6e0] sm:$0xff]
          %v6281 = vld [vmem:[%s13 + $0x6e8] sm:$0xff]
          %v6282 = vld [vmem:[%s13 + $0x6f0] sm:$0xff]
          %v6283 = vld [vmem:[%s13 + $0x6f8] sm:$0xff]
          %v6284 = vld [vmem:[%s13 + $0x700] sm:$0xff]
          %v6285 = vld [vmem:[%s13 + $0x708] sm:$0xff]
          %v6286 = vld [vmem:[%s13 + $0x710] sm:$0xff]
          %v6287 = vld [vmem:[%s13 + $0x718] sm:$0xff]
          %v6288 = vld [vmem:[%s13 + $0x720] sm:$0xff]
          %v6289 = vld [vmem:[%s13 + $0x728] sm:$0xff]
          %v6290 = vld [vmem:[%s13 + $0x730] sm:$0xff]
          %v6291 = vld [vmem:[%s13 + $0x738] sm:$0xff]
          %v6292 = vld [vmem:[%s13 + $0x740] sm:$0xff]
          %v6293 = vld [vmem:[%s13 + $0x748] sm:$0xff]
          %v6294 = vld [vmem:[%s13 + $0x750] sm:$0xff]
          %v6295 = vld [vmem:[%s13 + $0x758] sm:$0xff]
          %v6296 = vld [vmem:[%s13 + $0x760] sm:$0xff]
          %v6297 = vld [vmem:[%s13 + $0x768] sm:$0xff]
          %v6298 = vld [vmem:[%s13 + $0x770] sm:$0xff]
          %v6299 = vld [vmem:[%s13 + $0x778] sm:$0xff]
          %v6300 = vld [vmem:[%s13 + $0x780] sm:$0xff]
          %v6301 = vld [vmem:[%s13 + $0x788] sm:$0xff]
          %v6302 = vld [vmem:[%s13 + $0x790] sm:$0xff]
          %v6303 = vld [vmem:[%s13 + $0x798] sm:$0xff]
          %v6304 = vld [vmem:[%s13 + $0x7a0] sm:$0xff]
          %v6305 = vld [vmem:[%s13 + $0x7a8] sm:$0xff]
          %v6306 = vld [vmem:[%s13 + $0x7b0] sm:$0xff]
          %v6307 = vld [vmem:[%s13 + $0x7b8] sm:$0xff]
          %v6308 = vld [vmem:[%s13 + $0x7c0] sm:$0xff]
          %v6309 = vld [vmem:[%s13 + $0x7c8] sm:$0xff]
          %v6310 = vld [vmem:[%s13 + $0x7d0] sm:$0xff]
          %v6311 = vld [vmem:[%s13 + $0x7d8] sm:$0xff]
          %v6312 = vld [vmem:[%s13 + $0x7e0] sm:$0xff]
          %v6313 = vld [vmem:[%s13 + $0x7e8] sm:$0xff]
          %v6314 = vld [vmem:[%s13 + $0x7f0] sm:$0xff]
          %v6315 = vld [vmem:[%s13 + $0x7f8] sm:$0xff]
          %v6316 = vld [vmem:[#allocation17] sm:$0xff]
          %v6317 = vld [vmem:[#allocation17 + $0x8] sm:$0xff]
          %v6574 = vunpack.c.l.b16 %v6060
          %v6575 = vunpack.c.h.b16 %v6060
          %v6576 = vunpack.c.l.b16 %v6061
          %v6577 = vunpack.c.h.b16 %v6061
          %v6578 = vunpack.c.l.b16 %v6062
          %v6579 = vunpack.c.h.b16 %v6062
          %v6580 = vunpack.c.l.b16 %v6063
          %v6581 = vunpack.c.h.b16 %v6063
          %v6582 = vunpack.c.l.b16 %v6064
          %v6583 = vunpack.c.h.b16 %v6064
          %v6584 = vunpack.c.l.b16 %v6065
          %v6585 = vunpack.c.h.b16 %v6065
          %v6586 = vunpack.c.l.b16 %v6066
          %v6587 = vunpack.c.h.b16 %v6066
          %v6588 = vunpack.c.l.b16 %v6067
          %v6589 = vunpack.c.h.b16 %v6067
          %v6590 = vunpack.c.l.b16 %v6068
          %v6591 = vunpack.c.h.b16 %v6068
          %v6592 = vunpack.c.l.b16 %v6069
          %v6593 = vunpack.c.h.b16 %v6069
          %v6594 = vunpack.c.l.b16 %v6070
          %v6595 = vunpack.c.h.b16 %v6070
          %v6596 = vunpack.c.l.b16 %v6071
          %v6597 = vunpack.c.h.b16 %v6071
          %v6598 = vunpack.c.l.b16 %v6072
          %v6599 = vunpack.c.h.b16 %v6072
          %v6600 = vunpack.c.l.b16 %v6073
          %v6601 = vunpack.c.h.b16 %v6073
          %v6602 = vunpack.c.l.b16 %v6074
          %v6603 = vunpack.c.h.b16 %v6074
          %v6604 = vunpack.c.l.b16 %v6075
          %v6605 = vunpack.c.h.b16 %v6075
          %v6606 = vunpack.c.l.b16 %v6076
          %v6607 = vunpack.c.h.b16 %v6076
          %v6608 = vunpack.c.l.b16 %v6077
          %v6609 = vunpack.c.h.b16 %v6077
          %v6610 = vunpack.c.l.b16 %v6078
          %v6611 = vunpack.c.h.b16 %v6078
          %v6612 = vunpack.c.l.b16 %v6079
          %v6613 = vunpack.c.h.b16 %v6079
          %v6614 = vunpack.c.l.b16 %v6080
          %v6615 = vunpack.c.h.b16 %v6080
          %v6616 = vunpack.c.l.b16 %v6081
          %v6617 = vunpack.c.h.b16 %v6081
          %v6618 = vunpack.c.l.b16 %v6082
          %v6619 = vunpack.c.h.b16 %v6082
          %v6620 = vunpack.c.l.b16 %v6083
          %v6621 = vunpack.c.h.b16 %v6083
          %v6622 = vunpack.c.l.b16 %v6084
          %v6623 = vunpack.c.h.b16 %v6084
          %v6624 = vunpack.c.l.b16 %v6085
          %v6625 = vunpack.c.h.b16 %v6085
          %v6626 = vunpack.c.l.b16 %v6086
          %v6627 = vunpack.c.h.b16 %v6086
          %v6628 = vunpack.c.l.b16 %v6087
          %v6629 = vunpack.c.h.b16 %v6087
          %v6630 = vunpack.c.l.b16 %v6088
          %v6631 = vunpack.c.h.b16 %v6088
          %v6632 = vunpack.c.l.b16 %v6089
          %v6633 = vunpack.c.h.b16 %v6089
          %v6634 = vunpack.c.l.b16 %v6090
          %v6635 = vunpack.c.h.b16 %v6090
          %v6636 = vunpack.c.l.b16 %v6091
          %v6637 = vunpack.c.h.b16 %v6091
          %v6638 = vunpack.c.l.b16 %v6092
          %v6639 = vunpack.c.h.b16 %v6092
          %v6640 = vunpack.c.l.b16 %v6093
          %v6641 = vunpack.c.h.b16 %v6093
          %v6642 = vunpack.c.l.b16 %v6094
          %v6643 = vunpack.c.h.b16 %v6094
          %v6644 = vunpack.c.l.b16 %v6095
          %v6645 = vunpack.c.h.b16 %v6095
          %v6646 = vunpack.c.l.b16 %v6096
          %v6647 = vunpack.c.h.b16 %v6096
          %v6648 = vunpack.c.l.b16 %v6097
          %v6649 = vunpack.c.h.b16 %v6097
          %v6650 = vunpack.c.l.b16 %v6098
          %v6651 = vunpack.c.h.b16 %v6098
          %v6652 = vunpack.c.l.b16 %v6099
          %v6653 = vunpack.c.h.b16 %v6099
          %v6654 = vunpack.c.l.b16 %v6100
          %v6655 = vunpack.c.h.b16 %v6100
          %v6656 = vunpack.c.l.b16 %v6101
          %v6657 = vunpack.c.h.b16 %v6101
          %v6658 = vunpack.c.l.b16 %v6102
          %v6659 = vunpack.c.h.b16 %v6102
          %v6660 = vunpack.c.l.b16 %v6103
          %v6661 = vunpack.c.h.b16 %v6103
          %v6662 = vunpack.c.l.b16 %v6104
          %v6663 = vunpack.c.h.b16 %v6104
          %v6664 = vunpack.c.l.b16 %v6105
          %v6665 = vunpack.c.h.b16 %v6105
          %v6666 = vunpack.c.l.b16 %v6106
          %v6667 = vunpack.c.h.b16 %v6106
          %v6668 = vunpack.c.l.b16 %v6107
          %v6669 = vunpack.c.h.b16 %v6107
          %v6670 = vunpack.c.l.b16 %v6108
          %v6671 = vunpack.c.h.b16 %v6108
          %v6672 = vunpack.c.l.b16 %v6109
          %v6673 = vunpack.c.h.b16 %v6109
          %v6674 = vunpack.c.l.b16 %v6110
          %v6675 = vunpack.c.h.b16 %v6110
          %v6676 = vunpack.c.l.b16 %v6111
          %v6677 = vunpack.c.h.b16 %v6111
          %v6678 = vunpack.c.l.b16 %v6112
          %v6679 = vunpack.c.h.b16 %v6112
          %v6680 = vunpack.c.l.b16 %v6113
          %v6681 = vunpack.c.h.b16 %v6113
          %v6682 = vunpack.c.l.b16 %v6114
          %v6683 = vunpack.c.h.b16 %v6114
          %v6684 = vunpack.c.l.b16 %v6115
          %v6685 = vunpack.c.h.b16 %v6115
          %v6686 = vunpack.c.l.b16 %v6116
          %v6687 = vunpack.c.h.b16 %v6116
          %v6688 = vunpack.c.l.b16 %v6117
          %v6689 = vunpack.c.h.b16 %v6117
          %v6690 = vunpack.c.l.b16 %v6118
          %v6691 = vunpack.c.h.b16 %v6118
          %v6692 = vunpack.c.l.b16 %v6119
          %v6693 = vunpack.c.h.b16 %v6119
          %v6694 = vunpack.c.l.b16 %v6120
          %v6695 = vunpack.c.h.b16 %v6120
          %v6696 = vunpack.c.l.b16 %v6121
          %v6697 = vunpack.c.h.b16 %v6121
          %v6698 = vunpack.c.l.b16 %v6122
          %v6699 = vunpack.c.h.b16 %v6122
          %v6700 = vunpack.c.l.b16 %v6123
          %v6701 = vunpack.c.h.b16 %v6123
          %v6702 = vunpack.c.l.b16 %v6124
          %v6703 = vunpack.c.h.b16 %v6124
          %v6704 = vunpack.c.l.b16 %v6125
          %v6705 = vunpack.c.h.b16 %v6125
          %v6706 = vunpack.c.l.b16 %v6126
          %v6707 = vunpack.c.h.b16 %v6126
          %v6708 = vunpack.c.l.b16 %v6127
          %v6709 = vunpack.c.h.b16 %v6127
          %v6710 = vunpack.c.l.b16 %v6128
          %v6711 = vunpack.c.h.b16 %v6128
          %v6712 = vunpack.c.l.b16 %v6129
          %v6713 = vunpack.c.h.b16 %v6129
          %v6714 = vunpack.c.l.b16 %v6130
          %v6715 = vunpack.c.h.b16 %v6130
          %v6716 = vunpack.c.l.b16 %v6131
          %v6717 = vunpack.c.h.b16 %v6131
          %v6718 = vunpack.c.l.b16 %v6132
          %v6719 = vunpack.c.h.b16 %v6132
          %v6720 = vunpack.c.l.b16 %v6133
          %v6721 = vunpack.c.h.b16 %v6133
          %v6722 = vunpack.c.l.b16 %v6134
          %v6723 = vunpack.c.h.b16 %v6134
          %v6724 = vunpack.c.l.b16 %v6135
          %v6725 = vunpack.c.h.b16 %v6135
          %v6726 = vunpack.c.l.b16 %v6136
          %v6727 = vunpack.c.h.b16 %v6136
          %v6728 = vunpack.c.l.b16 %v6137
          %v6729 = vunpack.c.h.b16 %v6137
          %v6730 = vunpack.c.l.b16 %v6138
          %v6731 = vunpack.c.h.b16 %v6138
          %v6732 = vunpack.c.l.b16 %v6139
          %v6733 = vunpack.c.h.b16 %v6139
          %v6734 = vunpack.c.l.b16 %v6140
          %v6735 = vunpack.c.h.b16 %v6140
          %v6736 = vunpack.c.l.b16 %v6141
          %v6737 = vunpack.c.h.b16 %v6141
          %v6738 = vunpack.c.l.b16 %v6142
          %v6739 = vunpack.c.h.b16 %v6142
          %v6740 = vunpack.c.l.b16 %v6143
          %v6741 = vunpack.c.h.b16 %v6143
          %v6742 = vunpack.c.l.b16 %v6144
          %v6743 = vunpack.c.h.b16 %v6144
          %v6744 = vunpack.c.l.b16 %v6145
          %v6745 = vunpack.c.h.b16 %v6145
          %v6746 = vunpack.c.l.b16 %v6146
          %v6747 = vunpack.c.h.b16 %v6146
          %v6748 = vunpack.c.l.b16 %v6147
          %v6749 = vunpack.c.h.b16 %v6147
          %v6750 = vunpack.c.l.b16 %v6148
          %v6751 = vunpack.c.h.b16 %v6148
          %v6752 = vunpack.c.l.b16 %v6149
          %v6753 = vunpack.c.h.b16 %v6149
          %v6754 = vunpack.c.l.b16 %v6150
          %v6755 = vunpack.c.h.b16 %v6150
          %v6756 = vunpack.c.l.b16 %v6151
          %v6757 = vunpack.c.h.b16 %v6151
          %v6758 = vunpack.c.l.b16 %v6152
          %v6759 = vunpack.c.h.b16 %v6152
          %v6760 = vunpack.c.l.b16 %v6153
          %v6761 = vunpack.c.h.b16 %v6153
          %v6762 = vunpack.c.l.b16 %v6154
          %v6763 = vunpack.c.h.b16 %v6154
          %v6764 = vunpack.c.l.b16 %v6155
          %v6765 = vunpack.c.h.b16 %v6155
          %v6766 = vunpack.c.l.b16 %v6156
          %v6767 = vunpack.c.h.b16 %v6156
          %v6768 = vunpack.c.l.b16 %v6157
          %v6769 = vunpack.c.h.b16 %v6157
          %v6770 = vunpack.c.l.b16 %v6158
          %v6771 = vunpack.c.h.b16 %v6158
          %v6772 = vunpack.c.l.b16 %v6159
          %v6773 = vunpack.c.h.b16 %v6159
          %v6774 = vunpack.c.l.b16 %v6160
          %v6775 = vunpack.c.h.b16 %v6160
          %v6776 = vunpack.c.l.b16 %v6161
          %v6777 = vunpack.c.h.b16 %v6161
          %v6778 = vunpack.c.l.b16 %v6162
          %v6779 = vunpack.c.h.b16 %v6162
          %v6780 = vunpack.c.l.b16 %v6163
          %v6781 = vunpack.c.h.b16 %v6163
          %v6782 = vunpack.c.l.b16 %v6164
          %v6783 = vunpack.c.h.b16 %v6164
          %v6784 = vunpack.c.l.b16 %v6165
          %v6785 = vunpack.c.h.b16 %v6165
          %v6786 = vunpack.c.l.b16 %v6166
          %v6787 = vunpack.c.h.b16 %v6166
          %v6788 = vunpack.c.l.b16 %v6167
          %v6789 = vunpack.c.h.b16 %v6167
          %v6790 = vunpack.c.l.b16 %v6168
          %v6791 = vunpack.c.h.b16 %v6168
          %v6792 = vunpack.c.l.b16 %v6169
          %v6793 = vunpack.c.h.b16 %v6169
          %v6794 = vunpack.c.l.b16 %v6170
          %v6795 = vunpack.c.h.b16 %v6170
          %v6796 = vunpack.c.l.b16 %v6171
          %v6797 = vunpack.c.h.b16 %v6171
          %v6798 = vunpack.c.l.b16 %v6172
          %v6799 = vunpack.c.h.b16 %v6172
          %v6800 = vunpack.c.l.b16 %v6173
          %v6801 = vunpack.c.h.b16 %v6173
          %v6802 = vunpack.c.l.b16 %v6174
          %v6803 = vunpack.c.h.b16 %v6174
          %v6804 = vunpack.c.l.b16 %v6175
          %v6805 = vunpack.c.h.b16 %v6175
          %v6806 = vunpack.c.l.b16 %v6176
          %v6807 = vunpack.c.h.b16 %v6176
          %v6808 = vunpack.c.l.b16 %v6177
          %v6809 = vunpack.c.h.b16 %v6177
          %v6810 = vunpack.c.l.b16 %v6178
          %v6811 = vunpack.c.h.b16 %v6178
          %v6812 = vunpack.c.l.b16 %v6179
          %v6813 = vunpack.c.h.b16 %v6179
          %v6814 = vunpack.c.l.b16 %v6180
          %v6815 = vunpack.c.h.b16 %v6180
          %v6816 = vunpack.c.l.b16 %v6181
          %v6817 = vunpack.c.h.b16 %v6181
          %v6818 = vunpack.c.l.b16 %v6182
          %v6819 = vunpack.c.h.b16 %v6182
          %v6820 = vunpack.c.l.b16 %v6183
          %v6821 = vunpack.c.h.b16 %v6183
          %v6822 = vunpack.c.l.b16 %v6184
          %v6823 = vunpack.c.h.b16 %v6184
          %v6824 = vunpack.c.l.b16 %v6185
          %v6825 = vunpack.c.h.b16 %v6185
          %v6826 = vunpack.c.l.b16 %v6186
          %v6827 = vunpack.c.h.b16 %v6186
          %v6828 = vunpack.c.l.b16 %v6187
          %v6829 = vunpack.c.h.b16 %v6187
          %v6830 = vunpack.c.l.b16 %v6188
          %v6831 = vunpack.c.h.b16 %v6188
          %v6832 = vunpack.c.l.b16 %v6189
          %v6833 = vunpack.c.h.b16 %v6189
          %v6834 = vunpack.c.l.b16 %v6190
          %v6835 = vunpack.c.h.b16 %v6190
          %v6836 = vunpack.c.l.b16 %v6191
          %v6837 = vunpack.c.h.b16 %v6191
          %v6838 = vunpack.c.l.b16 %v6192
          %v6839 = vunpack.c.h.b16 %v6192
          %v6840 = vunpack.c.l.b16 %v6193
          %v6841 = vunpack.c.h.b16 %v6193
          %v6842 = vunpack.c.l.b16 %v6194
          %v6843 = vunpack.c.h.b16 %v6194
          %v6844 = vunpack.c.l.b16 %v6195
          %v6845 = vunpack.c.h.b16 %v6195
          %v6846 = vunpack.c.l.b16 %v6196
          %v6847 = vunpack.c.h.b16 %v6196
          %v6848 = vunpack.c.l.b16 %v6197
          %v6849 = vunpack.c.h.b16 %v6197
          %v6850 = vunpack.c.l.b16 %v6198
          %v6851 = vunpack.c.h.b16 %v6198
          %v6852 = vunpack.c.l.b16 %v6199
          %v6853 = vunpack.c.h.b16 %v6199
          %v6854 = vunpack.c.l.b16 %v6200
          %v6855 = vunpack.c.h.b16 %v6200
          %v6856 = vunpack.c.l.b16 %v6201
          %v6857 = vunpack.c.h.b16 %v6201
          %v6858 = vunpack.c.l.b16 %v6202
          %v6859 = vunpack.c.h.b16 %v6202
          %v6860 = vunpack.c.l.b16 %v6203
          %v6861 = vunpack.c.h.b16 %v6203
          %v6862 = vunpack.c.l.b16 %v6204
          %v6863 = vunpack.c.h.b16 %v6204
          %v6864 = vunpack.c.l.b16 %v6205
          %v6865 = vunpack.c.h.b16 %v6205
          %v6866 = vunpack.c.l.b16 %v6206
          %v6867 = vunpack.c.h.b16 %v6206
          %v6868 = vunpack.c.l.b16 %v6207
          %v6869 = vunpack.c.h.b16 %v6207
          %v6870 = vunpack.c.l.b16 %v6208
          %v6871 = vunpack.c.h.b16 %v6208
          %v6872 = vunpack.c.l.b16 %v6209
          %v6873 = vunpack.c.h.b16 %v6209
          %v6874 = vunpack.c.l.b16 %v6210
          %v6875 = vunpack.c.h.b16 %v6210
          %v6876 = vunpack.c.l.b16 %v6211
          %v6877 = vunpack.c.h.b16 %v6211
          %v6878 = vunpack.c.l.b16 %v6212
          %v6879 = vunpack.c.h.b16 %v6212
          %v6880 = vunpack.c.l.b16 %v6213
          %v6881 = vunpack.c.h.b16 %v6213
          %v6882 = vunpack.c.l.b16 %v6214
          %v6883 = vunpack.c.h.b16 %v6214
          %v6884 = vunpack.c.l.b16 %v6215
          %v6885 = vunpack.c.h.b16 %v6215
          %v6886 = vunpack.c.l.b16 %v6216
          %v6887 = vunpack.c.h.b16 %v6216
          %v6888 = vunpack.c.l.b16 %v6217
          %v6889 = vunpack.c.h.b16 %v6217
          %v6890 = vunpack.c.l.b16 %v6218
          %v6891 = vunpack.c.h.b16 %v6218
          %v6892 = vunpack.c.l.b16 %v6219
          %v6893 = vunpack.c.h.b16 %v6219
          %v6894 = vunpack.c.l.b16 %v6220
          %v6895 = vunpack.c.h.b16 %v6220
          %v6896 = vunpack.c.l.b16 %v6221
          %v6897 = vunpack.c.h.b16 %v6221
          %v6898 = vunpack.c.l.b16 %v6222
          %v6899 = vunpack.c.h.b16 %v6222
          %v6900 = vunpack.c.l.b16 %v6223
          %v6901 = vunpack.c.h.b16 %v6223
          %v6902 = vunpack.c.l.b16 %v6224
          %v6903 = vunpack.c.h.b16 %v6224
          %v6904 = vunpack.c.l.b16 %v6225
          %v6905 = vunpack.c.h.b16 %v6225
          %v6906 = vunpack.c.l.b16 %v6226
          %v6907 = vunpack.c.h.b16 %v6226
          %v6908 = vunpack.c.l.b16 %v6227
          %v6909 = vunpack.c.h.b16 %v6227
          %v6910 = vunpack.c.l.b16 %v6228
          %v6911 = vunpack.c.h.b16 %v6228
          %v6912 = vunpack.c.l.b16 %v6229
          %v6913 = vunpack.c.h.b16 %v6229
          %v6914 = vunpack.c.l.b16 %v6230
          %v6915 = vunpack.c.h.b16 %v6230
          %v6916 = vunpack.c.l.b16 %v6231
          %v6917 = vunpack.c.h.b16 %v6231
          %v6918 = vunpack.c.l.b16 %v6232
          %v6919 = vunpack.c.h.b16 %v6232
          %v6920 = vunpack.c.l.b16 %v6233
          %v6921 = vunpack.c.h.b16 %v6233
          %v6922 = vunpack.c.l.b16 %v6234
          %v6923 = vunpack.c.h.b16 %v6234
          %v6924 = vunpack.c.l.b16 %v6235
          %v6925 = vunpack.c.h.b16 %v6235
          %v6926 = vunpack.c.l.b16 %v6236
          %v6927 = vunpack.c.h.b16 %v6236
          %v6928 = vunpack.c.l.b16 %v6237
          %v6929 = vunpack.c.h.b16 %v6237
          %v6930 = vunpack.c.l.b16 %v6238
          %v6931 = vunpack.c.h.b16 %v6238
          %v6932 = vunpack.c.l.b16 %v6239
          %v6933 = vunpack.c.h.b16 %v6239
          %v6934 = vunpack.c.l.b16 %v6240
          %v6935 = vunpack.c.h.b16 %v6240
          %v6936 = vunpack.c.l.b16 %v6241
          %v6937 = vunpack.c.h.b16 %v6241
          %v6938 = vunpack.c.l.b16 %v6242
          %v6939 = vunpack.c.h.b16 %v6242
          %v6940 = vunpack.c.l.b16 %v6243
          %v6941 = vunpack.c.h.b16 %v6243
          %v6942 = vunpack.c.l.b16 %v6244
          %v6943 = vunpack.c.h.b16 %v6244
          %v6944 = vunpack.c.l.b16 %v6245
          %v6945 = vunpack.c.h.b16 %v6245
          %v6946 = vunpack.c.l.b16 %v6246
          %v6947 = vunpack.c.h.b16 %v6246
          %v6948 = vunpack.c.l.b16 %v6247
          %v6949 = vunpack.c.h.b16 %v6247
          %v6950 = vunpack.c.l.b16 %v6248
          %v6951 = vunpack.c.h.b16 %v6248
          %v6952 = vunpack.c.l.b16 %v6249
          %v6953 = vunpack.c.h.b16 %v6249
          %v6954 = vunpack.c.l.b16 %v6250
          %v6955 = vunpack.c.h.b16 %v6250
          %v6956 = vunpack.c.l.b16 %v6251
          %v6957 = vunpack.c.h.b16 %v6251
          %v6958 = vunpack.c.l.b16 %v6252
          %v6959 = vunpack.c.h.b16 %v6252
          %v6960 = vunpack.c.l.b16 %v6253
          %v6961 = vunpack.c.h.b16 %v6253
          %v6962 = vunpack.c.l.b16 %v6254
          %v6963 = vunpack.c.h.b16 %v6254
          %v6964 = vunpack.c.l.b16 %v6255
          %v6965 = vunpack.c.h.b16 %v6255
          %v6966 = vunpack.c.l.b16 %v6256
          %v6967 = vunpack.c.h.b16 %v6256
          %v6968 = vunpack.c.l.b16 %v6257
          %v6969 = vunpack.c.h.b16 %v6257
          %v6970 = vunpack.c.l.b16 %v6258
          %v6971 = vunpack.c.h.b16 %v6258
          %v6972 = vunpack.c.l.b16 %v6259
          %v6973 = vunpack.c.h.b16 %v6259
          %v6974 = vunpack.c.l.b16 %v6260
          %v6975 = vunpack.c.h.b16 %v6260
          %v6976 = vunpack.c.l.b16 %v6261
          %v6977 = vunpack.c.h.b16 %v6261
          %v6978 = vunpack.c.l.b16 %v6262
          %v6979 = vunpack.c.h.b16 %v6262
          %v6980 = vunpack.c.l.b16 %v6263
          %v6981 = vunpack.c.h.b16 %v6263
          %v6982 = vunpack.c.l.b16 %v6264
          %v6983 = vunpack.c.h.b16 %v6264
          %v6984 = vunpack.c.l.b16 %v6265
          %v6985 = vunpack.c.h.b16 %v6265
          %v6986 = vunpack.c.l.b16 %v6266
          %v6987 = vunpack.c.h.b16 %v6266
          %v6988 = vunpack.c.l.b16 %v6267
          %v6989 = vunpack.c.h.b16 %v6267
          %v6990 = vunpack.c.l.b16 %v6268
          %v6991 = vunpack.c.h.b16 %v6268
          %v6992 = vunpack.c.l.b16 %v6269
          %v6993 = vunpack.c.h.b16 %v6269
          %v6994 = vunpack.c.l.b16 %v6270
          %v6995 = vunpack.c.h.b16 %v6270
          %v6996 = vunpack.c.l.b16 %v6271
          %v6997 = vunpack.c.h.b16 %v6271
          %v6998 = vunpack.c.l.b16 %v6272
          %v6999 = vunpack.c.h.b16 %v6272
          %v7000 = vunpack.c.l.b16 %v6273
          %v7001 = vunpack.c.h.b16 %v6273
          %v7002 = vunpack.c.l.b16 %v6274
          %v7003 = vunpack.c.h.b16 %v6274
          %v7004 = vunpack.c.l.b16 %v6275
          %v7005 = vunpack.c.h.b16 %v6275
          %v7006 = vunpack.c.l.b16 %v6276
          %v7007 = vunpack.c.h.b16 %v6276
          %v7008 = vunpack.c.l.b16 %v6277
          %v7009 = vunpack.c.h.b16 %v6277
          %v7010 = vunpack.c.l.b16 %v6278
          %v7011 = vunpack.c.h.b16 %v6278
          %v7012 = vunpack.c.l.b16 %v6279
          %v7013 = vunpack.c.h.b16 %v6279
          %v7014 = vunpack.c.l.b16 %v6280
          %v7015 = vunpack.c.h.b16 %v6280
          %v7016 = vunpack.c.l.b16 %v6281
          %v7017 = vunpack.c.h.b16 %v6281
          %v7018 = vunpack.c.l.b16 %v6282
          %v7019 = vunpack.c.h.b16 %v6282
          %v7020 = vunpack.c.l.b16 %v6283
          %v7021 = vunpack.c.h.b16 %v6283
          %v7022 = vunpack.c.l.b16 %v6284
          %v7023 = vunpack.c.h.b16 %v6284
          %v7024 = vunpack.c.l.b16 %v6285
          %v7025 = vunpack.c.h.b16 %v6285
          %v7026 = vunpack.c.l.b16 %v6286
          %v7027 = vunpack.c.h.b16 %v6286
          %v7028 = vunpack.c.l.b16 %v6287
          %v7029 = vunpack.c.h.b16 %v6287
          %v7030 = vunpack.c.l.b16 %v6288
          %v7031 = vunpack.c.h.b16 %v6288
          %v7032 = vunpack.c.l.b16 %v6289
          %v7033 = vunpack.c.h.b16 %v6289
          %v7034 = vunpack.c.l.b16 %v6290
          %v7035 = vunpack.c.h.b16 %v6290
          %v7036 = vunpack.c.l.b16 %v6291
          %v7037 = vunpack.c.h.b16 %v6291
          %v7038 = vunpack.c.l.b16 %v6292
          %v7039 = vunpack.c.h.b16 %v6292
          %v7040 = vunpack.c.l.b16 %v6293
          %v7041 = vunpack.c.h.b16 %v6293
          %v7042 = vunpack.c.l.b16 %v6294
          %v7043 = vunpack.c.h.b16 %v6294
          %v7044 = vunpack.c.l.b16 %v6295
          %v7045 = vunpack.c.h.b16 %v6295
          %v7046 = vunpack.c.l.b16 %v6296
          %v7047 = vunpack.c.h.b16 %v6296
          %v7048 = vunpack.c.l.b16 %v6297
          %v7049 = vunpack.c.h.b16 %v6297
          %v7050 = vunpack.c.l.b16 %v6298
          %v7051 = vunpack.c.h.b16 %v6298
          %v7052 = vunpack.c.l.b16 %v6299
          %v7053 = vunpack.c.h.b16 %v6299
          %v7054 = vunpack.c.l.b16 %v6300
          %v7055 = vunpack.c.h.b16 %v6300
          %v7056 = vunpack.c.l.b16 %v6301
          %v7057 = vunpack.c.h.b16 %v6301
          %v7058 = vunpack.c.l.b16 %v6302
          %v7059 = vunpack.c.h.b16 %v6302
          %v7060 = vunpack.c.l.b16 %v6303
          %v7061 = vunpack.c.h.b16 %v6303
          %v7062 = vunpack.c.l.b16 %v6304
          %v7063 = vunpack.c.h.b16 %v6304
          %v7064 = vunpack.c.l.b16 %v6305
          %v7065 = vunpack.c.h.b16 %v6305
          %v7066 = vunpack.c.l.b16 %v6306
          %v7067 = vunpack.c.h.b16 %v6306
          %v7068 = vunpack.c.l.b16 %v6307
          %v7069 = vunpack.c.h.b16 %v6307
          %v7070 = vunpack.c.l.b16 %v6308
          %v7071 = vunpack.c.h.b16 %v6308
          %v7072 = vunpack.c.l.b16 %v6309
          %v7073 = vunpack.c.h.b16 %v6309
          %v7074 = vunpack.c.l.b16 %v6310
          %v7075 = vunpack.c.h.b16 %v6310
          %v7076 = vunpack.c.l.b16 %v6311
          %v7077 = vunpack.c.h.b16 %v6311
          %v7078 = vunpack.c.l.b16 %v6312
          %v7079 = vunpack.c.h.b16 %v6312
          %v7080 = vunpack.c.l.b16 %v6313
          %v7081 = vunpack.c.h.b16 %v6313
          %v7082 = vunpack.c.l.b16 %v6314
          %v7083 = vunpack.c.h.b16 %v6314
          %v7084 = vunpack.c.l.b16 %v6315
          %v7085 = vunpack.c.h.b16 %v6315
          %v7086 = vpack.c.b16 %v6590, %v6574
          %v7087 = vpack.c.b16 %v6591, %v6575
          %v7088 = vpack.c.b16 %v6592, %v6576
          %v7089 = vpack.c.b16 %v6593, %v6577
          %v7090 = vpack.c.b16 %v6594, %v6578
          %v7091 = vpack.c.b16 %v6595, %v6579
          %v7092 = vpack.c.b16 %v6596, %v6580
          %v7093 = vpack.c.b16 %v6597, %v6581
          %v7094 = vpack.c.b16 %v6598, %v6582
          %v7095 = vpack.c.b16 %v6599, %v6583
          %v7096 = vpack.c.b16 %v6600, %v6584
          %v7097 = vpack.c.b16 %v6601, %v6585
          %v7098 = vpack.c.b16 %v6602, %v6586
          %v7099 = vpack.c.b16 %v6603, %v6587
          %v7100 = vpack.c.b16 %v6604, %v6588
          %v7101 = vpack.c.b16 %v6605, %v6589
          %v7102 = vpack.c.b16 %v6622, %v6606
          %v7103 = vpack.c.b16 %v6623, %v6607
          %v7104 = vpack.c.b16 %v6624, %v6608
          %v7105 = vpack.c.b16 %v6625, %v6609
          %v7106 = vpack.c.b16 %v6626, %v6610
          %v7107 = vpack.c.b16 %v6627, %v6611
          %v7108 = vpack.c.b16 %v6628, %v6612
          %v7109 = vpack.c.b16 %v6629, %v6613
          %v7110 = vpack.c.b16 %v6630, %v6614
          %v7111 = vpack.c.b16 %v6631, %v6615
          %v7112 = vpack.c.b16 %v6632, %v6616
          %v7113 = vpack.c.b16 %v6633, %v6617
          %v7114 = vpack.c.b16 %v6634, %v6618
          %v7115 = vpack.c.b16 %v6635, %v6619
          %v7116 = vpack.c.b16 %v6636, %v6620
          %v7117 = vpack.c.b16 %v6637, %v6621
          %v7118 = vpack.c.b16 %v6654, %v6638
          %v7119 = vpack.c.b16 %v6655, %v6639
          %v7120 = vpack.c.b16 %v6656, %v6640
          %v7121 = vpack.c.b16 %v6657, %v6641
          %v7122 = vpack.c.b16 %v6658, %v6642
          %v7123 = vpack.c.b16 %v6659, %v6643
          %v7124 = vpack.c.b16 %v6660, %v6644
          %v7125 = vpack.c.b16 %v6661, %v6645
          %v7126 = vpack.c.b16 %v6662, %v6646
          %v7127 = vpack.c.b16 %v6663, %v6647
          %v7128 = vpack.c.b16 %v6664, %v6648
          %v7129 = vpack.c.b16 %v6665, %v6649
          %v7130 = vpack.c.b16 %v6666, %v6650
          %v7131 = vpack.c.b16 %v6667, %v6651
          %v7132 = vpack.c.b16 %v6668, %v6652
          %v7133 = vpack.c.b16 %v6669, %v6653
          %v7134 = vpack.c.b16 %v6686, %v6670
          %v7135 = vpack.c.b16 %v6687, %v6671
          %v7136 = vpack.c.b16 %v6688, %v6672
          %v7137 = vpack.c.b16 %v6689, %v6673
          %v7138 = vpack.c.b16 %v6690, %v6674
          %v7139 = vpack.c.b16 %v6691, %v6675
          %v7140 = vpack.c.b16 %v6692, %v6676
          %v7141 = vpack.c.b16 %v6693, %v6677
          %v7142 = vpack.c.b16 %v6694, %v6678
          %v7143 = vpack.c.b16 %v6695, %v6679
          %v7144 = vpack.c.b16 %v6696, %v6680
          %v7145 = vpack.c.b16 %v6697, %v6681
          %v7146 = vpack.c.b16 %v6698, %v6682
          %v7147 = vpack.c.b16 %v6699, %v6683
          %v7148 = vpack.c.b16 %v6700, %v6684
          %v7149 = vpack.c.b16 %v6701, %v6685
          %v7150 = vpack.c.b16 %v6718, %v6702
          %v7151 = vpack.c.b16 %v6719, %v6703
          %v7152 = vpack.c.b16 %v6720, %v6704
          %v7153 = vpack.c.b16 %v6721, %v6705
          %v7154 = vpack.c.b16 %v6722, %v6706
          %v7155 = vpack.c.b16 %v6723, %v6707
          %v7156 = vpack.c.b16 %v6724, %v6708
          %v7157 = vpack.c.b16 %v6725, %v6709
          %v7158 = vpack.c.b16 %v6726, %v6710
          %v7159 = vpack.c.b16 %v6727, %v6711
          %v7160 = vpack.c.b16 %v6728, %v6712
          %v7161 = vpack.c.b16 %v6729, %v6713
          %v7162 = vpack.c.b16 %v6730, %v6714
          %v7163 = vpack.c.b16 %v6731, %v6715
          %v7164 = vpack.c.b16 %v6732, %v6716
          %v7165 = vpack.c.b16 %v6733, %v6717
          %v7166 = vpack.c.b16 %v6750, %v6734
          %v7167 = vpack.c.b16 %v6751, %v6735
          %v7168 = vpack.c.b16 %v6752, %v6736
          %v7169 = vpack.c.b16 %v6753, %v6737
          %v7170 = vpack.c.b16 %v6754, %v6738
          %v7171 = vpack.c.b16 %v6755, %v6739
          %v7172 = vpack.c.b16 %v6756, %v6740
          %v7173 = vpack.c.b16 %v6757, %v6741
          %v7174 = vpack.c.b16 %v6758, %v6742
          %v7175 = vpack.c.b16 %v6759, %v6743
          %v7176 = vpack.c.b16 %v6760, %v6744
          %v7177 = vpack.c.b16 %v6761, %v6745
          %v7178 = vpack.c.b16 %v6762, %v6746
          %v7179 = vpack.c.b16 %v6763, %v6747
          %v7180 = vpack.c.b16 %v6764, %v6748
          %v7181 = vpack.c.b16 %v6765, %v6749
          %v7182 = vpack.c.b16 %v6782, %v6766
          %v7183 = vpack.c.b16 %v6783, %v6767
          %v7184 = vpack.c.b16 %v6784, %v6768
          %v7185 = vpack.c.b16 %v6785, %v6769
          %v7186 = vpack.c.b16 %v6786, %v6770
          %v7187 = vpack.c.b16 %v6787, %v6771
          %v7188 = vpack.c.b16 %v6788, %v6772
          %v7189 = vpack.c.b16 %v6789, %v6773
          %v7190 = vpack.c.b16 %v6790, %v6774
          %v7191 = vpack.c.b16 %v6791, %v6775
          %v7192 = vpack.c.b16 %v6792, %v6776
          %v7193 = vpack.c.b16 %v6793, %v6777
          %v7194 = vpack.c.b16 %v6794, %v6778
          %v7195 = vpack.c.b16 %v6795, %v6779
          %v7196 = vpack.c.b16 %v6796, %v6780
          %v7197 = vpack.c.b16 %v6797, %v6781
          %v7198 = vpack.c.b16 %v6814, %v6798
          %v7199 = vpack.c.b16 %v6815, %v6799
          %v7200 = vpack.c.b16 %v6816, %v6800
          %v7201 = vpack.c.b16 %v6817, %v6801
          %v7202 = vpack.c.b16 %v6818, %v6802
          %v7203 = vpack.c.b16 %v6819, %v6803
          %v7204 = vpack.c.b16 %v6820, %v6804
          %v7205 = vpack.c.b16 %v6821, %v6805
          %v7206 = vpack.c.b16 %v6822, %v6806
          %v7207 = vpack.c.b16 %v6823, %v6807
          %v7208 = vpack.c.b16 %v6824, %v6808
          %v7209 = vpack.c.b16 %v6825, %v6809
          %v7210 = vpack.c.b16 %v6826, %v6810
          %v7211 = vpack.c.b16 %v6827, %v6811
          %v7212 = vpack.c.b16 %v6828, %v6812
          %v7213 = vpack.c.b16 %v6829, %v6813
          %v7214 = vpack.c.b16 %v6846, %v6830
          %v7215 = vpack.c.b16 %v6847, %v6831
          %v7216 = vpack.c.b16 %v6848, %v6832
          %v7217 = vpack.c.b16 %v6849, %v6833
          %v7218 = vpack.c.b16 %v6850, %v6834
          %v7219 = vpack.c.b16 %v6851, %v6835
          %v7220 = vpack.c.b16 %v6852, %v6836
          %v7221 = vpack.c.b16 %v6853, %v6837
          %v7222 = vpack.c.b16 %v6854, %v6838
          %v7223 = vpack.c.b16 %v6855, %v6839
          %v7224 = vpack.c.b16 %v6856, %v6840
          %v7225 = vpack.c.b16 %v6857, %v6841
          %v7226 = vpack.c.b16 %v6858, %v6842
          %v7227 = vpack.c.b16 %v6859, %v6843
          %v7228 = vpack.c.b16 %v6860, %v6844
          %v7229 = vpack.c.b16 %v6861, %v6845
          %v7230 = vpack.c.b16 %v6878, %v6862
          %v7231 = vpack.c.b16 %v6879, %v6863
          %v7232 = vpack.c.b16 %v6880, %v6864
          %v7233 = vpack.c.b16 %v6881, %v6865
          %v7234 = vpack.c.b16 %v6882, %v6866
          %v7235 = vpack.c.b16 %v6883, %v6867
          %v7236 = vpack.c.b16 %v6884, %v6868
          %v7237 = vpack.c.b16 %v6885, %v6869
          %v7238 = vpack.c.b16 %v6886, %v6870
          %v7239 = vpack.c.b16 %v6887, %v6871
          %v7240 = vpack.c.b16 %v6888, %v6872
          %v7241 = vpack.c.b16 %v6889, %v6873
          %v7242 = vpack.c.b16 %v6890, %v6874
          %v7243 = vpack.c.b16 %v6891, %v6875
          %v7244 = vpack.c.b16 %v6892, %v6876
          %v7245 = vpack.c.b16 %v6893, %v6877
          %v7246 = vpack.c.b16 %v6910, %v6894
          %v7247 = vpack.c.b16 %v6911, %v6895
          %v7248 = vpack.c.b16 %v6912, %v6896
          %v7249 = vpack.c.b16 %v6913, %v6897
          %v7250 = vpack.c.b16 %v6914, %v6898
          %v7251 = vpack.c.b16 %v6915, %v6899
          %v7252 = vpack.c.b16 %v6916, %v6900
          %v7253 = vpack.c.b16 %v6917, %v6901
          %v7254 = vpack.c.b16 %v6918, %v6902
          %v7255 = vpack.c.b16 %v6919, %v6903
          %v7256 = vpack.c.b16 %v6920, %v6904
          %v7257 = vpack.c.b16 %v6921, %v6905
          %v7258 = vpack.c.b16 %v6922, %v6906
          %v7259 = vpack.c.b16 %v6923, %v6907
          %v7260 = vpack.c.b16 %v6924, %v6908
          %v7261 = vpack.c.b16 %v6925, %v6909
          %v7262 = vpack.c.b16 %v6942, %v6926
          %v7263 = vpack.c.b16 %v6943, %v6927
          %v7264 = vpack.c.b16 %v6944, %v6928
          %v7265 = vpack.c.b16 %v6945, %v6929
          %v7266 = vpack.c.b16 %v6946, %v6930
          %v7267 = vpack.c.b16 %v6947, %v6931
          %v7268 = vpack.c.b16 %v6948, %v6932
          %v7269 = vpack.c.b16 %v6949, %v6933
          %v7270 = vpack.c.b16 %v6950, %v6934
          %v7271 = vpack.c.b16 %v6951, %v6935
          %v7272 = vpack.c.b16 %v6952, %v6936
          %v7273 = vpack.c.b16 %v6953, %v6937
          %v7274 = vpack.c.b16 %v6954, %v6938
          %v7275 = vpack.c.b16 %v6955, %v6939
          %v7276 = vpack.c.b16 %v6956, %v6940
          %v7277 = vpack.c.b16 %v6957, %v6941
          %v7278 = vpack.c.b16 %v6974, %v6958
          %v7279 = vpack.c.b16 %v6975, %v6959
          %v7280 = vpack.c.b16 %v6976, %v6960
          %v7281 = vpack.c.b16 %v6977, %v6961
          %v7282 = vpack.c.b16 %v6978, %v6962
          %v7283 = vpack.c.b16 %v6979, %v6963
          %v7284 = vpack.c.b16 %v6980, %v6964
          %v7285 = vpack.c.b16 %v6981, %v6965
          %v7286 = vpack.c.b16 %v6982, %v6966
          %v7287 = vpack.c.b16 %v6983, %v6967
          %v7288 = vpack.c.b16 %v6984, %v6968
          %v7289 = vpack.c.b16 %v6985, %v6969
          %v7290 = vpack.c.b16 %v6986, %v6970
          %v7291 = vpack.c.b16 %v6987, %v6971
          %v7292 = vpack.c.b16 %v6988, %v6972
          %v7293 = vpack.c.b16 %v6989, %v6973
          %v7294 = vpack.c.b16 %v7006, %v6990
          %v7295 = vpack.c.b16 %v7007, %v6991
          %v7296 = vpack.c.b16 %v7008, %v6992
          %v7297 = vpack.c.b16 %v7009, %v6993
          %v7298 = vpack.c.b16 %v7010, %v6994
          %v7299 = vpack.c.b16 %v7011, %v6995
          %v7300 = vpack.c.b16 %v7012, %v6996
          %v7301 = vpack.c.b16 %v7013, %v6997
          %v7302 = vpack.c.b16 %v7014, %v6998
          %v7303 = vpack.c.b16 %v7015, %v6999
          %v7304 = vpack.c.b16 %v7016, %v7000
          %v7305 = vpack.c.b16 %v7017, %v7001
          %v7306 = vpack.c.b16 %v7018, %v7002
          %v7307 = vpack.c.b16 %v7019, %v7003
          %v7308 = vpack.c.b16 %v7020, %v7004
          %v7309 = vpack.c.b16 %v7021, %v7005
          %v7310 = vpack.c.b16 %v7038, %v7022
          %v7311 = vpack.c.b16 %v7039, %v7023
          %v7312 = vpack.c.b16 %v7040, %v7024
          %v7313 = vpack.c.b16 %v7041, %v7025
          %v7314 = vpack.c.b16 %v7042, %v7026
          %v7315 = vpack.c.b16 %v7043, %v7027
          %v7316 = vpack.c.b16 %v7044, %v7028
          %v7317 = vpack.c.b16 %v7045, %v7029
          %v7318 = vpack.c.b16 %v7046, %v7030
          %v7319 = vpack.c.b16 %v7047, %v7031
          %v7320 = vpack.c.b16 %v7048, %v7032
          %v7321 = vpack.c.b16 %v7049, %v7033
          %v7322 = vpack.c.b16 %v7050, %v7034
          %v7323 = vpack.c.b16 %v7051, %v7035
          %v7324 = vpack.c.b16 %v7052, %v7036
          %v7325 = vpack.c.b16 %v7053, %v7037
          %v7326 = vpack.c.b16 %v7070, %v7054
          %v7327 = vpack.c.b16 %v7071, %v7055
          %v7328 = vpack.c.b16 %v7072, %v7056
          %v7329 = vpack.c.b16 %v7073, %v7057
          %v7330 = vpack.c.b16 %v7074, %v7058
          %v7331 = vpack.c.b16 %v7075, %v7059
          %v7332 = vpack.c.b16 %v7076, %v7060
          %v7333 = vpack.c.b16 %v7077, %v7061
          %v7334 = vpack.c.b16 %v7078, %v7062
          %v7335 = vpack.c.b16 %v7079, %v7063
          %v7336 = vpack.c.b16 %v7080, %v7064
          %v7337 = vpack.c.b16 %v7081, %v7065
          %v7338 = vpack.c.b16 %v7082, %v7066
          %v7339 = vpack.c.b16 %v7083, %v7067
          %v7340 = vpack.c.b16 %v7084, %v7068
          %v7341 = vpack.c.b16 %v7085, %v7069
          %v7600 = vlaneseq
          %v7601 = vshrl.u32 %v7600, 7
          %v7602 = vsub.s32 0, %v7601
          %v7603 = vrot.slane %v6316, %v7602
          %v7604 = vlaneseq
          %v7605 = vshrl.u32 %v7604, 7
          %v7606 = vsub.s32 1, %v7605
          %v7607 = vrot.slane %v6316, %v7606
          %v7608 = vlaneseq
          %v7609 = vshrl.u32 %v7608, 7
          %v7610 = vsub.s32 2, %v7609
          %v7611 = vrot.slane %v6316, %v7610
          %v7612 = vlaneseq
          %v7613 = vshrl.u32 %v7612, 7
          %v7614 = vsub.s32 3, %v7613
          %v7615 = vrot.slane %v6316, %v7614
          %v7616 = vlaneseq
          %v7617 = vshrl.u32 %v7616, 7
          %v7618 = vsub.s32 4, %v7617
          %v7619 = vrot.slane %v6316, %v7618
          %v7620 = vlaneseq
          %v7621 = vshrl.u32 %v7620, 7
          %v7622 = vsub.s32 5, %v7621
          %v7623 = vrot.slane %v6316, %v7622
          %v7624 = vlaneseq
          %v7625 = vshrl.u32 %v7624, 7
          %v7626 = vsub.s32 6, %v7625
          %v7627 = vrot.slane %v6316, %v7626
          %v7628 = vlaneseq
          %v7629 = vshrl.u32 %v7628, 7
          %v7630 = vsub.s32 7, %v7629
          %v7631 = vrot.slane %v6316, %v7630
          %v7632 = vlaneseq
          %v7633 = vshrl.u32 %v7632, 7
          %v7634 = vsub.s32 0, %v7633
          %v7635 = vrot.slane %v6317, %v7634
          %v7636 = vlaneseq
          %v7637 = vshrl.u32 %v7636, 7
          %v7638 = vsub.s32 1, %v7637
          %v7639 = vrot.slane %v6317, %v7638
          %v7640 = vlaneseq
          %v7641 = vshrl.u32 %v7640, 7
          %v7642 = vsub.s32 2, %v7641
          %v7643 = vrot.slane %v6317, %v7642
          %v7644 = vlaneseq
          %v7645 = vshrl.u32 %v7644, 7
          %v7646 = vsub.s32 3, %v7645
          %v7647 = vrot.slane %v6317, %v7646
          %v7648 = vlaneseq
          %v7649 = vshrl.u32 %v7648, 7
          %v7650 = vsub.s32 4, %v7649
          %v7651 = vrot.slane %v6317, %v7650
          %v7652 = vlaneseq
          %v7653 = vshrl.u32 %v7652, 7
          %v7654 = vsub.s32 5, %v7653
          %v7655 = vrot.slane %v6317, %v7654
          %v7656 = vlaneseq
          %v7657 = vshrl.u32 %v7656, 7
          %v7658 = vsub.s32 6, %v7657
          %v7659 = vrot.slane %v6317, %v7658
          %v7660 = vlaneseq
          %v7661 = vshrl.u32 %v7660, 7
          %v7662 = vsub.s32 7, %v7661
          %v7663 = vrot.slane %v6317, %v7662
          %7680 = vmatprep.subr.bf16.mxu0 %v7199
          %7681 = vmatpush1.bf16.msra.mxu0 %v7198
          %7682 = vmatprep.subr.bf16.mxu0 %v7183
          %7683 = vmatpush1.bf16.msra.mxu0 %v7182
          %7684 = vmatprep.subr.bf16.mxu0 %v7167
          %7685 = vmatpush1.bf16.msra.mxu0 %v7166
          %7686 = vmatprep.subr.bf16.mxu0 %v7151
          %7687 = vmatpush1.bf16.msra.mxu0 %v7150
          %7688 = vmatprep.subr.bf16.mxu0 %v7135
          %7689 = vmatpush1.bf16.msra.mxu0 %v7134
          %7690 = vmatprep.subr.bf16.mxu0 %v7119
          %7691 = vmatpush1.bf16.msra.mxu0 %v7118
          %7692 = vmatprep.subr.bf16.mxu0 %v7103
          %7693 = vmatpush1.bf16.msra.mxu0 %v7102
          %7694 = vmatprep.subr.bf16.mxu0 %v7087
          %7695 = vmatpush1.bf16.msra.mxu0 %v7086
          %7696 = vmatprep.subr.bf16.mxu0 %v7327
          %7697 = vmatpush2.bf16.msra.mxu0 %v7326
          %7698 = vmatprep.subr.bf16.mxu0 %v7311
          %7699 = vmatpush2.bf16.msra.mxu0 %v7310
          %7700 = vmatprep.subr.bf16.mxu0 %v7295
          %7701 = vmatpush2.bf16.msra.mxu0 %v7294
          %7702 = vmatprep.subr.bf16.mxu0 %v7279
          %7703 = vmatpush2.bf16.msra.mxu0 %v7278
          %7704 = vmatprep.subr.bf16.mxu0 %v7263
          %7705 = vmatpush2.bf16.msra.mxu0 %v7262
          %7706 = vmatprep.subr.bf16.mxu0 %v7247
          %7707 = vmatpush2.bf16.msra.mxu0 %v7246
          %7708 = vmatprep.subr.bf16.mxu0 %v7231
          %7709 = vmatpush2.bf16.msra.mxu0 %v7230
          %7710 = vmatprep.subr.bf16.mxu0 %v7215
          %7711 = vmatpush2.bf16.msra.mxu0 %v7214
          %7712 = vmatprep.mubr.bf16.mxu0 %v6059
          %7713 = vmatmul.mubr.bf16.gmra.mxu0 %v6058
          %v7714 = vpop.f32.mrf.mxu0
          %v7715 = vadd.f32 %v7603, %v7714
          %v7716 = vpop.f32.mrf.mxu0
          %v7717 = vadd.f32 %v7607, %v7716
          %v7718 = vpop.f32.mrf.mxu0
          %v7719 = vpop.f32.mrf.mxu0
          %7720 = vdwg.mxu0
          %7721 = vmatprep.subr.bf16.mxu0 %v7201
          %7722 = vmatpush1.bf16.msra.mxu0 %v7200
          %7723 = vmatprep.subr.bf16.mxu0 %v7185
          %7724 = vmatpush1.bf16.msra.mxu0 %v7184
          %7725 = vmatprep.subr.bf16.mxu0 %v7169
          %7726 = vmatpush1.bf16.msra.mxu0 %v7168
          %7727 = vmatprep.subr.bf16.mxu0 %v7153
          %7728 = vmatpush1.bf16.msra.mxu0 %v7152
          %7729 = vmatprep.subr.bf16.mxu0 %v7137
          %7730 = vmatpush1.bf16.msra.mxu0 %v7136
          %7731 = vmatprep.subr.bf16.mxu0 %v7121
          %7732 = vmatpush1.bf16.msra.mxu0 %v7120
          %7733 = vmatprep.subr.bf16.mxu0 %v7105
          %7734 = vmatpush1.bf16.msra.mxu0 %v7104
          %7735 = vmatprep.subr.bf16.mxu0 %v7089
          %7736 = vmatpush1.bf16.msra.mxu0 %v7088
          %7737 = vmatprep.subr.bf16.mxu0 %v7329
          %7738 = vmatpush2.bf16.msra.mxu0 %v7328
          %7739 = vmatprep.subr.bf16.mxu0 %v7313
          %7740 = vmatpush2.bf16.msra.mxu0 %v7312
          %7741 = vmatprep.subr.bf16.mxu0 %v7297
          %7742 = vmatpush2.bf16.msra.mxu0 %v7296
          %7743 = vmatprep.subr.bf16.mxu0 %v7281
          %7744 = vmatpush2.bf16.msra.mxu0 %v7280
          %7745 = vmatprep.subr.bf16.mxu0 %v7265
          %7746 = vmatpush2.bf16.msra.mxu0 %v7264
          %7747 = vmatprep.subr.bf16.mxu0 %v7249
          %7748 = vmatpush2.bf16.msra.mxu0 %v7248
          %7749 = vmatprep.subr.bf16.mxu0 %v7233
          %7750 = vmatpush2.bf16.msra.mxu0 %v7232
          %7751 = vmatprep.subr.bf16.mxu0 %v7217
          %7752 = vmatpush2.bf16.msra.mxu0 %v7216
          %7753 = vmatprep.mubr.bf16.mxu0 %v6059
          %7754 = vmatmul.mubr.bf16.gmra.mxu0 %v6058
          %v7755 = vpop.f32.mrf.mxu0
          %v7756 = vadd.f32 %v7611, %v7755
          %v7757 = vpop.f32.mrf.mxu0
          %v7758 = vadd.f32 %v7615, %v7757
          %v7759 = vpop.f32.mrf.mxu0
          %v7760 = vpop.f32.mrf.mxu0
          %7761 = vdwg.mxu0
          %7762 = vmatprep.subr.bf16.mxu0 %v7203
          %7763 = vmatpush1.bf16.msra.mxu0 %v7202
          %7764 = vmatprep.subr.bf16.mxu0 %v7187
          %7765 = vmatpush1.bf16.msra.mxu0 %v7186
          %7766 = vmatprep.subr.bf16.mxu0 %v7171
          %7767 = vmatpush1.bf16.msra.mxu0 %v7170
          %7768 = vmatprep.subr.bf16.mxu0 %v7155
          %7769 = vmatpush1.bf16.msra.mxu0 %v7154
          %7770 = vmatprep.subr.bf16.mxu0 %v7139
          %7771 = vmatpush1.bf16.msra.mxu0 %v7138
          %7772 = vmatprep.subr.bf16.mxu0 %v7123
          %7773 = vmatpush1.bf16.msra.mxu0 %v7122
          %7774 = vmatprep.subr.bf16.mxu0 %v7107
          %7775 = vmatpush1.bf16.msra.mxu0 %v7106
          %7776 = vmatprep.subr.bf16.mxu0 %v7091
          %7777 = vmatpush1.bf16.msra.mxu0 %v7090
          %7778 = vmatprep.subr.bf16.mxu0 %v7331
          %7779 = vmatpush2.bf16.msra.mxu0 %v7330
          %7780 = vmatprep.subr.bf16.mxu0 %v7315
          %7781 = vmatpush2.bf16.msra.mxu0 %v7314
          %7782 = vmatprep.subr.bf16.mxu0 %v7299
          %7783 = vmatpush2.bf16.msra.mxu0 %v7298
          %7784 = vmatprep.subr.bf16.mxu0 %v7283
          %7785 = vmatpush2.bf16.msra.mxu0 %v7282
          %7786 = vmatprep.subr.bf16.mxu0 %v7267
          %7787 = vmatpush2.bf16.msra.mxu0 %v7266
          %7788 = vmatprep.subr.bf16.mxu0 %v7251
          %7789 = vmatpush2.bf16.msra.mxu0 %v7250
          %7790 = vmatprep.subr.bf16.mxu0 %v7235
          %7791 = vmatpush2.bf16.msra.mxu0 %v7234
          %7792 = vmatprep.subr.bf16.mxu0 %v7219
          %7793 = vmatpush2.bf16.msra.mxu0 %v7218
          %7794 = vmatprep.mubr.bf16.mxu0 %v6059
          %7795 = vmatmul.mubr.bf16.gmra.mxu0 %v6058
          %v7796 = vpop.f32.mrf.mxu0
          %v7797 = vadd.f32 %v7619, %v7796
          %v7798 = vpop.f32.mrf.mxu0
          %v7799 = vadd.f32 %v7623, %v7798
          %v7800 = vpop.f32.mrf.mxu0
          %v7801 = vpop.f32.mrf.mxu0
          %7802 = vdwg.mxu0
          %7803 = vmatprep.subr.bf16.mxu0 %v7205
          %7804 = vmatpush1.bf16.msra.mxu0 %v7204
          %7805 = vmatprep.subr.bf16.mxu0 %v7189
          %7806 = vmatpush1.bf16.msra.mxu0 %v7188
          %7807 = vmatprep.subr.bf16.mxu0 %v7173
          %7808 = vmatpush1.bf16.msra.mxu0 %v7172
          %7809 = vmatprep.subr.bf16.mxu0 %v7157
          %7810 = vmatpush1.bf16.msra.mxu0 %v7156
          %7811 = vmatprep.subr.bf16.mxu0 %v7141
          %7812 = vmatpush1.bf16.msra.mxu0 %v7140
          %7813 = vmatprep.subr.bf16.mxu0 %v7125
          %7814 = vmatpush1.bf16.msra.mxu0 %v7124
          %7815 = vmatprep.subr.bf16.mxu0 %v7109
          %7816 = vmatpush1.bf16.msra.mxu0 %v7108
          %7817 = vmatprep.subr.bf16.mxu0 %v7093
          %7818 = vmatpush1.bf16.msra.mxu0 %v7092
          %7819 = vmatprep.subr.bf16.mxu0 %v7333
          %7820 = vmatpush2.bf16.msra.mxu0 %v7332
          %7821 = vmatprep.subr.bf16.mxu0 %v7317
          %7822 = vmatpush2.bf16.msra.mxu0 %v7316
          %7823 = vmatprep.subr.bf16.mxu0 %v7301
          %7824 = vmatpush2.bf16.msra.mxu0 %v7300
          %7825 = vmatprep.subr.bf16.mxu0 %v7285
          %7826 = vmatpush2.bf16.msra.mxu0 %v7284
          %7827 = vmatprep.subr.bf16.mxu0 %v7269
          %7828 = vmatpush2.bf16.msra.mxu0 %v7268
          %7829 = vmatprep.subr.bf16.mxu0 %v7253
          %7830 = vmatpush2.bf16.msra.mxu0 %v7252
          %7831 = vmatprep.subr.bf16.mxu0 %v7237
          %7832 = vmatpush2.bf16.msra.mxu0 %v7236
          %7833 = vmatprep.subr.bf16.mxu0 %v7221
          %7834 = vmatpush2.bf16.msra.mxu0 %v7220
          %7835 = vmatprep.mubr.bf16.mxu0 %v6059
          %7836 = vmatmul.mubr.bf16.gmra.mxu0 %v6058
          %v7837 = vpop.f32.mrf.mxu0
          %v7838 = vadd.f32 %v7627, %v7837
          %v7839 = vpop.f32.mrf.mxu0
          %v7840 = vadd.f32 %v7631, %v7839
          %v7841 = vpop.f32.mrf.mxu0
          %v7842 = vpop.f32.mrf.mxu0
          %7843 = vdwg.mxu0
          %7844 = vmatprep.subr.bf16.mxu0 %v7207
          %7845 = vmatpush1.bf16.msra.mxu0 %v7206
          %7846 = vmatprep.subr.bf16.mxu0 %v7191
          %7847 = vmatpush1.bf16.msra.mxu0 %v7190
          %7848 = vmatprep.subr.bf16.mxu0 %v7175
          %7849 = vmatpush1.bf16.msra.mxu0 %v7174
          %7850 = vmatprep.subr.bf16.mxu0 %v7159
          %7851 = vmatpush1.bf16.msra.mxu0 %v7158
          %7852 = vmatprep.subr.bf16.mxu0 %v7143
          %7853 = vmatpush1.bf16.msra.mxu0 %v7142
          %7854 = vmatprep.subr.bf16.mxu0 %v7127
          %7855 = vmatpush1.bf16.msra.mxu0 %v7126
          %7856 = vmatprep.subr.bf16.mxu0 %v7111
          %7857 = vmatpush1.bf16.msra.mxu0 %v7110
          %7858 = vmatprep.subr.bf16.mxu0 %v7095
          %7859 = vmatpush1.bf16.msra.mxu0 %v7094
          %7860 = vmatprep.subr.bf16.mxu0 %v7335
          %7861 = vmatpush2.bf16.msra.mxu0 %v7334
          %7862 = vmatprep.subr.bf16.mxu0 %v7319
          %7863 = vmatpush2.bf16.msra.mxu0 %v7318
          %7864 = vmatprep.subr.bf16.mxu0 %v7303
          %7865 = vmatpush2.bf16.msra.mxu0 %v7302
          %7866 = vmatprep.subr.bf16.mxu0 %v7287
          %7867 = vmatpush2.bf16.msra.mxu0 %v7286
          %7868 = vmatprep.subr.bf16.mxu0 %v7271
          %7869 = vmatpush2.bf16.msra.mxu0 %v7270
          %7870 = vmatprep.subr.bf16.mxu0 %v7255
          %7871 = vmatpush2.bf16.msra.mxu0 %v7254
          %7872 = vmatprep.subr.bf16.mxu0 %v7239
          %7873 = vmatpush2.bf16.msra.mxu0 %v7238
          %7874 = vmatprep.subr.bf16.mxu0 %v7223
          %7875 = vmatpush2.bf16.msra.mxu0 %v7222
          %7876 = vmatprep.mubr.bf16.mxu0 %v6059
          %7877 = vmatmul.mubr.bf16.gmra.mxu0 %v6058
          %v7878 = vpop.f32.mrf.mxu0
          %v7879 = vadd.f32 %v7635, %v7878
          %v7880 = vpop.f32.mrf.mxu0
          %v7881 = vadd.f32 %v7639, %v7880
          %v7882 = vpop.f32.mrf.mxu0
          %v7883 = vpop.f32.mrf.mxu0
          %7884 = vdwg.mxu0
          %7885 = vmatprep.subr.bf16.mxu0 %v7209
          %7886 = vmatpush1.bf16.msra.mxu0 %v7208
          %7887 = vmatprep.subr.bf16.mxu0 %v7193
          %7888 = vmatpush1.bf16.msra.mxu0 %v7192
          %7889 = vmatprep.subr.bf16.mxu0 %v7177
          %7890 = vmatpush1.bf16.msra.mxu0 %v7176
          %7891 = vmatprep.subr.bf16.mxu0 %v7161
          %7892 = vmatpush1.bf16.msra.mxu0 %v7160
          %7893 = vmatprep.subr.bf16.mxu0 %v7145
          %7894 = vmatpush1.bf16.msra.mxu0 %v7144
          %7895 = vmatprep.subr.bf16.mxu0 %v7129
          %7896 = vmatpush1.bf16.msra.mxu0 %v7128
          %7897 = vmatprep.subr.bf16.mxu0 %v7113
          %7898 = vmatpush1.bf16.msra.mxu0 %v7112
          %7899 = vmatprep.subr.bf16.mxu0 %v7097
          %7900 = vmatpush1.bf16.msra.mxu0 %v7096
          %7901 = vmatprep.subr.bf16.mxu0 %v7337
          %7902 = vmatpush2.bf16.msra.mxu0 %v7336
          %7903 = vmatprep.subr.bf16.mxu0 %v7321
          %7904 = vmatpush2.bf16.msra.mxu0 %v7320
          %7905 = vmatprep.subr.bf16.mxu0 %v7305
          %7906 = vmatpush2.bf16.msra.mxu0 %v7304
          %7907 = vmatprep.subr.bf16.mxu0 %v7289
          %7908 = vmatpush2.bf16.msra.mxu0 %v7288
          %7909 = vmatprep.subr.bf16.mxu0 %v7273
          %7910 = vmatpush2.bf16.msra.mxu0 %v7272
          %7911 = vmatprep.subr.bf16.mxu0 %v7257
          %7912 = vmatpush2.bf16.msra.mxu0 %v7256
          %7913 = vmatprep.subr.bf16.mxu0 %v7241
          %7914 = vmatpush2.bf16.msra.mxu0 %v7240
          %7915 = vmatprep.subr.bf16.mxu0 %v7225
          %7916 = vmatpush2.bf16.msra.mxu0 %v7224
          %7917 = vmatprep.mubr.bf16.mxu0 %v6059
          %7918 = vmatmul.mubr.bf16.gmra.mxu0 %v6058
          %v7919 = vpop.f32.mrf.mxu0
          %v7920 = vadd.f32 %v7643, %v7919
          %v7921 = vpop.f32.mrf.mxu0
          %v7922 = vadd.f32 %v7647, %v7921
          %v7923 = vpop.f32.mrf.mxu0
          %v7924 = vpop.f32.mrf.mxu0
          %7925 = vdwg.mxu0
          %7926 = vmatprep.subr.bf16.mxu0 %v7211
          %7927 = vmatpush1.bf16.msra.mxu0 %v7210
          %7928 = vmatprep.subr.bf16.mxu0 %v7195
          %7929 = vmatpush1.bf16.msra.mxu0 %v7194
          %7930 = vmatprep.subr.bf16.mxu0 %v7179
          %7931 = vmatpush1.bf16.msra.mxu0 %v7178
          %7932 = vmatprep.subr.bf16.mxu0 %v7163
          %7933 = vmatpush1.bf16.msra.mxu0 %v7162
          %7934 = vmatprep.subr.bf16.mxu0 %v7147
          %7935 = vmatpush1.bf16.msra.mxu0 %v7146
          %7936 = vmatprep.subr.bf16.mxu0 %v7131
          %7937 = vmatpush1.bf16.msra.mxu0 %v7130
          %7938 = vmatprep.subr.bf16.mxu0 %v7115
          %7939 = vmatpush1.bf16.msra.mxu0 %v7114
          %7940 = vmatprep.subr.bf16.mxu0 %v7099
          %7941 = vmatpush1.bf16.msra.mxu0 %v7098
          %7942 = vmatprep.subr.bf16.mxu0 %v7339
          %7943 = vmatpush2.bf16.msra.mxu0 %v7338
          %7944 = vmatprep.subr.bf16.mxu0 %v7323
          %7945 = vmatpush2.bf16.msra.mxu0 %v7322
          %7946 = vmatprep.subr.bf16.mxu0 %v7307
          %7947 = vmatpush2.bf16.msra.mxu0 %v7306
          %7948 = vmatprep.subr.bf16.mxu0 %v7291
          %7949 = vmatpush2.bf16.msra.mxu0 %v7290
          %7950 = vmatprep.subr.bf16.mxu0 %v7275
          %7951 = vmatpush2.bf16.msra.mxu0 %v7274
          %7952 = vmatprep.subr.bf16.mxu0 %v7259
          %7953 = vmatpush2.bf16.msra.mxu0 %v7258
          %7954 = vmatprep.subr.bf16.mxu0 %v7243
          %7955 = vmatpush2.bf16.msra.mxu0 %v7242
          %7956 = vmatprep.subr.bf16.mxu0 %v7227
          %7957 = vmatpush2.bf16.msra.mxu0 %v7226
          %7958 = vmatprep.mubr.bf16.mxu0 %v6059
          %7959 = vmatmul.mubr.bf16.gmra.mxu0 %v6058
          %v7960 = vpop.f32.mrf.mxu0
          %v7961 = vadd.f32 %v7651, %v7960
          %v7962 = vpop.f32.mrf.mxu0
          %v7963 = vadd.f32 %v7655, %v7962
          %v7964 = vpop.f32.mrf.mxu0
          %v7965 = vpop.f32.mrf.mxu0
          %7966 = vdwg.mxu0
          %7967 = vmatprep.subr.bf16.mxu0 %v7213
          %7968 = vmatpush1.bf16.msra.mxu0 %v7212
          %7969 = vmatprep.subr.bf16.mxu0 %v7197
          %7970 = vmatpush1.bf16.msra.mxu0 %v7196
          %7971 = vmatprep.subr.bf16.mxu0 %v7181
          %7972 = vmatpush1.bf16.msra.mxu0 %v7180
          %7973 = vmatprep.subr.bf16.mxu0 %v7165
          %7974 = vmatpush1.bf16.msra.mxu0 %v7164
          %7975 = vmatprep.subr.bf16.mxu0 %v7149
          %7976 = vmatpush1.bf16.msra.mxu0 %v7148
          %7977 = vmatprep.subr.bf16.mxu0 %v7133
          %7978 = vmatpush1.bf16.msra.mxu0 %v7132
          %7979 = vmatprep.subr.bf16.mxu0 %v7117
          %7980 = vmatpush1.bf16.msra.mxu0 %v7116
          %7981 = vmatprep.subr.bf16.mxu0 %v7101
          %7982 = vmatpush1.bf16.msra.mxu0 %v7100
          %7983 = vmatprep.subr.bf16.mxu0 %v7341
          %7984 = vmatpush2.bf16.msra.mxu0 %v7340
          %7985 = vmatprep.subr.bf16.mxu0 %v7325
          %7986 = vmatpush2.bf16.msra.mxu0 %v7324
          %7987 = vmatprep.subr.bf16.mxu0 %v7309
          %7988 = vmatpush2.bf16.msra.mxu0 %v7308
          %7989 = vmatprep.subr.bf16.mxu0 %v7293
          %7990 = vmatpush2.bf16.msra.mxu0 %v7292
          %7991 = vmatprep.subr.bf16.mxu0 %v7277
          %7992 = vmatpush2.bf16.msra.mxu0 %v7276
          %7993 = vmatprep.subr.bf16.mxu0 %v7261
          %7994 = vmatpush2.bf16.msra.mxu0 %v7260
          %7995 = vmatprep.subr.bf16.mxu0 %v7245
          %7996 = vmatpush2.bf16.msra.mxu0 %v7244
          %7997 = vmatprep.subr.bf16.mxu0 %v7229
          %7998 = vmatpush2.bf16.msra.mxu0 %v7228
          %7999 = vmatprep.mubr.bf16.mxu0 %v6059
          %8000 = vmatmul.mubr.bf16.gmra.mxu0 %v6058
          %v8001 = vpop.f32.mrf.mxu0
          %v8002 = vadd.f32 %v7659, %v8001
          %v8003 = vpop.f32.mrf.mxu0
          %v8004 = vadd.f32 %v7663, %v8003
          %v8005 = vpop.f32.mrf.mxu0
          %v8006 = vpop.f32.mrf.mxu0
          %8007 = vdwg.mxu0
          %v8016 = vcombine.low %v7715, %v7717
          %v8017 = vcombine.low %v7756, %v7758
          %v8018 = vcombine.low %v7797, %v7799
          %v8019 = vcombine.low %v7838, %v7840
          %v8021 = vunpack.c.l.s4 1966171168
          %v8022 = vunpack.c.0.s8 %v8021
          %v8023 = vlaneseq
          %v8024 = vshrl.u32 %v8023, 7
          %v8025 = vsub.s32 %v8022, %v8024
          %v8026 = vrot.slane %v8016, %v8025
          %v8028 = vunpack.c.l.s4 1966171168
          %v8029 = vunpack.c.0.s8 %v8028
          %v8030 = vlaneseq
          %v8031 = vshrl.u32 %v8030, 7
          %v8032 = vsub.s32 %v8029, %v8031
          %v8033 = vrot.slane %v8017, %v8032
          %v8035 = vunpack.c.l.s4 1966171168
          %v8036 = vunpack.c.0.s8 %v8035
          %v8037 = vlaneseq
          %v8038 = vshrl.u32 %v8037, 7
          %v8039 = vsub.s32 %v8036, %v8038
          %v8040 = vrot.slane %v8018, %v8039
          %v8042 = vunpack.c.l.s4 1966171168
          %v8043 = vunpack.c.0.s8 %v8042
          %v8044 = vlaneseq
          %v8045 = vshrl.u32 %v8044, 7
          %v8046 = vsub.s32 %v8043, %v8045
          %v8047 = vrot.slane %v8019, %v8046
          %v8048 = vcombine.low %v8026, %v8033
          %v8049 = vcombine.low %v8040, %v8047
          %v8051 = vunpack.c.l.s4 1966171168
          %v8052 = vunpack.c.0.s8 %v8051
          %v8053 = vlaneseq
          %v8054 = vshrl.u32 %v8053, 7
          %v8055 = vsub.s32 %v8052, %v8054
          %v8056 = vrot.slane %v8048, %v8055
          %v8058 = vunpack.c.l.s4 1966171168
          %v8059 = vunpack.c.0.s8 %v8058
          %v8060 = vlaneseq
          %v8061 = vshrl.u32 %v8060, 7
          %v8062 = vsub.s32 %v8059, %v8061
          %v8063 = vrot.slane %v8049, %v8062
          %v8064 = vcombine.low %v8056, %v8063
          %8066 = vst [vmem:[%s662] sm:$0xff] %v8064
          %v8075 = vcombine.low %v7879, %v7881
          %v8076 = vcombine.low %v7920, %v7922
          %v8077 = vcombine.low %v7961, %v7963
          %v8078 = vcombine.low %v8002, %v8004
          %v8080 = vunpack.c.l.s4 1966171168
          %v8081 = vunpack.c.0.s8 %v8080
          %v8082 = vlaneseq
          %v8083 = vshrl.u32 %v8082, 7
          %v8084 = vsub.s32 %v8081, %v8083
          %v8085 = vrot.slane %v8075, %v8084
          %v8087 = vunpack.c.l.s4 1966171168
          %v8088 = vunpack.c.0.s8 %v8087
          %v8089 = vlaneseq
          %v8090 = vshrl.u32 %v8089, 7
          %v8091 = vsub.s32 %v8088, %v8090
          %v8092 = vrot.slane %v8076, %v8091
          %v8094 = vunpack.c.l.s4 1966171168
          %v8095 = vunpack.c.0.s8 %v8094
          %v8096 = vlaneseq
          %v8097 = vshrl.u32 %v8096, 7
          %v8098 = vsub.s32 %v8095, %v8097
          %v8099 = vrot.slane %v8077, %v8098
          %v8101 = vunpack.c.l.s4 1966171168
          %v8102 = vunpack.c.0.s8 %v8101
          %v8103 = vlaneseq
          %v8104 = vshrl.u32 %v8103, 7
          %v8105 = vsub.s32 %v8102, %v8104
          %v8106 = vrot.slane %v8078, %v8105
          %v8107 = vcombine.low %v8085, %v8092
          %v8108 = vcombine.low %v8099, %v8106
          %v8110 = vunpack.c.l.s4 1966171168
          %v8111 = vunpack.c.0.s8 %v8110
          %v8112 = vlaneseq
          %v8113 = vshrl.u32 %v8112, 7
          %v8114 = vsub.s32 %v8111, %v8113
          %v8115 = vrot.slane %v8107, %v8114
          %v8117 = vunpack.c.l.s4 1966171168
          %v8118 = vunpack.c.0.s8 %v8117
          %v8119 = vlaneseq
          %v8120 = vshrl.u32 %v8119, 7
          %v8121 = vsub.s32 %v8118, %v8120
          %v8122 = vrot.slane %v8108, %v8121
          %v8123 = vcombine.low %v8115, %v8122
          %8125 = vst [vmem:[%s669] sm:$0xff] %v8123
        $region124: #{tpu_custom_call.1} parent=79 // pred_fallthru
          _
        %s8126 = sand.u32 %s381, 1
        %s8127 = scalar_lea.sflag [#allocation5], %s8126
        %s8128 = sand.u32 %s381, 1
        %s8129 = smul.addr %s8128, 8
        %s8130 = scalar_lea.vmem [#allocation18], %s8129
        %s8131 = sand.u32 %s407, 1
        %s8132 = scalar_lea.sflag [#allocation20], %s8131
        %s8133 = sand.u32 %s407, 1
        %s8134 = smul.addr %s8133, 8
        %s8135 = scalar_lea.vmem [#allocation19], %s8134
        // Predicated region
        $region125: #{tpu_custom_call.1} parent=79 // pred_check
          %p8136 = pneg %p391
        $region126: #{tpu_custom_call.1} parent=79 // pred_check_branch
          %8138 = sbr.rel (%p8136) target = $region128
        $region127: #{tpu_custom_call.1} parent=79 // pred_region
          %s8140 = ssub.s32 128, 128
          %8141 = vsyncadd %s8127, %s8140
          %s8142 = smul.addr %s43, 8
          %s8143 = smul.addr %s8142, 16
          %s8144 = scalar_lea.hbm %s15, %s8143
          %s8146 = sshll.u32 %s8130, 4
          %s8147 = int_to_ptr.vmem [resolvable:$true] %s8146
          %8149 = dma.vmem_to_hbm [thread:$0]  %s8147, 128, %s8144, %s8127
        $region128: #{tpu_custom_call.1} parent=79 // pred_fallthru
          _
        // Predicated region
        $region129: #{tpu_custom_call.1} parent=79 // pred_check
          %p8150 = pneg %p417
        $region130: #{tpu_custom_call.1} parent=79 // pred_check_branch
          %8152 = sbr.rel (%p8150) target = $region132
        $region131: #{tpu_custom_call.1} parent=79 // pred_region
          %s8154 = ssub.s32 128, 128
          %8155 = vsyncadd %s8132, %s8154
          %s8156 = smul.addr %s43, 8
          %s8157 = smul.addr %s8156, 16
          %s8158 = scalar_lea.hbm %s16, %s8157
          %s8160 = sshll.u32 %s8135, 4
          %s8161 = int_to_ptr.vmem [resolvable:$true] %s8160
          %8163 = dma.vmem_to_hbm [thread:$0]  %s8161, 128, %s8158, %s8132
        $region132: #{tpu_custom_call.1} parent=79 // pred_fallthru
          _
      $region80: #{tpu_custom_call.1} parent=5 // pred_fallthru
        _
      %p8164 = scmp.le.s32.totalorder 2, %s34
      // Predicated region
      $region133: #{tpu_custom_call.1} parent=5 // pred_check
        %p8165 = pneg %p8164
      $region134: #{tpu_custom_call.1} parent=5 // pred_check_branch
        %8167 = sbr.rel (%p8165) target = $region136
      $region135: #{tpu_custom_call.1} parent=5 // pred_region
        %s8168 = ssub.s32 %s34, 2
        // Predicated region
        $region137: #{tpu_custom_call.1} parent=135 // pred_check
          %p8169 = pneg %p397
        $region138: #{tpu_custom_call.1} parent=135 // pred_check_branch
          %8171 = sbr.rel (%p8169) target = $region140
        $region139: #{tpu_custom_call.1} parent=135 // pred_region
          %s8172 = sand.u32 %s382, 1
          %s8173 = scalar_lea.sflag [#allocation5], %s8172
          %s8174 = sand.u32 %s382, 1
          %s8175 = smul.addr %s8174, 8
          %s8176 = scalar_lea.vmem [#allocation18], %s8175
          %8177 = dma.done %s8173, 128
        $region140: #{tpu_custom_call.1} parent=135 // pred_fallthru
          _
        // Predicated region
        $region141: #{tpu_custom_call.1} parent=135 // pred_check
          %p8178 = pneg %p423
        $region142: #{tpu_custom_call.1} parent=135 // pred_check_branch
          %8180 = sbr.rel (%p8178) target = $region144
        $region143: #{tpu_custom_call.1} parent=135 // pred_region
          %s8181 = sand.u32 %s408, 1
          %s8182 = scalar_lea.sflag [#allocation20], %s8181
          %s8183 = sand.u32 %s408, 1
          %s8184 = smul.addr %s8183, 8
          %s8185 = scalar_lea.vmem [#allocation19], %s8184
          %8186 = dma.done %s8182, 128
        $region144: #{tpu_custom_call.1} parent=135 // pred_fallthru
          _
      $region136: #{tpu_custom_call.1} parent=5 // pred_fallthru
        _
    $region6: #{tpu_custom_call.1} parent=1 // loop_footer
      %s38 = sadd.s32 1, %s34
    $region7: #{tpu_custom_call.1} parent=1 // loop_footer_branch
      %33 = sbr.rel target = $region3
    $region8: #{tpu_custom_call.1} parent=1 // loop_exit
      _
    %8187 = vsyncpa [#allocation4], 1
    %s8188 = scalar_lea.sflag [#allocation4], 1
    %8189 = vsyncpa %s8188, 1
    %8190 = vsyncpa [#allocation7], 1
    %8191 = vsyncpa [#allocation10], 1
    %8192 = vsyncpa [#allocation13], 1
    %8193 = vsyncpa [#allocation16], 1
    %8194 = vsyncpa [#allocation5], 1
    %s8195 = scalar_lea.sflag [#allocation5], 1
    %8196 = vsyncpa %s8195, 1
    %8197 = vsyncpa [#allocation20], 1
    %s8198 = scalar_lea.sflag [#allocation20], 1
    %8199 = vsyncpa %s8198, 1

</llo_original>
